<compile_context>
chip_gen: v7x
topology: tpu7x:2x2x1
jax: 0.10.0
libtpu: 0.0.40
codegen_flags: <defaults>
</compile_context>

<pallas_src>
import jax
import jax.numpy as jnp
from jax.experimental import pallas as pl
from jax.experimental.pallas import tpu as pltpu


PATCH = 16            # encoder stand-in downsample factor -> feature maps [B, 512, H/16, W/16]
N_CLASSES = 21
N_CLASSES_PAD = 128   # decoder output padded to a lane-dense width; sliced back to 21 in wrapper
FEAT_CH = 512
QK_CH = 256           # query_key_net stand-in feature width (== `linear` n_feat at image 128)
N_AGENTS = 5
N_AUX = 4


# --------------------------------------------------------------------------------------------
# Fused kernel.  Grid = (5 agents,), agent axis "arbitrary" (the last step consumes all agents'
# features from VMEM scratch).  Per-agent weights are double-buffered blocks; all shared /
# attention / decoder weights are constant blocks (DMA'd once).
# --------------------------------------------------------------------------------------------
def _fused_kernel(x_ref, ew_ref, eb_ref, qw_ref, qb_ref,
                  kw_ref, kb_ref, qnw_ref, qnb_ref,
                  aw_ref, am_ref, dw_ref, db_ref,
                  pred_ref, attn_ref, enc_s, qk_s):
    a = pl.program_id(0)
    n_agents = pl.num_programs(0)
    B, HW, Kp = x_ref.shape[1], x_ref.shape[2], x_ref.shape[3]
    C = ew_ref.shape[2]

    # ------------------------- Phase 1: runs for every agent -------------------------
    # TODO(synk): n_segnet_encoder / conv2DBatchNormRelu backbone undefined in the reference;
    # per-agent img_encoder stand-in = one stride-16 patch conv + ReLU (bf16 MXU, f32 acc).
    x = x_ref[0].reshape(B * HW, Kp)
    feat = jnp.dot(x, ew_ref[0], preferred_element_type=jnp.float32) + eb_ref[0]
    feat = jnp.maximum(feat, 0.0)
    enc_s[a] = feat.reshape(B, HW, C).astype(jnp.bfloat16)

    # TODO(synk): policy_net4 conv stack undefined; query_key_net stand-in = shared stride-16
    # patch conv + ReLU fused here with its spatial mean-pool to [B, 256].
    qk = jnp.dot(x, qw_ref[...], preferred_element_type=jnp.float32) + qb_ref[...]
    qk = jnp.maximum(qk, 0.0).reshape(B, HW, qw_ref.shape[1])
    qk_s[a] = jnp.mean(qk, axis=1)

    # ------------------------- Phase 2: last agent only -------------------------
    @pl.when(a == n_agents - 1)
    def _():
        A = attn_ref.shape[1]                                         # 4 auxiliary agents

        def mlp(x_in, w_ref, b_ref):
            # exact `linear` module: Linear(256,256)+ReLU, Linear(256,128)+ReLU, Linear(128,128)
            h = jnp.dot(x_in, w_ref[0:QK_CH, :],
                        preferred_element_type=jnp.float32) + b_ref[0:1, :]
            h = jnp.maximum(h, 0.0).astype(jnp.bfloat16)
            h = jnp.dot(h, w_ref[QK_CH:QK_CH + 256, 0:128],
                        preferred_element_type=jnp.float32) + b_ref[1:2, 0:128]
            h = jnp.maximum(h, 0.0).astype(jnp.bfloat16)
            return jnp.dot(h, w_ref[QK_CH + 256:QK_CH + 384, 0:128],
                           preferred_element_type=jnp.float32) + b_ref[2:3, 0:128]

        # query branch (agent 1) + all 4 key branches batched into one (A*B, .) MLP pass
        q_in = qk_s[0].astype(jnp.bfloat16)                           # (B, 256)
        k_in = jnp.concatenate([qk_s[1], qk_s[2], qk_s[3], qk_s[4]],
                               axis=0).astype(jnp.bfloat16)           # (A*B, 256), agent-major
        query = mlp(q_in, qnw_ref, qnb_ref)                           # (B, 128)   f32
        keys = mlp(k_in, kw_ref, kb_ref)                              # (A*B, 128) f32

        # AdditiveAttentin (sparse=False -> softmax over the 4 agents; exact divide)
        wf = aw_ref[0:128, :]                                         # linear_feat
        wc = aw_ref[128:256, :]                                       # linear_context
        temp1 = jnp.dot(keys.astype(jnp.bfloat16), wf,
                        preferred_element_type=jnp.float32) + am_ref[0:1, :]     # (A*B, 128)
        temp2 = jnp.dot(query.astype(jnp.bfloat16), wc,
                        preferred_element_type=jnp.float32) + am_ref[1:2, :]     # (B, 128)
        temp2_rep = jnp.concatenate([temp2] * A, axis=0)                         # (A*B, 128)
        h = temp1 + temp2_rep
        logits = jnp.sum(h * am_ref[2:3, :], axis=-1, keepdims=True) \
            + am_ref[3:4, 0:1]                                        # linear_out -> (A*B, 1)

        l_list = [logits[i * B:(i + 1) * B] for i in range(A)]        # per-agent (B, 1)
        m = l_list[0]
        for i in range(1, A):
            m = jnp.maximum(m, l_list[i])
        e_list = [jnp.exp(l - m) for l in l_list]
        denom = e_list[0]
        for i in range(1, A):
            denom = denom + e_list[i]
        w_list = [e / denom for e in e_list]                          # exact softmax weights
        attn_ref[...] = jnp.concatenate(w_list, axis=1)               # single (B, A) store

        # attention-weighted value fusion, batched over the full (B, HW, C) slab per agent
        aux = w_list[0][:, :, None] * enc_s[1].astype(jnp.float32)
        for i in range(1, A):
            aux = aux + w_list[i][:, :, None] * enc_s[i + 1].astype(jnp.float32)  # (B, HW, C)

        # TODO(synk): n_segnet_decoder upsampling stack undefined; stand-in = 1x1 conv on
        # concat(feat_map1, aux_feat) to 21 classes (zero-padded to 128 lanes), done as two
        # batched (B*HW, 512) x (512, 128) matmuls so no in-kernel concat is needed.
        feat1 = enc_s[0].reshape(B * HW, C)                           # bf16
        aux2 = aux.reshape(B * HW, C).astype(jnp.bfloat16)
        pred = jnp.dot(feat1, dw_ref[0:C, :], preferred_element_type=jnp.float32)
        pred = pred + jnp.dot(aux2, dw_ref[C:2 * C, :], preferred_element_type=jnp.float32)
        pred_ref[...] = pred + db_ref[...]


def pallas_learn_who2com(patches, p):
    n_agents, B, HW, Kp = patches.shape

    def full(arr):
        nd = arr.ndim
        return pl.BlockSpec(arr.shape, lambda a: (0,) * nd)

    in_specs = [
        pl.BlockSpec((1, B, HW, Kp), lambda a: (a, 0, 0, 0)),     # per-agent patches
        pl.BlockSpec((1, Kp, FEAT_CH), lambda a: (a, 0, 0)),      # per-agent encoder weights
        pl.BlockSpec((1, 1, FEAT_CH), lambda a: (a, 0, 0)),       # per-agent encoder bias
        full(p["qk_w"]), full(p["qk_b"]),                         # shared query_key_net
        full(p["key_w"]), full(p["key_b"]),                       # packed key_net
        full(p["qry_w"]), full(p["qry_b"]),                       # packed query_net
        full(p["attn_w"]), full(p["attn_m"]),                     # packed attention params
        full(p["dec_w"]), full(p["dec_b"]),                       # packed decoder params
    ]
    pred, attn = pl.pallas_call(
        _fused_kernel,
        out_shape=(jax.ShapeDtypeStruct((B * HW, N_CLASSES_PAD), jnp.float32),
                   jax.ShapeDtypeStruct((B, N_AUX), jnp.float32)),
        grid=(n_agents,),
        in_specs=in_specs,
        out_specs=(pl.BlockSpec((B * HW, N_CLASSES_PAD), lambda a: (0, 0)),
                   pl.BlockSpec((B, N_AUX), lambda a: (0, 0))),
        scratch_shapes=[pltpu.VMEM((n_agents, B, HW, FEAT_CH), jnp.bfloat16),
                        pltpu.VMEM((n_agents, B, QK_CH), jnp.float32)],
        compiler_params=pltpu.CompilerParams(dimension_semantics=("arbitrary",)),
    )(patches, p["enc_w"], p["enc_b"], p["qk_w"], p["qk_b"],
      p["key_w"], p["key_b"], p["qry_w"], p["qry_b"],
      p["attn_w"], p["attn_m"], p["dec_w"], p["dec_b"])
    return pred, attn


# ----------------------------------- glue (params, im2col) -----------------------------------

def _init_linear(key, fan_in, fan_out, w_dtype=jnp.bfloat16):
    kw, kb = jax.random.split(key)
    s = 1.0 / float(fan_in) ** 0.5
    w = jax.random.uniform(kw, (fan_in, fan_out), minval=-s, maxval=s, dtype=jnp.float32)
    b = jax.random.uniform(kb, (1, fan_out), minval=-s, maxval=s, dtype=jnp.float32)
    return w.astype(w_dtype), b


def _patchify(inputs):
    """[B, 15, H, W] NCHW -> bf16 patches [5 agents, B, (H/P)*(W/P), 3*P*P] (im2col glue)."""
    B, _, H, W = inputs.shape
    hs, ws = H // PATCH, W // PATCH
    x = inputs.reshape(B, N_AGENTS, 3, hs, PATCH, ws, PATCH)
    x = x.transpose(1, 0, 3, 5, 2, 4, 6)
    return x.reshape(N_AGENTS, B, hs * ws, 3 * PATCH * PATCH).astype(jnp.bfloat16)


def init_params(key, image_size):
    input_feat_sz = image_size / 32
    feat_map_sz = int(input_feat_sz // 4)
    n_feat = int(256 * feat_map_sz * feat_map_sz)          # matches the reference `linear` module
    assert n_feat == QK_CH, "query_key_net stand-in emits 256 features; use image_size=128"

    keys = jax.random.split(key, 16)
    p = {}
    # separate per-agent encoders (module default shared_img_encoder=False), stacked for one call
    enc_w, enc_b = [], []
    for i in range(N_AGENTS):
        w, b = _init_linear(keys[i], 3 * PATCH * PATCH, FEAT_CH)
        enc_w.append(w)
        enc_b.append(b)
    p["enc_w"] = jnp.stack(enc_w)                          # (5, 768, 512) bf16
    p["enc_b"] = jnp.stack(enc_b)                          # (5, 1, 512)   f32
    p["qk_w"], p["qk_b"] = _init_linear(keys[5], 3 * PATCH * PATCH, QK_CH)

    def pack_mlp(ks):
        # pack the 3-layer `linear` module into one weight slab (640, 256) + one bias slab (3, 256)
        dims = [(QK_CH, 256), (256, 128), (128, 128)]
        w_slab = jnp.zeros((QK_CH + 256 + 128, 256), jnp.float32)
        b_slab = jnp.zeros((3, 256), jnp.float32)
        row = 0
        for j, (fi, fo) in enumerate(dims):
            w, b = _init_linear(ks[j], fi, fo, w_dtype=jnp.float32)
            w_slab = w_slab.at[row:row + fi, :fo].set(w)
            b_slab = b_slab.at[j, :fo].set(b[0])
            row += fi
        return w_slab.astype(jnp.bfloat16), b_slab

    p["key_w"], p["key_b"] = pack_mlp(keys[6:9])
    p["qry_w"], p["qry_b"] = pack_mlp(keys[9:12])

    wf, bfr = _init_linear(keys[12], 128, 128, w_dtype=jnp.float32)   # AdditiveAttentin.linear_feat
    wc, bcr = _init_linear(keys[13], 128, 128, w_dtype=jnp.float32)   # AdditiveAttentin.linear_context
    wo, bo = _init_linear(keys[14], 128, 1, w_dtype=jnp.float32)      # AdditiveAttentin.linear_out
    p["attn_w"] = jnp.concatenate([wf, wc], axis=0).astype(jnp.bfloat16)   # (256, 128)
    attn_m = jnp.zeros((4, 128), jnp.float32)
    attn_m = attn_m.at[0].set(bfr[0]).at[1].set(bcr[0]).at[2].set(wo[:, 0])
    attn_m = attn_m.at[3, 0].set(bo[0, 0])
    p["attn_m"] = attn_m                                   # rows: bfr, bcr, wo, bo

    wd, bd = _init_linear(keys[15], 2 * FEAT_CH, N_CLASSES, w_dtype=jnp.float32)
    dec_w = jnp.zeros((2 * FEAT_CH, N_CLASSES_PAD), jnp.float32).at[:, :N_CLASSES].set(wd)
    p["dec_w"] = dec_w.astype(jnp.bfloat16)                # rows 0:512 -> feat_map1, 512:1024 -> aux
    p["dec_b"] = jnp.zeros((1, N_CLASSES_PAD), jnp.float32).at[:, :N_CLASSES].set(bd)
    return p


def learn_who2com_forward(params, inputs, training=True):
    """inputs: [B, 15, H, W] (5 agents x 3 channels, NCHW) -> (pred, prob_action, action)."""
    B, _, H, W = inputs.shape
    hs, ws = H // PATCH, W // PATCH

    # divide_inputs + im2col (one transpose); the same patch tensor feeds both the per-agent
    # encoders and the unified (batch-concatenated) query_key_net, matching the reference.
    patches = _patchify(inputs)                                           # (5, B, hs*ws, 768)

    pred_pad, attn = pallas_learn_who2com(patches, params)

    pred = (pred_pad.reshape(B, hs, ws, N_CLASSES_PAD)[..., :N_CLASSES]
            .transpose(0, 3, 1, 2))                                       # (B, 21, hs, ws)
    prob_action = attn[:, None, :]                                        # (B, 1, 4)
    action = jnp.argmax(prob_action, axis=2)                              # (B, 1)
    return pred, prob_action, action


if __name__ == "__main__":
    B = 2
    IMAGE_SIZE = 128   # smallest size for which the module's `linear` (image_size/32//4) is valid
    rng = jax.random.PRNGKey(0)
    k_in, k_par = jax.random.split(rng)
    inputs = jax.random.normal(k_in, (B, 15, IMAGE_SIZE, IMAGE_SIZE), dtype=jnp.float32)
    params = init_params(k_par, IMAGE_SIZE)

    fwd = jax.jit(learn_who2com_forward)
    pred, prob_action, action = fwd(params, inputs)
    jax.block_until_ready((pred, prob_action, action))

    hs = IMAGE_SIZE // PATCH
    assert pred.shape == (B, N_CLASSES, hs, hs)
    assert prob_action.shape == (B, 1, N_AUX)
    assert action.shape == (B, 1)
    assert bool(jnp.all(jnp.isfinite(pred)))
    assert bool(jnp.allclose(jnp.sum(prob_action, axis=2), 1.0, atol=1e-3))
    print("KERNEL_OK")
</pallas_src>

<mosaic_0001>
module attributes {stable_mosaic.version = 11 : i64} {
  func.func @_fused_kernel(%arg0: i32, %arg1: memref<1x2x64x768xbf16, #tpu.memory_space<vmem>>, %arg2: memref<1x768x512xbf16, #tpu.memory_space<vmem>>, %arg3: memref<1x1x512xf32, #tpu.memory_space<vmem>>, %arg4: memref<768x256xbf16, #tpu.memory_space<vmem>>, %arg5: memref<1x256xf32, #tpu.memory_space<vmem>>, %arg6: memref<640x256xbf16, #tpu.memory_space<vmem>>, %arg7: memref<3x256xf32, #tpu.memory_space<vmem>>, %arg8: memref<640x256xbf16, #tpu.memory_space<vmem>>, %arg9: memref<3x256xf32, #tpu.memory_space<vmem>>, %arg10: memref<256x128xbf16, #tpu.memory_space<vmem>>, %arg11: memref<4x128xf32, #tpu.memory_space<vmem>>, %arg12: memref<1024x128xbf16, #tpu.memory_space<vmem>>, %arg13: memref<1x128xf32, #tpu.memory_space<vmem>>, %arg14: memref<128x128xf32, #tpu.memory_space<vmem>>, %arg15: memref<2x4xf32, #tpu.memory_space<vmem>>, %arg16: memref<5x2x64x512xbf16, #tpu.memory_space<vmem>>, %arg17: memref<5x2x256xf32, #tpu.memory_space<vmem>>) attributes {dimension_semantics = [#tpu.dimension_semantics<arbitrary>], iteration_bounds = array<i64: 5>, scalar_prefetch = 0 : i64, scratch_operands = 2 : i64, tpu.core_type = #tpu.core_type<tc>, window_params = [{transform_indices = @transform_0, window_bounds = array<i64: 1, 2, 64, 768>}, {transform_indices = @transform_1, window_bounds = array<i64: 1, 768, 512>}, {transform_indices = @transform_2, window_bounds = array<i64: 1, 1, 512>}, {pipeline_mode = #tpu.pipeline_mode<synchronous>, transform_indices = @transform_3, window_bounds = array<i64: 768, 256>}, {pipeline_mode = #tpu.pipeline_mode<synchronous>, transform_indices = @transform_4, window_bounds = array<i64: 1, 256>}, {pipeline_mode = #tpu.pipeline_mode<synchronous>, transform_indices = @transform_5, window_bounds = array<i64: 640, 256>}, {pipeline_mode = #tpu.pipeline_mode<synchronous>, transform_indices = @transform_6, window_bounds = array<i64: 3, 256>}, {pipeline_mode = #tpu.pipeline_mode<synchronous>, transform_indices = @transform_7, window_bounds = array<i64: 640, 256>}, {pipeline_mode = #tpu.pipeline_mode<synchronous>, transform_indices = @transform_8, window_bounds = array<i64: 3, 256>}, {pipeline_mode = #tpu.pipeline_mode<synchronous>, transform_indices = @transform_9, window_bounds = array<i64: 256, 128>}, {pipeline_mode = #tpu.pipeline_mode<synchronous>, transform_indices = @transform_10, window_bounds = array<i64: 4, 128>}, {pipeline_mode = #tpu.pipeline_mode<synchronous>, transform_indices = @transform_11, window_bounds = array<i64: 1024, 128>}, {pipeline_mode = #tpu.pipeline_mode<synchronous>, transform_indices = @transform_12, window_bounds = array<i64: 1, 128>}, {pipeline_mode = #tpu.pipeline_mode<synchronous>, transform_indices = @transform_13, window_bounds = array<i64: 128, 128>}, {pipeline_mode = #tpu.pipeline_mode<synchronous>, transform_indices = @transform_14, window_bounds = array<i64: 2, 4>}]} {
    %c0 = arith.constant 0 : index
    %c0_0 = arith.constant 0 : index
    %c0_1 = arith.constant 0 : index
    %c0_2 = arith.constant 0 : index
    %0 = vector.load %arg1[%c0, %c0_0, %c0_1, %c0_2] : memref<1x2x64x768xbf16, #tpu.memory_space<vmem>>, vector<1x2x64x768xbf16>
    %1 = vector.shape_cast %0 : vector<1x2x64x768xbf16> to vector<2x64x768xbf16>
    %2 = vector.shape_cast %1 : vector<2x64x768xbf16> to vector<128x768xbf16>
    %c0_3 = arith.constant 0 : index
    %c0_4 = arith.constant 0 : index
    %c0_5 = arith.constant 0 : index
    %3 = vector.load %arg2[%c0_3, %c0_4, %c0_5] : memref<1x768x512xbf16, #tpu.memory_space<vmem>>, vector<1x768x512xbf16>
    %4 = vector.shape_cast %3 : vector<1x768x512xbf16> to vector<768x512xbf16>
    %cst = arith.constant dense<0.000000e+00> : vector<128x512xf32>
    %5 = tpu.matmul %2, %4, %cst {dimension_numbers = #tpu.dot_dimension_numbers<[1], [0], [0], [1], [0, 0, 1, 1], [], []>} : vector<128x768xbf16>, vector<768x512xbf16>, vector<128x512xf32> -> vector<128x512xf32>
    %c0_6 = arith.constant 0 : index
    %c0_7 = arith.constant 0 : index
    %c0_8 = arith.constant 0 : index
    %6 = vector.load %arg3[%c0_6, %c0_7, %c0_8] : memref<1x1x512xf32, #tpu.memory_space<vmem>>, vector<1x1x512xf32>
    %7 = vector.shape_cast %6 : vector<1x1x512xf32> to vector<1x512xf32>
    %8 = vector.broadcast %7 : vector<1x512xf32> to vector<128x512xf32>
    %9 = arith.addf %5, %8 : vector<128x512xf32>
    %cst_9 = arith.constant 0.000000e+00 : f32
    %10 = vector.broadcast %cst_9 : f32 to vector<128x512xf32>
    %11 = arith.maximumf %9, %10 : vector<128x512xf32>
    %12 = vector.shape_cast %11 : vector<128x512xf32> to vector<2x64x512xf32>
    %13 = arith.truncf %12 : vector<2x64x512xf32> to vector<2x64x512xbf16>
    %14 = arith.index_cast %arg0 : i32 to index
    %c0_10 = arith.constant 0 : index
    %c0_11 = arith.constant 0 : index
    %c0_12 = arith.constant 0 : index
    %15 = vector.load %arg16[%14, %c0_10, %c0_11, %c0_12] : memref<5x2x64x512xbf16, #tpu.memory_space<vmem>>, vector<1x2x64x512xbf16>
    %16 = vector.shape_cast %15 : vector<1x2x64x512xbf16> to vector<2x64x512xbf16>
    %17 = vector.shape_cast %13 : vector<2x64x512xbf16> to vector<1x2x64x512xbf16>
    tpu.vector_store %arg16[%14, %c0_10, %c0_11, %c0_12], %17 {strides = array<i32>} : memref<5x2x64x512xbf16, #tpu.memory_space<vmem>>, vector<1x2x64x512xbf16>,
    %c0_13 = arith.constant 0 : index
    %c0_14 = arith.constant 0 : index
    %18 = vector.load %arg4[%c0_13, %c0_14] : memref<768x256xbf16, #tpu.memory_space<vmem>>, vector<768x256xbf16>
    %cst_15 = arith.constant dense<0.000000e+00> : vector<128x256xf32>
    %19 = tpu.matmul %2, %18, %cst_15 {dimension_numbers = #tpu.dot_dimension_numbers<[1], [0], [0], [1], [0, 0, 1, 1], [], []>} : vector<128x768xbf16>, vector<768x256xbf16>, vector<128x256xf32> -> vector<128x256xf32>
    %c0_16 = arith.constant 0 : index
    %c0_17 = arith.constant 0 : index
    %20 = vector.load %arg5[%c0_16, %c0_17] : memref<1x256xf32, #tpu.memory_space<vmem>>, vector<1x256xf32>
    %21 = vector.broadcast %20 : vector<1x256xf32> to vector<128x256xf32>
    %22 = arith.addf %19, %21 : vector<128x256xf32>
    %cst_18 = arith.constant 0.000000e+00 : f32
    %23 = vector.broadcast %cst_18 : f32 to vector<128x256xf32>
    %24 = arith.maximumf %22, %23 : vector<128x256xf32>
    %25 = vector.shape_cast %24 : vector<128x256xf32> to vector<2x64x256xf32>
    %cst_19 = arith.constant dense<0.000000e+00> : vector<2x256xf32>
    %26 = vector.multi_reduction <add>, %25, %cst_19 [1] : vector<2x64x256xf32> to vector<2x256xf32>
    %cst_20 = arith.constant 6.400000e+01 : f32
    %27 = vector.broadcast %cst_20 : f32 to vector<2x256xf32>
    %28 = arith.divf %26, %27 : vector<2x256xf32>
    %29 = arith.index_cast %arg0 : i32 to index
    %c0_21 = arith.constant 0 : index
    %c0_22 = arith.constant 0 : index
    %30 = vector.load %arg17[%29, %c0_21, %c0_22] : memref<5x2x256xf32, #tpu.memory_space<vmem>>, vector<1x2x256xf32>
    %31 = vector.shape_cast %30 : vector<1x2x256xf32> to vector<2x256xf32>
    %32 = vector.shape_cast %28 : vector<2x256xf32> to vector<1x2x256xf32>
    tpu.vector_store %arg17[%29, %c0_21, %c0_22], %32 {strides = array<i32>} : memref<5x2x256xf32, #tpu.memory_space<vmem>>, vector<1x2x256xf32>,
    %c4_i32 = arith.constant 4 : i32
    %33 = arith.cmpi eq, %arg0, %c4_i32 : i32
    %34 = arith.extui %33 : i1 to i32
    %c0_i32 = arith.constant 0 : i32
    %35 = arith.cmpi ne, %34, %c0_i32 : i32
    scf.if %35 {
      %c0_23 = arith.constant 0 : index
      %c0_24 = arith.constant 0 : index
      %c0_25 = arith.constant 0 : index
      %36 = vector.load %arg17[%c0_23, %c0_24, %c0_25] : memref<5x2x256xf32, #tpu.memory_space<vmem>>, vector<1x2x256xf32>
      %37 = vector.shape_cast %36 : vector<1x2x256xf32> to vector<2x256xf32>
      %38 = arith.truncf %37 : vector<2x256xf32> to vector<2x256xbf16>
      %c1 = arith.constant 1 : index
      %c0_26 = arith.constant 0 : index
      %c0_27 = arith.constant 0 : index
      %39 = vector.load %arg17[%c1, %c0_26, %c0_27] : memref<5x2x256xf32, #tpu.memory_space<vmem>>, vector<1x2x256xf32>
      %40 = vector.shape_cast %39 : vector<1x2x256xf32> to vector<2x256xf32>
      %c2 = arith.constant 2 : index
      %c0_28 = arith.constant 0 : index
      %c0_29 = arith.constant 0 : index
      %41 = vector.load %arg17[%c2, %c0_28, %c0_29] : memref<5x2x256xf32, #tpu.memory_space<vmem>>, vector<1x2x256xf32>
      %42 = vector.shape_cast %41 : vector<1x2x256xf32> to vector<2x256xf32>
      %c3 = arith.constant 3 : index
      %c0_30 = arith.constant 0 : index
      %c0_31 = arith.constant 0 : index
      %43 = vector.load %arg17[%c3, %c0_30, %c0_31] : memref<5x2x256xf32, #tpu.memory_space<vmem>>, vector<1x2x256xf32>
      %44 = vector.shape_cast %43 : vector<1x2x256xf32> to vector<2x256xf32>
      %c4 = arith.constant 4 : index
      %c0_32 = arith.constant 0 : index
      %c0_33 = arith.constant 0 : index
      %45 = vector.load %arg17[%c4, %c0_32, %c0_33] : memref<5x2x256xf32, #tpu.memory_space<vmem>>, vector<1x2x256xf32>
      %46 = vector.shape_cast %45 : vector<1x2x256xf32> to vector<2x256xf32>
      %47 = tpu.concatenate %40, %42, %44, %46 in 0 : vector<2x256xf32>, vector<2x256xf32>, vector<2x256xf32>, vector<2x256xf32> -> vector<8x256xf32>
      %48 = arith.truncf %47 : vector<8x256xf32> to vector<8x256xbf16>
      %c0_34 = arith.constant 0 : index
      %c0_35 = arith.constant 0 : index
      %49 = vector.load %arg8[%c0_34, %c0_35] : memref<640x256xbf16, #tpu.memory_space<vmem>>, vector<256x256xbf16>
      %cst_36 = arith.constant dense<0.000000e+00> : vector<2x256xf32>
      %50 = tpu.matmul %38, %49, %cst_36 {dimension_numbers = #tpu.dot_dimension_numbers<[1], [0], [0], [1], [0, 0, 1, 1], [], []>} : vector<2x256xbf16>, vector<256x256xbf16>, vector<2x256xf32> -> vector<2x256xf32>
      %c0_37 = arith.constant 0 : index
      %c0_38 = arith.constant 0 : index
      %51 = vector.load %arg9[%c0_37, %c0_38] : memref<3x256xf32, #tpu.memory_space<vmem>>, vector<1x256xf32>
      %52 = vector.broadcast %51 : vector<1x256xf32> to vector<2x256xf32>
      %53 = arith.addf %50, %52 : vector<2x256xf32>
      %cst_39 = arith.constant 0.000000e+00 : f32
      %54 = vector.broadcast %cst_39 : f32 to vector<2x256xf32>
      %55 = arith.maximumf %53, %54 : vector<2x256xf32>
      %56 = arith.truncf %55 : vector<2x256xf32> to vector<2x256xbf16>
      %c256 = arith.constant 256 : index
      %c0_40 = arith.constant 0 : index
      %57 = vector.load %arg8[%c256, %c0_40] : memref<640x256xbf16, #tpu.memory_space<vmem>>, vector<256x128xbf16>
      %cst_41 = arith.constant dense<0.000000e+00> : vector<2x128xf32>
      %58 = tpu.matmul %56, %57, %cst_41 {dimension_numbers = #tpu.dot_dimension_numbers<[1], [0], [0], [1], [0, 0, 1, 1], [], []>} : vector<2x256xbf16>, vector<256x128xbf16>, vector<2x128xf32> -> vector<2x128xf32>
      %c1_42 = arith.constant 1 : index
      %c0_43 = arith.constant 0 : index
      %59 = vector.load %arg9[%c1_42, %c0_43] : memref<3x256xf32, #tpu.memory_space<vmem>>, vector<1x128xf32>
      %60 = vector.broadcast %59 : vector<1x128xf32> to vector<2x128xf32>
      %61 = arith.addf %58, %60 : vector<2x128xf32>
      %cst_44 = arith.constant 0.000000e+00 : f32
      %62 = vector.broadcast %cst_44 : f32 to vector<2x128xf32>
      %63 = arith.maximumf %61, %62 : vector<2x128xf32>
      %64 = arith.truncf %63 : vector<2x128xf32> to vector<2x128xbf16>
      %c512 = arith.constant 512 : index
      %c0_45 = arith.constant 0 : index
      %65 = vector.load %arg8[%c512, %c0_45] : memref<640x256xbf16, #tpu.memory_space<vmem>>, vector<128x128xbf16>
      %cst_46 = arith.constant dense<0.000000e+00> : vector<2x128xf32>
      %66 = tpu.matmul %64, %65, %cst_46 {dimension_numbers = #tpu.dot_dimension_numbers<[1], [0], [0], [1], [0, 0, 1, 1], [], []>} : vector<2x128xbf16>, vector<128x128xbf16>, vector<2x128xf32> -> vector<2x128xf32>
      %c2_47 = arith.constant 2 : index
      %c0_48 = arith.constant 0 : index
      %67 = vector.load %arg9[%c2_47, %c0_48] : memref<3x256xf32, #tpu.memory_space<vmem>>, vector<1x128xf32>
      %68 = vector.broadcast %67 : vector<1x128xf32> to vector<2x128xf32>
      %69 = arith.addf %66, %68 : vector<2x128xf32>
      %c0_49 = arith.constant 0 : index
      %c0_50 = arith.constant 0 : index
      %70 = vector.load %arg6[%c0_49, %c0_50] : memref<640x256xbf16, #tpu.memory_space<vmem>>, vector<256x256xbf16>
      %cst_51 = arith.constant dense<0.000000e+00> : vector<8x256xf32>
      %71 = tpu.matmul %48, %70, %cst_51 {dimension_numbers = #tpu.dot_dimension_numbers<[1], [0], [0], [1], [0, 0, 1, 1], [], []>} : vector<8x256xbf16>, vector<256x256xbf16>, vector<8x256xf32> -> vector<8x256xf32>
      %c0_52 = arith.constant 0 : index
      %c0_53 = arith.constant 0 : index
      %72 = vector.load %arg7[%c0_52, %c0_53] : memref<3x256xf32, #tpu.memory_space<vmem>>, vector<1x256xf32>
      %73 = vector.broadcast %72 : vector<1x256xf32> to vector<8x256xf32>
      %74 = arith.addf %71, %73 : vector<8x256xf32>
      %cst_54 = arith.constant 0.000000e+00 : f32
      %75 = vector.broadcast %cst_54 : f32 to vector<8x256xf32>
      %76 = arith.maximumf %74, %75 : vector<8x256xf32>
      %77 = arith.truncf %76 : vector<8x256xf32> to vector<8x256xbf16>
      %c256_55 = arith.constant 256 : index
      %c0_56 = arith.constant 0 : index
      %78 = vector.load %arg6[%c256_55, %c0_56] : memref<640x256xbf16, #tpu.memory_space<vmem>>, vector<256x128xbf16>
      %cst_57 = arith.constant dense<0.000000e+00> : vector<8x128xf32>
      %79 = tpu.matmul %77, %78, %cst_57 {dimension_numbers = #tpu.dot_dimension_numbers<[1], [0], [0], [1], [0, 0, 1, 1], [], []>} : vector<8x256xbf16>, vector<256x128xbf16>, vector<8x128xf32> -> vector<8x128xf32>
      %c1_58 = arith.constant 1 : index
      %c0_59 = arith.constant 0 : index
      %80 = vector.load %arg7[%c1_58, %c0_59] : memref<3x256xf32, #tpu.memory_space<vmem>>, vector<1x128xf32>
      %81 = vector.broadcast %80 : vector<1x128xf32> to vector<8x128xf32>
      %82 = arith.addf %79, %81 : vector<8x128xf32>
      %cst_60 = arith.constant 0.000000e+00 : f32
      %83 = vector.broadcast %cst_60 : f32 to vector<8x128xf32>
      %84 = arith.maximumf %82, %83 : vector<8x128xf32>
      %85 = arith.truncf %84 : vector<8x128xf32> to vector<8x128xbf16>
      %c512_61 = arith.constant 512 : index
      %c0_62 = arith.constant 0 : index
      %86 = vector.load %arg6[%c512_61, %c0_62] : memref<640x256xbf16, #tpu.memory_space<vmem>>, vector<128x128xbf16>
      %cst_63 = arith.constant dense<0.000000e+00> : vector<8x128xf32>
      %87 = tpu.matmul %85, %86, %cst_63 {dimension_numbers = #tpu.dot_dimension_numbers<[1], [0], [0], [1], [0, 0, 1, 1], [], []>} : vector<8x128xbf16>, vector<128x128xbf16>, vector<8x128xf32> -> vector<8x128xf32>
      %c2_64 = arith.constant 2 : index
      %c0_65 = arith.constant 0 : index
      %88 = vector.load %arg7[%c2_64, %c0_65] : memref<3x256xf32, #tpu.memory_space<vmem>>, vector<1x128xf32>
      %89 = vector.broadcast %88 : vector<1x128xf32> to vector<8x128xf32>
      %90 = arith.addf %87, %89 : vector<8x128xf32>
      %c0_66 = arith.constant 0 : index
      %c0_67 = arith.constant 0 : index
      %91 = vector.load %arg10[%c0_66, %c0_67] : memref<256x128xbf16, #tpu.memory_space<vmem>>, vector<128x128xbf16>
      %c128 = arith.constant 128 : index
      %c0_68 = arith.constant 0 : index
      %92 = vector.load %arg10[%c128, %c0_68] : memref<256x128xbf16, #tpu.memory_space<vmem>>, vector<128x128xbf16>
      %93 = arith.truncf %90 : vector<8x128xf32> to vector<8x128xbf16>
      %cst_69 = arith.constant dense<0.000000e+00> : vector<8x128xf32>
      %94 = tpu.matmul %93, %91, %cst_69 {dimension_numbers = #tpu.dot_dimension_numbers<[1], [0], [0], [1], [0, 0, 1, 1], [], []>} : vector<8x128xbf16>, vector<128x128xbf16>, vector<8x128xf32> -> vector<8x128xf32>
      %c0_70 = arith.constant 0 : index
      %c0_71 = arith.constant 0 : index
      %95 = vector.load %arg11[%c0_70, %c0_71] : memref<4x128xf32, #tpu.memory_space<vmem>>, vector<1x128xf32>
      %96 = vector.broadcast %95 : vector<1x128xf32> to vector<8x128xf32>
      %97 = arith.addf %94, %96 : vector<8x128xf32>
      %98 = arith.truncf %69 : vector<2x128xf32> to vector<2x128xbf16>
      %cst_72 = arith.constant dense<0.000000e+00> : vector<2x128xf32>
      %99 = tpu.matmul %98, %92, %cst_72 {dimension_numbers = #tpu.dot_dimension_numbers<[1], [0], [0], [1], [0, 0, 1, 1], [], []>} : vector<2x128xbf16>, vector<128x128xbf16>, vector<2x128xf32> -> vector<2x128xf32>
      %c1_73 = arith.constant 1 : index
      %c0_74 = arith.constant 0 : index
      %100 = vector.load %arg11[%c1_73, %c0_74] : memref<4x128xf32, #tpu.memory_space<vmem>>, vector<1x128xf32>
      %101 = vector.broadcast %100 : vector<1x128xf32> to vector<2x128xf32>
      %102 = arith.addf %99, %101 : vector<2x128xf32>
      %103 = tpu.concatenate %102, %102, %102, %102 in 0 : vector<2x128xf32>, vector<2x128xf32>, vector<2x128xf32>, vector<2x128xf32> -> vector<8x128xf32>
      %104 = arith.addf %97, %103 : vector<8x128xf32>
      %c2_75 = arith.constant 2 : index
      %c0_76 = arith.constant 0 : index
      %105 = vector.load %arg11[%c2_75, %c0_76] : memref<4x128xf32, #tpu.memory_space<vmem>>, vector<1x128xf32>
      %106 = vector.broadcast %105 : vector<1x128xf32> to vector<8x128xf32>
      %107 = arith.mulf %104, %106 : vector<8x128xf32>
      %cst_77 = arith.constant dense<0.000000e+00> : vector<8xf32>
      %108 = vector.multi_reduction <add>, %107, %cst_77 [1] : vector<8x128xf32> to vector<8xf32>
      %109 = vector.shape_cast %108 : vector<8xf32> to vector<8x1xf32>
      %c3_78 = arith.constant 3 : index
      %c0_79 = arith.constant 0 : index
      %110 = vector.load %arg11[%c3_78, %c0_79] : memref<4x128xf32, #tpu.memory_space<vmem>>, vector<1x1xf32>
      %111 = vector.broadcast %110 : vector<1x1xf32> to vector<8x1xf32>
      %112 = arith.addf %109, %111 : vector<8x1xf32>
      %113 = vector.extract_strided_slice %112 {offsets = [0, 0], sizes = [2, 1], strides = [1, 1]} : vector<8x1xf32> to vector<2x1xf32>
      %114 = vector.extract_strided_slice %112 {offsets = [2, 0], sizes = [2, 1], strides = [1, 1]} : vector<8x1xf32> to vector<2x1xf32>
      %115 = vector.extract_strided_slice %112 {offsets = [4, 0], sizes = [2, 1], strides = [1, 1]} : vector<8x1xf32> to vector<2x1xf32>
      %116 = vector.extract_strided_slice %112 {offsets = [6, 0], sizes = [2, 1], strides = [1, 1]} : vector<8x1xf32> to vector<2x1xf32>
      %117 = arith.maximumf %113, %114 : vector<2x1xf32>
      %118 = arith.maximumf %117, %115 : vector<2x1xf32>
      %119 = arith.maximumf %118, %116 : vector<2x1xf32>
      %120 = arith.subf %113, %119 : vector<2x1xf32>
      %121 = math.exp %120 : vector<2x1xf32>
      %122 = arith.subf %114, %119 : vector<2x1xf32>
      %123 = math.exp %122 : vector<2x1xf32>
      %124 = arith.subf %115, %119 : vector<2x1xf32>
      %125 = math.exp %124 : vector<2x1xf32>
      %126 = arith.subf %116, %119 : vector<2x1xf32>
      %127 = math.exp %126 : vector<2x1xf32>
      %128 = arith.addf %121, %123 : vector<2x1xf32>
      %129 = arith.addf %128, %125 : vector<2x1xf32>
      %130 = arith.addf %129, %127 : vector<2x1xf32>
      %131 = arith.divf %121, %130 : vector<2x1xf32>
      %132 = arith.divf %123, %130 : vector<2x1xf32>
      %133 = arith.divf %125, %130 : vector<2x1xf32>
      %134 = arith.divf %127, %130 : vector<2x1xf32>
      %135 = tpu.concatenate %131, %132, %133, %134 in 1 : vector<2x1xf32>, vector<2x1xf32>, vector<2x1xf32>, vector<2x1xf32> -> vector<2x4xf32>
      %c0_80 = arith.constant 0 : index
      %c0_81 = arith.constant 0 : index
      %136 = vector.load %arg15[%c0_80, %c0_81] : memref<2x4xf32, #tpu.memory_space<vmem>>, vector<2x4xf32>
      tpu.vector_store %arg15[%c0_80, %c0_81], %135 {strides = array<i32>} : memref<2x4xf32, #tpu.memory_space<vmem>>, vector<2x4xf32>,
      %137 = vector.shape_cast %131 : vector<2x1xf32> to vector<2x1x1xf32>
      %c1_82 = arith.constant 1 : index
      %c0_83 = arith.constant 0 : index
      %c0_84 = arith.constant 0 : index
      %c0_85 = arith.constant 0 : index
      %138 = vector.load %arg16[%c1_82, %c0_83, %c0_84, %c0_85] : memref<5x2x64x512xbf16, #tpu.memory_space<vmem>>, vector<1x2x64x512xbf16>
      %139 = vector.shape_cast %138 : vector<1x2x64x512xbf16> to vector<2x64x512xbf16>
      %140 = arith.extf %139 : vector<2x64x512xbf16> to vector<2x64x512xf32>
      %141 = vector.broadcast %137 : vector<2x1x1xf32> to vector<2x64x512xf32>
      %142 = arith.mulf %141, %140 : vector<2x64x512xf32>
      %143 = vector.shape_cast %132 : vector<2x1xf32> to vector<2x1x1xf32>
      %c2_86 = arith.constant 2 : index
      %c0_87 = arith.constant 0 : index
      %c0_88 = arith.constant 0 : index
      %c0_89 = arith.constant 0 : index
      %144 = vector.load %arg16[%c2_86, %c0_87, %c0_88, %c0_89] : memref<5x2x64x512xbf16, #tpu.memory_space<vmem>>, vector<1x2x64x512xbf16>
      %145 = vector.shape_cast %144 : vector<1x2x64x512xbf16> to vector<2x64x512xbf16>
      %146 = arith.extf %145 : vector<2x64x512xbf16> to vector<2x64x512xf32>
      %147 = vector.broadcast %143 : vector<2x1x1xf32> to vector<2x64x512xf32>
      %148 = arith.mulf %147, %146 : vector<2x64x512xf32>
      %149 = arith.addf %142, %148 : vector<2x64x512xf32>
      %150 = vector.shape_cast %133 : vector<2x1xf32> to vector<2x1x1xf32>
      %c3_90 = arith.constant 3 : index
      %c0_91 = arith.constant 0 : index
      %c0_92 = arith.constant 0 : index
      %c0_93 = arith.constant 0 : index
      %151 = vector.load %arg16[%c3_90, %c0_91, %c0_92, %c0_93] : memref<5x2x64x512xbf16, #tpu.memory_space<vmem>>, vector<1x2x64x512xbf16>
      %152 = vector.shape_cast %151 : vector<1x2x64x512xbf16> to vector<2x64x512xbf16>
      %153 = arith.extf %152 : vector<2x64x512xbf16> to vector<2x64x512xf32>
      %154 = vector.broadcast %150 : vector<2x1x1xf32> to vector<2x64x512xf32>
      %155 = arith.mulf %154, %153 : vector<2x64x512xf32>
      %156 = arith.addf %149, %155 : vector<2x64x512xf32>
      %157 = vector.shape_cast %134 : vector<2x1xf32> to vector<2x1x1xf32>
      %c4_94 = arith.constant 4 : index
      %c0_95 = arith.constant 0 : index
      %c0_96 = arith.constant 0 : index
      %c0_97 = arith.constant 0 : index
      %158 = vector.load %arg16[%c4_94, %c0_95, %c0_96, %c0_97] : memref<5x2x64x512xbf16, #tpu.memory_space<vmem>>, vector<1x2x64x512xbf16>
      %159 = vector.shape_cast %158 : vector<1x2x64x512xbf16> to vector<2x64x512xbf16>
      %160 = arith.extf %159 : vector<2x64x512xbf16> to vector<2x64x512xf32>
      %161 = vector.broadcast %157 : vector<2x1x1xf32> to vector<2x64x512xf32>
      %162 = arith.mulf %161, %160 : vector<2x64x512xf32>
      %163 = arith.addf %156, %162 : vector<2x64x512xf32>
      %c0_98 = arith.constant 0 : index
      %c0_99 = arith.constant 0 : index
      %c0_100 = arith.constant 0 : index
      %c0_101 = arith.constant 0 : index
      %164 = vector.load %arg16[%c0_98, %c0_99, %c0_100, %c0_101] : memref<5x2x64x512xbf16, #tpu.memory_space<vmem>>, vector<1x2x64x512xbf16>
      %165 = vector.shape_cast %164 : vector<1x2x64x512xbf16> to vector<2x64x512xbf16>
      %166 = vector.shape_cast %165 : vector<2x64x512xbf16> to vector<128x512xbf16>
      %167 = vector.shape_cast %163 : vector<2x64x512xf32> to vector<128x512xf32>
      %168 = arith.truncf %167 : vector<128x512xf32> to vector<128x512xbf16>
      %c0_102 = arith.constant 0 : index
      %c0_103 = arith.constant 0 : index
      %169 = vector.load %arg12[%c0_102, %c0_103] : memref<1024x128xbf16, #tpu.memory_space<vmem>>, vector<512x128xbf16>
      %cst_104 = arith.constant dense<0.000000e+00> : vector<128x128xf32>
      %170 = tpu.matmul %166, %169, %cst_104 {dimension_numbers = #tpu.dot_dimension_numbers<[1], [0], [0], [1], [0, 0, 1, 1], [], []>} : vector<128x512xbf16>, vector<512x128xbf16>, vector<128x128xf32> -> vector<128x128xf32>
      %c512_105 = arith.constant 512 : index
      %c0_106 = arith.constant 0 : index
      %171 = vector.load %arg12[%c512_105, %c0_106] : memref<1024x128xbf16, #tpu.memory_space<vmem>>, vector<512x128xbf16>
      %cst_107 = arith.constant dense<0.000000e+00> : vector<128x128xf32>
      %172 = tpu.matmul %168, %171, %cst_107 {dimension_numbers = #tpu.dot_dimension_numbers<[1], [0], [0], [1], [0, 0, 1, 1], [], []>} : vector<128x512xbf16>, vector<512x128xbf16>, vector<128x128xf32> -> vector<128x128xf32>
      %173 = arith.addf %170, %172 : vector<128x128xf32>
      %c0_108 = arith.constant 0 : index
      %c0_109 = arith.constant 0 : index
      %174 = vector.load %arg13[%c0_108, %c0_109] : memref<1x128xf32, #tpu.memory_space<vmem>>, vector<1x128xf32>
      %175 = vector.broadcast %174 : vector<1x128xf32> to vector<128x128xf32>
      %176 = arith.addf %173, %175 : vector<128x128xf32>
      %c0_110 = arith.constant 0 : index
      %c0_111 = arith.constant 0 : index
      %177 = vector.load %arg14[%c0_110, %c0_111] : memref<128x128xf32, #tpu.memory_space<vmem>>, vector<128x128xf32>
      tpu.vector_store %arg14[%c0_110, %c0_111], %176 {strides = array<i32>} : memref<128x128xf32, #tpu.memory_space<vmem>>, vector<128x128xf32>,
    } else {
    }
    return
  }
  func.func @transform_0(%arg0: i32) -> (i32, i32, i32, i32) {
    %c0_i32 = arith.constant 0 : i32
    %c0_i32_0 = arith.constant 0 : i32
    %c0_i32_1 = arith.constant 0 : i32
    %c0_i32_2 = arith.constant 0 : i32
    return %arg0, %c0_i32, %c0_i32_0, %c0_i32_1 : i32, i32, i32, i32
  }
  func.func @transform_1(%arg0: i32) -> (i32, i32, i32) {
    %c0_i32 = arith.constant 0 : i32
    %c0_i32_0 = arith.constant 0 : i32
    %c0_i32_1 = arith.constant 0 : i32
    return %arg0, %c0_i32, %c0_i32_0 : i32, i32, i32
  }
  func.func @transform_2(%arg0: i32) -> (i32, i32, i32) {
    %c0_i32 = arith.constant 0 : i32
    %c0_i32_0 = arith.constant 0 : i32
    %c0_i32_1 = arith.constant 0 : i32
    return %arg0, %c0_i32, %c0_i32_0 : i32, i32, i32
  }
  func.func @transform_3(%arg0: i32) -> (i32, i32) {
    %c0_i32 = arith.constant 0 : i32
    %c0_i32_0 = arith.constant 0 : i32
    %c0_i32_1 = arith.constant 0 : i32
    return %c0_i32, %c0_i32_0 : i32, i32
  }
  func.func @transform_4(%arg0: i32) -> (i32, i32) {
    %c0_i32 = arith.constant 0 : i32
    %c0_i32_0 = arith.constant 0 : i32
    %c0_i32_1 = arith.constant 0 : i32
    return %c0_i32, %c0_i32_0 : i32, i32
  }
  func.func @transform_5(%arg0: i32) -> (i32, i32) {
    %c0_i32 = arith.constant 0 : i32
    %c0_i32_0 = arith.constant 0 : i32
    %c0_i32_1 = arith.constant 0 : i32
    return %c0_i32, %c0_i32_0 : i32, i32
  }
  func.func @transform_6(%arg0: i32) -> (i32, i32) {
    %c0_i32 = arith.constant 0 : i32
    %c0_i32_0 = arith.constant 0 : i32
    %c0_i32_1 = arith.constant 0 : i32
    return %c0_i32, %c0_i32_0 : i32, i32
  }
  func.func @transform_7(%arg0: i32) -> (i32, i32) {
    %c0_i32 = arith.constant 0 : i32
    %c0_i32_0 = arith.constant 0 : i32
    %c0_i32_1 = arith.constant 0 : i32
    return %c0_i32, %c0_i32_0 : i32, i32
  }
  func.func @transform_8(%arg0: i32) -> (i32, i32) {
    %c0_i32 = arith.constant 0 : i32
    %c0_i32_0 = arith.constant 0 : i32
    %c0_i32_1 = arith.constant 0 : i32
    return %c0_i32, %c0_i32_0 : i32, i32
  }
  func.func @transform_9(%arg0: i32) -> (i32, i32) {
    %c0_i32 = arith.constant 0 : i32
    %c0_i32_0 = arith.constant 0 : i32
    %c0_i32_1 = arith.constant 0 : i32
    return %c0_i32, %c0_i32_0 : i32, i32
  }
  func.func @transform_10(%arg0: i32) -> (i32, i32) {
    %c0_i32 = arith.constant 0 : i32
    %c0_i32_0 = arith.constant 0 : i32
    %c0_i32_1 = arith.constant 0 : i32
    return %c0_i32, %c0_i32_0 : i32, i32
  }
  func.func @transform_11(%arg0: i32) -> (i32, i32) {
    %c0_i32 = arith.constant 0 : i32
    %c0_i32_0 = arith.constant 0 : i32
    %c0_i32_1 = arith.constant 0 : i32
    return %c0_i32, %c0_i32_0 : i32, i32
  }
  func.func @transform_12(%arg0: i32) -> (i32, i32) {
    %c0_i32 = arith.constant 0 : i32
    %c0_i32_0 = arith.constant 0 : i32
    %c0_i32_1 = arith.constant 0 : i32
    return %c0_i32, %c0_i32_0 : i32, i32
  }
  func.func @transform_13(%arg0: i32) -> (i32, i32) {
    %c0_i32 = arith.constant 0 : i32
    %c0_i32_0 = arith.constant 0 : i32
    %c0_i32_1 = arith.constant 0 : i32
    return %c0_i32, %c0_i32_0 : i32, i32
  }
  func.func @transform_14(%arg0: i32) -> (i32, i32) {
    %c0_i32 = arith.constant 0 : i32
    %c0_i32_0 = arith.constant 0 : i32
    %c0_i32_1 = arith.constant 0 : i32
    return %c0_i32, %c0_i32_0 : i32, i32
  }
}

</mosaic_0001>

<llo_original>
// kernel: learn_who2com_forward.1
$region0: #{learn_who2com_forward.1}
  #allocation0 [shape = 'u32[]', space=smem, size = 0x4, offset = 0x4, fixed_abs, tag = 'smem constant byte address 0x4 - core index']
  #allocation1 [shape = 'u32[144,128]{1,0:T(1,128)}', space=vmem, size = 0x12000, scoped, tag = 'internal scratch']
  #allocation2 [shape = 'bf16[5,2,64,512]{3,2,1,0:T(16,128)(2,1)}', space=vmem, size = 0xa0000, scoped, tag = 'scratch operand']
  #allocation3 [shape = 'f32[5,2,256]{2,1,0:T(2,128)}', space=vmem, size = 0x2800, scoped, tag = 'scratch operand']
  %s0 = inlined_call_operand.vmem [shape: bf16[5,2,64,768], index: 0, kind: input, shape index: {}]
  %s1 = inlined_call_operand.vmem [shape: bf16[5,768,512], index: 1, kind: input, shape index: {}]
  %s2 = inlined_call_operand.vmem [shape: f32[5,1,512], index: 2, kind: input, shape index: {}]
  %s3 = inlined_call_operand.vmem [shape: bf16[768,256], index: 3, kind: input, shape index: {}]
  %s4 = inlined_call_operand.vmem [shape: f32[1,256], index: 4, kind: input, shape index: {}]
  %s5 = inlined_call_operand.vmem [shape: bf16[640,256], index: 5, kind: input, shape index: {}]
  %s6 = inlined_call_operand.vmem [shape: f32[3,256], index: 6, kind: input, shape index: {}]
  %s7 = inlined_call_operand.vmem [shape: bf16[640,256], index: 7, kind: input, shape index: {}]
  %s8 = inlined_call_operand.vmem [shape: f32[3,256], index: 8, kind: input, shape index: {}]
  %s9 = inlined_call_operand.vmem [shape: bf16[256,128], index: 9, kind: input, shape index: {}]
  %s10 = inlined_call_operand.vmem [shape: f32[4,128], index: 10, kind: input, shape index: {}]
  %s11 = inlined_call_operand.vmem [shape: bf16[1024,128], index: 11, kind: input, shape index: {}]
  %s12 = inlined_call_operand.vmem [shape: f32[1,128], index: 12, kind: input, shape index: {}]
  %s13 = inlined_call_operand.vmem [shape: f32[128,128], index: 13, kind: output, shape index: {0}]
  %s14 = inlined_call_operand.vmem [shape: f32[2,4], index: 14, kind: output, shape index: {1}]
  %15 = xla_tuple %s13, %s14
  %s16 = sld [smem:[#allocation0]]
  $region97: #{learn_who2com_forward.1} parent=0
    _
  %s18 = ssub.s32 1, %s16
  %s19 = scalar_select 0, %s18, %s16
  loop: start=0, step=1, limit=7
  $region2: #{learn_who2com_forward.1} parent=0 // loop_pre_header
    _
  $region3: #{learn_who2com_forward.1} parent=0 // loop_header
    %s21 = sphi 0, %s25
    %p22 = scmp.ge.s32.totalorder %s21, 7
    %s31 = sphi 0, %s33
    %s34 = sphi 0, %s31
    %s35 = sphi 0, %s34
    %s51 = sphi 0, %s35
    %s57 = sphi 0, %s59
    %s60 = sphi 0, %s57
    %s61 = sphi 0, %s60
    %s77 = sphi 0, %s61
    %s83 = sphi 0, %s85
    %s86 = sphi 0, %s83
    %s87 = sphi 0, %s86
    %s103 = sphi 0, %s87
    %s107 = sphi 0, %s107
    %s109 = sphi 0, %s107
    %s110 = sphi 0, %s109
    %s124 = sphi 0, %s110
    %s128 = sphi 0, %s128
    %s130 = sphi 0, %s128
    %s131 = sphi 0, %s130
    %s145 = sphi 0, %s131
    %s149 = sphi 0, %s149
    %s151 = sphi 0, %s149
    %s152 = sphi 0, %s151
    %s166 = sphi 0, %s152
    %s170 = sphi 0, %s170
    %s172 = sphi 0, %s170
    %s173 = sphi 0, %s172
    %s187 = sphi 0, %s173
    %s191 = sphi 0, %s191
    %s193 = sphi 0, %s191
    %s194 = sphi 0, %s193
    %s208 = sphi 0, %s194
    %s212 = sphi 0, %s212
    %s214 = sphi 0, %s212
    %s215 = sphi 0, %s214
    %s229 = sphi 0, %s215
    %s233 = sphi 0, %s233
    %s235 = sphi 0, %s233
    %s236 = sphi 0, %s235
    %s250 = sphi 0, %s236
    %s254 = sphi 0, %s254
    %s256 = sphi 0, %s254
    %s257 = sphi 0, %s256
    %s271 = sphi 0, %s257
    %s275 = sphi 0, %s275
    %s277 = sphi 0, %s275
    %s278 = sphi 0, %s277
    %s292 = sphi 0, %s278
    %s296 = sphi 0, %s296
    %s298 = sphi 0, %s296
    %s299 = sphi 0, %s298
    %s313 = sphi 0, %s299
    %s317 = sphi 0, %s317
    %s319 = sphi 0, %s317
    %s320 = sphi 0, %s319
    %s334 = sphi 0, %s320
    %s338 = sphi 0, %s338
    %s340 = sphi 0, %s338
    %s341 = sphi 0, %s340
    %s355 = sphi 0, %s341
  $region4: #{learn_who2com_forward.1} parent=0 // loop_header_branch
    %24 = sbr.rel (%p22) target = $region8
  $region5: #{learn_who2com_forward.1} parent=0 // loop_body
    %s26 = ssub.s32 %s21, 1
    %s27 = ssub.s32 %s21, 2
    %s28 = sadd.s32 %s21, 1
    %s29 = ssub.s32 %s21, %s28
    %p30 = scmp.eq.s32.totalorder %s29, 0
    %s32 = sadd.s32 %s31, 1
    %s33 = scalar_select %p30, %s31, %s32
    %p36 = pneg %p30
    %p37 = scmp.eq.s32.totalorder %s21, 4
    %p38 = por %p36, %p37
    %p39 = scmp.ne.s32.totalorder %s31, %s34
    %p40 = scmp.eq.s32.totalorder %s21, 0
    %p41 = por %p39, %p40
    %p42 = scmp.ne.s32.totalorder %s31, %s34
    %p43 = scmp.eq.s32.totalorder %s26, 4
    %p44 = por %p42, %p43
    %p45 = scmp.ne.s32.totalorder %s34, %s35
    %p46 = scmp.eq.s32.totalorder %s26, 0
    %p47 = por %p45, %p46
    %p48 = scmp.ne.s32.totalorder %s34, %s35
    %p49 = scmp.eq.s32.totalorder %s27, 4
    %p50 = por %p48, %p49
    %p52 = scmp.ne.s32.totalorder %s35, %s51
    %p53 = scmp.eq.s32.totalorder %s27, 0
    %p54 = por %p52, %p53
    %s55 = ssub.s32 %s21, %s28
    %p56 = scmp.eq.s32.totalorder %s55, 0
    %s58 = sadd.s32 %s57, 1
    %s59 = scalar_select %p56, %s57, %s58
    %p62 = pneg %p56
    %p63 = scmp.eq.s32.totalorder %s21, 4
    %p64 = por %p62, %p63
    %p65 = scmp.ne.s32.totalorder %s57, %s60
    %p66 = scmp.eq.s32.totalorder %s21, 0
    %p67 = por %p65, %p66
    %p68 = scmp.ne.s32.totalorder %s57, %s60
    %p69 = scmp.eq.s32.totalorder %s26, 4
    %p70 = por %p68, %p69
    %p71 = scmp.ne.s32.totalorder %s60, %s61
    %p72 = scmp.eq.s32.totalorder %s26, 0
    %p73 = por %p71, %p72
    %p74 = scmp.ne.s32.totalorder %s60, %s61
    %p75 = scmp.eq.s32.totalorder %s27, 4
    %p76 = por %p74, %p75
    %p78 = scmp.ne.s32.totalorder %s61, %s77
    %p79 = scmp.eq.s32.totalorder %s27, 0
    %p80 = por %p78, %p79
    %s81 = ssub.s32 %s21, %s28
    %p82 = scmp.eq.s32.totalorder %s81, 0
    %s84 = sadd.s32 %s83, 1
    %s85 = scalar_select %p82, %s83, %s84
    %p88 = pneg %p82
    %p89 = scmp.eq.s32.totalorder %s21, 4
    %p90 = por %p88, %p89
    %p91 = scmp.ne.s32.totalorder %s83, %s86
    %p92 = scmp.eq.s32.totalorder %s21, 0
    %p93 = por %p91, %p92
    %p94 = scmp.ne.s32.totalorder %s83, %s86
    %p95 = scmp.eq.s32.totalorder %s26, 4
    %p96 = por %p94, %p95
    %p97 = scmp.ne.s32.totalorder %s86, %s87
    %p98 = scmp.eq.s32.totalorder %s26, 0
    %p99 = por %p97, %p98
    %p100 = scmp.ne.s32.totalorder %s86, %s87
    %p101 = scmp.eq.s32.totalorder %s27, 4
    %p102 = por %p100, %p101
    %p104 = scmp.ne.s32.totalorder %s87, %s103
    %p105 = scmp.eq.s32.totalorder %s27, 0
    %p106 = por %p104, %p105
    %s108 = sadd.s32 %s107, 1
    %p111 = scmp.eq.s32.totalorder %s21, 4
    %p112 = scmp.ne.s32.totalorder %s107, %s109
    %p113 = scmp.eq.s32.totalorder %s21, 0
    %p114 = por %p112, %p113
    %p115 = scmp.ne.s32.totalorder %s107, %s109
    %p116 = scmp.eq.s32.totalorder %s26, 4
    %p117 = por %p115, %p116
    %p118 = scmp.ne.s32.totalorder %s109, %s110
    %p119 = scmp.eq.s32.totalorder %s26, 0
    %p120 = por %p118, %p119
    %p121 = scmp.ne.s32.totalorder %s109, %s110
    %p122 = scmp.eq.s32.totalorder %s27, 4
    %p123 = por %p121, %p122
    %p125 = scmp.ne.s32.totalorder %s110, %s124
    %p126 = scmp.eq.s32.totalorder %s27, 0
    %p127 = por %p125, %p126
    %s129 = sadd.s32 %s128, 1
    %p132 = scmp.eq.s32.totalorder %s21, 4
    %p133 = scmp.ne.s32.totalorder %s128, %s130
    %p134 = scmp.eq.s32.totalorder %s21, 0
    %p135 = por %p133, %p134
    %p136 = scmp.ne.s32.totalorder %s128, %s130
    %p137 = scmp.eq.s32.totalorder %s26, 4
    %p138 = por %p136, %p137
    %p139 = scmp.ne.s32.totalorder %s130, %s131
    %p140 = scmp.eq.s32.totalorder %s26, 0
    %p141 = por %p139, %p140
    %p142 = scmp.ne.s32.totalorder %s130, %s131
    %p143 = scmp.eq.s32.totalorder %s27, 4
    %p144 = por %p142, %p143
    %p146 = scmp.ne.s32.totalorder %s131, %s145
    %p147 = scmp.eq.s32.totalorder %s27, 0
    %p148 = por %p146, %p147
    %s150 = sadd.s32 %s149, 1
    %p153 = scmp.eq.s32.totalorder %s21, 4
    %p154 = scmp.ne.s32.totalorder %s149, %s151
    %p155 = scmp.eq.s32.totalorder %s21, 0
    %p156 = por %p154, %p155
    %p157 = scmp.ne.s32.totalorder %s149, %s151
    %p158 = scmp.eq.s32.totalorder %s26, 4
    %p159 = por %p157, %p158
    %p160 = scmp.ne.s32.totalorder %s151, %s152
    %p161 = scmp.eq.s32.totalorder %s26, 0
    %p162 = por %p160, %p161
    %p163 = scmp.ne.s32.totalorder %s151, %s152
    %p164 = scmp.eq.s32.totalorder %s27, 4
    %p165 = por %p163, %p164
    %p167 = scmp.ne.s32.totalorder %s152, %s166
    %p168 = scmp.eq.s32.totalorder %s27, 0
    %p169 = por %p167, %p168
    %s171 = sadd.s32 %s170, 1
    %p174 = scmp.eq.s32.totalorder %s21, 4
    %p175 = scmp.ne.s32.totalorder %s170, %s172
    %p176 = scmp.eq.s32.totalorder %s21, 0
    %p177 = por %p175, %p176
    %p178 = scmp.ne.s32.totalorder %s170, %s172
    %p179 = scmp.eq.s32.totalorder %s26, 4
    %p180 = por %p178, %p179
    %p181 = scmp.ne.s32.totalorder %s172, %s173
    %p182 = scmp.eq.s32.totalorder %s26, 0
    %p183 = por %p181, %p182
    %p184 = scmp.ne.s32.totalorder %s172, %s173
    %p185 = scmp.eq.s32.totalorder %s27, 4
    %p186 = por %p184, %p185
    %p188 = scmp.ne.s32.totalorder %s173, %s187
    %p189 = scmp.eq.s32.totalorder %s27, 0
    %p190 = por %p188, %p189
    %s192 = sadd.s32 %s191, 1
    %p195 = scmp.eq.s32.totalorder %s21, 4
    %p196 = scmp.ne.s32.totalorder %s191, %s193
    %p197 = scmp.eq.s32.totalorder %s21, 0
    %p198 = por %p196, %p197
    %p199 = scmp.ne.s32.totalorder %s191, %s193
    %p200 = scmp.eq.s32.totalorder %s26, 4
    %p201 = por %p199, %p200
    %p202 = scmp.ne.s32.totalorder %s193, %s194
    %p203 = scmp.eq.s32.totalorder %s26, 0
    %p204 = por %p202, %p203
    %p205 = scmp.ne.s32.totalorder %s193, %s194
    %p206 = scmp.eq.s32.totalorder %s27, 4
    %p207 = por %p205, %p206
    %p209 = scmp.ne.s32.totalorder %s194, %s208
    %p210 = scmp.eq.s32.totalorder %s27, 0
    %p211 = por %p209, %p210
    %s213 = sadd.s32 %s212, 1
    %p216 = scmp.eq.s32.totalorder %s21, 4
    %p217 = scmp.ne.s32.totalorder %s212, %s214
    %p218 = scmp.eq.s32.totalorder %s21, 0
    %p219 = por %p217, %p218
    %p220 = scmp.ne.s32.totalorder %s212, %s214
    %p221 = scmp.eq.s32.totalorder %s26, 4
    %p222 = por %p220, %p221
    %p223 = scmp.ne.s32.totalorder %s214, %s215
    %p224 = scmp.eq.s32.totalorder %s26, 0
    %p225 = por %p223, %p224
    %p226 = scmp.ne.s32.totalorder %s214, %s215
    %p227 = scmp.eq.s32.totalorder %s27, 4
    %p228 = por %p226, %p227
    %p230 = scmp.ne.s32.totalorder %s215, %s229
    %p231 = scmp.eq.s32.totalorder %s27, 0
    %p232 = por %p230, %p231
    %s234 = sadd.s32 %s233, 1
    %p237 = scmp.eq.s32.totalorder %s21, 4
    %p238 = scmp.ne.s32.totalorder %s233, %s235
    %p239 = scmp.eq.s32.totalorder %s21, 0
    %p240 = por %p238, %p239
    %p241 = scmp.ne.s32.totalorder %s233, %s235
    %p242 = scmp.eq.s32.totalorder %s26, 4
    %p243 = por %p241, %p242
    %p244 = scmp.ne.s32.totalorder %s235, %s236
    %p245 = scmp.eq.s32.totalorder %s26, 0
    %p246 = por %p244, %p245
    %p247 = scmp.ne.s32.totalorder %s235, %s236
    %p248 = scmp.eq.s32.totalorder %s27, 4
    %p249 = por %p247, %p248
    %p251 = scmp.ne.s32.totalorder %s236, %s250
    %p252 = scmp.eq.s32.totalorder %s27, 0
    %p253 = por %p251, %p252
    %s255 = sadd.s32 %s254, 1
    %p258 = scmp.eq.s32.totalorder %s21, 4
    %p259 = scmp.ne.s32.totalorder %s254, %s256
    %p260 = scmp.eq.s32.totalorder %s21, 0
    %p261 = por %p259, %p260
    %p262 = scmp.ne.s32.totalorder %s254, %s256
    %p263 = scmp.eq.s32.totalorder %s26, 4
    %p264 = por %p262, %p263
    %p265 = scmp.ne.s32.totalorder %s256, %s257
    %p266 = scmp.eq.s32.totalorder %s26, 0
    %p267 = por %p265, %p266
    %p268 = scmp.ne.s32.totalorder %s256, %s257
    %p269 = scmp.eq.s32.totalorder %s27, 4
    %p270 = por %p268, %p269
    %p272 = scmp.ne.s32.totalorder %s257, %s271
    %p273 = scmp.eq.s32.totalorder %s27, 0
    %p274 = por %p272, %p273
    %s276 = sadd.s32 %s275, 1
    %p279 = scmp.eq.s32.totalorder %s21, 4
    %p280 = scmp.ne.s32.totalorder %s275, %s277
    %p281 = scmp.eq.s32.totalorder %s21, 0
    %p282 = por %p280, %p281
    %p283 = scmp.ne.s32.totalorder %s275, %s277
    %p284 = scmp.eq.s32.totalorder %s26, 4
    %p285 = por %p283, %p284
    %p286 = scmp.ne.s32.totalorder %s277, %s278
    %p287 = scmp.eq.s32.totalorder %s26, 0
    %p288 = por %p286, %p287
    %p289 = scmp.ne.s32.totalorder %s277, %s278
    %p290 = scmp.eq.s32.totalorder %s27, 4
    %p291 = por %p289, %p290
    %p293 = scmp.ne.s32.totalorder %s278, %s292
    %p294 = scmp.eq.s32.totalorder %s27, 0
    %p295 = por %p293, %p294
    %s297 = sadd.s32 %s296, 1
    %p300 = scmp.eq.s32.totalorder %s21, 4
    %p301 = scmp.ne.s32.totalorder %s296, %s298
    %p302 = scmp.eq.s32.totalorder %s21, 0
    %p303 = por %p301, %p302
    %p304 = scmp.ne.s32.totalorder %s296, %s298
    %p305 = scmp.eq.s32.totalorder %s26, 4
    %p306 = por %p304, %p305
    %p307 = scmp.ne.s32.totalorder %s298, %s299
    %p308 = scmp.eq.s32.totalorder %s26, 0
    %p309 = por %p307, %p308
    %p310 = scmp.ne.s32.totalorder %s298, %s299
    %p311 = scmp.eq.s32.totalorder %s27, 4
    %p312 = por %p310, %p311
    %p314 = scmp.ne.s32.totalorder %s299, %s313
    %p315 = scmp.eq.s32.totalorder %s27, 0
    %p316 = por %p314, %p315
    %s318 = sadd.s32 %s317, 1
    %p321 = scmp.eq.s32.totalorder %s21, 4
    %p322 = scmp.ne.s32.totalorder %s317, %s319
    %p323 = scmp.eq.s32.totalorder %s21, 0
    %p324 = por %p322, %p323
    %p325 = scmp.ne.s32.totalorder %s317, %s319
    %p326 = scmp.eq.s32.totalorder %s26, 4
    %p327 = por %p325, %p326
    %p328 = scmp.ne.s32.totalorder %s319, %s320
    %p329 = scmp.eq.s32.totalorder %s26, 0
    %p330 = por %p328, %p329
    %p331 = scmp.ne.s32.totalorder %s319, %s320
    %p332 = scmp.eq.s32.totalorder %s27, 4
    %p333 = por %p331, %p332
    %p335 = scmp.ne.s32.totalorder %s320, %s334
    %p336 = scmp.eq.s32.totalorder %s27, 0
    %p337 = por %p335, %p336
    %s339 = sadd.s32 %s338, 1
    %p342 = scmp.eq.s32.totalorder %s21, 4
    %p343 = scmp.ne.s32.totalorder %s338, %s340
    %p344 = scmp.eq.s32.totalorder %s21, 0
    %p345 = por %p343, %p344
    %p346 = scmp.ne.s32.totalorder %s338, %s340
    %p347 = scmp.eq.s32.totalorder %s26, 4
    %p348 = por %p346, %p347
    %p349 = scmp.ne.s32.totalorder %s340, %s341
    %p350 = scmp.eq.s32.totalorder %s26, 0
    %p351 = por %p349, %p350
    %p352 = scmp.ne.s32.totalorder %s340, %s341
    %p353 = scmp.eq.s32.totalorder %s27, 4
    %p354 = por %p352, %p353
    %p356 = scmp.ne.s32.totalorder %s341, %s355
    %p357 = scmp.eq.s32.totalorder %s27, 0
    %p358 = por %p356, %p357
    %p359 = scmp.le.s32.totalorder 1, %s21
    %p360 = scmp.lt.s32.totalorder %s21, 6
    %p361 = pnand %p359, %p360
    %p362 = pneg %p361
    // Predicated region
    $region9: #{learn_who2com_forward.1} parent=5 // pred_check
      _
    $region10: #{learn_who2com_forward.1} parent=5 // pred_check_branch
      %364 = sbr.rel (%p361) target = $region12
    $region11: #{learn_who2com_forward.1} parent=5 // pred_region
      %s365 = ssub.s32 %s21, 1
      // Predicated region
      $region13: #{learn_who2com_forward.1} parent=11 // pred_check
        %p366 = pneg %p120
      $region14: #{learn_who2com_forward.1} parent=11 // pred_check_branch
        %368 = sbr.rel (%p366) target = $region16
      $region15: #{learn_who2com_forward.1} parent=11 // pred_region
        _
      $region16: #{learn_who2com_forward.1} parent=11 // pred_fallthru
        _
      // Predicated region
      $region17: #{learn_who2com_forward.1} parent=11 // pred_check
        %p369 = pneg %p141
      $region18: #{learn_who2com_forward.1} parent=11 // pred_check_branch
        %371 = sbr.rel (%p369) target = $region20
      $region19: #{learn_who2com_forward.1} parent=11 // pred_region
        _
      $region20: #{learn_who2com_forward.1} parent=11 // pred_fallthru
        _
      // Predicated region
      $region21: #{learn_who2com_forward.1} parent=11 // pred_check
        %p372 = pneg %p162
      $region22: #{learn_who2com_forward.1} parent=11 // pred_check_branch
        %374 = sbr.rel (%p372) target = $region24
      $region23: #{learn_who2com_forward.1} parent=11 // pred_region
        _
      $region24: #{learn_who2com_forward.1} parent=11 // pred_fallthru
        _
      // Predicated region
      $region25: #{learn_who2com_forward.1} parent=11 // pred_check
        %p375 = pneg %p183
      $region26: #{learn_who2com_forward.1} parent=11 // pred_check_branch
        %377 = sbr.rel (%p375) target = $region28
      $region27: #{learn_who2com_forward.1} parent=11 // pred_region
        _
      $region28: #{learn_who2com_forward.1} parent=11 // pred_fallthru
        _
      // Predicated region
      $region29: #{learn_who2com_forward.1} parent=11 // pred_check
        %p378 = pneg %p204
      $region30: #{learn_who2com_forward.1} parent=11 // pred_check_branch
        %380 = sbr.rel (%p378) target = $region32
      $region31: #{learn_who2com_forward.1} parent=11 // pred_region
        _
      $region32: #{learn_who2com_forward.1} parent=11 // pred_fallthru
        _
      // Predicated region
      $region33: #{learn_who2com_forward.1} parent=11 // pred_check
        %p381 = pneg %p225
      $region34: #{learn_who2com_forward.1} parent=11 // pred_check_branch
        %383 = sbr.rel (%p381) target = $region36
      $region35: #{learn_who2com_forward.1} parent=11 // pred_region
        _
      $region36: #{learn_who2com_forward.1} parent=11 // pred_fallthru
        _
      // Predicated region
      $region37: #{learn_who2com_forward.1} parent=11 // pred_check
        %p384 = pneg %p246
      $region38: #{learn_who2com_forward.1} parent=11 // pred_check_branch
        %386 = sbr.rel (%p384) target = $region40
      $region39: #{learn_who2com_forward.1} parent=11 // pred_region
        _
      $region40: #{learn_who2com_forward.1} parent=11 // pred_fallthru
        _
      // Predicated region
      $region41: #{learn_who2com_forward.1} parent=11 // pred_check
        %p387 = pneg %p267
      $region42: #{learn_who2com_forward.1} parent=11 // pred_check_branch
        %389 = sbr.rel (%p387) target = $region44
      $region43: #{learn_who2com_forward.1} parent=11 // pred_region
        _
      $region44: #{learn_who2com_forward.1} parent=11 // pred_fallthru
        _
      // Predicated region
      $region45: #{learn_who2com_forward.1} parent=11 // pred_check
        %p390 = pneg %p288
      $region46: #{learn_who2com_forward.1} parent=11 // pred_check_branch
        %392 = sbr.rel (%p390) target = $region48
      $region47: #{learn_who2com_forward.1} parent=11 // pred_region
        _
      $region48: #{learn_who2com_forward.1} parent=11 // pred_fallthru
        _
      // Predicated region
      $region49: #{learn_who2com_forward.1} parent=11 // pred_check
        %p393 = pneg %p309
      $region50: #{learn_who2com_forward.1} parent=11 // pred_check_branch
        %395 = sbr.rel (%p393) target = $region52
      $region51: #{learn_who2com_forward.1} parent=11 // pred_region
        _
      $region52: #{learn_who2com_forward.1} parent=11 // pred_fallthru
        _
    $region12: #{learn_who2com_forward.1} parent=5 // pred_fallthru
      _
    %p396 = scmp.lt.s32.totalorder %s21, 5
    // Predicated region
    $region53: #{learn_who2com_forward.1} parent=5 // pred_check
      %p397 = pneg %p396
    $region54: #{learn_who2com_forward.1} parent=5 // pred_check_branch
      %399 = sbr.rel (%p397) target = $region56
    $region55: #{learn_who2com_forward.1} parent=5 // pred_region
      // Predicated region
      $region57: #{learn_who2com_forward.1} parent=55 // pred_check
        %p400 = pneg %p41
      $region58: #{learn_who2com_forward.1} parent=55 // pred_check_branch
        %402 = sbr.rel (%p400) target = $region60
      $region59: #{learn_who2com_forward.1} parent=55 // pred_region
        %p403 = scmp.lt.s32.totalorder %s21, 4
        %s404 = scalar_select %p403, %s21, 4
        %s405 = smul.addr %s404, 96
        %s406 = smul.addr %s405, 4
        %s407 = scalar_lea.vmem %s0, %s406
      $region60: #{learn_who2com_forward.1} parent=55 // pred_fallthru
        _
      // Predicated region
      $region61: #{learn_who2com_forward.1} parent=55 // pred_check
        %p408 = pneg %p67
      $region62: #{learn_who2com_forward.1} parent=55 // pred_check_branch
        %410 = sbr.rel (%p408) target = $region64
      $region63: #{learn_who2com_forward.1} parent=55 // pred_region
        %p411 = scmp.lt.s32.totalorder %s21, 4
        %s412 = scalar_select %p411, %s21, 4
        %s413 = smul.addr %s412, 384
        %s414 = smul.addr %s413, 4
        %s415 = scalar_lea.vmem %s1, %s414
      $region64: #{learn_who2com_forward.1} parent=55 // pred_fallthru
        _
      // Predicated region
      $region65: #{learn_who2com_forward.1} parent=55 // pred_check
        %p416 = pneg %p93
      $region66: #{learn_who2com_forward.1} parent=55 // pred_check_branch
        %418 = sbr.rel (%p416) target = $region68
      $region67: #{learn_who2com_forward.1} parent=55 // pred_region
        %p419 = scmp.lt.s32.totalorder %s21, 4
        %s420 = scalar_select %p419, %s21, 4
        %s421 = smul.addr %s420, 4
        %s422 = scalar_lea.vmem %s2, %s421
      $region68: #{learn_who2com_forward.1} parent=55 // pred_fallthru
        _
    $region56: #{learn_who2com_forward.1} parent=5 // pred_fallthru
      _
    %p423 = scmp.le.s32.totalorder 1, %s21
    %p424 = scmp.lt.s32.totalorder %s21, 6
    %p425 = pnand %p423, %p424
    %p426 = pneg %p425
    // Predicated region
    $region69: #{learn_who2com_forward.1} parent=5 // pred_check
      _
    $region70: #{learn_who2com_forward.1} parent=5 // pred_check_branch
      %428 = sbr.rel (%p425) target = $region72
    $region71: #{learn_who2com_forward.1} parent=5 // pred_region
      %s429 = ssub.s32 %s21, 1
      %p430 = scmp.lt.s32.totalorder %s26, 4
      %s431 = scalar_select %p430, %s26, 4
      %s432 = smul.addr %s431, 96
      %s433 = smul.addr %s432, 4
      %s434 = scalar_lea.vmem %s0, %s433
      %p435 = pneg %p47
      %p436 = pneg %p44
      %p437 = scmp.lt.s32.totalorder %s26, 4
      %s438 = scalar_select %p437, %s26, 4
      %s439 = smul.addr %s438, 384
      %s440 = smul.addr %s439, 4
      %s441 = scalar_lea.vmem %s1, %s440
      %p442 = pneg %p73
      %p443 = pneg %p70
      %p444 = scmp.lt.s32.totalorder %s26, 4
      %s445 = scalar_select %p444, %s26, 4
      %s446 = smul.addr %s445, 4
      %s447 = scalar_lea.vmem %s2, %s446
      %p448 = pneg %p99
      %p449 = pneg %p96
      %p450 = pneg %p120
      %p451 = pneg %p117
      %p452 = pneg %p141
      %p453 = pneg %p138
      %p454 = pneg %p162
      %p455 = pneg %p159
      %p456 = pneg %p183
      %p457 = pneg %p180
      %p458 = pneg %p204
      %p459 = pneg %p201
      %p460 = pneg %p225
      %p461 = pneg %p222
      %p462 = pneg %p246
      %p463 = pneg %p243
      %p464 = pneg %p267
      %p465 = pneg %p264
      %p466 = pneg %p288
      %p467 = pneg %p285
      %p468 = pneg %p309
      %p469 = pneg %p306
      %p470 = pneg %p330
      %p471 = pneg %p327
      %p472 = pneg %p351
      %p473 = pneg %p348
      %p474 = scmp.lt.s32.totalorder %s26, 4
      %s475 = scalar_select %p474, %s26, 4
      %s476 = smul.addr %s475, 96
      %s477 = smul.addr %s476, 4
      %s478 = scalar_lea.vmem %s0, %s477
      %p479 = scmp.lt.s32.totalorder %s26, 4
      %s480 = scalar_select %p479, %s26, 4
      %s481 = smul.addr %s480, 384
      %s482 = smul.addr %s481, 4
      %s483 = scalar_lea.vmem %s1, %s482
      %p484 = scmp.lt.s32.totalorder %s26, 4
      %s485 = scalar_select %p484, %s26, 4
      %s486 = smul.addr %s485, 4
      %s487 = scalar_lea.vmem %s2, %s486
      %v489 = vld [vmem:[%s478] sm:$0xff]
      %v490 = vld [vmem:[%s478 + $0x8] sm:$0xff]
      %v491 = vld [vmem:[%s478 + $0x10] sm:$0xff]
      %v492 = vld [vmem:[%s478 + $0x18] sm:$0xff]
      %v493 = vld [vmem:[%s478 + $0x20] sm:$0xff]
      %v494 = vld [vmem:[%s478 + $0x28] sm:$0xff]
      %v495 = vld [vmem:[%s478 + $0x30] sm:$0xff]
      %v496 = vld [vmem:[%s478 + $0x38] sm:$0xff]
      %v497 = vld [vmem:[%s478 + $0x40] sm:$0xff]
      %v498 = vld [vmem:[%s478 + $0x48] sm:$0xff]
      %v499 = vld [vmem:[%s478 + $0x50] sm:$0xff]
      %v500 = vld [vmem:[%s478 + $0x58] sm:$0xff]
      %v501 = vld [vmem:[%s478 + $0x60] sm:$0xff]
      %v502 = vld [vmem:[%s478 + $0x68] sm:$0xff]
      %v503 = vld [vmem:[%s478 + $0x70] sm:$0xff]
      %v504 = vld [vmem:[%s478 + $0x78] sm:$0xff]
      %v505 = vld [vmem:[%s478 + $0x80] sm:$0xff]
      %v506 = vld [vmem:[%s478 + $0x88] sm:$0xff]
      %v507 = vld [vmem:[%s478 + $0x90] sm:$0xff]
      %v508 = vld [vmem:[%s478 + $0x98] sm:$0xff]
      %v509 = vld [vmem:[%s478 + $0xa0] sm:$0xff]
      %v510 = vld [vmem:[%s478 + $0xa8] sm:$0xff]
      %v511 = vld [vmem:[%s478 + $0xb0] sm:$0xff]
      %v512 = vld [vmem:[%s478 + $0xb8] sm:$0xff]
      %v513 = vld [vmem:[%s478 + $0xc0] sm:$0xff]
      %v514 = vld [vmem:[%s478 + $0xc8] sm:$0xff]
      %v515 = vld [vmem:[%s478 + $0xd0] sm:$0xff]
      %v516 = vld [vmem:[%s478 + $0xd8] sm:$0xff]
      %v517 = vld [vmem:[%s478 + $0xe0] sm:$0xff]
      %v518 = vld [vmem:[%s478 + $0xe8] sm:$0xff]
      %v519 = vld [vmem:[%s478 + $0xf0] sm:$0xff]
      %v520 = vld [vmem:[%s478 + $0xf8] sm:$0xff]
      %v521 = vld [vmem:[%s478 + $0x100] sm:$0xff]
      %v522 = vld [vmem:[%s478 + $0x108] sm:$0xff]
      %v523 = vld [vmem:[%s478 + $0x110] sm:$0xff]
      %v524 = vld [vmem:[%s478 + $0x118] sm:$0xff]
      %v525 = vld [vmem:[%s478 + $0x120] sm:$0xff]
      %v526 = vld [vmem:[%s478 + $0x128] sm:$0xff]
      %v527 = vld [vmem:[%s478 + $0x130] sm:$0xff]
      %v528 = vld [vmem:[%s478 + $0x138] sm:$0xff]
      %v529 = vld [vmem:[%s478 + $0x140] sm:$0xff]
      %v530 = vld [vmem:[%s478 + $0x148] sm:$0xff]
      %v531 = vld [vmem:[%s478 + $0x150] sm:$0xff]
      %v532 = vld [vmem:[%s478 + $0x158] sm:$0xff]
      %v533 = vld [vmem:[%s478 + $0x160] sm:$0xff]
      %v534 = vld [vmem:[%s478 + $0x168] sm:$0xff]
      %v535 = vld [vmem:[%s478 + $0x170] sm:$0xff]
      %v536 = vld [vmem:[%s478 + $0x178] sm:$0xff]
      %v537 = vld [vmem:[%s483] sm:$0xff]
      %v538 = vld [vmem:[%s483 + $0x8] sm:$0xff]
      %v539 = vld [vmem:[%s483 + $0x10] sm:$0xff]
      %v540 = vld [vmem:[%s483 + $0x18] sm:$0xff]
      %v541 = vld [vmem:[%s483 + $0x20] sm:$0xff]
      %v542 = vld [vmem:[%s483 + $0x28] sm:$0xff]
      %v543 = vld [vmem:[%s483 + $0x30] sm:$0xff]
      %v544 = vld [vmem:[%s483 + $0x38] sm:$0xff]
      %v545 = vld [vmem:[%s483 + $0x40] sm:$0xff]
      %v546 = vld [vmem:[%s483 + $0x48] sm:$0xff]
      %v547 = vld [vmem:[%s483 + $0x50] sm:$0xff]
      %v548 = vld [vmem:[%s483 + $0x58] sm:$0xff]
      %v549 = vld [vmem:[%s483 + $0x60] sm:$0xff]
      %v550 = vld [vmem:[%s483 + $0x68] sm:$0xff]
      %v551 = vld [vmem:[%s483 + $0x70] sm:$0xff]
      %v552 = vld [vmem:[%s483 + $0x78] sm:$0xff]
      %v553 = vld [vmem:[%s483 + $0x80] sm:$0xff]
      %v554 = vld [vmem:[%s483 + $0x88] sm:$0xff]
      %v555 = vld [vmem:[%s483 + $0x90] sm:$0xff]
      %v556 = vld [vmem:[%s483 + $0x98] sm:$0xff]
      %v557 = vld [vmem:[%s483 + $0xa0] sm:$0xff]
      %v558 = vld [vmem:[%s483 + $0xa8] sm:$0xff]
      %v559 = vld [vmem:[%s483 + $0xb0] sm:$0xff]
      %v560 = vld [vmem:[%s483 + $0xb8] sm:$0xff]
      %v561 = vld [vmem:[%s483 + $0xc0] sm:$0xff]
      %v562 = vld [vmem:[%s483 + $0xc8] sm:$0xff]
      %v563 = vld [vmem:[%s483 + $0xd0] sm:$0xff]
      %v564 = vld [vmem:[%s483 + $0xd8] sm:$0xff]
      %v565 = vld [vmem:[%s483 + $0xe0] sm:$0xff]
      %v566 = vld [vmem:[%s483 + $0xe8] sm:$0xff]
      %v567 = vld [vmem:[%s483 + $0xf0] sm:$0xff]
      %v568 = vld [vmem:[%s483 + $0xf8] sm:$0xff]
      %v569 = vld [vmem:[%s483 + $0x100] sm:$0xff]
      %v570 = vld [vmem:[%s483 + $0x108] sm:$0xff]
      %v571 = vld [vmem:[%s483 + $0x110] sm:$0xff]
      %v572 = vld [vmem:[%s483 + $0x118] sm:$0xff]
      %v573 = vld [vmem:[%s483 + $0x120] sm:$0xff]
      %v574 = vld [vmem:[%s483 + $0x128] sm:$0xff]
      %v575 = vld [vmem:[%s483 + $0x130] sm:$0xff]
      %v576 = vld [vmem:[%s483 + $0x138] sm:$0xff]
      %v577 = vld [vmem:[%s483 + $0x140] sm:$0xff]
      %v578 = vld [vmem:[%s483 + $0x148] sm:$0xff]
      %v579 = vld [vmem:[%s483 + $0x150] sm:$0xff]
      %v580 = vld [vmem:[%s483 + $0x158] sm:$0xff]
      %v581 = vld [vmem:[%s483 + $0x160] sm:$0xff]
      %v582 = vld [vmem:[%s483 + $0x168] sm:$0xff]
      %v583 = vld [vmem:[%s483 + $0x170] sm:$0xff]
      %v584 = vld [vmem:[%s483 + $0x178] sm:$0xff]
      %v585 = vld [vmem:[%s483 + $0x180] sm:$0xff]
      %v586 = vld [vmem:[%s483 + $0x188] sm:$0xff]
      %v587 = vld [vmem:[%s483 + $0x190] sm:$0xff]
      %v588 = vld [vmem:[%s483 + $0x198] sm:$0xff]
      %v589 = vld [vmem:[%s483 + $0x1a0] sm:$0xff]
      %v590 = vld [vmem:[%s483 + $0x1a8] sm:$0xff]
      %v591 = vld [vmem:[%s483 + $0x1b0] sm:$0xff]
      %v592 = vld [vmem:[%s483 + $0x1b8] sm:$0xff]
      %v593 = vld [vmem:[%s483 + $0x1c0] sm:$0xff]
      %v594 = vld [vmem:[%s483 + $0x1c8] sm:$0xff]
      %v595 = vld [vmem:[%s483 + $0x1d0] sm:$0xff]
      %v596 = vld [vmem:[%s483 + $0x1d8] sm:$0xff]
      %v597 = vld [vmem:[%s483 + $0x1e0] sm:$0xff]
      %v598 = vld [vmem:[%s483 + $0x1e8] sm:$0xff]
      %v599 = vld [vmem:[%s483 + $0x1f0] sm:$0xff]
      %v600 = vld [vmem:[%s483 + $0x1f8] sm:$0xff]
      %v601 = vld [vmem:[%s483 + $0x200] sm:$0xff]
      %v602 = vld [vmem:[%s483 + $0x208] sm:$0xff]
      %v603 = vld [vmem:[%s483 + $0x210] sm:$0xff]
      %v604 = vld [vmem:[%s483 + $0x218] sm:$0xff]
      %v605 = vld [vmem:[%s483 + $0x220] sm:$0xff]
      %v606 = vld [vmem:[%s483 + $0x228] sm:$0xff]
      %v607 = vld [vmem:[%s483 + $0x230] sm:$0xff]
      %v608 = vld [vmem:[%s483 + $0x238] sm:$0xff]
      %v609 = vld [vmem:[%s483 + $0x240] sm:$0xff]
      %v610 = vld [vmem:[%s483 + $0x248] sm:$0xff]
      %v611 = vld [vmem:[%s483 + $0x250] sm:$0xff]
      %v612 = vld [vmem:[%s483 + $0x258] sm:$0xff]
      %v613 = vld [vmem:[%s483 + $0x260] sm:$0xff]
      %v614 = vld [vmem:[%s483 + $0x268] sm:$0xff]
      %v615 = vld [vmem:[%s483 + $0x270] sm:$0xff]
      %v616 = vld [vmem:[%s483 + $0x278] sm:$0xff]
      %v617 = vld [vmem:[%s483 + $0x280] sm:$0xff]
      %v618 = vld [vmem:[%s483 + $0x288] sm:$0xff]
      %v619 = vld [vmem:[%s483 + $0x290] sm:$0xff]
      %v620 = vld [vmem:[%s483 + $0x298] sm:$0xff]
      %v621 = vld [vmem:[%s483 + $0x2a0] sm:$0xff]
      %v622 = vld [vmem:[%s483 + $0x2a8] sm:$0xff]
      %v623 = vld [vmem:[%s483 + $0x2b0] sm:$0xff]
      %v624 = vld [vmem:[%s483 + $0x2b8] sm:$0xff]
      %v625 = vld [vmem:[%s483 + $0x2c0] sm:$0xff]
      %v626 = vld [vmem:[%s483 + $0x2c8] sm:$0xff]
      %v627 = vld [vmem:[%s483 + $0x2d0] sm:$0xff]
      %v628 = vld [vmem:[%s483 + $0x2d8] sm:$0xff]
      %v629 = vld [vmem:[%s483 + $0x2e0] sm:$0xff]
      %v630 = vld [vmem:[%s483 + $0x2e8] sm:$0xff]
      %v631 = vld [vmem:[%s483 + $0x2f0] sm:$0xff]
      %v632 = vld [vmem:[%s483 + $0x2f8] sm:$0xff]
      %v633 = vld [vmem:[%s483 + $0x300] sm:$0xff]
      %v634 = vld [vmem:[%s483 + $0x308] sm:$0xff]
      %v635 = vld [vmem:[%s483 + $0x310] sm:$0xff]
      %v636 = vld [vmem:[%s483 + $0x318] sm:$0xff]
      %v637 = vld [vmem:[%s483 + $0x320] sm:$0xff]
      %v638 = vld [vmem:[%s483 + $0x328] sm:$0xff]
      %v639 = vld [vmem:[%s483 + $0x330] sm:$0xff]
      %v640 = vld [vmem:[%s483 + $0x338] sm:$0xff]
      %v641 = vld [vmem:[%s483 + $0x340] sm:$0xff]
      %v642 = vld [vmem:[%s483 + $0x348] sm:$0xff]
      %v643 = vld [vmem:[%s483 + $0x350] sm:$0xff]
      %v644 = vld [vmem:[%s483 + $0x358] sm:$0xff]
      %v645 = vld [vmem:[%s483 + $0x360] sm:$0xff]
      %v646 = vld [vmem:[%s483 + $0x368] sm:$0xff]
      %v647 = vld [vmem:[%s483 + $0x370] sm:$0xff]
      %v648 = vld [vmem:[%s483 + $0x378] sm:$0xff]
      %v649 = vld [vmem:[%s483 + $0x380] sm:$0xff]
      %v650 = vld [vmem:[%s483 + $0x388] sm:$0xff]
      %v651 = vld [vmem:[%s483 + $0x390] sm:$0xff]
      %v652 = vld [vmem:[%s483 + $0x398] sm:$0xff]
      %v653 = vld [vmem:[%s483 + $0x3a0] sm:$0xff]
      %v654 = vld [vmem:[%s483 + $0x3a8] sm:$0xff]
      %v655 = vld [vmem:[%s483 + $0x3b0] sm:$0xff]
      %v656 = vld [vmem:[%s483 + $0x3b8] sm:$0xff]
      %v657 = vld [vmem:[%s483 + $0x3c0] sm:$0xff]
      %v658 = vld [vmem:[%s483 + $0x3c8] sm:$0xff]
      %v659 = vld [vmem:[%s483 + $0x3d0] sm:$0xff]
      %v660 = vld [vmem:[%s483 + $0x3d8] sm:$0xff]
      %v661 = vld [vmem:[%s483 + $0x3e0] sm:$0xff]
      %v662 = vld [vmem:[%s483 + $0x3e8] sm:$0xff]
      %v663 = vld [vmem:[%s483 + $0x3f0] sm:$0xff]
      %v664 = vld [vmem:[%s483 + $0x3f8] sm:$0xff]
      %v665 = vld [vmem:[%s483 + $0x400] sm:$0xff]
      %v666 = vld [vmem:[%s483 + $0x408] sm:$0xff]
      %v667 = vld [vmem:[%s483 + $0x410] sm:$0xff]
      %v668 = vld [vmem:[%s483 + $0x418] sm:$0xff]
      %v669 = vld [vmem:[%s483 + $0x420] sm:$0xff]
      %v670 = vld [vmem:[%s483 + $0x428] sm:$0xff]
      %v671 = vld [vmem:[%s483 + $0x430] sm:$0xff]
      %v672 = vld [vmem:[%s483 + $0x438] sm:$0xff]
      %v673 = vld [vmem:[%s483 + $0x440] sm:$0xff]
      %v674 = vld [vmem:[%s483 + $0x448] sm:$0xff]
      %v675 = vld [vmem:[%s483 + $0x450] sm:$0xff]
      %v676 = vld [vmem:[%s483 + $0x458] sm:$0xff]
      %v677 = vld [vmem:[%s483 + $0x460] sm:$0xff]
      %v678 = vld [vmem:[%s483 + $0x468] sm:$0xff]
      %v679 = vld [vmem:[%s483 + $0x470] sm:$0xff]
      %v680 = vld [vmem:[%s483 + $0x478] sm:$0xff]
      %v681 = vld [vmem:[%s483 + $0x480] sm:$0xff]
      %v682 = vld [vmem:[%s483 + $0x488] sm:$0xff]
      %v683 = vld [vmem:[%s483 + $0x490] sm:$0xff]
      %v684 = vld [vmem:[%s483 + $0x498] sm:$0xff]
      %v685 = vld [vmem:[%s483 + $0x4a0] sm:$0xff]
      %v686 = vld [vmem:[%s483 + $0x4a8] sm:$0xff]
      %v687 = vld [vmem:[%s483 + $0x4b0] sm:$0xff]
      %v688 = vld [vmem:[%s483 + $0x4b8] sm:$0xff]
      %v689 = vld [vmem:[%s483 + $0x4c0] sm:$0xff]
      %v690 = vld [vmem:[%s483 + $0x4c8] sm:$0xff]
      %v691 = vld [vmem:[%s483 + $0x4d0] sm:$0xff]
      %v692 = vld [vmem:[%s483 + $0x4d8] sm:$0xff]
      %v693 = vld [vmem:[%s483 + $0x4e0] sm:$0xff]
      %v694 = vld [vmem:[%s483 + $0x4e8] sm:$0xff]
      %v695 = vld [vmem:[%s483 + $0x4f0] sm:$0xff]
      %v696 = vld [vmem:[%s483 + $0x4f8] sm:$0xff]
      %v697 = vld [vmem:[%s483 + $0x500] sm:$0xff]
      %v698 = vld [vmem:[%s483 + $0x508] sm:$0xff]
      %v699 = vld [vmem:[%s483 + $0x510] sm:$0xff]
      %v700 = vld [vmem:[%s483 + $0x518] sm:$0xff]
      %v701 = vld [vmem:[%s483 + $0x520] sm:$0xff]
      %v702 = vld [vmem:[%s483 + $0x528] sm:$0xff]
      %v703 = vld [vmem:[%s483 + $0x530] sm:$0xff]
      %v704 = vld [vmem:[%s483 + $0x538] sm:$0xff]
      %v705 = vld [vmem:[%s483 + $0x540] sm:$0xff]
      %v706 = vld [vmem:[%s483 + $0x548] sm:$0xff]
      %v707 = vld [vmem:[%s483 + $0x550] sm:$0xff]
      %v708 = vld [vmem:[%s483 + $0x558] sm:$0xff]
      %v709 = vld [vmem:[%s483 + $0x560] sm:$0xff]
      %v710 = vld [vmem:[%s483 + $0x568] sm:$0xff]
      %v711 = vld [vmem:[%s483 + $0x570] sm:$0xff]
      %v712 = vld [vmem:[%s483 + $0x578] sm:$0xff]
      %v713 = vld [vmem:[%s483 + $0x580] sm:$0xff]
      %v714 = vld [vmem:[%s483 + $0x588] sm:$0xff]
      %v715 = vld [vmem:[%s483 + $0x590] sm:$0xff]
      %v716 = vld [vmem:[%s483 + $0x598] sm:$0xff]
      %v717 = vld [vmem:[%s483 + $0x5a0] sm:$0xff]
      %v718 = vld [vmem:[%s483 + $0x5a8] sm:$0xff]
      %v719 = vld [vmem:[%s483 + $0x5b0] sm:$0xff]
      %v720 = vld [vmem:[%s483 + $0x5b8] sm:$0xff]
      %v721 = vld [vmem:[%s483 + $0x5c0] sm:$0xff]
      %v722 = vld [vmem:[%s483 + $0x5c8] sm:$0xff]
      %v723 = vld [vmem:[%s483 + $0x5d0] sm:$0xff]
      %v724 = vld [vmem:[%s483 + $0x5d8] sm:$0xff]
      %v725 = vld [vmem:[%s483 + $0x5e0] sm:$0xff]
      %v726 = vld [vmem:[%s483 + $0x5e8] sm:$0xff]
      %v727 = vld [vmem:[%s483 + $0x5f0] sm:$0xff]
      %v728 = vld [vmem:[%s483 + $0x5f8] sm:$0xff]
      %v729 = vld [vmem:[%s487] sm:$0xf]
      %v731 = vlaneseq
      %v732 = vshrl.u32 %v731, 7
      %v733 = vsub.s32 0, %v732
      %v734 = vrot.slane %v729, %v733
      %v735 = vlaneseq
      %v736 = vshrl.u32 %v735, 7
      %v737 = vsub.s32 1, %v736
      %v738 = vrot.slane %v729, %v737
      %v739 = vlaneseq
      %v740 = vshrl.u32 %v739, 7
      %v741 = vsub.s32 2, %v740
      %v742 = vrot.slane %v729, %v741
      %v743 = vlaneseq
      %v744 = vshrl.u32 %v743, 7
      %v745 = vsub.s32 3, %v744
      %v746 = vrot.slane %v729, %v745
      %v799 = vunpack.c.l.b16 %v489
      %v800 = vunpack.c.h.b16 %v489
      %v801 = vunpack.c.l.b16 %v490
      %v802 = vunpack.c.h.b16 %v490
      %v803 = vunpack.c.l.b16 %v491
      %v804 = vunpack.c.h.b16 %v491
      %v805 = vunpack.c.l.b16 %v492
      %v806 = vunpack.c.h.b16 %v492
      %v807 = vunpack.c.l.b16 %v493
      %v808 = vunpack.c.h.b16 %v493
      %v809 = vunpack.c.l.b16 %v494
      %v810 = vunpack.c.h.b16 %v494
      %v811 = vunpack.c.l.b16 %v495
      %v812 = vunpack.c.h.b16 %v495
      %v813 = vunpack.c.l.b16 %v496
      %v814 = vunpack.c.h.b16 %v496
      %v815 = vunpack.c.l.b16 %v497
      %v816 = vunpack.c.h.b16 %v497
      %v817 = vunpack.c.l.b16 %v498
      %v818 = vunpack.c.h.b16 %v498
      %v819 = vunpack.c.l.b16 %v499
      %v820 = vunpack.c.h.b16 %v499
      %v821 = vunpack.c.l.b16 %v500
      %v822 = vunpack.c.h.b16 %v500
      %v823 = vunpack.c.l.b16 %v501
      %v824 = vunpack.c.h.b16 %v501
      %v825 = vunpack.c.l.b16 %v502
      %v826 = vunpack.c.h.b16 %v502
      %v827 = vunpack.c.l.b16 %v503
      %v828 = vunpack.c.h.b16 %v503
      %v829 = vunpack.c.l.b16 %v504
      %v830 = vunpack.c.h.b16 %v504
      %v831 = vunpack.c.l.b16 %v505
      %v832 = vunpack.c.h.b16 %v505
      %v833 = vunpack.c.l.b16 %v506
      %v834 = vunpack.c.h.b16 %v506
      %v835 = vunpack.c.l.b16 %v507
      %v836 = vunpack.c.h.b16 %v507
      %v837 = vunpack.c.l.b16 %v508
      %v838 = vunpack.c.h.b16 %v508
      %v839 = vunpack.c.l.b16 %v509
      %v840 = vunpack.c.h.b16 %v509
      %v841 = vunpack.c.l.b16 %v510
      %v842 = vunpack.c.h.b16 %v510
      %v843 = vunpack.c.l.b16 %v511
      %v844 = vunpack.c.h.b16 %v511
      %v845 = vunpack.c.l.b16 %v512
      %v846 = vunpack.c.h.b16 %v512
      %v847 = vunpack.c.l.b16 %v513
      %v848 = vunpack.c.h.b16 %v513
      %v849 = vunpack.c.l.b16 %v514
      %v850 = vunpack.c.h.b16 %v514
      %v851 = vunpack.c.l.b16 %v515
      %v852 = vunpack.c.h.b16 %v515
      %v853 = vunpack.c.l.b16 %v516
      %v854 = vunpack.c.h.b16 %v516
      %v855 = vunpack.c.l.b16 %v517
      %v856 = vunpack.c.h.b16 %v517
      %v857 = vunpack.c.l.b16 %v518
      %v858 = vunpack.c.h.b16 %v518
      %v859 = vunpack.c.l.b16 %v519
      %v860 = vunpack.c.h.b16 %v519
      %v861 = vunpack.c.l.b16 %v520
      %v862 = vunpack.c.h.b16 %v520
      %v863 = vunpack.c.l.b16 %v521
      %v864 = vunpack.c.h.b16 %v521
      %v865 = vunpack.c.l.b16 %v522
      %v866 = vunpack.c.h.b16 %v522
      %v867 = vunpack.c.l.b16 %v523
      %v868 = vunpack.c.h.b16 %v523
      %v869 = vunpack.c.l.b16 %v524
      %v870 = vunpack.c.h.b16 %v524
      %v871 = vunpack.c.l.b16 %v525
      %v872 = vunpack.c.h.b16 %v525
      %v873 = vunpack.c.l.b16 %v526
      %v874 = vunpack.c.h.b16 %v526
      %v875 = vunpack.c.l.b16 %v527
      %v876 = vunpack.c.h.b16 %v527
      %v877 = vunpack.c.l.b16 %v528
      %v878 = vunpack.c.h.b16 %v528
      %v879 = vunpack.c.l.b16 %v529
      %v880 = vunpack.c.h.b16 %v529
      %v881 = vunpack.c.l.b16 %v530
      %v882 = vunpack.c.h.b16 %v530
      %v883 = vunpack.c.l.b16 %v531
      %v884 = vunpack.c.h.b16 %v531
      %v885 = vunpack.c.l.b16 %v532
      %v886 = vunpack.c.h.b16 %v532
      %v887 = vunpack.c.l.b16 %v533
      %v888 = vunpack.c.h.b16 %v533
      %v889 = vunpack.c.l.b16 %v534
      %v890 = vunpack.c.h.b16 %v534
      %v891 = vunpack.c.l.b16 %v535
      %v892 = vunpack.c.h.b16 %v535
      %v893 = vunpack.c.l.b16 %v536
      %v894 = vunpack.c.h.b16 %v536
      %v895 = vpack.c.b16 %v805, %v799
      %v896 = vpack.c.b16 %v806, %v800
      %v897 = vpack.c.b16 %v807, %v801
      %v898 = vpack.c.b16 %v808, %v802
      %v899 = vpack.c.b16 %v809, %v803
      %v900 = vpack.c.b16 %v810, %v804
      %v901 = vpack.c.b16 %v817, %v811
      %v902 = vpack.c.b16 %v818, %v812
      %v903 = vpack.c.b16 %v819, %v813
      %v904 = vpack.c.b16 %v820, %v814
      %v905 = vpack.c.b16 %v821, %v815
      %v906 = vpack.c.b16 %v822, %v816
      %v907 = vpack.c.b16 %v829, %v823
      %v908 = vpack.c.b16 %v830, %v824
      %v909 = vpack.c.b16 %v831, %v825
      %v910 = vpack.c.b16 %v832, %v826
      %v911 = vpack.c.b16 %v833, %v827
      %v912 = vpack.c.b16 %v834, %v828
      %v913 = vpack.c.b16 %v841, %v835
      %v914 = vpack.c.b16 %v842, %v836
      %v915 = vpack.c.b16 %v843, %v837
      %v916 = vpack.c.b16 %v844, %v838
      %v917 = vpack.c.b16 %v845, %v839
      %v918 = vpack.c.b16 %v846, %v840
      %v919 = vpack.c.b16 %v853, %v847
      %v920 = vpack.c.b16 %v854, %v848
      %v921 = vpack.c.b16 %v855, %v849
      %v922 = vpack.c.b16 %v856, %v850
      %v923 = vpack.c.b16 %v857, %v851
      %v924 = vpack.c.b16 %v858, %v852
      %v925 = vpack.c.b16 %v865, %v859
      %v926 = vpack.c.b16 %v866, %v860
      %v927 = vpack.c.b16 %v867, %v861
      %v928 = vpack.c.b16 %v868, %v862
      %v929 = vpack.c.b16 %v869, %v863
      %v930 = vpack.c.b16 %v870, %v864
      %v931 = vpack.c.b16 %v877, %v871
      %v932 = vpack.c.b16 %v878, %v872
      %v933 = vpack.c.b16 %v879, %v873
      %v934 = vpack.c.b16 %v880, %v874
      %v935 = vpack.c.b16 %v881, %v875
      %v936 = vpack.c.b16 %v882, %v876
      %v937 = vpack.c.b16 %v889, %v883
      %v938 = vpack.c.b16 %v890, %v884
      %v939 = vpack.c.b16 %v891, %v885
      %v940 = vpack.c.b16 %v892, %v886
      %v941 = vpack.c.b16 %v893, %v887
      %v942 = vpack.c.b16 %v894, %v888
      %v1183 = vunpack.c.l.b16 %v537
      %v1184 = vunpack.c.h.b16 %v537
      %v1185 = vunpack.c.l.b16 %v538
      %v1186 = vunpack.c.h.b16 %v538
      %v1187 = vunpack.c.l.b16 %v539
      %v1188 = vunpack.c.h.b16 %v539
      %v1189 = vunpack.c.l.b16 %v540
      %v1190 = vunpack.c.h.b16 %v540
      %v1191 = vunpack.c.l.b16 %v541
      %v1192 = vunpack.c.h.b16 %v541
      %v1193 = vunpack.c.l.b16 %v542
      %v1194 = vunpack.c.h.b16 %v542
      %v1195 = vunpack.c.l.b16 %v543
      %v1196 = vunpack.c.h.b16 %v543
      %v1197 = vunpack.c.l.b16 %v544
      %v1198 = vunpack.c.h.b16 %v544
      %v1199 = vunpack.c.l.b16 %v545
      %v1200 = vunpack.c.h.b16 %v545
      %v1201 = vunpack.c.l.b16 %v546
      %v1202 = vunpack.c.h.b16 %v546
      %v1203 = vunpack.c.l.b16 %v547
      %v1204 = vunpack.c.h.b16 %v547
      %v1205 = vunpack.c.l.b16 %v548
      %v1206 = vunpack.c.h.b16 %v548
      %v1207 = vunpack.c.l.b16 %v549
      %v1208 = vunpack.c.h.b16 %v549
      %v1209 = vunpack.c.l.b16 %v550
      %v1210 = vunpack.c.h.b16 %v550
      %v1211 = vunpack.c.l.b16 %v551
      %v1212 = vunpack.c.h.b16 %v551
      %v1213 = vunpack.c.l.b16 %v552
      %v1214 = vunpack.c.h.b16 %v552
      %v1215 = vunpack.c.l.b16 %v553
      %v1216 = vunpack.c.h.b16 %v553
      %v1217 = vunpack.c.l.b16 %v554
      %v1218 = vunpack.c.h.b16 %v554
      %v1219 = vunpack.c.l.b16 %v555
      %v1220 = vunpack.c.h.b16 %v555
      %v1221 = vunpack.c.l.b16 %v556
      %v1222 = vunpack.c.h.b16 %v556
      %v1223 = vunpack.c.l.b16 %v557
      %v1224 = vunpack.c.h.b16 %v557
      %v1225 = vunpack.c.l.b16 %v558
      %v1226 = vunpack.c.h.b16 %v558
      %v1227 = vunpack.c.l.b16 %v559
      %v1228 = vunpack.c.h.b16 %v559
      %v1229 = vunpack.c.l.b16 %v560
      %v1230 = vunpack.c.h.b16 %v560
      %v1231 = vunpack.c.l.b16 %v561
      %v1232 = vunpack.c.h.b16 %v561
      %v1233 = vunpack.c.l.b16 %v562
      %v1234 = vunpack.c.h.b16 %v562
      %v1235 = vunpack.c.l.b16 %v563
      %v1236 = vunpack.c.h.b16 %v563
      %v1237 = vunpack.c.l.b16 %v564
      %v1238 = vunpack.c.h.b16 %v564
      %v1239 = vunpack.c.l.b16 %v565
      %v1240 = vunpack.c.h.b16 %v565
      %v1241 = vunpack.c.l.b16 %v566
      %v1242 = vunpack.c.h.b16 %v566
      %v1243 = vunpack.c.l.b16 %v567
      %v1244 = vunpack.c.h.b16 %v567
      %v1245 = vunpack.c.l.b16 %v568
      %v1246 = vunpack.c.h.b16 %v568
      %v1247 = vunpack.c.l.b16 %v569
      %v1248 = vunpack.c.h.b16 %v569
      %v1249 = vunpack.c.l.b16 %v570
      %v1250 = vunpack.c.h.b16 %v570
      %v1251 = vunpack.c.l.b16 %v571
      %v1252 = vunpack.c.h.b16 %v571
      %v1253 = vunpack.c.l.b16 %v572
      %v1254 = vunpack.c.h.b16 %v572
      %v1255 = vunpack.c.l.b16 %v573
      %v1256 = vunpack.c.h.b16 %v573
      %v1257 = vunpack.c.l.b16 %v574
      %v1258 = vunpack.c.h.b16 %v574
      %v1259 = vunpack.c.l.b16 %v575
      %v1260 = vunpack.c.h.b16 %v575
      %v1261 = vunpack.c.l.b16 %v576
      %v1262 = vunpack.c.h.b16 %v576
      %v1263 = vunpack.c.l.b16 %v577
      %v1264 = vunpack.c.h.b16 %v577
      %v1265 = vunpack.c.l.b16 %v578
      %v1266 = vunpack.c.h.b16 %v578
      %v1267 = vunpack.c.l.b16 %v579
      %v1268 = vunpack.c.h.b16 %v579
      %v1269 = vunpack.c.l.b16 %v580
      %v1270 = vunpack.c.h.b16 %v580
      %v1271 = vunpack.c.l.b16 %v581
      %v1272 = vunpack.c.h.b16 %v581
      %v1273 = vunpack.c.l.b16 %v582
      %v1274 = vunpack.c.h.b16 %v582
      %v1275 = vunpack.c.l.b16 %v583
      %v1276 = vunpack.c.h.b16 %v583
      %v1277 = vunpack.c.l.b16 %v584
      %v1278 = vunpack.c.h.b16 %v584
      %v1279 = vunpack.c.l.b16 %v585
      %v1280 = vunpack.c.h.b16 %v585
      %v1281 = vunpack.c.l.b16 %v586
      %v1282 = vunpack.c.h.b16 %v586
      %v1283 = vunpack.c.l.b16 %v587
      %v1284 = vunpack.c.h.b16 %v587
      %v1285 = vunpack.c.l.b16 %v588
      %v1286 = vunpack.c.h.b16 %v588
      %v1287 = vunpack.c.l.b16 %v589
      %v1288 = vunpack.c.h.b16 %v589
      %v1289 = vunpack.c.l.b16 %v590
      %v1290 = vunpack.c.h.b16 %v590
      %v1291 = vunpack.c.l.b16 %v591
      %v1292 = vunpack.c.h.b16 %v591
      %v1293 = vunpack.c.l.b16 %v592
      %v1294 = vunpack.c.h.b16 %v592
      %v1295 = vunpack.c.l.b16 %v593
      %v1296 = vunpack.c.h.b16 %v593
      %v1297 = vunpack.c.l.b16 %v594
      %v1298 = vunpack.c.h.b16 %v594
      %v1299 = vunpack.c.l.b16 %v595
      %v1300 = vunpack.c.h.b16 %v595
      %v1301 = vunpack.c.l.b16 %v596
      %v1302 = vunpack.c.h.b16 %v596
      %v1303 = vunpack.c.l.b16 %v597
      %v1304 = vunpack.c.h.b16 %v597
      %v1305 = vunpack.c.l.b16 %v598
      %v1306 = vunpack.c.h.b16 %v598
      %v1307 = vunpack.c.l.b16 %v599
      %v1308 = vunpack.c.h.b16 %v599
      %v1309 = vunpack.c.l.b16 %v600
      %v1310 = vunpack.c.h.b16 %v600
      %v1311 = vunpack.c.l.b16 %v601
      %v1312 = vunpack.c.h.b16 %v601
      %v1313 = vunpack.c.l.b16 %v602
      %v1314 = vunpack.c.h.b16 %v602
      %v1315 = vunpack.c.l.b16 %v603
      %v1316 = vunpack.c.h.b16 %v603
      %v1317 = vunpack.c.l.b16 %v604
      %v1318 = vunpack.c.h.b16 %v604
      %v1319 = vunpack.c.l.b16 %v605
      %v1320 = vunpack.c.h.b16 %v605
      %v1321 = vunpack.c.l.b16 %v606
      %v1322 = vunpack.c.h.b16 %v606
      %v1323 = vunpack.c.l.b16 %v607
      %v1324 = vunpack.c.h.b16 %v607
      %v1325 = vunpack.c.l.b16 %v608
      %v1326 = vunpack.c.h.b16 %v608
      %v1327 = vunpack.c.l.b16 %v609
      %v1328 = vunpack.c.h.b16 %v609
      %v1329 = vunpack.c.l.b16 %v610
      %v1330 = vunpack.c.h.b16 %v610
      %v1331 = vunpack.c.l.b16 %v611
      %v1332 = vunpack.c.h.b16 %v611
      %v1333 = vunpack.c.l.b16 %v612
      %v1334 = vunpack.c.h.b16 %v612
      %v1335 = vunpack.c.l.b16 %v613
      %v1336 = vunpack.c.h.b16 %v613
      %v1337 = vunpack.c.l.b16 %v614
      %v1338 = vunpack.c.h.b16 %v614
      %v1339 = vunpack.c.l.b16 %v615
      %v1340 = vunpack.c.h.b16 %v615
      %v1341 = vunpack.c.l.b16 %v616
      %v1342 = vunpack.c.h.b16 %v616
      %v1343 = vunpack.c.l.b16 %v617
      %v1344 = vunpack.c.h.b16 %v617
      %v1345 = vunpack.c.l.b16 %v618
      %v1346 = vunpack.c.h.b16 %v618
      %v1347 = vunpack.c.l.b16 %v619
      %v1348 = vunpack.c.h.b16 %v619
      %v1349 = vunpack.c.l.b16 %v620
      %v1350 = vunpack.c.h.b16 %v620
      %v1351 = vunpack.c.l.b16 %v621
      %v1352 = vunpack.c.h.b16 %v621
      %v1353 = vunpack.c.l.b16 %v622
      %v1354 = vunpack.c.h.b16 %v622
      %v1355 = vunpack.c.l.b16 %v623
      %v1356 = vunpack.c.h.b16 %v623
      %v1357 = vunpack.c.l.b16 %v624
      %v1358 = vunpack.c.h.b16 %v624
      %v1359 = vunpack.c.l.b16 %v625
      %v1360 = vunpack.c.h.b16 %v625
      %v1361 = vunpack.c.l.b16 %v626
      %v1362 = vunpack.c.h.b16 %v626
      %v1363 = vunpack.c.l.b16 %v627
      %v1364 = vunpack.c.h.b16 %v627
      %v1365 = vunpack.c.l.b16 %v628
      %v1366 = vunpack.c.h.b16 %v628
      %v1367 = vunpack.c.l.b16 %v629
      %v1368 = vunpack.c.h.b16 %v629
      %v1369 = vunpack.c.l.b16 %v630
      %v1370 = vunpack.c.h.b16 %v630
      %v1371 = vunpack.c.l.b16 %v631
      %v1372 = vunpack.c.h.b16 %v631
      %v1373 = vunpack.c.l.b16 %v632
      %v1374 = vunpack.c.h.b16 %v632
      %v1375 = vunpack.c.l.b16 %v633
      %v1376 = vunpack.c.h.b16 %v633
      %v1377 = vunpack.c.l.b16 %v634
      %v1378 = vunpack.c.h.b16 %v634
      %v1379 = vunpack.c.l.b16 %v635
      %v1380 = vunpack.c.h.b16 %v635
      %v1381 = vunpack.c.l.b16 %v636
      %v1382 = vunpack.c.h.b16 %v636
      %v1383 = vunpack.c.l.b16 %v637
      %v1384 = vunpack.c.h.b16 %v637
      %v1385 = vunpack.c.l.b16 %v638
      %v1386 = vunpack.c.h.b16 %v638
      %v1387 = vunpack.c.l.b16 %v639
      %v1388 = vunpack.c.h.b16 %v639
      %v1389 = vunpack.c.l.b16 %v640
      %v1390 = vunpack.c.h.b16 %v640
      %v1391 = vunpack.c.l.b16 %v641
      %v1392 = vunpack.c.h.b16 %v641
      %v1393 = vunpack.c.l.b16 %v642
      %v1394 = vunpack.c.h.b16 %v642
      %v1395 = vunpack.c.l.b16 %v643
      %v1396 = vunpack.c.h.b16 %v643
      %v1397 = vunpack.c.l.b16 %v644
      %v1398 = vunpack.c.h.b16 %v644
      %v1399 = vunpack.c.l.b16 %v645
      %v1400 = vunpack.c.h.b16 %v645
      %v1401 = vunpack.c.l.b16 %v646
      %v1402 = vunpack.c.h.b16 %v646
      %v1403 = vunpack.c.l.b16 %v647
      %v1404 = vunpack.c.h.b16 %v647
      %v1405 = vunpack.c.l.b16 %v648
      %v1406 = vunpack.c.h.b16 %v648
      %v1407 = vunpack.c.l.b16 %v649
      %v1408 = vunpack.c.h.b16 %v649
      %v1409 = vunpack.c.l.b16 %v650
      %v1410 = vunpack.c.h.b16 %v650
      %v1411 = vunpack.c.l.b16 %v651
      %v1412 = vunpack.c.h.b16 %v651
      %v1413 = vunpack.c.l.b16 %v652
      %v1414 = vunpack.c.h.b16 %v652
      %v1415 = vunpack.c.l.b16 %v653
      %v1416 = vunpack.c.h.b16 %v653
      %v1417 = vunpack.c.l.b16 %v654
      %v1418 = vunpack.c.h.b16 %v654
      %v1419 = vunpack.c.l.b16 %v655
      %v1420 = vunpack.c.h.b16 %v655
      %v1421 = vunpack.c.l.b16 %v656
      %v1422 = vunpack.c.h.b16 %v656
      %v1423 = vunpack.c.l.b16 %v657
      %v1424 = vunpack.c.h.b16 %v657
      %v1425 = vunpack.c.l.b16 %v658
      %v1426 = vunpack.c.h.b16 %v658
      %v1427 = vunpack.c.l.b16 %v659
      %v1428 = vunpack.c.h.b16 %v659
      %v1429 = vunpack.c.l.b16 %v660
      %v1430 = vunpack.c.h.b16 %v660
      %v1431 = vunpack.c.l.b16 %v661
      %v1432 = vunpack.c.h.b16 %v661
      %v1433 = vunpack.c.l.b16 %v662
      %v1434 = vunpack.c.h.b16 %v662
      %v1435 = vunpack.c.l.b16 %v663
      %v1436 = vunpack.c.h.b16 %v663
      %v1437 = vunpack.c.l.b16 %v664
      %v1438 = vunpack.c.h.b16 %v664
      %v1439 = vunpack.c.l.b16 %v665
      %v1440 = vunpack.c.h.b16 %v665
      %v1441 = vunpack.c.l.b16 %v666
      %v1442 = vunpack.c.h.b16 %v666
      %v1443 = vunpack.c.l.b16 %v667
      %v1444 = vunpack.c.h.b16 %v667
      %v1445 = vunpack.c.l.b16 %v668
      %v1446 = vunpack.c.h.b16 %v668
      %v1447 = vunpack.c.l.b16 %v669
      %v1448 = vunpack.c.h.b16 %v669
      %v1449 = vunpack.c.l.b16 %v670
      %v1450 = vunpack.c.h.b16 %v670
      %v1451 = vunpack.c.l.b16 %v671
      %v1452 = vunpack.c.h.b16 %v671
      %v1453 = vunpack.c.l.b16 %v672
      %v1454 = vunpack.c.h.b16 %v672
      %v1455 = vunpack.c.l.b16 %v673
      %v1456 = vunpack.c.h.b16 %v673
      %v1457 = vunpack.c.l.b16 %v674
      %v1458 = vunpack.c.h.b16 %v674
      %v1459 = vunpack.c.l.b16 %v675
      %v1460 = vunpack.c.h.b16 %v675
      %v1461 = vunpack.c.l.b16 %v676
      %v1462 = vunpack.c.h.b16 %v676
      %v1463 = vunpack.c.l.b16 %v677
      %v1464 = vunpack.c.h.b16 %v677
      %v1465 = vunpack.c.l.b16 %v678
      %v1466 = vunpack.c.h.b16 %v678
      %v1467 = vunpack.c.l.b16 %v679
      %v1468 = vunpack.c.h.b16 %v679
      %v1469 = vunpack.c.l.b16 %v680
      %v1470 = vunpack.c.h.b16 %v680
      %v1471 = vunpack.c.l.b16 %v681
      %v1472 = vunpack.c.h.b16 %v681
      %v1473 = vunpack.c.l.b16 %v682
      %v1474 = vunpack.c.h.b16 %v682
      %v1475 = vunpack.c.l.b16 %v683
      %v1476 = vunpack.c.h.b16 %v683
      %v1477 = vunpack.c.l.b16 %v684
      %v1478 = vunpack.c.h.b16 %v684
      %v1479 = vunpack.c.l.b16 %v685
      %v1480 = vunpack.c.h.b16 %v685
      %v1481 = vunpack.c.l.b16 %v686
      %v1482 = vunpack.c.h.b16 %v686
      %v1483 = vunpack.c.l.b16 %v687
      %v1484 = vunpack.c.h.b16 %v687
      %v1485 = vunpack.c.l.b16 %v688
      %v1486 = vunpack.c.h.b16 %v688
      %v1487 = vunpack.c.l.b16 %v689
      %v1488 = vunpack.c.h.b16 %v689
      %v1489 = vunpack.c.l.b16 %v690
      %v1490 = vunpack.c.h.b16 %v690
      %v1491 = vunpack.c.l.b16 %v691
      %v1492 = vunpack.c.h.b16 %v691
      %v1493 = vunpack.c.l.b16 %v692
      %v1494 = vunpack.c.h.b16 %v692
      %v1495 = vunpack.c.l.b16 %v693
      %v1496 = vunpack.c.h.b16 %v693
      %v1497 = vunpack.c.l.b16 %v694
      %v1498 = vunpack.c.h.b16 %v694
      %v1499 = vunpack.c.l.b16 %v695
      %v1500 = vunpack.c.h.b16 %v695
      %v1501 = vunpack.c.l.b16 %v696
      %v1502 = vunpack.c.h.b16 %v696
      %v1503 = vunpack.c.l.b16 %v697
      %v1504 = vunpack.c.h.b16 %v697
      %v1505 = vunpack.c.l.b16 %v698
      %v1506 = vunpack.c.h.b16 %v698
      %v1507 = vunpack.c.l.b16 %v699
      %v1508 = vunpack.c.h.b16 %v699
      %v1509 = vunpack.c.l.b16 %v700
      %v1510 = vunpack.c.h.b16 %v700
      %v1511 = vunpack.c.l.b16 %v701
      %v1512 = vunpack.c.h.b16 %v701
      %v1513 = vunpack.c.l.b16 %v702
      %v1514 = vunpack.c.h.b16 %v702
      %v1515 = vunpack.c.l.b16 %v703
      %v1516 = vunpack.c.h.b16 %v703
      %v1517 = vunpack.c.l.b16 %v704
      %v1518 = vunpack.c.h.b16 %v704
      %v1519 = vunpack.c.l.b16 %v705
      %v1520 = vunpack.c.h.b16 %v705
      %v1521 = vunpack.c.l.b16 %v706
      %v1522 = vunpack.c.h.b16 %v706
      %v1523 = vunpack.c.l.b16 %v707
      %v1524 = vunpack.c.h.b16 %v707
      %v1525 = vunpack.c.l.b16 %v708
      %v1526 = vunpack.c.h.b16 %v708
      %v1527 = vunpack.c.l.b16 %v709
      %v1528 = vunpack.c.h.b16 %v709
      %v1529 = vunpack.c.l.b16 %v710
      %v1530 = vunpack.c.h.b16 %v710
      %v1531 = vunpack.c.l.b16 %v711
      %v1532 = vunpack.c.h.b16 %v711
      %v1533 = vunpack.c.l.b16 %v712
      %v1534 = vunpack.c.h.b16 %v712
      %v1535 = vunpack.c.l.b16 %v713
      %v1536 = vunpack.c.h.b16 %v713
      %v1537 = vunpack.c.l.b16 %v714
      %v1538 = vunpack.c.h.b16 %v714
      %v1539 = vunpack.c.l.b16 %v715
      %v1540 = vunpack.c.h.b16 %v715
      %v1541 = vunpack.c.l.b16 %v716
      %v1542 = vunpack.c.h.b16 %v716
      %v1543 = vunpack.c.l.b16 %v717
      %v1544 = vunpack.c.h.b16 %v717
      %v1545 = vunpack.c.l.b16 %v718
      %v1546 = vunpack.c.h.b16 %v718
      %v1547 = vunpack.c.l.b16 %v719
      %v1548 = vunpack.c.h.b16 %v719
      %v1549 = vunpack.c.l.b16 %v720
      %v1550 = vunpack.c.h.b16 %v720
      %v1551 = vunpack.c.l.b16 %v721
      %v1552 = vunpack.c.h.b16 %v721
      %v1553 = vunpack.c.l.b16 %v722
      %v1554 = vunpack.c.h.b16 %v722
      %v1555 = vunpack.c.l.b16 %v723
      %v1556 = vunpack.c.h.b16 %v723
      %v1557 = vunpack.c.l.b16 %v724
      %v1558 = vunpack.c.h.b16 %v724
      %v1559 = vunpack.c.l.b16 %v725
      %v1560 = vunpack.c.h.b16 %v725
      %v1561 = vunpack.c.l.b16 %v726
      %v1562 = vunpack.c.h.b16 %v726
      %v1563 = vunpack.c.l.b16 %v727
      %v1564 = vunpack.c.h.b16 %v727
      %v1565 = vunpack.c.l.b16 %v728
      %v1566 = vunpack.c.h.b16 %v728
      %v1567 = vpack.c.b16 %v1187, %v1183
      %v1568 = vpack.c.b16 %v1188, %v1184
      %v1569 = vpack.c.b16 %v1189, %v1185
      %v1570 = vpack.c.b16 %v1190, %v1186
      %v1571 = vpack.c.b16 %v1195, %v1191
      %v1572 = vpack.c.b16 %v1196, %v1192
      %v1573 = vpack.c.b16 %v1197, %v1193
      %v1574 = vpack.c.b16 %v1198, %v1194
      %v1575 = vpack.c.b16 %v1203, %v1199
      %v1576 = vpack.c.b16 %v1204, %v1200
      %v1577 = vpack.c.b16 %v1205, %v1201
      %v1578 = vpack.c.b16 %v1206, %v1202
      %v1579 = vpack.c.b16 %v1211, %v1207
      %v1580 = vpack.c.b16 %v1212, %v1208
      %v1581 = vpack.c.b16 %v1213, %v1209
      %v1582 = vpack.c.b16 %v1214, %v1210
      %v1583 = vpack.c.b16 %v1219, %v1215
      %v1584 = vpack.c.b16 %v1220, %v1216
      %v1585 = vpack.c.b16 %v1221, %v1217
      %v1586 = vpack.c.b16 %v1222, %v1218
      %v1587 = vpack.c.b16 %v1227, %v1223
      %v1588 = vpack.c.b16 %v1228, %v1224
      %v1589 = vpack.c.b16 %v1229, %v1225
      %v1590 = vpack.c.b16 %v1230, %v1226
      %v1591 = vpack.c.b16 %v1235, %v1231
      %v1592 = vpack.c.b16 %v1236, %v1232
      %v1593 = vpack.c.b16 %v1237, %v1233
      %v1594 = vpack.c.b16 %v1238, %v1234
      %v1595 = vpack.c.b16 %v1243, %v1239
      %v1596 = vpack.c.b16 %v1244, %v1240
      %v1597 = vpack.c.b16 %v1245, %v1241
      %v1598 = vpack.c.b16 %v1246, %v1242
      %v1599 = vpack.c.b16 %v1251, %v1247
      %v1600 = vpack.c.b16 %v1252, %v1248
      %v1601 = vpack.c.b16 %v1253, %v1249
      %v1602 = vpack.c.b16 %v1254, %v1250
      %v1603 = vpack.c.b16 %v1259, %v1255
      %v1604 = vpack.c.b16 %v1260, %v1256
      %v1605 = vpack.c.b16 %v1261, %v1257
      %v1606 = vpack.c.b16 %v1262, %v1258
      %v1607 = vpack.c.b16 %v1267, %v1263
      %v1608 = vpack.c.b16 %v1268, %v1264
      %v1609 = vpack.c.b16 %v1269, %v1265
      %v1610 = vpack.c.b16 %v1270, %v1266
      %v1611 = vpack.c.b16 %v1275, %v1271
      %v1612 = vpack.c.b16 %v1276, %v1272
      %v1613 = vpack.c.b16 %v1277, %v1273
      %v1614 = vpack.c.b16 %v1278, %v1274
      %v1615 = vpack.c.b16 %v1283, %v1279
      %v1616 = vpack.c.b16 %v1284, %v1280
      %v1617 = vpack.c.b16 %v1285, %v1281
      %v1618 = vpack.c.b16 %v1286, %v1282
      %v1619 = vpack.c.b16 %v1291, %v1287
      %v1620 = vpack.c.b16 %v1292, %v1288
      %v1621 = vpack.c.b16 %v1293, %v1289
      %v1622 = vpack.c.b16 %v1294, %v1290
      %v1623 = vpack.c.b16 %v1299, %v1295
      %v1624 = vpack.c.b16 %v1300, %v1296
      %v1625 = vpack.c.b16 %v1301, %v1297
      %v1626 = vpack.c.b16 %v1302, %v1298
      %v1627 = vpack.c.b16 %v1307, %v1303
      %v1628 = vpack.c.b16 %v1308, %v1304
      %v1629 = vpack.c.b16 %v1309, %v1305
      %v1630 = vpack.c.b16 %v1310, %v1306
      %v1631 = vpack.c.b16 %v1315, %v1311
      %v1632 = vpack.c.b16 %v1316, %v1312
      %v1633 = vpack.c.b16 %v1317, %v1313
      %v1634 = vpack.c.b16 %v1318, %v1314
      %v1635 = vpack.c.b16 %v1323, %v1319
      %v1636 = vpack.c.b16 %v1324, %v1320
      %v1637 = vpack.c.b16 %v1325, %v1321
      %v1638 = vpack.c.b16 %v1326, %v1322
      %v1639 = vpack.c.b16 %v1331, %v1327
      %v1640 = vpack.c.b16 %v1332, %v1328
      %v1641 = vpack.c.b16 %v1333, %v1329
      %v1642 = vpack.c.b16 %v1334, %v1330
      %v1643 = vpack.c.b16 %v1339, %v1335
      %v1644 = vpack.c.b16 %v1340, %v1336
      %v1645 = vpack.c.b16 %v1341, %v1337
      %v1646 = vpack.c.b16 %v1342, %v1338
      %v1647 = vpack.c.b16 %v1347, %v1343
      %v1648 = vpack.c.b16 %v1348, %v1344
      %v1649 = vpack.c.b16 %v1349, %v1345
      %v1650 = vpack.c.b16 %v1350, %v1346
      %v1651 = vpack.c.b16 %v1355, %v1351
      %v1652 = vpack.c.b16 %v1356, %v1352
      %v1653 = vpack.c.b16 %v1357, %v1353
      %v1654 = vpack.c.b16 %v1358, %v1354
      %v1655 = vpack.c.b16 %v1363, %v1359
      %v1656 = vpack.c.b16 %v1364, %v1360
      %v1657 = vpack.c.b16 %v1365, %v1361
      %v1658 = vpack.c.b16 %v1366, %v1362
      %v1659 = vpack.c.b16 %v1371, %v1367
      %v1660 = vpack.c.b16 %v1372, %v1368
      %v1661 = vpack.c.b16 %v1373, %v1369
      %v1662 = vpack.c.b16 %v1374, %v1370
      %v1663 = vpack.c.b16 %v1379, %v1375
      %v1664 = vpack.c.b16 %v1380, %v1376
      %v1665 = vpack.c.b16 %v1381, %v1377
      %v1666 = vpack.c.b16 %v1382, %v1378
      %v1667 = vpack.c.b16 %v1387, %v1383
      %v1668 = vpack.c.b16 %v1388, %v1384
      %v1669 = vpack.c.b16 %v1389, %v1385
      %v1670 = vpack.c.b16 %v1390, %v1386
      %v1671 = vpack.c.b16 %v1395, %v1391
      %v1672 = vpack.c.b16 %v1396, %v1392
      %v1673 = vpack.c.b16 %v1397, %v1393
      %v1674 = vpack.c.b16 %v1398, %v1394
      %v1675 = vpack.c.b16 %v1403, %v1399
      %v1676 = vpack.c.b16 %v1404, %v1400
      %v1677 = vpack.c.b16 %v1405, %v1401
      %v1678 = vpack.c.b16 %v1406, %v1402
      %v1679 = vpack.c.b16 %v1411, %v1407
      %v1680 = vpack.c.b16 %v1412, %v1408
      %v1681 = vpack.c.b16 %v1413, %v1409
      %v1682 = vpack.c.b16 %v1414, %v1410
      %v1683 = vpack.c.b16 %v1419, %v1415
      %v1684 = vpack.c.b16 %v1420, %v1416
      %v1685 = vpack.c.b16 %v1421, %v1417
      %v1686 = vpack.c.b16 %v1422, %v1418
      %v1687 = vpack.c.b16 %v1427, %v1423
      %v1688 = vpack.c.b16 %v1428, %v1424
      %v1689 = vpack.c.b16 %v1429, %v1425
      %v1690 = vpack.c.b16 %v1430, %v1426
      %v1691 = vpack.c.b16 %v1435, %v1431
      %v1692 = vpack.c.b16 %v1436, %v1432
      %v1693 = vpack.c.b16 %v1437, %v1433
      %v1694 = vpack.c.b16 %v1438, %v1434
      %v1695 = vpack.c.b16 %v1443, %v1439
      %v1696 = vpack.c.b16 %v1444, %v1440
      %v1697 = vpack.c.b16 %v1445, %v1441
      %v1698 = vpack.c.b16 %v1446, %v1442
      %v1699 = vpack.c.b16 %v1451, %v1447
      %v1700 = vpack.c.b16 %v1452, %v1448
      %v1701 = vpack.c.b16 %v1453, %v1449
      %v1702 = vpack.c.b16 %v1454, %v1450
      %v1703 = vpack.c.b16 %v1459, %v1455
      %v1704 = vpack.c.b16 %v1460, %v1456
      %v1705 = vpack.c.b16 %v1461, %v1457
      %v1706 = vpack.c.b16 %v1462, %v1458
      %v1707 = vpack.c.b16 %v1467, %v1463
      %v1708 = vpack.c.b16 %v1468, %v1464
      %v1709 = vpack.c.b16 %v1469, %v1465
      %v1710 = vpack.c.b16 %v1470, %v1466
      %v1711 = vpack.c.b16 %v1475, %v1471
      %v1712 = vpack.c.b16 %v1476, %v1472
      %v1713 = vpack.c.b16 %v1477, %v1473
      %v1714 = vpack.c.b16 %v1478, %v1474
      %v1715 = vpack.c.b16 %v1483, %v1479
      %v1716 = vpack.c.b16 %v1484, %v1480
      %v1717 = vpack.c.b16 %v1485, %v1481
      %v1718 = vpack.c.b16 %v1486, %v1482
      %v1719 = vpack.c.b16 %v1491, %v1487
      %v1720 = vpack.c.b16 %v1492, %v1488
      %v1721 = vpack.c.b16 %v1493, %v1489
      %v1722 = vpack.c.b16 %v1494, %v1490
      %v1723 = vpack.c.b16 %v1499, %v1495
      %v1724 = vpack.c.b16 %v1500, %v1496
      %v1725 = vpack.c.b16 %v1501, %v1497
      %v1726 = vpack.c.b16 %v1502, %v1498
      %v1727 = vpack.c.b16 %v1507, %v1503
      %v1728 = vpack.c.b16 %v1508, %v1504
      %v1729 = vpack.c.b16 %v1509, %v1505
      %v1730 = vpack.c.b16 %v1510, %v1506
      %v1731 = vpack.c.b16 %v1515, %v1511
      %v1732 = vpack.c.b16 %v1516, %v1512
      %v1733 = vpack.c.b16 %v1517, %v1513
      %v1734 = vpack.c.b16 %v1518, %v1514
      %v1735 = vpack.c.b16 %v1523, %v1519
      %v1736 = vpack.c.b16 %v1524, %v1520
      %v1737 = vpack.c.b16 %v1525, %v1521
      %v1738 = vpack.c.b16 %v1526, %v1522
      %v1739 = vpack.c.b16 %v1531, %v1527
      %v1740 = vpack.c.b16 %v1532, %v1528
      %v1741 = vpack.c.b16 %v1533, %v1529
      %v1742 = vpack.c.b16 %v1534, %v1530
      %v1743 = vpack.c.b16 %v1539, %v1535
      %v1744 = vpack.c.b16 %v1540, %v1536
      %v1745 = vpack.c.b16 %v1541, %v1537
      %v1746 = vpack.c.b16 %v1542, %v1538
      %v1747 = vpack.c.b16 %v1547, %v1543
      %v1748 = vpack.c.b16 %v1548, %v1544
      %v1749 = vpack.c.b16 %v1549, %v1545
      %v1750 = vpack.c.b16 %v1550, %v1546
      %v1751 = vpack.c.b16 %v1555, %v1551
      %v1752 = vpack.c.b16 %v1556, %v1552
      %v1753 = vpack.c.b16 %v1557, %v1553
      %v1754 = vpack.c.b16 %v1558, %v1554
      %v1755 = vpack.c.b16 %v1563, %v1559
      %v1756 = vpack.c.b16 %v1564, %v1560
      %v1757 = vpack.c.b16 %v1565, %v1561
      %v1758 = vpack.c.b16 %v1566, %v1562
      %1951 = vmatprep.subr.bf16.mxu0 %v1568
      %1952 = vmatpush1.bf16.msra.mxu0 %v1567
      %1953 = vmatprep.subr.bf16.mxu0 %v1572
      %1954 = vmatpush1.bf16.msra.mxu0 %v1571
      %1955 = vmatprep.subr.bf16.mxu0 %v1576
      %1956 = vmatpush1.bf16.msra.mxu0 %v1575
      %1957 = vmatprep.subr.bf16.mxu0 %v1580
      %1958 = vmatpush1.bf16.msra.mxu0 %v1579
      %1959 = vmatprep.subr.bf16.mxu0 %v1584
      %1960 = vmatpush1.bf16.msra.mxu0 %v1583
      %1961 = vmatprep.subr.bf16.mxu0 %v1588
      %1962 = vmatpush1.bf16.msra.mxu0 %v1587
      %1963 = vmatprep.subr.bf16.mxu0 %v1592
      %1964 = vmatpush1.bf16.msra.mxu0 %v1591
      %1965 = vmatprep.subr.bf16.mxu0 %v1596
      %1966 = vmatpush1.bf16.msra.mxu0 %v1595
      %1967 = vmatprep.subr.bf16.mxu0 %v1600
      %1968 = vmatpush1.bf16.msra.mxu0 %v1599
      %1969 = vmatprep.subr.bf16.mxu0 %v1604
      %1970 = vmatpush1.bf16.msra.mxu0 %v1603
      %1971 = vmatprep.subr.bf16.mxu0 %v1608
      %1972 = vmatpush1.bf16.msra.mxu0 %v1607
      %1973 = vmatprep.subr.bf16.mxu0 %v1612
      %1974 = vmatpush1.bf16.msra.mxu0 %v1611
      %1975 = vmatprep.subr.bf16.mxu0 %v1616
      %1976 = vmatpush1.bf16.msra.mxu0 %v1615
      %1977 = vmatprep.subr.bf16.mxu0 %v1620
      %1978 = vmatpush1.bf16.msra.mxu0 %v1619
      %1979 = vmatprep.subr.bf16.mxu0 %v1624
      %1980 = vmatpush1.bf16.msra.mxu0 %v1623
      %1981 = vmatprep.subr.bf16.mxu0 %v1628
      %1982 = vmatpush1.bf16.msra.mxu0 %v1627
      %1983 = vmatprep.mubr.bf16.mxu0 %v896
      %1984 = vmatmul.mubr.bf16.gmra.mrb[0].mxu0 %v895
      %v1985 = vpop.f32.mrb[0].mxu0
      %v1986 = vadd.f32 %v734, %v1985
      %v1987 = vpop.f32.mrb[0].mxu0
      %v1988 = vadd.f32 %v738, %v1987
      %v1989 = vpop.f32.mrb[0].mxu0
      %v1990 = vadd.f32 %v734, %v1989
      %v1991 = vpop.f32.mrb[0].mxu0
      %v1992 = vadd.f32 %v738, %v1991
      %1993 = vmatprep.mubr.bf16.mxu0 %v902
      %1994 = vmatmul.mubr.bf16.gmra.mrb[0].mxu0 %v901
      %v1995 = vpop.f32.mrb[0].mxu0
      %v1996 = vadd.f32 %v734, %v1995
      %v1997 = vpop.f32.mrb[0].mxu0
      %v1998 = vadd.f32 %v738, %v1997
      %v1999 = vpop.f32.mrb[0].mxu0
      %v2000 = vadd.f32 %v734, %v1999
      %v2001 = vpop.f32.mrb[0].mxu0
      %v2002 = vadd.f32 %v738, %v2001
      %2003 = vmatprep.mubr.bf16.mxu0 %v908
      %2004 = vmatmul.mubr.bf16.gmra.mrb[0].mxu0 %v907
      %v2005 = vpop.f32.mrb[0].mxu0
      %v2006 = vadd.f32 %v734, %v2005
      %v2007 = vpop.f32.mrb[0].mxu0
      %v2008 = vadd.f32 %v738, %v2007
      %v2009 = vpop.f32.mrb[0].mxu0
      %v2010 = vadd.f32 %v734, %v2009
      %v2011 = vpop.f32.mrb[0].mxu0
      %v2012 = vadd.f32 %v738, %v2011
      %2013 = vmatprep.mubr.bf16.mxu0 %v914
      %2014 = vmatmul.mubr.bf16.gmra.mrb[0].mxu0 %v913
      %v2015 = vpop.f32.mrb[0].mxu0
      %v2016 = vadd.f32 %v734, %v2015
      %v2017 = vpop.f32.mrb[0].mxu0
      %v2018 = vadd.f32 %v738, %v2017
      %v2019 = vpop.f32.mrb[0].mxu0
      %v2020 = vadd.f32 %v734, %v2019
      %v2021 = vpop.f32.mrb[0].mxu0
      %v2022 = vadd.f32 %v738, %v2021
      %2023 = vmatprep.mubr.bf16.mxu0 %v920
      %2024 = vmatmul.mubr.bf16.gmra.mrb[0].mxu0 %v919
      %v2025 = vpop.f32.mrb[0].mxu0
      %v2026 = vadd.f32 %v734, %v2025
      %v2027 = vpop.f32.mrb[0].mxu0
      %v2028 = vadd.f32 %v738, %v2027
      %v2029 = vpop.f32.mrb[0].mxu0
      %v2030 = vadd.f32 %v734, %v2029
      %v2031 = vpop.f32.mrb[0].mxu0
      %v2032 = vadd.f32 %v738, %v2031
      %2033 = vmatprep.mubr.bf16.mxu0 %v926
      %2034 = vmatmul.mubr.bf16.gmra.mrb[0].mxu0 %v925
      %v2035 = vpop.f32.mrb[0].mxu0
      %v2036 = vadd.f32 %v734, %v2035
      %v2037 = vpop.f32.mrb[0].mxu0
      %v2038 = vadd.f32 %v738, %v2037
      %v2039 = vpop.f32.mrb[0].mxu0
      %v2040 = vadd.f32 %v734, %v2039
      %v2041 = vpop.f32.mrb[0].mxu0
      %v2042 = vadd.f32 %v738, %v2041
      %2043 = vmatprep.mubr.bf16.mxu0 %v932
      %2044 = vmatmul.mubr.bf16.gmra.mrb[0].mxu0 %v931
      %v2045 = vpop.f32.mrb[0].mxu0
      %v2046 = vadd.f32 %v734, %v2045
      %v2047 = vpop.f32.mrb[0].mxu0
      %v2048 = vadd.f32 %v738, %v2047
      %v2049 = vpop.f32.mrb[0].mxu0
      %v2050 = vadd.f32 %v734, %v2049
      %v2051 = vpop.f32.mrb[0].mxu0
      %v2052 = vadd.f32 %v738, %v2051
      %2053 = vmatprep.mubr.bf16.mxu0 %v938
      %2054 = vmatmul.mubr.bf16.gmra.mrb[0].mxu0 %v937
      %v2055 = vpop.f32.mrb[0].mxu0
      %v2056 = vadd.f32 %v734, %v2055
      %v2057 = vpop.f32.mrb[0].mxu0
      %v2058 = vadd.f32 %v738, %v2057
      %v2059 = vpop.f32.mrb[0].mxu0
      %v2060 = vadd.f32 %v734, %v2059
      %v2061 = vpop.f32.mrb[0].mxu0
      %v2062 = vadd.f32 %v738, %v2061
      %2063 = vdwg.mxu0
      %2064 = vmatprep.subr.bf16.mxu0 %v1632
      %2065 = vmatpush1.bf16.msra.mxu0 %v1631
      %2066 = vmatprep.subr.bf16.mxu0 %v1636
      %2067 = vmatpush1.bf16.msra.mxu0 %v1635
      %2068 = vmatprep.subr.bf16.mxu0 %v1640
      %2069 = vmatpush1.bf16.msra.mxu0 %v1639
      %2070 = vmatprep.subr.bf16.mxu0 %v1644
      %2071 = vmatpush1.bf16.msra.mxu0 %v1643
      %2072 = vmatprep.subr.bf16.mxu0 %v1648
      %2073 = vmatpush1.bf16.msra.mxu0 %v1647
      %2074 = vmatprep.subr.bf16.mxu0 %v1652
      %2075 = vmatpush1.bf16.msra.mxu0 %v1651
      %2076 = vmatprep.subr.bf16.mxu0 %v1656
      %2077 = vmatpush1.bf16.msra.mxu0 %v1655
      %2078 = vmatprep.subr.bf16.mxu0 %v1660
      %2079 = vmatpush1.bf16.msra.mxu0 %v1659
      %2080 = vmatprep.subr.bf16.mxu0 %v1664
      %2081 = vmatpush1.bf16.msra.mxu0 %v1663
      %2082 = vmatprep.subr.bf16.mxu0 %v1668
      %2083 = vmatpush1.bf16.msra.mxu0 %v1667
      %2084 = vmatprep.subr.bf16.mxu0 %v1672
      %2085 = vmatpush1.bf16.msra.mxu0 %v1671
      %2086 = vmatprep.subr.bf16.mxu0 %v1676
      %2087 = vmatpush1.bf16.msra.mxu0 %v1675
      %2088 = vmatprep.subr.bf16.mxu0 %v1680
      %2089 = vmatpush1.bf16.msra.mxu0 %v1679
      %2090 = vmatprep.subr.bf16.mxu0 %v1684
      %2091 = vmatpush1.bf16.msra.mxu0 %v1683
      %2092 = vmatprep.subr.bf16.mxu0 %v1688
      %2093 = vmatpush1.bf16.msra.mxu0 %v1687
      %2094 = vmatprep.subr.bf16.mxu0 %v1692
      %2095 = vmatpush1.bf16.msra.mxu0 %v1691
      %2096 = vmatprep.mubr.bf16.mxu0 %v898
      %2097 = vmatmul.mubr.bf16.gmra.mrb[0].mxu0 %v897
      %v2098 = vpop.f32.mrb[0].mxu0
      %v2099 = vadd.f32 %v1986, %v2098
      %v2100 = vpop.f32.mrb[0].mxu0
      %v2101 = vadd.f32 %v1988, %v2100
      %v2102 = vpop.f32.mrb[0].mxu0
      %v2103 = vadd.f32 %v1990, %v2102
      %v2104 = vpop.f32.mrb[0].mxu0
      %v2105 = vadd.f32 %v1992, %v2104
      %2106 = vmatprep.mubr.bf16.mxu0 %v904
      %2107 = vmatmul.mubr.bf16.gmra.mrb[0].mxu0 %v903
      %v2108 = vpop.f32.mrb[0].mxu0
      %v2109 = vadd.f32 %v1996, %v2108
      %v2110 = vpop.f32.mrb[0].mxu0
      %v2111 = vadd.f32 %v1998, %v2110
      %v2112 = vpop.f32.mrb[0].mxu0
      %v2113 = vadd.f32 %v2000, %v2112
      %v2114 = vpop.f32.mrb[0].mxu0
      %v2115 = vadd.f32 %v2002, %v2114
      %2116 = vmatprep.mubr.bf16.mxu0 %v910
      %2117 = vmatmul.mubr.bf16.gmra.mrb[0].mxu0 %v909
      %v2118 = vpop.f32.mrb[0].mxu0
      %v2119 = vadd.f32 %v2006, %v2118
      %v2120 = vpop.f32.mrb[0].mxu0
      %v2121 = vadd.f32 %v2008, %v2120
      %v2122 = vpop.f32.mrb[0].mxu0
      %v2123 = vadd.f32 %v2010, %v2122
      %v2124 = vpop.f32.mrb[0].mxu0
      %v2125 = vadd.f32 %v2012, %v2124
      %2126 = vmatprep.mubr.bf16.mxu0 %v916
      %2127 = vmatmul.mubr.bf16.gmra.mrb[0].mxu0 %v915
      %v2128 = vpop.f32.mrb[0].mxu0
      %v2129 = vadd.f32 %v2016, %v2128
      %v2130 = vpop.f32.mrb[0].mxu0
      %v2131 = vadd.f32 %v2018, %v2130
      %v2132 = vpop.f32.mrb[0].mxu0
      %v2133 = vadd.f32 %v2020, %v2132
      %v2134 = vpop.f32.mrb[0].mxu0
      %v2135 = vadd.f32 %v2022, %v2134
      %2136 = vmatprep.mubr.bf16.mxu0 %v922
      %2137 = vmatmul.mubr.bf16.gmra.mrb[0].mxu0 %v921
      %v2138 = vpop.f32.mrb[0].mxu0
      %v2139 = vadd.f32 %v2026, %v2138
      %v2140 = vpop.f32.mrb[0].mxu0
      %v2141 = vadd.f32 %v2028, %v2140
      %v2142 = vpop.f32.mrb[0].mxu0
      %v2143 = vadd.f32 %v2030, %v2142
      %v2144 = vpop.f32.mrb[0].mxu0
      %v2145 = vadd.f32 %v2032, %v2144
      %2146 = vmatprep.mubr.bf16.mxu0 %v928
      %2147 = vmatmul.mubr.bf16.gmra.mrb[0].mxu0 %v927
      %v2148 = vpop.f32.mrb[0].mxu0
      %v2149 = vadd.f32 %v2036, %v2148
      %v2150 = vpop.f32.mrb[0].mxu0
      %v2151 = vadd.f32 %v2038, %v2150
      %v2152 = vpop.f32.mrb[0].mxu0
      %v2153 = vadd.f32 %v2040, %v2152
      %v2154 = vpop.f32.mrb[0].mxu0
      %v2155 = vadd.f32 %v2042, %v2154
      %2156 = vmatprep.mubr.bf16.mxu0 %v934
      %2157 = vmatmul.mubr.bf16.gmra.mrb[0].mxu0 %v933
      %v2158 = vpop.f32.mrb[0].mxu0
      %v2159 = vadd.f32 %v2046, %v2158
      %v2160 = vpop.f32.mrb[0].mxu0
      %v2161 = vadd.f32 %v2048, %v2160
      %v2162 = vpop.f32.mrb[0].mxu0
      %v2163 = vadd.f32 %v2050, %v2162
      %v2164 = vpop.f32.mrb[0].mxu0
      %v2165 = vadd.f32 %v2052, %v2164
      %2166 = vmatprep.mubr.bf16.mxu0 %v940
      %2167 = vmatmul.mubr.bf16.gmra.mrb[0].mxu0 %v939
      %v2168 = vpop.f32.mrb[0].mxu0
      %v2169 = vadd.f32 %v2056, %v2168
      %v2170 = vpop.f32.mrb[0].mxu0
      %v2171 = vadd.f32 %v2058, %v2170
      %v2172 = vpop.f32.mrb[0].mxu0
      %v2173 = vadd.f32 %v2060, %v2172
      %v2174 = vpop.f32.mrb[0].mxu0
      %v2175 = vadd.f32 %v2062, %v2174
      %2176 = vdwg.mxu0
      %2177 = vmatprep.subr.bf16.mxu0 %v1696
      %2178 = vmatpush1.bf16.msra.mxu0 %v1695
      %2179 = vmatprep.subr.bf16.mxu0 %v1700
      %2180 = vmatpush1.bf16.msra.mxu0 %v1699
      %2181 = vmatprep.subr.bf16.mxu0 %v1704
      %2182 = vmatpush1.bf16.msra.mxu0 %v1703
      %2183 = vmatprep.subr.bf16.mxu0 %v1708
      %2184 = vmatpush1.bf16.msra.mxu0 %v1707
      %2185 = vmatprep.subr.bf16.mxu0 %v1712
      %2186 = vmatpush1.bf16.msra.mxu0 %v1711
      %2187 = vmatprep.subr.bf16.mxu0 %v1716
      %2188 = vmatpush1.bf16.msra.mxu0 %v1715
      %2189 = vmatprep.subr.bf16.mxu0 %v1720
      %2190 = vmatpush1.bf16.msra.mxu0 %v1719
      %2191 = vmatprep.subr.bf16.mxu0 %v1724
      %2192 = vmatpush1.bf16.msra.mxu0 %v1723
      %2193 = vmatprep.subr.bf16.mxu0 %v1728
      %2194 = vmatpush1.bf16.msra.mxu0 %v1727
      %2195 = vmatprep.subr.bf16.mxu0 %v1732
      %2196 = vmatpush1.bf16.msra.mxu0 %v1731
      %2197 = vmatprep.subr.bf16.mxu0 %v1736
      %2198 = vmatpush1.bf16.msra.mxu0 %v1735
      %2199 = vmatprep.subr.bf16.mxu0 %v1740
      %2200 = vmatpush1.bf16.msra.mxu0 %v1739
      %2201 = vmatprep.subr.bf16.mxu0 %v1744
      %2202 = vmatpush1.bf16.msra.mxu0 %v1743
      %2203 = vmatprep.subr.bf16.mxu0 %v1748
      %2204 = vmatpush1.bf16.msra.mxu0 %v1747
      %2205 = vmatprep.subr.bf16.mxu0 %v1752
      %2206 = vmatpush1.bf16.msra.mxu0 %v1751
      %2207 = vmatprep.subr.bf16.mxu0 %v1756
      %2208 = vmatpush1.bf16.msra.mxu0 %v1755
      %2209 = vmatprep.mubr.bf16.mxu0 %v900
      %2210 = vmatmul.mubr.bf16.gmra.mrb[0].mxu0 %v899
      %v2211 = vpop.f32.mrb[0].mxu0
      %v2212 = vadd.f32 %v2099, %v2211
      %v2213 = vpop.f32.mrb[0].mxu0
      %v2214 = vadd.f32 %v2101, %v2213
      %v2215 = vpop.f32.mrb[0].mxu0
      %v2216 = vadd.f32 %v2103, %v2215
      %v2217 = vpop.f32.mrb[0].mxu0
      %v2218 = vadd.f32 %v2105, %v2217
      %2219 = vmatprep.mubr.bf16.mxu0 %v906
      %2220 = vmatmul.mubr.bf16.gmra.mrb[0].mxu0 %v905
      %v2221 = vpop.f32.mrb[0].mxu0
      %v2222 = vadd.f32 %v2109, %v2221
      %v2223 = vpop.f32.mrb[0].mxu0
      %v2224 = vadd.f32 %v2111, %v2223
      %v2225 = vpop.f32.mrb[0].mxu0
      %v2226 = vadd.f32 %v2113, %v2225
      %v2227 = vpop.f32.mrb[0].mxu0
      %v2228 = vadd.f32 %v2115, %v2227
      %2229 = vmatprep.mubr.bf16.mxu0 %v912
      %2230 = vmatmul.mubr.bf16.gmra.mrb[0].mxu0 %v911
      %v2231 = vpop.f32.mrb[0].mxu0
      %v2232 = vadd.f32 %v2119, %v2231
      %v2233 = vpop.f32.mrb[0].mxu0
      %v2234 = vadd.f32 %v2121, %v2233
      %v2235 = vpop.f32.mrb[0].mxu0
      %v2236 = vadd.f32 %v2123, %v2235
      %v2237 = vpop.f32.mrb[0].mxu0
      %v2238 = vadd.f32 %v2125, %v2237
      %2239 = vmatprep.mubr.bf16.mxu0 %v918
      %2240 = vmatmul.mubr.bf16.gmra.mrb[0].mxu0 %v917
      %v2241 = vpop.f32.mrb[0].mxu0
      %v2242 = vadd.f32 %v2129, %v2241
      %v2243 = vpop.f32.mrb[0].mxu0
      %v2244 = vadd.f32 %v2131, %v2243
      %v2245 = vpop.f32.mrb[0].mxu0
      %v2246 = vadd.f32 %v2133, %v2245
      %v2247 = vpop.f32.mrb[0].mxu0
      %v2248 = vadd.f32 %v2135, %v2247
      %2249 = vmatprep.mubr.bf16.mxu0 %v924
      %2250 = vmatmul.mubr.bf16.gmra.mrb[0].mxu0 %v923
      %v2251 = vpop.f32.mrb[0].mxu0
      %v2252 = vadd.f32 %v2139, %v2251
      %v2253 = vpop.f32.mrb[0].mxu0
      %v2254 = vadd.f32 %v2141, %v2253
      %v2255 = vpop.f32.mrb[0].mxu0
      %v2256 = vadd.f32 %v2143, %v2255
      %v2257 = vpop.f32.mrb[0].mxu0
      %v2258 = vadd.f32 %v2145, %v2257
      %2259 = vmatprep.mubr.bf16.mxu0 %v930
      %2260 = vmatmul.mubr.bf16.gmra.mrb[0].mxu0 %v929
      %v2261 = vpop.f32.mrb[0].mxu0
      %v2262 = vadd.f32 %v2149, %v2261
      %v2263 = vpop.f32.mrb[0].mxu0
      %v2264 = vadd.f32 %v2151, %v2263
      %v2265 = vpop.f32.mrb[0].mxu0
      %v2266 = vadd.f32 %v2153, %v2265
      %v2267 = vpop.f32.mrb[0].mxu0
      %v2268 = vadd.f32 %v2155, %v2267
      %2269 = vmatprep.mubr.bf16.mxu0 %v936
      %2270 = vmatmul.mubr.bf16.gmra.mrb[0].mxu0 %v935
      %v2271 = vpop.f32.mrb[0].mxu0
      %v2272 = vadd.f32 %v2159, %v2271
      %v2273 = vpop.f32.mrb[0].mxu0
      %v2274 = vadd.f32 %v2161, %v2273
      %v2275 = vpop.f32.mrb[0].mxu0
      %v2276 = vadd.f32 %v2163, %v2275
      %v2277 = vpop.f32.mrb[0].mxu0
      %v2278 = vadd.f32 %v2165, %v2277
      %2279 = vmatprep.mubr.bf16.mxu0 %v942
      %2280 = vmatmul.mubr.bf16.gmra.mrb[0].mxu0 %v941
      %v2281 = vpop.f32.mrb[0].mxu0
      %v2282 = vadd.f32 %v2169, %v2281
      %v2283 = vpop.f32.mrb[0].mxu0
      %v2284 = vadd.f32 %v2171, %v2283
      %v2285 = vpop.f32.mrb[0].mxu0
      %v2286 = vadd.f32 %v2173, %v2285
      %v2287 = vpop.f32.mrb[0].mxu0
      %v2288 = vadd.f32 %v2175, %v2287
      %2289 = vdwg.mxu0
      %2290 = vmatprep.subr.bf16.mxu0 %v1570
      %2291 = vmatpush1.bf16.msra.mxu0 %v1569
      %2292 = vmatprep.subr.bf16.mxu0 %v1574
      %2293 = vmatpush1.bf16.msra.mxu0 %v1573
      %2294 = vmatprep.subr.bf16.mxu0 %v1578
      %2295 = vmatpush1.bf16.msra.mxu0 %v1577
      %2296 = vmatprep.subr.bf16.mxu0 %v1582
      %2297 = vmatpush1.bf16.msra.mxu0 %v1581
      %2298 = vmatprep.subr.bf16.mxu0 %v1586
      %2299 = vmatpush1.bf16.msra.mxu0 %v1585
      %2300 = vmatprep.subr.bf16.mxu0 %v1590
      %2301 = vmatpush1.bf16.msra.mxu0 %v1589
      %2302 = vmatprep.subr.bf16.mxu0 %v1594
      %2303 = vmatpush1.bf16.msra.mxu0 %v1593
      %2304 = vmatprep.subr.bf16.mxu0 %v1598
      %2305 = vmatpush1.bf16.msra.mxu0 %v1597
      %2306 = vmatprep.subr.bf16.mxu0 %v1602
      %2307 = vmatpush1.bf16.msra.mxu0 %v1601
      %2308 = vmatprep.subr.bf16.mxu0 %v1606
      %2309 = vmatpush1.bf16.msra.mxu0 %v1605
      %2310 = vmatprep.subr.bf16.mxu0 %v1610
      %2311 = vmatpush1.bf16.msra.mxu0 %v1609
      %2312 = vmatprep.subr.bf16.mxu0 %v1614
      %2313 = vmatpush1.bf16.msra.mxu0 %v1613
      %2314 = vmatprep.subr.bf16.mxu0 %v1618
      %2315 = vmatpush1.bf16.msra.mxu0 %v1617
      %2316 = vmatprep.subr.bf16.mxu0 %v1622
      %2317 = vmatpush1.bf16.msra.mxu0 %v1621
      %2318 = vmatprep.subr.bf16.mxu0 %v1626
      %2319 = vmatpush1.bf16.msra.mxu0 %v1625
      %2320 = vmatprep.subr.bf16.mxu0 %v1630
      %2321 = vmatpush1.bf16.msra.mxu0 %v1629
      %2322 = vmatprep.mubr.bf16.mxu0 %v896
      %2323 = vmatmul.mubr.bf16.gmra.mrb[0].mxu0 %v895
      %v2324 = vpop.f32.mrb[0].mxu0
      %v2325 = vadd.f32 %v742, %v2324
      %v2326 = vpop.f32.mrb[0].mxu0
      %v2327 = vadd.f32 %v746, %v2326
      %v2328 = vpop.f32.mrb[0].mxu0
      %v2329 = vadd.f32 %v742, %v2328
      %v2330 = vpop.f32.mrb[0].mxu0
      %v2331 = vadd.f32 %v746, %v2330
      %2332 = vmatprep.mubr.bf16.mxu0 %v902
      %2333 = vmatmul.mubr.bf16.gmra.mrb[0].mxu0 %v901
      %v2334 = vpop.f32.mrb[0].mxu0
      %v2335 = vadd.f32 %v742, %v2334
      %v2336 = vpop.f32.mrb[0].mxu0
      %v2337 = vadd.f32 %v746, %v2336
      %v2338 = vpop.f32.mrb[0].mxu0
      %v2339 = vadd.f32 %v742, %v2338
      %v2340 = vpop.f32.mrb[0].mxu0
      %v2341 = vadd.f32 %v746, %v2340
      %2342 = vmatprep.mubr.bf16.mxu0 %v908
      %2343 = vmatmul.mubr.bf16.gmra.mrb[0].mxu0 %v907
      %v2344 = vpop.f32.mrb[0].mxu0
      %v2345 = vadd.f32 %v742, %v2344
      %v2346 = vpop.f32.mrb[0].mxu0
      %v2347 = vadd.f32 %v746, %v2346
      %v2348 = vpop.f32.mrb[0].mxu0
      %v2349 = vadd.f32 %v742, %v2348
      %v2350 = vpop.f32.mrb[0].mxu0
      %v2351 = vadd.f32 %v746, %v2350
      %2352 = vmatprep.mubr.bf16.mxu0 %v914
      %2353 = vmatmul.mubr.bf16.gmra.mrb[0].mxu0 %v913
      %v2354 = vpop.f32.mrb[0].mxu0
      %v2355 = vadd.f32 %v742, %v2354
      %v2356 = vpop.f32.mrb[0].mxu0
      %v2357 = vadd.f32 %v746, %v2356
      %v2358 = vpop.f32.mrb[0].mxu0
      %v2359 = vadd.f32 %v742, %v2358
      %v2360 = vpop.f32.mrb[0].mxu0
      %v2361 = vadd.f32 %v746, %v2360
      %2362 = vmatprep.mubr.bf16.mxu0 %v920
      %2363 = vmatmul.mubr.bf16.gmra.mrb[0].mxu0 %v919
      %v2364 = vpop.f32.mrb[0].mxu0
      %v2365 = vadd.f32 %v742, %v2364
      %v2366 = vpop.f32.mrb[0].mxu0
      %v2367 = vadd.f32 %v746, %v2366
      %v2368 = vpop.f32.mrb[0].mxu0
      %v2369 = vadd.f32 %v742, %v2368
      %v2370 = vpop.f32.mrb[0].mxu0
      %v2371 = vadd.f32 %v746, %v2370
      %2372 = vmatprep.mubr.bf16.mxu0 %v926
      %2373 = vmatmul.mubr.bf16.gmra.mrb[0].mxu0 %v925
      %v2374 = vpop.f32.mrb[0].mxu0
      %v2375 = vadd.f32 %v742, %v2374
      %v2376 = vpop.f32.mrb[0].mxu0
      %v2377 = vadd.f32 %v746, %v2376
      %v2378 = vpop.f32.mrb[0].mxu0
      %v2379 = vadd.f32 %v742, %v2378
      %v2380 = vpop.f32.mrb[0].mxu0
      %v2381 = vadd.f32 %v746, %v2380
      %2382 = vmatprep.mubr.bf16.mxu0 %v932
      %2383 = vmatmul.mubr.bf16.gmra.mrb[0].mxu0 %v931
      %v2384 = vpop.f32.mrb[0].mxu0
      %v2385 = vadd.f32 %v742, %v2384
      %v2386 = vpop.f32.mrb[0].mxu0
      %v2387 = vadd.f32 %v746, %v2386
      %v2388 = vpop.f32.mrb[0].mxu0
      %v2389 = vadd.f32 %v742, %v2388
      %v2390 = vpop.f32.mrb[0].mxu0
      %v2391 = vadd.f32 %v746, %v2390
      %2392 = vmatprep.mubr.bf16.mxu0 %v938
      %2393 = vmatmul.mubr.bf16.gmra.mrb[0].mxu0 %v937
      %v2394 = vpop.f32.mrb[0].mxu0
      %v2395 = vadd.f32 %v742, %v2394
      %v2396 = vpop.f32.mrb[0].mxu0
      %v2397 = vadd.f32 %v746, %v2396
      %v2398 = vpop.f32.mrb[0].mxu0
      %v2399 = vadd.f32 %v742, %v2398
      %v2400 = vpop.f32.mrb[0].mxu0
      %v2401 = vadd.f32 %v746, %v2400
      %2402 = vdwg.mxu0
      %2403 = vmatprep.subr.bf16.mxu0 %v1634
      %2404 = vmatpush1.bf16.msra.mxu0 %v1633
      %2405 = vmatprep.subr.bf16.mxu0 %v1638
      %2406 = vmatpush1.bf16.msra.mxu0 %v1637
      %2407 = vmatprep.subr.bf16.mxu0 %v1642
      %2408 = vmatpush1.bf16.msra.mxu0 %v1641
      %2409 = vmatprep.subr.bf16.mxu0 %v1646
      %2410 = vmatpush1.bf16.msra.mxu0 %v1645
      %2411 = vmatprep.subr.bf16.mxu0 %v1650
      %2412 = vmatpush1.bf16.msra.mxu0 %v1649
      %2413 = vmatprep.subr.bf16.mxu0 %v1654
      %2414 = vmatpush1.bf16.msra.mxu0 %v1653
      %2415 = vmatprep.subr.bf16.mxu0 %v1658
      %2416 = vmatpush1.bf16.msra.mxu0 %v1657
      %2417 = vmatprep.subr.bf16.mxu0 %v1662
      %2418 = vmatpush1.bf16.msra.mxu0 %v1661
      %2419 = vmatprep.subr.bf16.mxu0 %v1666
      %2420 = vmatpush1.bf16.msra.mxu0 %v1665
      %2421 = vmatprep.subr.bf16.mxu0 %v1670
      %2422 = vmatpush1.bf16.msra.mxu0 %v1669
      %2423 = vmatprep.subr.bf16.mxu0 %v1674
      %2424 = vmatpush1.bf16.msra.mxu0 %v1673
      %2425 = vmatprep.subr.bf16.mxu0 %v1678
      %2426 = vmatpush1.bf16.msra.mxu0 %v1677
      %2427 = vmatprep.subr.bf16.mxu0 %v1682
      %2428 = vmatpush1.bf16.msra.mxu0 %v1681
      %2429 = vmatprep.subr.bf16.mxu0 %v1686
      %2430 = vmatpush1.bf16.msra.mxu0 %v1685
      %2431 = vmatprep.subr.bf16.mxu0 %v1690
      %2432 = vmatpush1.bf16.msra.mxu0 %v1689
      %2433 = vmatprep.subr.bf16.mxu0 %v1694
      %2434 = vmatpush1.bf16.msra.mxu0 %v1693
      %2435 = vmatprep.mubr.bf16.mxu0 %v898
      %2436 = vmatmul.mubr.bf16.gmra.mrb[0].mxu0 %v897
      %v2437 = vpop.f32.mrb[0].mxu0
      %v2438 = vadd.f32 %v2325, %v2437
      %v2439 = vpop.f32.mrb[0].mxu0
      %v2440 = vadd.f32 %v2327, %v2439
      %v2441 = vpop.f32.mrb[0].mxu0
      %v2442 = vadd.f32 %v2329, %v2441
      %v2443 = vpop.f32.mrb[0].mxu0
      %v2444 = vadd.f32 %v2331, %v2443
      %2445 = vmatprep.mubr.bf16.mxu0 %v904
      %2446 = vmatmul.mubr.bf16.gmra.mrb[0].mxu0 %v903
      %v2447 = vpop.f32.mrb[0].mxu0
      %v2448 = vadd.f32 %v2335, %v2447
      %v2449 = vpop.f32.mrb[0].mxu0
      %v2450 = vadd.f32 %v2337, %v2449
      %v2451 = vpop.f32.mrb[0].mxu0
      %v2452 = vadd.f32 %v2339, %v2451
      %v2453 = vpop.f32.mrb[0].mxu0
      %v2454 = vadd.f32 %v2341, %v2453
      %2455 = vmatprep.mubr.bf16.mxu0 %v910
      %2456 = vmatmul.mubr.bf16.gmra.mrb[0].mxu0 %v909
      %v2457 = vpop.f32.mrb[0].mxu0
      %v2458 = vadd.f32 %v2345, %v2457
      %v2459 = vpop.f32.mrb[0].mxu0
      %v2460 = vadd.f32 %v2347, %v2459
      %v2461 = vpop.f32.mrb[0].mxu0
      %v2462 = vadd.f32 %v2349, %v2461
      %v2463 = vpop.f32.mrb[0].mxu0
      %v2464 = vadd.f32 %v2351, %v2463
      %2465 = vmatprep.mubr.bf16.mxu0 %v916
      %2466 = vmatmul.mubr.bf16.gmra.mrb[0].mxu0 %v915
      %v2467 = vpop.f32.mrb[0].mxu0
      %v2468 = vadd.f32 %v2355, %v2467
      %v2469 = vpop.f32.mrb[0].mxu0
      %v2470 = vadd.f32 %v2357, %v2469
      %v2471 = vpop.f32.mrb[0].mxu0
      %v2472 = vadd.f32 %v2359, %v2471
      %v2473 = vpop.f32.mrb[0].mxu0
      %v2474 = vadd.f32 %v2361, %v2473
      %2475 = vmatprep.mubr.bf16.mxu0 %v922
      %2476 = vmatmul.mubr.bf16.gmra.mrb[0].mxu0 %v921
      %v2477 = vpop.f32.mrb[0].mxu0
      %v2478 = vadd.f32 %v2365, %v2477
      %v2479 = vpop.f32.mrb[0].mxu0
      %v2480 = vadd.f32 %v2367, %v2479
      %v2481 = vpop.f32.mrb[0].mxu0
      %v2482 = vadd.f32 %v2369, %v2481
      %v2483 = vpop.f32.mrb[0].mxu0
      %v2484 = vadd.f32 %v2371, %v2483
      %2485 = vmatprep.mubr.bf16.mxu0 %v928
      %2486 = vmatmul.mubr.bf16.gmra.mrb[0].mxu0 %v927
      %v2487 = vpop.f32.mrb[0].mxu0
      %v2488 = vadd.f32 %v2375, %v2487
      %v2489 = vpop.f32.mrb[0].mxu0
      %v2490 = vadd.f32 %v2377, %v2489
      %v2491 = vpop.f32.mrb[0].mxu0
      %v2492 = vadd.f32 %v2379, %v2491
      %v2493 = vpop.f32.mrb[0].mxu0
      %v2494 = vadd.f32 %v2381, %v2493
      %2495 = vmatprep.mubr.bf16.mxu0 %v934
      %2496 = vmatmul.mubr.bf16.gmra.mrb[0].mxu0 %v933
      %v2497 = vpop.f32.mrb[0].mxu0
      %v2498 = vadd.f32 %v2385, %v2497
      %v2499 = vpop.f32.mrb[0].mxu0
      %v2500 = vadd.f32 %v2387, %v2499
      %v2501 = vpop.f32.mrb[0].mxu0
      %v2502 = vadd.f32 %v2389, %v2501
      %v2503 = vpop.f32.mrb[0].mxu0
      %v2504 = vadd.f32 %v2391, %v2503
      %2505 = vmatprep.mubr.bf16.mxu0 %v940
      %2506 = vmatmul.mubr.bf16.gmra.mrb[0].mxu0 %v939
      %v2507 = vpop.f32.mrb[0].mxu0
      %v2508 = vadd.f32 %v2395, %v2507
      %v2509 = vpop.f32.mrb[0].mxu0
      %v2510 = vadd.f32 %v2397, %v2509
      %v2511 = vpop.f32.mrb[0].mxu0
      %v2512 = vadd.f32 %v2399, %v2511
      %v2513 = vpop.f32.mrb[0].mxu0
      %v2514 = vadd.f32 %v2401, %v2513
      %2515 = vdwg.mxu0
      %2516 = vmatprep.subr.bf16.mxu0 %v1698
      %2517 = vmatpush1.bf16.msra.mxu0 %v1697
      %2518 = vmatprep.subr.bf16.mxu0 %v1702
      %2519 = vmatpush1.bf16.msra.mxu0 %v1701
      %2520 = vmatprep.subr.bf16.mxu0 %v1706
      %2521 = vmatpush1.bf16.msra.mxu0 %v1705
      %2522 = vmatprep.subr.bf16.mxu0 %v1710
      %2523 = vmatpush1.bf16.msra.mxu0 %v1709
      %2524 = vmatprep.subr.bf16.mxu0 %v1714
      %2525 = vmatpush1.bf16.msra.mxu0 %v1713
      %2526 = vmatprep.subr.bf16.mxu0 %v1718
      %2527 = vmatpush1.bf16.msra.mxu0 %v1717
      %2528 = vmatprep.subr.bf16.mxu0 %v1722
      %2529 = vmatpush1.bf16.msra.mxu0 %v1721
      %2530 = vmatprep.subr.bf16.mxu0 %v1726
      %2531 = vmatpush1.bf16.msra.mxu0 %v1725
      %2532 = vmatprep.subr.bf16.mxu0 %v1730
      %2533 = vmatpush1.bf16.msra.mxu0 %v1729
      %2534 = vmatprep.subr.bf16.mxu0 %v1734
      %2535 = vmatpush1.bf16.msra.mxu0 %v1733
      %2536 = vmatprep.subr.bf16.mxu0 %v1738
      %2537 = vmatpush1.bf16.msra.mxu0 %v1737
      %2538 = vmatprep.subr.bf16.mxu0 %v1742
      %2539 = vmatpush1.bf16.msra.mxu0 %v1741
      %2540 = vmatprep.subr.bf16.mxu0 %v1746
      %2541 = vmatpush1.bf16.msra.mxu0 %v1745
      %2542 = vmatprep.subr.bf16.mxu0 %v1750
      %2543 = vmatpush1.bf16.msra.mxu0 %v1749
      %2544 = vmatprep.subr.bf16.mxu0 %v1754
      %2545 = vmatpush1.bf16.msra.mxu0 %v1753
      %2546 = vmatprep.subr.bf16.mxu0 %v1758
      %2547 = vmatpush1.bf16.msra.mxu0 %v1757
      %2548 = vmatprep.mubr.bf16.mxu0 %v900
      %2549 = vmatmul.mubr.bf16.gmra.mrb[0].mxu0 %v899
      %v2550 = vpop.f32.mrb[0].mxu0
      %v2551 = vadd.f32 %v2438, %v2550
      %v2552 = vpop.f32.mrb[0].mxu0
      %v2553 = vadd.f32 %v2440, %v2552
      %v2554 = vpop.f32.mrb[0].mxu0
      %v2555 = vadd.f32 %v2442, %v2554
      %v2556 = vpop.f32.mrb[0].mxu0
      %v2557 = vadd.f32 %v2444, %v2556
      %2558 = vmatprep.mubr.bf16.mxu0 %v906
      %2559 = vmatmul.mubr.bf16.gmra.mrb[0].mxu0 %v905
      %v2560 = vpop.f32.mrb[0].mxu0
      %v2561 = vadd.f32 %v2448, %v2560
      %v2562 = vpop.f32.mrb[0].mxu0
      %v2563 = vadd.f32 %v2450, %v2562
      %v2564 = vpop.f32.mrb[0].mxu0
      %v2565 = vadd.f32 %v2452, %v2564
      %v2566 = vpop.f32.mrb[0].mxu0
      %v2567 = vadd.f32 %v2454, %v2566
      %2568 = vmatprep.mubr.bf16.mxu0 %v912
      %2569 = vmatmul.mubr.bf16.gmra.mrb[0].mxu0 %v911
      %v2570 = vpop.f32.mrb[0].mxu0
      %v2571 = vadd.f32 %v2458, %v2570
      %v2572 = vpop.f32.mrb[0].mxu0
      %v2573 = vadd.f32 %v2460, %v2572
      %v2574 = vpop.f32.mrb[0].mxu0
      %v2575 = vadd.f32 %v2462, %v2574
      %v2576 = vpop.f32.mrb[0].mxu0
      %v2577 = vadd.f32 %v2464, %v2576
      %2578 = vmatprep.mubr.bf16.mxu0 %v918
      %2579 = vmatmul.mubr.bf16.gmra.mrb[0].mxu0 %v917
      %v2580 = vpop.f32.mrb[0].mxu0
      %v2581 = vadd.f32 %v2468, %v2580
      %v2582 = vpop.f32.mrb[0].mxu0
      %v2583 = vadd.f32 %v2470, %v2582
      %v2584 = vpop.f32.mrb[0].mxu0
      %v2585 = vadd.f32 %v2472, %v2584
      %v2586 = vpop.f32.mrb[0].mxu0
      %v2587 = vadd.f32 %v2474, %v2586
      %2588 = vmatprep.mubr.bf16.mxu0 %v924
      %2589 = vmatmul.mubr.bf16.gmra.mrb[0].mxu0 %v923
      %v2590 = vpop.f32.mrb[0].mxu0
      %v2591 = vadd.f32 %v2478, %v2590
      %v2592 = vpop.f32.mrb[0].mxu0
      %v2593 = vadd.f32 %v2480, %v2592
      %v2594 = vpop.f32.mrb[0].mxu0
      %v2595 = vadd.f32 %v2482, %v2594
      %v2596 = vpop.f32.mrb[0].mxu0
      %v2597 = vadd.f32 %v2484, %v2596
      %2598 = vmatprep.mubr.bf16.mxu0 %v930
      %2599 = vmatmul.mubr.bf16.gmra.mrb[0].mxu0 %v929
      %v2600 = vpop.f32.mrb[0].mxu0
      %v2601 = vadd.f32 %v2488, %v2600
      %v2602 = vpop.f32.mrb[0].mxu0
      %v2603 = vadd.f32 %v2490, %v2602
      %v2604 = vpop.f32.mrb[0].mxu0
      %v2605 = vadd.f32 %v2492, %v2604
      %v2606 = vpop.f32.mrb[0].mxu0
      %v2607 = vadd.f32 %v2494, %v2606
      %2608 = vmatprep.mubr.bf16.mxu0 %v936
      %2609 = vmatmul.mubr.bf16.gmra.mrb[0].mxu0 %v935
      %v2610 = vpop.f32.mrb[0].mxu0
      %v2611 = vadd.f32 %v2498, %v2610
      %v2612 = vpop.f32.mrb[0].mxu0
      %v2613 = vadd.f32 %v2500, %v2612
      %v2614 = vpop.f32.mrb[0].mxu0
      %v2615 = vadd.f32 %v2502, %v2614
      %v2616 = vpop.f32.mrb[0].mxu0
      %v2617 = vadd.f32 %v2504, %v2616
      %2618 = vmatprep.mubr.bf16.mxu0 %v942
      %2619 = vmatmul.mubr.bf16.gmra.mrb[0].mxu0 %v941
      %v2620 = vpop.f32.mrb[0].mxu0
      %v2621 = vadd.f32 %v2508, %v2620
      %v2622 = vpop.f32.mrb[0].mxu0
      %v2623 = vadd.f32 %v2510, %v2622
      %v2624 = vpop.f32.mrb[0].mxu0
      %v2625 = vadd.f32 %v2512, %v2624
      %v2626 = vpop.f32.mrb[0].mxu0
      %v2627 = vadd.f32 %v2514, %v2626
      %2628 = vdwg.mxu0
      %v2629 = vmax.f32 %v2212, 0.0
      %v2630 = vmax.f32 %v2214, 0.0
      %v2631 = vmax.f32 %v2551, 0.0
      %v2632 = vmax.f32 %v2553, 0.0
      %v2633 = vmax.f32 %v2216, 0.0
      %v2634 = vmax.f32 %v2218, 0.0
      %v2635 = vmax.f32 %v2555, 0.0
      %v2636 = vmax.f32 %v2557, 0.0
      %v2637 = vmax.f32 %v2222, 0.0
      %v2638 = vmax.f32 %v2224, 0.0
      %v2639 = vmax.f32 %v2561, 0.0
      %v2640 = vmax.f32 %v2563, 0.0
      %v2641 = vmax.f32 %v2226, 0.0
      %v2642 = vmax.f32 %v2228, 0.0
      %v2643 = vmax.f32 %v2565, 0.0
      %v2644 = vmax.f32 %v2567, 0.0
      %v2645 = vmax.f32 %v2232, 0.0
      %v2646 = vmax.f32 %v2234, 0.0
      %v2647 = vmax.f32 %v2571, 0.0
      %v2648 = vmax.f32 %v2573, 0.0
      %v2649 = vmax.f32 %v2236, 0.0
      %v2650 = vmax.f32 %v2238, 0.0
      %v2651 = vmax.f32 %v2575, 0.0
      %v2652 = vmax.f32 %v2577, 0.0
      %v2653 = vmax.f32 %v2242, 0.0
      %v2654 = vmax.f32 %v2244, 0.0
      %v2655 = vmax.f32 %v2581, 0.0
      %v2656 = vmax.f32 %v2583, 0.0
      %v2657 = vmax.f32 %v2246, 0.0
      %v2658 = vmax.f32 %v2248, 0.0
      %v2659 = vmax.f32 %v2585, 0.0
      %v2660 = vmax.f32 %v2587, 0.0
      %v2661 = vmax.f32 %v2252, 0.0
      %v2662 = vmax.f32 %v2254, 0.0
      %v2663 = vmax.f32 %v2591, 0.0
      %v2664 = vmax.f32 %v2593, 0.0
      %v2665 = vmax.f32 %v2256, 0.0
      %v2666 = vmax.f32 %v2258, 0.0
      %v2667 = vmax.f32 %v2595, 0.0
      %v2668 = vmax.f32 %v2597, 0.0
      %v2669 = vmax.f32 %v2262, 0.0
      %v2670 = vmax.f32 %v2264, 0.0
      %v2671 = vmax.f32 %v2601, 0.0
      %v2672 = vmax.f32 %v2603, 0.0
      %v2673 = vmax.f32 %v2266, 0.0
      %v2674 = vmax.f32 %v2268, 0.0
      %v2675 = vmax.f32 %v2605, 0.0
      %v2676 = vmax.f32 %v2607, 0.0
      %v2677 = vmax.f32 %v2272, 0.0
      %v2678 = vmax.f32 %v2274, 0.0
      %v2679 = vmax.f32 %v2611, 0.0
      %v2680 = vmax.f32 %v2613, 0.0
      %v2681 = vmax.f32 %v2276, 0.0
      %v2682 = vmax.f32 %v2278, 0.0
      %v2683 = vmax.f32 %v2615, 0.0
      %v2684 = vmax.f32 %v2617, 0.0
      %v2685 = vmax.f32 %v2282, 0.0
      %v2686 = vmax.f32 %v2284, 0.0
      %v2687 = vmax.f32 %v2621, 0.0
      %v2688 = vmax.f32 %v2623, 0.0
      %v2689 = vmax.f32 %v2286, 0.0
      %v2690 = vmax.f32 %v2288, 0.0
      %v2691 = vmax.f32 %v2625, 0.0
      %v2692 = vmax.f32 %v2627, 0.0
      %v2693 = vpack.c.bf16 %v2633, %v2629
      %v2694 = vpack.c.bf16 %v2634, %v2630
      %v2695 = vpack.c.bf16 %v2635, %v2631
      %v2696 = vpack.c.bf16 %v2636, %v2632
      %v2697 = vpack.c.bf16 %v2641, %v2637
      %v2698 = vpack.c.bf16 %v2642, %v2638
      %v2699 = vpack.c.bf16 %v2643, %v2639
      %v2700 = vpack.c.bf16 %v2644, %v2640
      %v2701 = vpack.c.bf16 %v2649, %v2645
      %v2702 = vpack.c.bf16 %v2650, %v2646
      %v2703 = vpack.c.bf16 %v2651, %v2647
      %v2704 = vpack.c.bf16 %v2652, %v2648
      %v2705 = vpack.c.bf16 %v2657, %v2653
      %v2706 = vpack.c.bf16 %v2658, %v2654
      %v2707 = vpack.c.bf16 %v2659, %v2655
      %v2708 = vpack.c.bf16 %v2660, %v2656
      %v2709 = vpack.c.bf16 %v2665, %v2661
      %v2710 = vpack.c.bf16 %v2666, %v2662
      %v2711 = vpack.c.bf16 %v2667, %v2663
      %v2712 = vpack.c.bf16 %v2668, %v2664
      %v2713 = vpack.c.bf16 %v2673, %v2669
      %v2714 = vpack.c.bf16 %v2674, %v2670
      %v2715 = vpack.c.bf16 %v2675, %v2671
      %v2716 = vpack.c.bf16 %v2676, %v2672
      %v2717 = vpack.c.bf16 %v2681, %v2677
      %v2718 = vpack.c.bf16 %v2682, %v2678
      %v2719 = vpack.c.bf16 %v2683, %v2679
      %v2720 = vpack.c.bf16 %v2684, %v2680
      %v2721 = vpack.c.bf16 %v2689, %v2685
      %v2722 = vpack.c.bf16 %v2690, %v2686
      %v2723 = vpack.c.bf16 %v2691, %v2687
      %v2724 = vpack.c.bf16 %v2692, %v2688
      %s2725 = smul.u32 %s26, 32
      %s2726 = smul.addr %s2725, 8
      %s2727 = scalar_lea.vmem [#allocation2], %s2726
      %2728 = vst [vmem:[%s2727] sm:$0xff] %v2693
      %2729 = vst [vmem:[%s2727 + $0x8] sm:$0xff] %v2694
      %2730 = vst [vmem:[%s2727 + $0x10] sm:$0xff] %v2695
      %2731 = vst [vmem:[%s2727 + $0x18] sm:$0xff] %v2696
      %2732 = vst [vmem:[%s2727 + $0x20] sm:$0xff] %v2697
      %2733 = vst [vmem:[%s2727 + $0x28] sm:$0xff] %v2698
      %2734 = vst [vmem:[%s2727 + $0x30] sm:$0xff] %v2699
      %2735 = vst [vmem:[%s2727 + $0x38] sm:$0xff] %v2700
      %2736 = vst [vmem:[%s2727 + $0x40] sm:$0xff] %v2701
      %2737 = vst [vmem:[%s2727 + $0x48] sm:$0xff] %v2702
      %2738 = vst [vmem:[%s2727 + $0x50] sm:$0xff] %v2703
      %2739 = vst [vmem:[%s2727 + $0x58] sm:$0xff] %v2704
      %2740 = vst [vmem:[%s2727 + $0x60] sm:$0xff] %v2705
      %2741 = vst [vmem:[%s2727 + $0x68] sm:$0xff] %v2706
      %2742 = vst [vmem:[%s2727 + $0x70] sm:$0xff] %v2707
      %2743 = vst [vmem:[%s2727 + $0x78] sm:$0xff] %v2708
      %2744 = vst [vmem:[%s2727 + $0x80] sm:$0xff] %v2709
      %2745 = vst [vmem:[%s2727 + $0x88] sm:$0xff] %v2710
      %2746 = vst [vmem:[%s2727 + $0x90] sm:$0xff] %v2711
      %2747 = vst [vmem:[%s2727 + $0x98] sm:$0xff] %v2712
      %2748 = vst [vmem:[%s2727 + $0xa0] sm:$0xff] %v2713
      %2749 = vst [vmem:[%s2727 + $0xa8] sm:$0xff] %v2714
      %2750 = vst [vmem:[%s2727 + $0xb0] sm:$0xff] %v2715
      %2751 = vst [vmem:[%s2727 + $0xb8] sm:$0xff] %v2716
      %2752 = vst [vmem:[%s2727 + $0xc0] sm:$0xff] %v2717
      %2753 = vst [vmem:[%s2727 + $0xc8] sm:$0xff] %v2718
      %2754 = vst [vmem:[%s2727 + $0xd0] sm:$0xff] %v2719
      %2755 = vst [vmem:[%s2727 + $0xd8] sm:$0xff] %v2720
      %2756 = vst [vmem:[%s2727 + $0xe0] sm:$0xff] %v2721
      %2757 = vst [vmem:[%s2727 + $0xe8] sm:$0xff] %v2722
      %2758 = vst [vmem:[%s2727 + $0xf0] sm:$0xff] %v2723
      %2759 = vst [vmem:[%s2727 + $0xf8] sm:$0xff] %v2724
      %v2760 = vld [vmem:[%s3] sm:$0xff]
      %v2761 = vld [vmem:[%s3 + $0x8] sm:$0xff]
      %v2762 = vld [vmem:[%s3 + $0x10] sm:$0xff]
      %v2763 = vld [vmem:[%s3 + $0x18] sm:$0xff]
      %v2764 = vld [vmem:[%s3 + $0x20] sm:$0xff]
      %v2765 = vld [vmem:[%s3 + $0x28] sm:$0xff]
      %v2766 = vld [vmem:[%s3 + $0x30] sm:$0xff]
      %v2767 = vld [vmem:[%s3 + $0x38] sm:$0xff]
      %v2768 = vld [vmem:[%s3 + $0x40] sm:$0xff]
      %v2769 = vld [vmem:[%s3 + $0x48] sm:$0xff]
      %v2770 = vld [vmem:[%s3 + $0x50] sm:$0xff]
      %v2771 = vld [vmem:[%s3 + $0x58] sm:$0xff]
      %v2772 = vld [vmem:[%s3 + $0x60] sm:$0xff]
      %v2773 = vld [vmem:[%s3 + $0x68] sm:$0xff]
      %v2774 = vld [vmem:[%s3 + $0x70] sm:$0xff]
      %v2775 = vld [vmem:[%s3 + $0x78] sm:$0xff]
      %v2776 = vld [vmem:[%s3 + $0x80] sm:$0xff]
      %v2777 = vld [vmem:[%s3 + $0x88] sm:$0xff]
      %v2778 = vld [vmem:[%s3 + $0x90] sm:$0xff]
      %v2779 = vld [vmem:[%s3 + $0x98] sm:$0xff]
      %v2780 = vld [vmem:[%s3 + $0xa0] sm:$0xff]
      %v2781 = vld [vmem:[%s3 + $0xa8] sm:$0xff]
      %v2782 = vld [vmem:[%s3 + $0xb0] sm:$0xff]
      %v2783 = vld [vmem:[%s3 + $0xb8] sm:$0xff]
      %v2784 = vld [vmem:[%s3 + $0xc0] sm:$0xff]
      %v2785 = vld [vmem:[%s3 + $0xc8] sm:$0xff]
      %v2786 = vld [vmem:[%s3 + $0xd0] sm:$0xff]
      %v2787 = vld [vmem:[%s3 + $0xd8] sm:$0xff]
      %v2788 = vld [vmem:[%s3 + $0xe0] sm:$0xff]
      %v2789 = vld [vmem:[%s3 + $0xe8] sm:$0xff]
      %v2790 = vld [vmem:[%s3 + $0xf0] sm:$0xff]
      %v2791 = vld [vmem:[%s3 + $0xf8] sm:$0xff]
      %v2792 = vld [vmem:[%s3 + $0x100] sm:$0xff]
      %v2793 = vld [vmem:[%s3 + $0x108] sm:$0xff]
      %v2794 = vld [vmem:[%s3 + $0x110] sm:$0xff]
      %v2795 = vld [vmem:[%s3 + $0x118] sm:$0xff]
      %v2796 = vld [vmem:[%s3 + $0x120] sm:$0xff]
      %v2797 = vld [vmem:[%s3 + $0x128] sm:$0xff]
      %v2798 = vld [vmem:[%s3 + $0x130] sm:$0xff]
      %v2799 = vld [vmem:[%s3 + $0x138] sm:$0xff]
      %v2800 = vld [vmem:[%s3 + $0x140] sm:$0xff]
      %v2801 = vld [vmem:[%s3 + $0x148] sm:$0xff]
      %v2802 = vld [vmem:[%s3 + $0x150] sm:$0xff]
      %v2803 = vld [vmem:[%s3 + $0x158] sm:$0xff]
      %v2804 = vld [vmem:[%s3 + $0x160] sm:$0xff]
      %v2805 = vld [vmem:[%s3 + $0x168] sm:$0xff]
      %v2806 = vld [vmem:[%s3 + $0x170] sm:$0xff]
      %v2807 = vld [vmem:[%s3 + $0x178] sm:$0xff]
      %v2808 = vld [vmem:[%s3 + $0x180] sm:$0xff]
      %v2809 = vld [vmem:[%s3 + $0x188] sm:$0xff]
      %v2810 = vld [vmem:[%s3 + $0x190] sm:$0xff]
      %v2811 = vld [vmem:[%s3 + $0x198] sm:$0xff]
      %v2812 = vld [vmem:[%s3 + $0x1a0] sm:$0xff]
      %v2813 = vld [vmem:[%s3 + $0x1a8] sm:$0xff]
      %v2814 = vld [vmem:[%s3 + $0x1b0] sm:$0xff]
      %v2815 = vld [vmem:[%s3 + $0x1b8] sm:$0xff]
      %v2816 = vld [vmem:[%s3 + $0x1c0] sm:$0xff]
      %v2817 = vld [vmem:[%s3 + $0x1c8] sm:$0xff]
      %v2818 = vld [vmem:[%s3 + $0x1d0] sm:$0xff]
      %v2819 = vld [vmem:[%s3 + $0x1d8] sm:$0xff]
      %v2820 = vld [vmem:[%s3 + $0x1e0] sm:$0xff]
      %v2821 = vld [vmem:[%s3 + $0x1e8] sm:$0xff]
      %v2822 = vld [vmem:[%s3 + $0x1f0] sm:$0xff]
      %v2823 = vld [vmem:[%s3 + $0x1f8] sm:$0xff]
      %v2824 = vld [vmem:[%s3 + $0x200] sm:$0xff]
      %v2825 = vld [vmem:[%s3 + $0x208] sm:$0xff]
      %v2826 = vld [vmem:[%s3 + $0x210] sm:$0xff]
      %v2827 = vld [vmem:[%s3 + $0x218] sm:$0xff]
      %v2828 = vld [vmem:[%s3 + $0x220] sm:$0xff]
      %v2829 = vld [vmem:[%s3 + $0x228] sm:$0xff]
      %v2830 = vld [vmem:[%s3 + $0x230] sm:$0xff]
      %v2831 = vld [vmem:[%s3 + $0x238] sm:$0xff]
      %v2832 = vld [vmem:[%s3 + $0x240] sm:$0xff]
      %v2833 = vld [vmem:[%s3 + $0x248] sm:$0xff]
      %v2834 = vld [vmem:[%s3 + $0x250] sm:$0xff]
      %v2835 = vld [vmem:[%s3 + $0x258] sm:$0xff]
      %v2836 = vld [vmem:[%s3 + $0x260] sm:$0xff]
      %v2837 = vld [vmem:[%s3 + $0x268] sm:$0xff]
      %v2838 = vld [vmem:[%s3 + $0x270] sm:$0xff]
      %v2839 = vld [vmem:[%s3 + $0x278] sm:$0xff]
      %v2840 = vld [vmem:[%s3 + $0x280] sm:$0xff]
      %v2841 = vld [vmem:[%s3 + $0x288] sm:$0xff]
      %v2842 = vld [vmem:[%s3 + $0x290] sm:$0xff]
      %v2843 = vld [vmem:[%s3 + $0x298] sm:$0xff]
      %v2844 = vld [vmem:[%s3 + $0x2a0] sm:$0xff]
      %v2845 = vld [vmem:[%s3 + $0x2a8] sm:$0xff]
      %v2846 = vld [vmem:[%s3 + $0x2b0] sm:$0xff]
      %v2847 = vld [vmem:[%s3 + $0x2b8] sm:$0xff]
      %v2848 = vld [vmem:[%s3 + $0x2c0] sm:$0xff]
      %v2849 = vld [vmem:[%s3 + $0x2c8] sm:$0xff]
      %v2850 = vld [vmem:[%s3 + $0x2d0] sm:$0xff]
      %v2851 = vld [vmem:[%s3 + $0x2d8] sm:$0xff]
      %v2852 = vld [vmem:[%s3 + $0x2e0] sm:$0xff]
      %v2853 = vld [vmem:[%s3 + $0x2e8] sm:$0xff]
      %v2854 = vld [vmem:[%s3 + $0x2f0] sm:$0xff]
      %v2855 = vld [vmem:[%s3 + $0x2f8] sm:$0xff]
      %v2856 = vld [vmem:[%s4] sm:$0x3]
      %v2858 = vlaneseq
      %v2859 = vshrl.u32 %v2858, 7
      %v2860 = vsub.s32 0, %v2859
      %v2861 = vrot.slane %v2856, %v2860
      %v2862 = vlaneseq
      %v2863 = vshrl.u32 %v2862, 7
      %v2864 = vsub.s32 1, %v2863
      %v2865 = vrot.slane %v2856, %v2864
      %v2964 = vunpack.c.l.b16 %v2760
      %v2965 = vunpack.c.h.b16 %v2760
      %v2966 = vunpack.c.l.b16 %v2761
      %v2967 = vunpack.c.h.b16 %v2761
      %v2968 = vunpack.c.l.b16 %v2762
      %v2969 = vunpack.c.h.b16 %v2762
      %v2970 = vunpack.c.l.b16 %v2763
      %v2971 = vunpack.c.h.b16 %v2763
      %v2972 = vunpack.c.l.b16 %v2764
      %v2973 = vunpack.c.h.b16 %v2764
      %v2974 = vunpack.c.l.b16 %v2765
      %v2975 = vunpack.c.h.b16 %v2765
      %v2976 = vunpack.c.l.b16 %v2766
      %v2977 = vunpack.c.h.b16 %v2766
      %v2978 = vunpack.c.l.b16 %v2767
      %v2979 = vunpack.c.h.b16 %v2767
      %v2980 = vunpack.c.l.b16 %v2768
      %v2981 = vunpack.c.h.b16 %v2768
      %v2982 = vunpack.c.l.b16 %v2769
      %v2983 = vunpack.c.h.b16 %v2769
      %v2984 = vunpack.c.l.b16 %v2770
      %v2985 = vunpack.c.h.b16 %v2770
      %v2986 = vunpack.c.l.b16 %v2771
      %v2987 = vunpack.c.h.b16 %v2771
      %v2988 = vunpack.c.l.b16 %v2772
      %v2989 = vunpack.c.h.b16 %v2772
      %v2990 = vunpack.c.l.b16 %v2773
      %v2991 = vunpack.c.h.b16 %v2773
      %v2992 = vunpack.c.l.b16 %v2774
      %v2993 = vunpack.c.h.b16 %v2774
      %v2994 = vunpack.c.l.b16 %v2775
      %v2995 = vunpack.c.h.b16 %v2775
      %v2996 = vunpack.c.l.b16 %v2776
      %v2997 = vunpack.c.h.b16 %v2776
      %v2998 = vunpack.c.l.b16 %v2777
      %v2999 = vunpack.c.h.b16 %v2777
      %v3000 = vunpack.c.l.b16 %v2778
      %v3001 = vunpack.c.h.b16 %v2778
      %v3002 = vunpack.c.l.b16 %v2779
      %v3003 = vunpack.c.h.b16 %v2779
      %v3004 = vunpack.c.l.b16 %v2780
      %v3005 = vunpack.c.h.b16 %v2780
      %v3006 = vunpack.c.l.b16 %v2781
      %v3007 = vunpack.c.h.b16 %v2781
      %v3008 = vunpack.c.l.b16 %v2782
      %v3009 = vunpack.c.h.b16 %v2782
      %v3010 = vunpack.c.l.b16 %v2783
      %v3011 = vunpack.c.h.b16 %v2783
      %v3012 = vunpack.c.l.b16 %v2784
      %v3013 = vunpack.c.h.b16 %v2784
      %v3014 = vunpack.c.l.b16 %v2785
      %v3015 = vunpack.c.h.b16 %v2785
      %v3016 = vunpack.c.l.b16 %v2786
      %v3017 = vunpack.c.h.b16 %v2786
      %v3018 = vunpack.c.l.b16 %v2787
      %v3019 = vunpack.c.h.b16 %v2787
      %v3020 = vunpack.c.l.b16 %v2788
      %v3021 = vunpack.c.h.b16 %v2788
      %v3022 = vunpack.c.l.b16 %v2789
      %v3023 = vunpack.c.h.b16 %v2789
      %v3024 = vunpack.c.l.b16 %v2790
      %v3025 = vunpack.c.h.b16 %v2790
      %v3026 = vunpack.c.l.b16 %v2791
      %v3027 = vunpack.c.h.b16 %v2791
      %v3028 = vunpack.c.l.b16 %v2792
      %v3029 = vunpack.c.h.b16 %v2792
      %v3030 = vunpack.c.l.b16 %v2793
      %v3031 = vunpack.c.h.b16 %v2793
      %v3032 = vunpack.c.l.b16 %v2794
      %v3033 = vunpack.c.h.b16 %v2794
      %v3034 = vunpack.c.l.b16 %v2795
      %v3035 = vunpack.c.h.b16 %v2795
      %v3036 = vunpack.c.l.b16 %v2796
      %v3037 = vunpack.c.h.b16 %v2796
      %v3038 = vunpack.c.l.b16 %v2797
      %v3039 = vunpack.c.h.b16 %v2797
      %v3040 = vunpack.c.l.b16 %v2798
      %v3041 = vunpack.c.h.b16 %v2798
      %v3042 = vunpack.c.l.b16 %v2799
      %v3043 = vunpack.c.h.b16 %v2799
      %v3044 = vunpack.c.l.b16 %v2800
      %v3045 = vunpack.c.h.b16 %v2800
      %v3046 = vunpack.c.l.b16 %v2801
      %v3047 = vunpack.c.h.b16 %v2801
      %v3048 = vunpack.c.l.b16 %v2802
      %v3049 = vunpack.c.h.b16 %v2802
      %v3050 = vunpack.c.l.b16 %v2803
      %v3051 = vunpack.c.h.b16 %v2803
      %v3052 = vunpack.c.l.b16 %v2804
      %v3053 = vunpack.c.h.b16 %v2804
      %v3054 = vunpack.c.l.b16 %v2805
      %v3055 = vunpack.c.h.b16 %v2805
      %v3056 = vunpack.c.l.b16 %v2806
      %v3057 = vunpack.c.h.b16 %v2806
      %v3058 = vunpack.c.l.b16 %v2807
      %v3059 = vunpack.c.h.b16 %v2807
      %v3060 = vunpack.c.l.b16 %v2808
      %v3061 = vunpack.c.h.b16 %v2808
      %v3062 = vunpack.c.l.b16 %v2809
      %v3063 = vunpack.c.h.b16 %v2809
      %v3064 = vunpack.c.l.b16 %v2810
      %v3065 = vunpack.c.h.b16 %v2810
      %v3066 = vunpack.c.l.b16 %v2811
      %v3067 = vunpack.c.h.b16 %v2811
      %v3068 = vunpack.c.l.b16 %v2812
      %v3069 = vunpack.c.h.b16 %v2812
      %v3070 = vunpack.c.l.b16 %v2813
      %v3071 = vunpack.c.h.b16 %v2813
      %v3072 = vunpack.c.l.b16 %v2814
      %v3073 = vunpack.c.h.b16 %v2814
      %v3074 = vunpack.c.l.b16 %v2815
      %v3075 = vunpack.c.h.b16 %v2815
      %v3076 = vunpack.c.l.b16 %v2816
      %v3077 = vunpack.c.h.b16 %v2816
      %v3078 = vunpack.c.l.b16 %v2817
      %v3079 = vunpack.c.h.b16 %v2817
      %v3080 = vunpack.c.l.b16 %v2818
      %v3081 = vunpack.c.h.b16 %v2818
      %v3082 = vunpack.c.l.b16 %v2819
      %v3083 = vunpack.c.h.b16 %v2819
      %v3084 = vunpack.c.l.b16 %v2820
      %v3085 = vunpack.c.h.b16 %v2820
      %v3086 = vunpack.c.l.b16 %v2821
      %v3087 = vunpack.c.h.b16 %v2821
      %v3088 = vunpack.c.l.b16 %v2822
      %v3089 = vunpack.c.h.b16 %v2822
      %v3090 = vunpack.c.l.b16 %v2823
      %v3091 = vunpack.c.h.b16 %v2823
      %v3092 = vunpack.c.l.b16 %v2824
      %v3093 = vunpack.c.h.b16 %v2824
      %v3094 = vunpack.c.l.b16 %v2825
      %v3095 = vunpack.c.h.b16 %v2825
      %v3096 = vunpack.c.l.b16 %v2826
      %v3097 = vunpack.c.h.b16 %v2826
      %v3098 = vunpack.c.l.b16 %v2827
      %v3099 = vunpack.c.h.b16 %v2827
      %v3100 = vunpack.c.l.b16 %v2828
      %v3101 = vunpack.c.h.b16 %v2828
      %v3102 = vunpack.c.l.b16 %v2829
      %v3103 = vunpack.c.h.b16 %v2829
      %v3104 = vunpack.c.l.b16 %v2830
      %v3105 = vunpack.c.h.b16 %v2830
      %v3106 = vunpack.c.l.b16 %v2831
      %v3107 = vunpack.c.h.b16 %v2831
      %v3108 = vunpack.c.l.b16 %v2832
      %v3109 = vunpack.c.h.b16 %v2832
      %v3110 = vunpack.c.l.b16 %v2833
      %v3111 = vunpack.c.h.b16 %v2833
      %v3112 = vunpack.c.l.b16 %v2834
      %v3113 = vunpack.c.h.b16 %v2834
      %v3114 = vunpack.c.l.b16 %v2835
      %v3115 = vunpack.c.h.b16 %v2835
      %v3116 = vunpack.c.l.b16 %v2836
      %v3117 = vunpack.c.h.b16 %v2836
      %v3118 = vunpack.c.l.b16 %v2837
      %v3119 = vunpack.c.h.b16 %v2837
      %v3120 = vunpack.c.l.b16 %v2838
      %v3121 = vunpack.c.h.b16 %v2838
      %v3122 = vunpack.c.l.b16 %v2839
      %v3123 = vunpack.c.h.b16 %v2839
      %v3124 = vunpack.c.l.b16 %v2840
      %v3125 = vunpack.c.h.b16 %v2840
      %v3126 = vunpack.c.l.b16 %v2841
      %v3127 = vunpack.c.h.b16 %v2841
      %v3128 = vunpack.c.l.b16 %v2842
      %v3129 = vunpack.c.h.b16 %v2842
      %v3130 = vunpack.c.l.b16 %v2843
      %v3131 = vunpack.c.h.b16 %v2843
      %v3132 = vunpack.c.l.b16 %v2844
      %v3133 = vunpack.c.h.b16 %v2844
      %v3134 = vunpack.c.l.b16 %v2845
      %v3135 = vunpack.c.h.b16 %v2845
      %v3136 = vunpack.c.l.b16 %v2846
      %v3137 = vunpack.c.h.b16 %v2846
      %v3138 = vunpack.c.l.b16 %v2847
      %v3139 = vunpack.c.h.b16 %v2847
      %v3140 = vunpack.c.l.b16 %v2848
      %v3141 = vunpack.c.h.b16 %v2848
      %v3142 = vunpack.c.l.b16 %v2849
      %v3143 = vunpack.c.h.b16 %v2849
      %v3144 = vunpack.c.l.b16 %v2850
      %v3145 = vunpack.c.h.b16 %v2850
      %v3146 = vunpack.c.l.b16 %v2851
      %v3147 = vunpack.c.h.b16 %v2851
      %v3148 = vunpack.c.l.b16 %v2852
      %v3149 = vunpack.c.h.b16 %v2852
      %v3150 = vunpack.c.l.b16 %v2853
      %v3151 = vunpack.c.h.b16 %v2853
      %v3152 = vunpack.c.l.b16 %v2854
      %v3153 = vunpack.c.h.b16 %v2854
      %v3154 = vunpack.c.l.b16 %v2855
      %v3155 = vunpack.c.h.b16 %v2855
      %v3156 = vpack.c.b16 %v2966, %v2964
      %v3157 = vpack.c.b16 %v2967, %v2965
      %v3158 = vpack.c.b16 %v2970, %v2968
      %v3159 = vpack.c.b16 %v2971, %v2969
      %v3160 = vpack.c.b16 %v2974, %v2972
      %v3161 = vpack.c.b16 %v2975, %v2973
      %v3162 = vpack.c.b16 %v2978, %v2976
      %v3163 = vpack.c.b16 %v2979, %v2977
      %v3164 = vpack.c.b16 %v2982, %v2980
      %v3165 = vpack.c.b16 %v2983, %v2981
      %v3166 = vpack.c.b16 %v2986, %v2984
      %v3167 = vpack.c.b16 %v2987, %v2985
      %v3168 = vpack.c.b16 %v2990, %v2988
      %v3169 = vpack.c.b16 %v2991, %v2989
      %v3170 = vpack.c.b16 %v2994, %v2992
      %v3171 = vpack.c.b16 %v2995, %v2993
      %v3172 = vpack.c.b16 %v2998, %v2996
      %v3173 = vpack.c.b16 %v2999, %v2997
      %v3174 = vpack.c.b16 %v3002, %v3000
      %v3175 = vpack.c.b16 %v3003, %v3001
      %v3176 = vpack.c.b16 %v3006, %v3004
      %v3177 = vpack.c.b16 %v3007, %v3005
      %v3178 = vpack.c.b16 %v3010, %v3008
      %v3179 = vpack.c.b16 %v3011, %v3009
      %v3180 = vpack.c.b16 %v3014, %v3012
      %v3181 = vpack.c.b16 %v3015, %v3013
      %v3182 = vpack.c.b16 %v3018, %v3016
      %v3183 = vpack.c.b16 %v3019, %v3017
      %v3184 = vpack.c.b16 %v3022, %v3020
      %v3185 = vpack.c.b16 %v3023, %v3021
      %v3186 = vpack.c.b16 %v3026, %v3024
      %v3187 = vpack.c.b16 %v3027, %v3025
      %v3188 = vpack.c.b16 %v3030, %v3028
      %v3189 = vpack.c.b16 %v3031, %v3029
      %v3190 = vpack.c.b16 %v3034, %v3032
      %v3191 = vpack.c.b16 %v3035, %v3033
      %v3192 = vpack.c.b16 %v3038, %v3036
      %v3193 = vpack.c.b16 %v3039, %v3037
      %v3194 = vpack.c.b16 %v3042, %v3040
      %v3195 = vpack.c.b16 %v3043, %v3041
      %v3196 = vpack.c.b16 %v3046, %v3044
      %v3197 = vpack.c.b16 %v3047, %v3045
      %v3198 = vpack.c.b16 %v3050, %v3048
      %v3199 = vpack.c.b16 %v3051, %v3049
      %v3200 = vpack.c.b16 %v3054, %v3052
      %v3201 = vpack.c.b16 %v3055, %v3053
      %v3202 = vpack.c.b16 %v3058, %v3056
      %v3203 = vpack.c.b16 %v3059, %v3057
      %v3204 = vpack.c.b16 %v3062, %v3060
      %v3205 = vpack.c.b16 %v3063, %v3061
      %v3206 = vpack.c.b16 %v3066, %v3064
      %v3207 = vpack.c.b16 %v3067, %v3065
      %v3208 = vpack.c.b16 %v3070, %v3068
      %v3209 = vpack.c.b16 %v3071, %v3069
      %v3210 = vpack.c.b16 %v3074, %v3072
      %v3211 = vpack.c.b16 %v3075, %v3073
      %v3212 = vpack.c.b16 %v3078, %v3076
      %v3213 = vpack.c.b16 %v3079, %v3077
      %v3214 = vpack.c.b16 %v3082, %v3080
      %v3215 = vpack.c.b16 %v3083, %v3081
      %v3216 = vpack.c.b16 %v3086, %v3084
      %v3217 = vpack.c.b16 %v3087, %v3085
      %v3218 = vpack.c.b16 %v3090, %v3088
      %v3219 = vpack.c.b16 %v3091, %v3089
      %v3220 = vpack.c.b16 %v3094, %v3092
      %v3221 = vpack.c.b16 %v3095, %v3093
      %v3222 = vpack.c.b16 %v3098, %v3096
      %v3223 = vpack.c.b16 %v3099, %v3097
      %v3224 = vpack.c.b16 %v3102, %v3100
      %v3225 = vpack.c.b16 %v3103, %v3101
      %v3226 = vpack.c.b16 %v3106, %v3104
      %v3227 = vpack.c.b16 %v3107, %v3105
      %v3228 = vpack.c.b16 %v3110, %v3108
      %v3229 = vpack.c.b16 %v3111, %v3109
      %v3230 = vpack.c.b16 %v3114, %v3112
      %v3231 = vpack.c.b16 %v3115, %v3113
      %v3232 = vpack.c.b16 %v3118, %v3116
      %v3233 = vpack.c.b16 %v3119, %v3117
      %v3234 = vpack.c.b16 %v3122, %v3120
      %v3235 = vpack.c.b16 %v3123, %v3121
      %v3236 = vpack.c.b16 %v3126, %v3124
      %v3237 = vpack.c.b16 %v3127, %v3125
      %v3238 = vpack.c.b16 %v3130, %v3128
      %v3239 = vpack.c.b16 %v3131, %v3129
      %v3240 = vpack.c.b16 %v3134, %v3132
      %v3241 = vpack.c.b16 %v3135, %v3133
      %v3242 = vpack.c.b16 %v3138, %v3136
      %v3243 = vpack.c.b16 %v3139, %v3137
      %v3244 = vpack.c.b16 %v3142, %v3140
      %v3245 = vpack.c.b16 %v3143, %v3141
      %v3246 = vpack.c.b16 %v3146, %v3144
      %v3247 = vpack.c.b16 %v3147, %v3145
      %v3248 = vpack.c.b16 %v3150, %v3148
      %v3249 = vpack.c.b16 %v3151, %v3149
      %v3250 = vpack.c.b16 %v3154, %v3152
      %v3251 = vpack.c.b16 %v3155, %v3153
      %3348 = vmatprep.subr.bf16.mxu0 %v3157
      %3349 = vmatpush1.bf16.msra.mxu0 %v3156
      %3350 = vmatprep.subr.bf16.mxu0 %v3159
      %3351 = vmatpush1.bf16.msra.mxu0 %v3158
      %3352 = vmatprep.subr.bf16.mxu0 %v3161
      %3353 = vmatpush1.bf16.msra.mxu0 %v3160
      %3354 = vmatprep.subr.bf16.mxu0 %v3163
      %3355 = vmatpush1.bf16.msra.mxu0 %v3162
      %3356 = vmatprep.subr.bf16.mxu0 %v3165
      %3357 = vmatpush1.bf16.msra.mxu0 %v3164
      %3358 = vmatprep.subr.bf16.mxu0 %v3167
      %3359 = vmatpush1.bf16.msra.mxu0 %v3166
      %3360 = vmatprep.subr.bf16.mxu0 %v3169
      %3361 = vmatpush1.bf16.msra.mxu0 %v3168
      %3362 = vmatprep.subr.bf16.mxu0 %v3171
      %3363 = vmatpush1.bf16.msra.mxu0 %v3170
      %3364 = vmatprep.subr.bf16.mxu0 %v3173
      %3365 = vmatpush1.bf16.msra.mxu0 %v3172
      %3366 = vmatprep.subr.bf16.mxu0 %v3175
      %3367 = vmatpush1.bf16.msra.mxu0 %v3174
      %3368 = vmatprep.subr.bf16.mxu0 %v3177
      %3369 = vmatpush1.bf16.msra.mxu0 %v3176
      %3370 = vmatprep.subr.bf16.mxu0 %v3179
      %3371 = vmatpush1.bf16.msra.mxu0 %v3178
      %3372 = vmatprep.subr.bf16.mxu0 %v3181
      %3373 = vmatpush1.bf16.msra.mxu0 %v3180
      %3374 = vmatprep.subr.bf16.mxu0 %v3183
      %3375 = vmatpush1.bf16.msra.mxu0 %v3182
      %3376 = vmatprep.subr.bf16.mxu0 %v3185
      %3377 = vmatpush1.bf16.msra.mxu0 %v3184
      %3378 = vmatprep.subr.bf16.mxu0 %v3187
      %3379 = vmatpush1.bf16.msra.mxu0 %v3186
      %3380 = vmatprep.mubr.bf16.mxu0 %v896
      %3381 = vmatmul.mubr.bf16.gmra.mrb[0].mxu0 %v895
      %v3382 = vpop.f32.mrb[0].mxu0
      %v3383 = vadd.f32 %v2861, %v3382
      %v3384 = vpop.f32.mrb[0].mxu0
      %v3385 = vadd.f32 %v2865, %v3384
      %v3386 = vpop.f32.mrb[0].mxu0
      %v3387 = vadd.f32 %v2861, %v3386
      %v3388 = vpop.f32.mrb[0].mxu0
      %v3389 = vadd.f32 %v2865, %v3388
      %3390 = vmatprep.mubr.bf16.mxu0 %v902
      %3391 = vmatmul.mubr.bf16.gmra.mrb[0].mxu0 %v901
      %v3392 = vpop.f32.mrb[0].mxu0
      %v3393 = vadd.f32 %v2861, %v3392
      %v3394 = vpop.f32.mrb[0].mxu0
      %v3395 = vadd.f32 %v2865, %v3394
      %v3396 = vpop.f32.mrb[0].mxu0
      %v3397 = vadd.f32 %v2861, %v3396
      %v3398 = vpop.f32.mrb[0].mxu0
      %v3399 = vadd.f32 %v2865, %v3398
      %3400 = vmatprep.mubr.bf16.mxu0 %v908
      %3401 = vmatmul.mubr.bf16.gmra.mrb[0].mxu0 %v907
      %v3402 = vpop.f32.mrb[0].mxu0
      %v3403 = vadd.f32 %v2861, %v3402
      %v3404 = vpop.f32.mrb[0].mxu0
      %v3405 = vadd.f32 %v2865, %v3404
      %v3406 = vpop.f32.mrb[0].mxu0
      %v3407 = vadd.f32 %v2861, %v3406
      %v3408 = vpop.f32.mrb[0].mxu0
      %v3409 = vadd.f32 %v2865, %v3408
      %3410 = vmatprep.mubr.bf16.mxu0 %v914
      %3411 = vmatmul.mubr.bf16.gmra.mrb[0].mxu0 %v913
      %v3412 = vpop.f32.mrb[0].mxu0
      %v3413 = vadd.f32 %v2861, %v3412
      %v3414 = vpop.f32.mrb[0].mxu0
      %v3415 = vadd.f32 %v2865, %v3414
      %v3416 = vpop.f32.mrb[0].mxu0
      %v3417 = vadd.f32 %v2861, %v3416
      %v3418 = vpop.f32.mrb[0].mxu0
      %v3419 = vadd.f32 %v2865, %v3418
      %3420 = vmatprep.mubr.bf16.mxu0 %v920
      %3421 = vmatmul.mubr.bf16.gmra.mrb[0].mxu0 %v919
      %v3422 = vpop.f32.mrb[0].mxu0
      %v3423 = vadd.f32 %v2861, %v3422
      %v3424 = vpop.f32.mrb[0].mxu0
      %v3425 = vadd.f32 %v2865, %v3424
      %v3426 = vpop.f32.mrb[0].mxu0
      %v3427 = vadd.f32 %v2861, %v3426
      %v3428 = vpop.f32.mrb[0].mxu0
      %v3429 = vadd.f32 %v2865, %v3428
      %3430 = vmatprep.mubr.bf16.mxu0 %v926
      %3431 = vmatmul.mubr.bf16.gmra.mrb[0].mxu0 %v925
      %v3432 = vpop.f32.mrb[0].mxu0
      %v3433 = vadd.f32 %v2861, %v3432
      %v3434 = vpop.f32.mrb[0].mxu0
      %v3435 = vadd.f32 %v2865, %v3434
      %v3436 = vpop.f32.mrb[0].mxu0
      %v3437 = vadd.f32 %v2861, %v3436
      %v3438 = vpop.f32.mrb[0].mxu0
      %v3439 = vadd.f32 %v2865, %v3438
      %3440 = vmatprep.mubr.bf16.mxu0 %v932
      %3441 = vmatmul.mubr.bf16.gmra.mrb[0].mxu0 %v931
      %v3442 = vpop.f32.mrb[0].mxu0
      %v3443 = vadd.f32 %v2861, %v3442
      %v3444 = vpop.f32.mrb[0].mxu0
      %v3445 = vadd.f32 %v2865, %v3444
      %v3446 = vpop.f32.mrb[0].mxu0
      %v3447 = vadd.f32 %v2861, %v3446
      %v3448 = vpop.f32.mrb[0].mxu0
      %v3449 = vadd.f32 %v2865, %v3448
      %3450 = vmatprep.mubr.bf16.mxu0 %v938
      %3451 = vmatmul.mubr.bf16.gmra.mrb[0].mxu0 %v937
      %v3452 = vpop.f32.mrb[0].mxu0
      %v3453 = vadd.f32 %v2861, %v3452
      %v3454 = vpop.f32.mrb[0].mxu0
      %v3455 = vadd.f32 %v2865, %v3454
      %v3456 = vpop.f32.mrb[0].mxu0
      %v3457 = vadd.f32 %v2861, %v3456
      %v3458 = vpop.f32.mrb[0].mxu0
      %v3459 = vadd.f32 %v2865, %v3458
      %3460 = vdwg.mxu0
      %3461 = vmatprep.subr.bf16.mxu0 %v3189
      %3462 = vmatpush1.bf16.msra.mxu0 %v3188
      %3463 = vmatprep.subr.bf16.mxu0 %v3191
      %3464 = vmatpush1.bf16.msra.mxu0 %v3190
      %3465 = vmatprep.subr.bf16.mxu0 %v3193
      %3466 = vmatpush1.bf16.msra.mxu0 %v3192
      %3467 = vmatprep.subr.bf16.mxu0 %v3195
      %3468 = vmatpush1.bf16.msra.mxu0 %v3194
      %3469 = vmatprep.subr.bf16.mxu0 %v3197
      %3470 = vmatpush1.bf16.msra.mxu0 %v3196
      %3471 = vmatprep.subr.bf16.mxu0 %v3199
      %3472 = vmatpush1.bf16.msra.mxu0 %v3198
      %3473 = vmatprep.subr.bf16.mxu0 %v3201
      %3474 = vmatpush1.bf16.msra.mxu0 %v3200
      %3475 = vmatprep.subr.bf16.mxu0 %v3203
      %3476 = vmatpush1.bf16.msra.mxu0 %v3202
      %3477 = vmatprep.subr.bf16.mxu0 %v3205
      %3478 = vmatpush1.bf16.msra.mxu0 %v3204
      %3479 = vmatprep.subr.bf16.mxu0 %v3207
      %3480 = vmatpush1.bf16.msra.mxu0 %v3206
      %3481 = vmatprep.subr.bf16.mxu0 %v3209
      %3482 = vmatpush1.bf16.msra.mxu0 %v3208
      %3483 = vmatprep.subr.bf16.mxu0 %v3211
      %3484 = vmatpush1.bf16.msra.mxu0 %v3210
      %3485 = vmatprep.subr.bf16.mxu0 %v3213
      %3486 = vmatpush1.bf16.msra.mxu0 %v3212
      %3487 = vmatprep.subr.bf16.mxu0 %v3215
      %3488 = vmatpush1.bf16.msra.mxu0 %v3214
      %3489 = vmatprep.subr.bf16.mxu0 %v3217
      %3490 = vmatpush1.bf16.msra.mxu0 %v3216
      %3491 = vmatprep.subr.bf16.mxu0 %v3219
      %3492 = vmatpush1.bf16.msra.mxu0 %v3218
      %3493 = vmatprep.mubr.bf16.mxu0 %v898
      %3494 = vmatmul.mubr.bf16.gmra.mrb[0].mxu0 %v897
      %v3495 = vpop.f32.mrb[0].mxu0
      %v3496 = vadd.f32 %v3383, %v3495
      %v3497 = vpop.f32.mrb[0].mxu0
      %v3498 = vadd.f32 %v3385, %v3497
      %v3499 = vpop.f32.mrb[0].mxu0
      %v3500 = vadd.f32 %v3387, %v3499
      %v3501 = vpop.f32.mrb[0].mxu0
      %v3502 = vadd.f32 %v3389, %v3501
      %3503 = vmatprep.mubr.bf16.mxu0 %v904
      %3504 = vmatmul.mubr.bf16.gmra.mrb[0].mxu0 %v903
      %v3505 = vpop.f32.mrb[0].mxu0
      %v3506 = vadd.f32 %v3393, %v3505
      %v3507 = vpop.f32.mrb[0].mxu0
      %v3508 = vadd.f32 %v3395, %v3507
      %v3509 = vpop.f32.mrb[0].mxu0
      %v3510 = vadd.f32 %v3397, %v3509
      %v3511 = vpop.f32.mrb[0].mxu0
      %v3512 = vadd.f32 %v3399, %v3511
      %3513 = vmatprep.mubr.bf16.mxu0 %v910
      %3514 = vmatmul.mubr.bf16.gmra.mrb[0].mxu0 %v909
      %v3515 = vpop.f32.mrb[0].mxu0
      %v3516 = vadd.f32 %v3403, %v3515
      %v3517 = vpop.f32.mrb[0].mxu0
      %v3518 = vadd.f32 %v3405, %v3517
      %v3519 = vpop.f32.mrb[0].mxu0
      %v3520 = vadd.f32 %v3407, %v3519
      %v3521 = vpop.f32.mrb[0].mxu0
      %v3522 = vadd.f32 %v3409, %v3521
      %3523 = vmatprep.mubr.bf16.mxu0 %v916
      %3524 = vmatmul.mubr.bf16.gmra.mrb[0].mxu0 %v915
      %v3525 = vpop.f32.mrb[0].mxu0
      %v3526 = vadd.f32 %v3413, %v3525
      %v3527 = vpop.f32.mrb[0].mxu0
      %v3528 = vadd.f32 %v3415, %v3527
      %v3529 = vpop.f32.mrb[0].mxu0
      %v3530 = vadd.f32 %v3417, %v3529
      %v3531 = vpop.f32.mrb[0].mxu0
      %v3532 = vadd.f32 %v3419, %v3531
      %3533 = vmatprep.mubr.bf16.mxu0 %v922
      %3534 = vmatmul.mubr.bf16.gmra.mrb[0].mxu0 %v921
      %v3535 = vpop.f32.mrb[0].mxu0
      %v3536 = vadd.f32 %v3423, %v3535
      %v3537 = vpop.f32.mrb[0].mxu0
      %v3538 = vadd.f32 %v3425, %v3537
      %v3539 = vpop.f32.mrb[0].mxu0
      %v3540 = vadd.f32 %v3427, %v3539
      %v3541 = vpop.f32.mrb[0].mxu0
      %v3542 = vadd.f32 %v3429, %v3541
      %3543 = vmatprep.mubr.bf16.mxu0 %v928
      %3544 = vmatmul.mubr.bf16.gmra.mrb[0].mxu0 %v927
      %v3545 = vpop.f32.mrb[0].mxu0
      %v3546 = vadd.f32 %v3433, %v3545
      %v3547 = vpop.f32.mrb[0].mxu0
      %v3548 = vadd.f32 %v3435, %v3547
      %v3549 = vpop.f32.mrb[0].mxu0
      %v3550 = vadd.f32 %v3437, %v3549
      %v3551 = vpop.f32.mrb[0].mxu0
      %v3552 = vadd.f32 %v3439, %v3551
      %3553 = vmatprep.mubr.bf16.mxu0 %v934
      %3554 = vmatmul.mubr.bf16.gmra.mrb[0].mxu0 %v933
      %v3555 = vpop.f32.mrb[0].mxu0
      %v3556 = vadd.f32 %v3443, %v3555
      %v3557 = vpop.f32.mrb[0].mxu0
      %v3558 = vadd.f32 %v3445, %v3557
      %v3559 = vpop.f32.mrb[0].mxu0
      %v3560 = vadd.f32 %v3447, %v3559
      %v3561 = vpop.f32.mrb[0].mxu0
      %v3562 = vadd.f32 %v3449, %v3561
      %3563 = vmatprep.mubr.bf16.mxu0 %v940
      %3564 = vmatmul.mubr.bf16.gmra.mrb[0].mxu0 %v939
      %v3565 = vpop.f32.mrb[0].mxu0
      %v3566 = vadd.f32 %v3453, %v3565
      %v3567 = vpop.f32.mrb[0].mxu0
      %v3568 = vadd.f32 %v3455, %v3567
      %v3569 = vpop.f32.mrb[0].mxu0
      %v3570 = vadd.f32 %v3457, %v3569
      %v3571 = vpop.f32.mrb[0].mxu0
      %v3572 = vadd.f32 %v3459, %v3571
      %3573 = vdwg.mxu0
      %3574 = vmatprep.subr.bf16.mxu0 %v3221
      %3575 = vmatpush1.bf16.msra.mxu0 %v3220
      %3576 = vmatprep.subr.bf16.mxu0 %v3223
      %3577 = vmatpush1.bf16.msra.mxu0 %v3222
      %3578 = vmatprep.subr.bf16.mxu0 %v3225
      %3579 = vmatpush1.bf16.msra.mxu0 %v3224
      %3580 = vmatprep.subr.bf16.mxu0 %v3227
      %3581 = vmatpush1.bf16.msra.mxu0 %v3226
      %3582 = vmatprep.subr.bf16.mxu0 %v3229
      %3583 = vmatpush1.bf16.msra.mxu0 %v3228
      %3584 = vmatprep.subr.bf16.mxu0 %v3231
      %3585 = vmatpush1.bf16.msra.mxu0 %v3230
      %3586 = vmatprep.subr.bf16.mxu0 %v3233
      %3587 = vmatpush1.bf16.msra.mxu0 %v3232
      %3588 = vmatprep.subr.bf16.mxu0 %v3235
      %3589 = vmatpush1.bf16.msra.mxu0 %v3234
      %3590 = vmatprep.subr.bf16.mxu0 %v3237
      %3591 = vmatpush1.bf16.msra.mxu0 %v3236
      %3592 = vmatprep.subr.bf16.mxu0 %v3239
      %3593 = vmatpush1.bf16.msra.mxu0 %v3238
      %3594 = vmatprep.subr.bf16.mxu0 %v3241
      %3595 = vmatpush1.bf16.msra.mxu0 %v3240
      %3596 = vmatprep.subr.bf16.mxu0 %v3243
      %3597 = vmatpush1.bf16.msra.mxu0 %v3242
      %3598 = vmatprep.subr.bf16.mxu0 %v3245
      %3599 = vmatpush1.bf16.msra.mxu0 %v3244
      %3600 = vmatprep.subr.bf16.mxu0 %v3247
      %3601 = vmatpush1.bf16.msra.mxu0 %v3246
      %3602 = vmatprep.subr.bf16.mxu0 %v3249
      %3603 = vmatpush1.bf16.msra.mxu0 %v3248
      %3604 = vmatprep.subr.bf16.mxu0 %v3251
      %3605 = vmatpush1.bf16.msra.mxu0 %v3250
      %3606 = vmatprep.mubr.bf16.mxu0 %v900
      %3607 = vmatmul.mubr.bf16.gmra.mrb[0].mxu0 %v899
      %v3608 = vpop.f32.mrb[0].mxu0
      %v3609 = vadd.f32 %v3496, %v3608
      %v3610 = vpop.f32.mrb[0].mxu0
      %v3611 = vadd.f32 %v3498, %v3610
      %v3612 = vpop.f32.mrb[0].mxu0
      %v3613 = vadd.f32 %v3500, %v3612
      %v3614 = vpop.f32.mrb[0].mxu0
      %v3615 = vadd.f32 %v3502, %v3614
      %3616 = vmatprep.mubr.bf16.mxu0 %v906
      %3617 = vmatmul.mubr.bf16.gmra.mrb[0].mxu0 %v905
      %v3618 = vpop.f32.mrb[0].mxu0
      %v3619 = vadd.f32 %v3506, %v3618
      %v3620 = vpop.f32.mrb[0].mxu0
      %v3621 = vadd.f32 %v3508, %v3620
      %v3622 = vpop.f32.mrb[0].mxu0
      %v3623 = vadd.f32 %v3510, %v3622
      %v3624 = vpop.f32.mrb[0].mxu0
      %v3625 = vadd.f32 %v3512, %v3624
      %3626 = vmatprep.mubr.bf16.mxu0 %v912
      %3627 = vmatmul.mubr.bf16.gmra.mrb[0].mxu0 %v911
      %v3628 = vpop.f32.mrb[0].mxu0
      %v3629 = vadd.f32 %v3516, %v3628
      %v3630 = vpop.f32.mrb[0].mxu0
      %v3631 = vadd.f32 %v3518, %v3630
      %v3632 = vpop.f32.mrb[0].mxu0
      %v3633 = vadd.f32 %v3520, %v3632
      %v3634 = vpop.f32.mrb[0].mxu0
      %v3635 = vadd.f32 %v3522, %v3634
      %3636 = vmatprep.mubr.bf16.mxu0 %v918
      %3637 = vmatmul.mubr.bf16.gmra.mrb[0].mxu0 %v917
      %v3638 = vpop.f32.mrb[0].mxu0
      %v3639 = vadd.f32 %v3526, %v3638
      %v3640 = vpop.f32.mrb[0].mxu0
      %v3641 = vadd.f32 %v3528, %v3640
      %v3642 = vpop.f32.mrb[0].mxu0
      %v3643 = vadd.f32 %v3530, %v3642
      %v3644 = vpop.f32.mrb[0].mxu0
      %v3645 = vadd.f32 %v3532, %v3644
      %3646 = vmatprep.mubr.bf16.mxu0 %v924
      %3647 = vmatmul.mubr.bf16.gmra.mrb[0].mxu0 %v923
      %v3648 = vpop.f32.mrb[0].mxu0
      %v3649 = vadd.f32 %v3536, %v3648
      %v3650 = vpop.f32.mrb[0].mxu0
      %v3651 = vadd.f32 %v3538, %v3650
      %v3652 = vpop.f32.mrb[0].mxu0
      %v3653 = vadd.f32 %v3540, %v3652
      %v3654 = vpop.f32.mrb[0].mxu0
      %v3655 = vadd.f32 %v3542, %v3654
      %3656 = vmatprep.mubr.bf16.mxu0 %v930
      %3657 = vmatmul.mubr.bf16.gmra.mrb[0].mxu0 %v929
      %v3658 = vpop.f32.mrb[0].mxu0
      %v3659 = vadd.f32 %v3546, %v3658
      %v3660 = vpop.f32.mrb[0].mxu0
      %v3661 = vadd.f32 %v3548, %v3660
      %v3662 = vpop.f32.mrb[0].mxu0
      %v3663 = vadd.f32 %v3550, %v3662
      %v3664 = vpop.f32.mrb[0].mxu0
      %v3665 = vadd.f32 %v3552, %v3664
      %3666 = vmatprep.mubr.bf16.mxu0 %v936
      %3667 = vmatmul.mubr.bf16.gmra.mrb[0].mxu0 %v935
      %v3668 = vpop.f32.mrb[0].mxu0
      %v3669 = vadd.f32 %v3556, %v3668
      %v3670 = vpop.f32.mrb[0].mxu0
      %v3671 = vadd.f32 %v3558, %v3670
      %v3672 = vpop.f32.mrb[0].mxu0
      %v3673 = vadd.f32 %v3560, %v3672
      %v3674 = vpop.f32.mrb[0].mxu0
      %v3675 = vadd.f32 %v3562, %v3674
      %3676 = vmatprep.mubr.bf16.mxu0 %v942
      %3677 = vmatmul.mubr.bf16.gmra.mrb[0].mxu0 %v941
      %v3678 = vpop.f32.mrb[0].mxu0
      %v3679 = vadd.f32 %v3566, %v3678
      %v3680 = vpop.f32.mrb[0].mxu0
      %v3681 = vadd.f32 %v3568, %v3680
      %v3682 = vpop.f32.mrb[0].mxu0
      %v3683 = vadd.f32 %v3570, %v3682
      %v3684 = vpop.f32.mrb[0].mxu0
      %v3685 = vadd.f32 %v3572, %v3684
      %3686 = vdwg.mxu0
      %v3687 = vmax.f32 %v3609, 0.0
      %v3688 = vmax.f32 %v3611, 0.0
      %v3689 = vmax.f32 %v3613, 0.0
      %v3690 = vmax.f32 %v3615, 0.0
      %v3691 = vmax.f32 %v3619, 0.0
      %v3692 = vmax.f32 %v3621, 0.0
      %v3693 = vmax.f32 %v3623, 0.0
      %v3694 = vmax.f32 %v3625, 0.0
      %v3695 = vmax.f32 %v3629, 0.0
      %v3696 = vmax.f32 %v3631, 0.0
      %v3697 = vmax.f32 %v3633, 0.0
      %v3698 = vmax.f32 %v3635, 0.0
      %v3699 = vmax.f32 %v3639, 0.0
      %v3700 = vmax.f32 %v3641, 0.0
      %v3701 = vmax.f32 %v3643, 0.0
      %v3702 = vmax.f32 %v3645, 0.0
      %v3703 = vmax.f32 %v3649, 0.0
      %v3704 = vmax.f32 %v3651, 0.0
      %v3705 = vmax.f32 %v3653, 0.0
      %v3706 = vmax.f32 %v3655, 0.0
      %v3707 = vmax.f32 %v3659, 0.0
      %v3708 = vmax.f32 %v3661, 0.0
      %v3709 = vmax.f32 %v3663, 0.0
      %v3710 = vmax.f32 %v3665, 0.0
      %v3711 = vmax.f32 %v3669, 0.0
      %v3712 = vmax.f32 %v3671, 0.0
      %v3713 = vmax.f32 %v3673, 0.0
      %v3714 = vmax.f32 %v3675, 0.0
      %v3715 = vmax.f32 %v3679, 0.0
      %v3716 = vmax.f32 %v3681, 0.0
      %v3717 = vmax.f32 %v3683, 0.0
      %v3718 = vmax.f32 %v3685, 0.0
      %v3719 = vadd.f32 %v3687, %v3689
      %v3720 = vadd.f32 %v3719, %v3691
      %v3721 = vadd.f32 %v3720, %v3693
      %v3722 = vadd.f32 %v3721, %v3695
      %v3723 = vadd.f32 %v3722, %v3697
      %v3724 = vadd.f32 %v3723, %v3699
      %v3725 = vadd.f32 %v3724, %v3701
      %v3726 = vrot.slane %v3725, 4
      %v3727 = vadd.f32 %v3725, %v3726
      %v3728 = vrot.slane %v3727, 2
      %v3729 = vadd.f32 %v3727, %v3728
      %v3730 = vrot.slane %v3729, 1
      %v3731 = vadd.f32 %v3729, %v3730
      %v3732 = vadd.f32 %v3688, %v3690
      %v3733 = vadd.f32 %v3732, %v3692
      %v3734 = vadd.f32 %v3733, %v3694
      %v3735 = vadd.f32 %v3734, %v3696
      %v3736 = vadd.f32 %v3735, %v3698
      %v3737 = vadd.f32 %v3736, %v3700
      %v3738 = vadd.f32 %v3737, %v3702
      %v3739 = vrot.slane %v3738, 4
      %v3740 = vadd.f32 %v3738, %v3739
      %v3741 = vrot.slane %v3740, 2
      %v3742 = vadd.f32 %v3740, %v3741
      %v3743 = vrot.slane %v3742, 1
      %v3744 = vadd.f32 %v3742, %v3743
      %v3745 = vadd.f32 %v3703, %v3705
      %v3746 = vadd.f32 %v3745, %v3707
      %v3747 = vadd.f32 %v3746, %v3709
      %v3748 = vadd.f32 %v3747, %v3711
      %v3749 = vadd.f32 %v3748, %v3713
      %v3750 = vadd.f32 %v3749, %v3715
      %v3751 = vadd.f32 %v3750, %v3717
      %v3752 = vrot.slane %v3751, 4
      %v3753 = vadd.f32 %v3751, %v3752
      %v3754 = vrot.slane %v3753, 2
      %v3755 = vadd.f32 %v3753, %v3754
      %v3756 = vrot.slane %v3755, 1
      %v3757 = vadd.f32 %v3755, %v3756
      %v3758 = vadd.f32 %v3704, %v3706
      %v3759 = vadd.f32 %v3758, %v3708
      %v3760 = vadd.f32 %v3759, %v3710
      %v3761 = vadd.f32 %v3760, %v3712
      %v3762 = vadd.f32 %v3761, %v3714
      %v3763 = vadd.f32 %v3762, %v3716
      %v3764 = vadd.f32 %v3763, %v3718
      %v3765 = vrot.slane %v3764, 4
      %v3766 = vadd.f32 %v3764, %v3765
      %v3767 = vrot.slane %v3766, 2
      %v3768 = vadd.f32 %v3766, %v3767
      %v3769 = vrot.slane %v3768, 1
      %v3770 = vadd.f32 %v3768, %v3769
      %v3771 = vrcp.pop 64.0
      %v3772 = vmul.f32 %v3731, %v3771
      %v3773 = vmul.f32 %v3744, %v3771
      %v3774 = vmul.f32 %v3757, %v3771
      %v3775 = vmul.f32 %v3770, %v3771
      %v3780 = vcombine.low %v3772, %v3773
      %v3782 = vunpack.c.l.s4 1983009808
      %v3783 = vunpack.c.0.s8 %v3782
      %v3784 = vlaneseq
      %v3785 = vshrl.u32 %v3784, 7
      %v3786 = vsub.s32 %v3783, %v3785
      %v3787 = vrot.slane %v3780, %v3786
      %v3788 = vcombine.low %v3774, %v3775
      %v3790 = vunpack.c.l.s4 1983009808
      %v3791 = vunpack.c.0.s8 %v3790
      %v3792 = vlaneseq
      %v3793 = vshrl.u32 %v3792, 7
      %v3794 = vsub.s32 %v3791, %v3793
      %v3795 = vrot.slane %v3788, %v3794
      %vm3796 = vcmask 1044484
      %v3797 = vsel %vm3796, %v3787, %v3787
      %vm3798 = vcmask 1046534
      %v3799 = vsel %vm3798, %v3787, %v3797
      %v3800 = vrot.slane %v3795, 7
      %vm3801 = vcmask 1041409
      %v3802 = vsel %vm3801, %v3800, %v3799
      %vm3803 = vcmask 1043459
      %v3804 = vsel %vm3803, %v3800, %v3802
      %vm3805 = vcmask 1045509
      %v3806 = vsel %vm3805, %v3800, %v3804
      %vm3807 = vcmask 1047559
      %v3808 = vsel %vm3807, %v3800, %v3806
      %s3810 = smul.u32 %s26, 2
      %s3811 = smul.addr %s3810, 2
      %s3812 = scalar_lea.vmem [#allocation3], %s3811
      %3813 = vst [vmem:[%s3812] sm:$0xf] %v3808
      %p3814 = scmp.eq.s32.totalorder %s26, 4
      // Predicated region
      $region73: #{learn_who2com_forward.1} parent=71 // pred_check
        %p3815 = pneg %p3814
      $region74: #{learn_who2com_forward.1} parent=71 // pred_check_branch
        %3817 = sbr.rel (%p3815) target = $region76
      $region75: #{learn_who2com_forward.1} parent=71 // pred_region
        %v3818 = vld [vmem:[#allocation3] sm:$0xf]
        %v3821 = vunpack.c.l.s4 1983009808
        %v3822 = vunpack.c.0.s8 %v3821
        %v3823 = vlaneseq
        %v3824 = vshrl.u32 %v3823, 7
        %v3825 = vsub.s32 %v3822, %v3824
        %v3826 = vrot.slane %v3818, %v3825
        %v3827 = vcombine.high %v3826, %v3826
        %v3830 = vpack.c.bf16 %v3826, %v3826
        %v3831 = vpack.c.bf16 %v3827, %v3827
        %s3832 = scalar_lea.vmem [#allocation3], 4
        %v3833 = vld [vmem:[%s3832] sm:$0xf]
        %s3834 = scalar_lea.vmem [#allocation3], 8
        %v3835 = vld [vmem:[%s3834] sm:$0xf]
        %s3836 = scalar_lea.vmem [#allocation3], 12
        %v3837 = vld [vmem:[%s3836] sm:$0xf]
        %s3838 = scalar_lea.vmem [#allocation3], 16
        %v3839 = vld [vmem:[%s3838] sm:$0xf]
        %v3842 = vunpack.c.l.s4 1983009808
        %v3843 = vunpack.c.0.s8 %v3842
        %v3844 = vlaneseq
        %v3845 = vshrl.u32 %v3844, 7
        %v3846 = vsub.s32 %v3843, %v3845
        %v3847 = vrot.slane %v3833, %v3846
        %v3848 = vcombine.high %v3847, %v3847
        %v3852 = vcombine.low %v3835, %v3835
        %v3854 = vunpack.c.l.s4 1983009808
        %v3855 = vunpack.c.0.s8 %v3854
        %v3856 = vlaneseq
        %v3857 = vshrl.u32 %v3856, 7
        %v3858 = vsub.s32 %v3855, %v3857
        %v3859 = vrot.slane %v3852, %v3858
        %v3860 = vcombine.high %v3859, %v3859
        %v3865 = vunpack.c.l.s4 1983009808
        %v3866 = vunpack.c.0.s8 %v3865
        %v3867 = vlaneseq
        %v3868 = vshrl.u32 %v3867, 7
        %v3869 = vsub.s32 %v3866, %v3868
        %v3870 = vrot.slane %v3837, %v3869
        %v3871 = vcombine.low %v3870, %v3870
        %v3875 = vcombine.low %v3839, %v3839
        %v3877 = vunpack.c.l.s4 1983009808
        %v3878 = vunpack.c.0.s8 %v3877
        %v3879 = vlaneseq
        %v3880 = vshrl.u32 %v3879, 7
        %v3881 = vsub.s32 %v3878, %v3880
        %v3882 = vrot.slane %v3875, %v3881
        %v3883 = vcombine.low %v3882, %v3882
        %vm3886 = vcmask 1041408
        %v3887 = vsel %vm3886, %v3847, %v3859
        %v3888 = vsel %vm3886, %v3848, %v3860
        %vm3889 = vcmask 1043456
        %v3890 = vsel %vm3889, %v3887, %v3871
        %v3891 = vsel %vm3889, %v3888, %v3870
        %vm3892 = vcmask 1045504
        %v3893 = vsel %vm3892, %v3890, %v3883
        %v3894 = vsel %vm3892, %v3891, %v3882
        %v3895 = vpack.c.bf16 %v3893, %v3893
        %v3896 = vpack.c.bf16 %v3894, %v3894
        %v3897 = vld [vmem:[%s7] sm:$0xff]
        %v3898 = vld [vmem:[%s7 + $0x8] sm:$0xff]
        %v3899 = vld [vmem:[%s7 + $0x10] sm:$0xff]
        %v3900 = vld [vmem:[%s7 + $0x18] sm:$0xff]
        %v3901 = vld [vmem:[%s7 + $0x20] sm:$0xff]
        %v3902 = vld [vmem:[%s7 + $0x28] sm:$0xff]
        %v3903 = vld [vmem:[%s7 + $0x30] sm:$0xff]
        %v3904 = vld [vmem:[%s7 + $0x38] sm:$0xff]
        %v3905 = vld [vmem:[%s7 + $0x40] sm:$0xff]
        %v3906 = vld [vmem:[%s7 + $0x48] sm:$0xff]
        %v3907 = vld [vmem:[%s7 + $0x50] sm:$0xff]
        %v3908 = vld [vmem:[%s7 + $0x58] sm:$0xff]
        %v3909 = vld [vmem:[%s7 + $0x60] sm:$0xff]
        %v3910 = vld [vmem:[%s7 + $0x68] sm:$0xff]
        %v3911 = vld [vmem:[%s7 + $0x70] sm:$0xff]
        %v3912 = vld [vmem:[%s7 + $0x78] sm:$0xff]
        %v3913 = vld [vmem:[%s7 + $0x80] sm:$0xff]
        %v3914 = vld [vmem:[%s7 + $0x88] sm:$0xff]
        %v3915 = vld [vmem:[%s7 + $0x90] sm:$0xff]
        %v3916 = vld [vmem:[%s7 + $0x98] sm:$0xff]
        %v3917 = vld [vmem:[%s7 + $0xa0] sm:$0xff]
        %v3918 = vld [vmem:[%s7 + $0xa8] sm:$0xff]
        %v3919 = vld [vmem:[%s7 + $0xb0] sm:$0xff]
        %v3920 = vld [vmem:[%s7 + $0xb8] sm:$0xff]
        %v3921 = vld [vmem:[%s7 + $0xc0] sm:$0xff]
        %v3922 = vld [vmem:[%s7 + $0xc8] sm:$0xff]
        %v3923 = vld [vmem:[%s7 + $0xd0] sm:$0xff]
        %v3924 = vld [vmem:[%s7 + $0xd8] sm:$0xff]
        %v3925 = vld [vmem:[%s7 + $0xe0] sm:$0xff]
        %v3926 = vld [vmem:[%s7 + $0xe8] sm:$0xff]
        %v3927 = vld [vmem:[%s7 + $0xf0] sm:$0xff]
        %v3928 = vld [vmem:[%s7 + $0xf8] sm:$0xff]
        %v3929 = vld [vmem:[%s8] ss:$4 sm:$0x3]
        %v3931 = vlaneseq
        %v3932 = vshrl.u32 %v3931, 7
        %v3933 = vsub.s32 0, %v3932
        %v3934 = vrot.slane %v3929, %v3933
        %v3935 = vlaneseq
        %v3936 = vshrl.u32 %v3935, 7
        %v3937 = vsub.s32 1, %v3936
        %v3938 = vrot.slane %v3929, %v3937
        %v3973 = vunpack.c.l.b16 %v3897
        %v3974 = vunpack.c.h.b16 %v3897
        %v3975 = vunpack.c.l.b16 %v3898
        %v3976 = vunpack.c.h.b16 %v3898
        %v3977 = vunpack.c.l.b16 %v3899
        %v3978 = vunpack.c.h.b16 %v3899
        %v3979 = vunpack.c.l.b16 %v3900
        %v3980 = vunpack.c.h.b16 %v3900
        %v3981 = vunpack.c.l.b16 %v3901
        %v3982 = vunpack.c.h.b16 %v3901
        %v3983 = vunpack.c.l.b16 %v3902
        %v3984 = vunpack.c.h.b16 %v3902
        %v3985 = vunpack.c.l.b16 %v3903
        %v3986 = vunpack.c.h.b16 %v3903
        %v3987 = vunpack.c.l.b16 %v3904
        %v3988 = vunpack.c.h.b16 %v3904
        %v3989 = vunpack.c.l.b16 %v3905
        %v3990 = vunpack.c.h.b16 %v3905
        %v3991 = vunpack.c.l.b16 %v3906
        %v3992 = vunpack.c.h.b16 %v3906
        %v3993 = vunpack.c.l.b16 %v3907
        %v3994 = vunpack.c.h.b16 %v3907
        %v3995 = vunpack.c.l.b16 %v3908
        %v3996 = vunpack.c.h.b16 %v3908
        %v3997 = vunpack.c.l.b16 %v3909
        %v3998 = vunpack.c.h.b16 %v3909
        %v3999 = vunpack.c.l.b16 %v3910
        %v4000 = vunpack.c.h.b16 %v3910
        %v4001 = vunpack.c.l.b16 %v3911
        %v4002 = vunpack.c.h.b16 %v3911
        %v4003 = vunpack.c.l.b16 %v3912
        %v4004 = vunpack.c.h.b16 %v3912
        %v4005 = vunpack.c.l.b16 %v3913
        %v4006 = vunpack.c.h.b16 %v3913
        %v4007 = vunpack.c.l.b16 %v3914
        %v4008 = vunpack.c.h.b16 %v3914
        %v4009 = vunpack.c.l.b16 %v3915
        %v4010 = vunpack.c.h.b16 %v3915
        %v4011 = vunpack.c.l.b16 %v3916
        %v4012 = vunpack.c.h.b16 %v3916
        %v4013 = vunpack.c.l.b16 %v3917
        %v4014 = vunpack.c.h.b16 %v3917
        %v4015 = vunpack.c.l.b16 %v3918
        %v4016 = vunpack.c.h.b16 %v3918
        %v4017 = vunpack.c.l.b16 %v3919
        %v4018 = vunpack.c.h.b16 %v3919
        %v4019 = vunpack.c.l.b16 %v3920
        %v4020 = vunpack.c.h.b16 %v3920
        %v4021 = vunpack.c.l.b16 %v3921
        %v4022 = vunpack.c.h.b16 %v3921
        %v4023 = vunpack.c.l.b16 %v3922
        %v4024 = vunpack.c.h.b16 %v3922
        %v4025 = vunpack.c.l.b16 %v3923
        %v4026 = vunpack.c.h.b16 %v3923
        %v4027 = vunpack.c.l.b16 %v3924
        %v4028 = vunpack.c.h.b16 %v3924
        %v4029 = vunpack.c.l.b16 %v3925
        %v4030 = vunpack.c.h.b16 %v3925
        %v4031 = vunpack.c.l.b16 %v3926
        %v4032 = vunpack.c.h.b16 %v3926
        %v4033 = vunpack.c.l.b16 %v3927
        %v4034 = vunpack.c.h.b16 %v3927
        %v4035 = vunpack.c.l.b16 %v3928
        %v4036 = vunpack.c.h.b16 %v3928
        %v4037 = vpack.c.b16 %v3975, %v3973
        %v4038 = vpack.c.b16 %v3976, %v3974
        %v4039 = vpack.c.b16 %v3979, %v3977
        %v4040 = vpack.c.b16 %v3980, %v3978
        %v4041 = vpack.c.b16 %v3983, %v3981
        %v4042 = vpack.c.b16 %v3984, %v3982
        %v4043 = vpack.c.b16 %v3987, %v3985
        %v4044 = vpack.c.b16 %v3988, %v3986
        %v4045 = vpack.c.b16 %v3991, %v3989
        %v4046 = vpack.c.b16 %v3992, %v3990
        %v4047 = vpack.c.b16 %v3995, %v3993
        %v4048 = vpack.c.b16 %v3996, %v3994
        %v4049 = vpack.c.b16 %v3999, %v3997
        %v4050 = vpack.c.b16 %v4000, %v3998
        %v4051 = vpack.c.b16 %v4003, %v4001
        %v4052 = vpack.c.b16 %v4004, %v4002
        %v4053 = vpack.c.b16 %v4007, %v4005
        %v4054 = vpack.c.b16 %v4008, %v4006
        %v4055 = vpack.c.b16 %v4011, %v4009
        %v4056 = vpack.c.b16 %v4012, %v4010
        %v4057 = vpack.c.b16 %v4015, %v4013
        %v4058 = vpack.c.b16 %v4016, %v4014
        %v4059 = vpack.c.b16 %v4019, %v4017
        %v4060 = vpack.c.b16 %v4020, %v4018
        %v4061 = vpack.c.b16 %v4023, %v4021
        %v4062 = vpack.c.b16 %v4024, %v4022
        %v4063 = vpack.c.b16 %v4027, %v4025
        %v4064 = vpack.c.b16 %v4028, %v4026
        %v4065 = vpack.c.b16 %v4031, %v4029
        %v4066 = vpack.c.b16 %v4032, %v4030
        %v4067 = vpack.c.b16 %v4035, %v4033
        %v4068 = vpack.c.b16 %v4036, %v4034
        %4101 = vmatprep.subr.bf16.mxu0 %v4038
        %4102 = vmatpush1.bf16.msra.mxu0 %v4037
        %4103 = vmatprep.subr.bf16.mxu0 %v4040
        %4104 = vmatpush1.bf16.msra.mxu0 %v4039
        %4105 = vmatprep.subr.bf16.mxu0 %v4042
        %4106 = vmatpush1.bf16.msra.mxu0 %v4041
        %4107 = vmatprep.subr.bf16.mxu0 %v4044
        %4108 = vmatpush1.bf16.msra.mxu0 %v4043
        %4109 = vmatprep.subr.bf16.mxu0 %v4046
        %4110 = vmatpush1.bf16.msra.mxu0 %v4045
        %4111 = vmatprep.subr.bf16.mxu0 %v4048
        %4112 = vmatpush1.bf16.msra.mxu0 %v4047
        %4113 = vmatprep.subr.bf16.mxu0 %v4050
        %4114 = vmatpush1.bf16.msra.mxu0 %v4049
        %4115 = vmatprep.subr.bf16.mxu0 %v4052
        %4116 = vmatpush1.bf16.msra.mxu0 %v4051
        %4117 = vmatprep.subr.bf16.mxu0 %v4054
        %4118 = vmatpush1.bf16.msra.mxu0 %v4053
        %4119 = vmatprep.subr.bf16.mxu0 %v4056
        %4120 = vmatpush1.bf16.msra.mxu0 %v4055
        %4121 = vmatprep.subr.bf16.mxu0 %v4058
        %4122 = vmatpush1.bf16.msra.mxu0 %v4057
        %4123 = vmatprep.subr.bf16.mxu0 %v4060
        %4124 = vmatpush1.bf16.msra.mxu0 %v4059
        %4125 = vmatprep.subr.bf16.mxu0 %v4062
        %4126 = vmatpush1.bf16.msra.mxu0 %v4061
        %4127 = vmatprep.subr.bf16.mxu0 %v4064
        %4128 = vmatpush1.bf16.msra.mxu0 %v4063
        %4129 = vmatprep.subr.bf16.mxu0 %v4066
        %4130 = vmatpush1.bf16.msra.mxu0 %v4065
        %4131 = vmatprep.subr.bf16.mxu0 %v4068
        %4132 = vmatpush1.bf16.msra.mxu0 %v4067
        %4133 = vmatprep.mubr.bf16.mxu0 %v3831
        %4134 = vmatmul.mubr.bf16.gmra.mrb[0].mxu0 %v3830
        %v4135 = vpop.f32.mrb[0].mxu0
        %v4136 = vadd.f32 %v3934, %v4135
        %v4137 = vpop.f32.mrb[0].mxu0
        %v4138 = vadd.f32 %v3938, %v4137
        %v4139 = vpop.f32.mrb[0].mxu0
        %v4140 = vpop.f32.mrb[0].mxu0
        %4141 = vdwg.mxu0
        %v4142 = vmax.f32 %v4136, 0.0
        %v4143 = vmax.f32 %v4138, 0.0
        %v4144 = vpack.c.bf16 %v4142, %v4142
        %v4145 = vpack.c.bf16 %v4143, %v4143
        %v4146 = vld [vmem:[%s7 + $0x100] sm:$0xf]
        %v4147 = vld [vmem:[%s7 + $0x108] sm:$0xf]
        %v4148 = vld [vmem:[%s7 + $0x110] sm:$0xf]
        %v4149 = vld [vmem:[%s7 + $0x118] sm:$0xf]
        %v4150 = vld [vmem:[%s7 + $0x120] sm:$0xf]
        %v4151 = vld [vmem:[%s7 + $0x128] sm:$0xf]
        %v4152 = vld [vmem:[%s7 + $0x130] sm:$0xf]
        %v4153 = vld [vmem:[%s7 + $0x138] sm:$0xf]
        %v4154 = vld [vmem:[%s7 + $0x140] sm:$0xf]
        %v4155 = vld [vmem:[%s7 + $0x148] sm:$0xf]
        %v4156 = vld [vmem:[%s7 + $0x150] sm:$0xf]
        %v4157 = vld [vmem:[%s7 + $0x158] sm:$0xf]
        %v4158 = vld [vmem:[%s7 + $0x160] sm:$0xf]
        %v4159 = vld [vmem:[%s7 + $0x168] sm:$0xf]
        %v4160 = vld [vmem:[%s7 + $0x170] sm:$0xf]
        %v4161 = vld [vmem:[%s7 + $0x178] sm:$0xf]
        %v4162 = vld [vmem:[%s7 + $0x180] sm:$0xf]
        %v4163 = vld [vmem:[%s7 + $0x188] sm:$0xf]
        %v4164 = vld [vmem:[%s7 + $0x190] sm:$0xf]
        %v4165 = vld [vmem:[%s7 + $0x198] sm:$0xf]
        %v4166 = vld [vmem:[%s7 + $0x1a0] sm:$0xf]
        %v4167 = vld [vmem:[%s7 + $0x1a8] sm:$0xf]
        %v4168 = vld [vmem:[%s7 + $0x1b0] sm:$0xf]
        %v4169 = vld [vmem:[%s7 + $0x1b8] sm:$0xf]
        %v4170 = vld [vmem:[%s7 + $0x1c0] sm:$0xf]
        %v4171 = vld [vmem:[%s7 + $0x1c8] sm:$0xf]
        %v4172 = vld [vmem:[%s7 + $0x1d0] sm:$0xf]
        %v4173 = vld [vmem:[%s7 + $0x1d8] sm:$0xf]
        %v4174 = vld [vmem:[%s7 + $0x1e0] sm:$0xf]
        %v4175 = vld [vmem:[%s7 + $0x1e8] sm:$0xf]
        %v4176 = vld [vmem:[%s7 + $0x1f0] sm:$0xf]
        %v4177 = vld [vmem:[%s7 + $0x1f8] sm:$0xf]
        %v4178 = vld [vmem:[%s8 + $0x1] sm:$0x1]
        %v4179 = vlaneseq
        %v4180 = vshrl.u32 %v4179, 7
        %v4181 = vsub.s32 0, %v4180
        %v4182 = vrot.slane %v4178, %v4181
        %v4215 = vunpack.c.l.b16 %v4146
        %v4216 = vunpack.c.l.b16 %v4147
        %v4217 = vunpack.c.l.b16 %v4148
        %v4218 = vunpack.c.l.b16 %v4149
        %v4219 = vunpack.c.l.b16 %v4150
        %v4220 = vunpack.c.l.b16 %v4151
        %v4221 = vunpack.c.l.b16 %v4152
        %v4222 = vunpack.c.l.b16 %v4153
        %v4223 = vunpack.c.l.b16 %v4154
        %v4224 = vunpack.c.l.b16 %v4155
        %v4225 = vunpack.c.l.b16 %v4156
        %v4226 = vunpack.c.l.b16 %v4157
        %v4227 = vunpack.c.l.b16 %v4158
        %v4228 = vunpack.c.l.b16 %v4159
        %v4229 = vunpack.c.l.b16 %v4160
        %v4230 = vunpack.c.l.b16 %v4161
        %v4231 = vunpack.c.l.b16 %v4162
        %v4232 = vunpack.c.l.b16 %v4163
        %v4233 = vunpack.c.l.b16 %v4164
        %v4234 = vunpack.c.l.b16 %v4165
        %v4235 = vunpack.c.l.b16 %v4166
        %v4236 = vunpack.c.l.b16 %v4167
        %v4237 = vunpack.c.l.b16 %v4168
        %v4238 = vunpack.c.l.b16 %v4169
        %v4239 = vunpack.c.l.b16 %v4170
        %v4240 = vunpack.c.l.b16 %v4171
        %v4241 = vunpack.c.l.b16 %v4172
        %v4242 = vunpack.c.l.b16 %v4173
        %v4243 = vunpack.c.l.b16 %v4174
        %v4244 = vunpack.c.l.b16 %v4175
        %v4245 = vunpack.c.l.b16 %v4176
        %v4246 = vunpack.c.l.b16 %v4177
        %v4247 = vpack.c.b16 %v4216, %v4215
        %v4248 = vpack.c.b16 %v4218, %v4217
        %v4249 = vpack.c.b16 %v4220, %v4219
        %v4250 = vpack.c.b16 %v4222, %v4221
        %v4251 = vpack.c.b16 %v4224, %v4223
        %v4252 = vpack.c.b16 %v4226, %v4225
        %v4253 = vpack.c.b16 %v4228, %v4227
        %v4254 = vpack.c.b16 %v4230, %v4229
        %v4255 = vpack.c.b16 %v4232, %v4231
        %v4256 = vpack.c.b16 %v4234, %v4233
        %v4257 = vpack.c.b16 %v4236, %v4235
        %v4258 = vpack.c.b16 %v4238, %v4237
        %v4259 = vpack.c.b16 %v4240, %v4239
        %v4260 = vpack.c.b16 %v4242, %v4241
        %v4261 = vpack.c.b16 %v4244, %v4243
        %v4262 = vpack.c.b16 %v4246, %v4245
        %4279 = vmatprep.subr.bf16.mxu0 0
        %4280 = vmatpush1.bf16.msra.mxu0 %v4247
        %4281 = vmatprep.subr.bf16.mxu0 0
        %4282 = vmatpush1.bf16.msra.mxu0 %v4248
        %4283 = vmatprep.subr.bf16.mxu0 0
        %4284 = vmatpush1.bf16.msra.mxu0 %v4249
        %4285 = vmatprep.subr.bf16.mxu0 0
        %4286 = vmatpush1.bf16.msra.mxu0 %v4250
        %4287 = vmatprep.subr.bf16.mxu0 0
        %4288 = vmatpush1.bf16.msra.mxu0 %v4251
        %4289 = vmatprep.subr.bf16.mxu0 0
        %4290 = vmatpush1.bf16.msra.mxu0 %v4252
        %4291 = vmatprep.subr.bf16.mxu0 0
        %4292 = vmatpush1.bf16.msra.mxu0 %v4253
        %4293 = vmatprep.subr.bf16.mxu0 0
        %4294 = vmatpush1.bf16.msra.mxu0 %v4254
        %4295 = vmatprep.subr.bf16.mxu0 0
        %4296 = vmatpush1.bf16.msra.mxu0 %v4255
        %4297 = vmatprep.subr.bf16.mxu0 0
        %4298 = vmatpush1.bf16.msra.mxu0 %v4256
        %4299 = vmatprep.subr.bf16.mxu0 0
        %4300 = vmatpush1.bf16.msra.mxu0 %v4257
        %4301 = vmatprep.subr.bf16.mxu0 0
        %4302 = vmatpush1.bf16.msra.mxu0 %v4258
        %4303 = vmatprep.subr.bf16.mxu0 0
        %4304 = vmatpush1.bf16.msra.mxu0 %v4259
        %4305 = vmatprep.subr.bf16.mxu0 0
        %4306 = vmatpush1.bf16.msra.mxu0 %v4260
        %4307 = vmatprep.subr.bf16.mxu0 0
        %4308 = vmatpush1.bf16.msra.mxu0 %v4261
        %4309 = vmatprep.subr.bf16.mxu0 0
        %4310 = vmatpush1.bf16.msra.mxu0 %v4262
        %4311 = vmatprep.mubr.bf16.mxu0 %v4145
        %4312 = vmatmul.mubr.bf16.gmra.mrb[0].mxu0 %v4144
        %v4313 = vpop.f32.mrb[0].mxu0
        %v4314 = vadd.f32 %v4182, %v4313
        %v4315 = vpop.f32.mrb[0].mxu0
        %v4316 = vpop.f32.mrb[0].mxu0
        %v4317 = vpop.f32.mrb[0].mxu0
        %4318 = vdwg.mxu0
        %v4319 = vmax.f32 %v4314, 0.0
        %v4320 = vpack.c.bf16 %v4319, %v4319
        %v4321 = vld [vmem:[%s7 + $0x200] sm:$0xf]
        %v4322 = vld [vmem:[%s7 + $0x208] sm:$0xf]
        %v4323 = vld [vmem:[%s7 + $0x210] sm:$0xf]
        %v4324 = vld [vmem:[%s7 + $0x218] sm:$0xf]
        %v4325 = vld [vmem:[%s7 + $0x220] sm:$0xf]
        %v4326 = vld [vmem:[%s7 + $0x228] sm:$0xf]
        %v4327 = vld [vmem:[%s7 + $0x230] sm:$0xf]
        %v4328 = vld [vmem:[%s7 + $0x238] sm:$0xf]
        %v4329 = vld [vmem:[%s7 + $0x240] sm:$0xf]
        %v4330 = vld [vmem:[%s7 + $0x248] sm:$0xf]
        %v4331 = vld [vmem:[%s7 + $0x250] sm:$0xf]
        %v4332 = vld [vmem:[%s7 + $0x258] sm:$0xf]
        %v4333 = vld [vmem:[%s7 + $0x260] sm:$0xf]
        %v4334 = vld [vmem:[%s7 + $0x268] sm:$0xf]
        %v4335 = vld [vmem:[%s7 + $0x270] sm:$0xf]
        %v4336 = vld [vmem:[%s7 + $0x278] sm:$0xf]
        %v4337 = vld [vmem:[%s8 + $0x2] sm:$0x1]
        %v4338 = vlaneseq
        %v4339 = vshrl.u32 %v4338, 7
        %v4340 = vsub.s32 0, %v4339
        %v4341 = vrot.slane %v4337, %v4340
        %v4358 = vunpack.c.l.b16 %v4321
        %v4359 = vunpack.c.l.b16 %v4322
        %v4360 = vunpack.c.l.b16 %v4323
        %v4361 = vunpack.c.l.b16 %v4324
        %v4362 = vunpack.c.l.b16 %v4325
        %v4363 = vunpack.c.l.b16 %v4326
        %v4364 = vunpack.c.l.b16 %v4327
        %v4365 = vunpack.c.l.b16 %v4328
        %v4366 = vunpack.c.l.b16 %v4329
        %v4367 = vunpack.c.l.b16 %v4330
        %v4368 = vunpack.c.l.b16 %v4331
        %v4369 = vunpack.c.l.b16 %v4332
        %v4370 = vunpack.c.l.b16 %v4333
        %v4371 = vunpack.c.l.b16 %v4334
        %v4372 = vunpack.c.l.b16 %v4335
        %v4373 = vunpack.c.l.b16 %v4336
        %v4374 = vpack.c.b16 %v4359, %v4358
        %v4375 = vpack.c.b16 %v4361, %v4360
        %v4376 = vpack.c.b16 %v4363, %v4362
        %v4377 = vpack.c.b16 %v4365, %v4364
        %v4378 = vpack.c.b16 %v4367, %v4366
        %v4379 = vpack.c.b16 %v4369, %v4368
        %v4380 = vpack.c.b16 %v4371, %v4370
        %v4381 = vpack.c.b16 %v4373, %v4372
        %4390 = vmatprep.subr.bf16.mxu0 0
        %4391 = vmatpush1.bf16.msra.mxu0 %v4374
        %4392 = vmatprep.subr.bf16.mxu0 0
        %4393 = vmatpush1.bf16.msra.mxu0 %v4375
        %4394 = vmatprep.subr.bf16.mxu0 0
        %4395 = vmatpush1.bf16.msra.mxu0 %v4376
        %4396 = vmatprep.subr.bf16.mxu0 0
        %4397 = vmatpush1.bf16.msra.mxu0 %v4377
        %4398 = vmatprep.subr.bf16.mxu0 0
        %4399 = vmatpush1.bf16.msra.mxu0 %v4378
        %4400 = vmatprep.subr.bf16.mxu0 0
        %4401 = vmatpush1.bf16.msra.mxu0 %v4379
        %4402 = vmatprep.subr.bf16.mxu0 0
        %4403 = vmatpush1.bf16.msra.mxu0 %v4380
        %4404 = vmatprep.subr.bf16.mxu0 0
        %4405 = vmatpush1.bf16.msra.mxu0 %v4381
        %4406 = vmatprep.subr.bf16.mxu0 0
        %4407 = vmatpush1.bf16.msra.mxu0 0
        %4408 = vmatprep.subr.bf16.mxu0 0
        %4409 = vmatpush1.bf16.msra.mxu0 0
        %4410 = vmatprep.subr.bf16.mxu0 0
        %4411 = vmatpush1.bf16.msra.mxu0 0
        %4412 = vmatprep.subr.bf16.mxu0 0
        %4413 = vmatpush1.bf16.msra.mxu0 0
        %4414 = vmatprep.subr.bf16.mxu0 0
        %4415 = vmatpush1.bf16.msra.mxu0 0
        %4416 = vmatprep.subr.bf16.mxu0 0
        %4417 = vmatpush1.bf16.msra.mxu0 0
        %4418 = vmatprep.subr.bf16.mxu0 0
        %4419 = vmatpush1.bf16.msra.mxu0 0
        %4420 = vmatprep.subr.bf16.mxu0 0
        %4421 = vmatpush1.bf16.msra.mxu0 0
        %4422 = vmatprep.mubr.bf16.mxu0 0
        %4423 = vmatmul.mubr.bf16.gmra.mrb[0].mxu0 %v4320
        %v4424 = vpop.f32.mrb[0].mxu0
        %v4425 = vadd.f32 %v4341, %v4424
        %v4426 = vpop.f32.mrb[0].mxu0
        %v4427 = vpop.f32.mrb[0].mxu0
        %v4428 = vpop.f32.mrb[0].mxu0
        %4429 = vdwg.mxu0
        %v4430 = vld [vmem:[%s5] sm:$0xff]
        %v4431 = vld [vmem:[%s5 + $0x8] sm:$0xff]
        %v4432 = vld [vmem:[%s5 + $0x10] sm:$0xff]
        %v4433 = vld [vmem:[%s5 + $0x18] sm:$0xff]
        %v4434 = vld [vmem:[%s5 + $0x20] sm:$0xff]
        %v4435 = vld [vmem:[%s5 + $0x28] sm:$0xff]
        %v4436 = vld [vmem:[%s5 + $0x30] sm:$0xff]
        %v4437 = vld [vmem:[%s5 + $0x38] sm:$0xff]
        %v4438 = vld [vmem:[%s5 + $0x40] sm:$0xff]
        %v4439 = vld [vmem:[%s5 + $0x48] sm:$0xff]
        %v4440 = vld [vmem:[%s5 + $0x50] sm:$0xff]
        %v4441 = vld [vmem:[%s5 + $0x58] sm:$0xff]
        %v4442 = vld [vmem:[%s5 + $0x60] sm:$0xff]
        %v4443 = vld [vmem:[%s5 + $0x68] sm:$0xff]
        %v4444 = vld [vmem:[%s5 + $0x70] sm:$0xff]
        %v4445 = vld [vmem:[%s5 + $0x78] sm:$0xff]
        %v4446 = vld [vmem:[%s5 + $0x80] sm:$0xff]
        %v4447 = vld [vmem:[%s5 + $0x88] sm:$0xff]
        %v4448 = vld [vmem:[%s5 + $0x90] sm:$0xff]
        %v4449 = vld [vmem:[%s5 + $0x98] sm:$0xff]
        %v4450 = vld [vmem:[%s5 + $0xa0] sm:$0xff]
        %v4451 = vld [vmem:[%s5 + $0xa8] sm:$0xff]
        %v4452 = vld [vmem:[%s5 + $0xb0] sm:$0xff]
        %v4453 = vld [vmem:[%s5 + $0xb8] sm:$0xff]
        %v4454 = vld [vmem:[%s5 + $0xc0] sm:$0xff]
        %v4455 = vld [vmem:[%s5 + $0xc8] sm:$0xff]
        %v4456 = vld [vmem:[%s5 + $0xd0] sm:$0xff]
        %v4457 = vld [vmem:[%s5 + $0xd8] sm:$0xff]
        %v4458 = vld [vmem:[%s5 + $0xe0] sm:$0xff]
        %v4459 = vld [vmem:[%s5 + $0xe8] sm:$0xff]
        %v4460 = vld [vmem:[%s5 + $0xf0] sm:$0xff]
        %v4461 = vld [vmem:[%s5 + $0xf8] sm:$0xff]
        %v4462 = vld [vmem:[%s6] ss:$4 sm:$0x3]
        %v4464 = vlaneseq
        %v4465 = vshrl.u32 %v4464, 7
        %v4466 = vsub.s32 0, %v4465
        %v4467 = vrot.slane %v4462, %v4466
        %v4468 = vlaneseq
        %v4469 = vshrl.u32 %v4468, 7
        %v4470 = vsub.s32 1, %v4469
        %v4471 = vrot.slane %v4462, %v4470
        %v4506 = vunpack.c.l.b16 %v4430
        %v4507 = vunpack.c.h.b16 %v4430
        %v4508 = vunpack.c.l.b16 %v4431
        %v4509 = vunpack.c.h.b16 %v4431
        %v4510 = vunpack.c.l.b16 %v4432
        %v4511 = vunpack.c.h.b16 %v4432
        %v4512 = vunpack.c.l.b16 %v4433
        %v4513 = vunpack.c.h.b16 %v4433
        %v4514 = vunpack.c.l.b16 %v4434
        %v4515 = vunpack.c.h.b16 %v4434
        %v4516 = vunpack.c.l.b16 %v4435
        %v4517 = vunpack.c.h.b16 %v4435
        %v4518 = vunpack.c.l.b16 %v4436
        %v4519 = vunpack.c.h.b16 %v4436
        %v4520 = vunpack.c.l.b16 %v4437
        %v4521 = vunpack.c.h.b16 %v4437
        %v4522 = vunpack.c.l.b16 %v4438
        %v4523 = vunpack.c.h.b16 %v4438
        %v4524 = vunpack.c.l.b16 %v4439
        %v4525 = vunpack.c.h.b16 %v4439
        %v4526 = vunpack.c.l.b16 %v4440
        %v4527 = vunpack.c.h.b16 %v4440
        %v4528 = vunpack.c.l.b16 %v4441
        %v4529 = vunpack.c.h.b16 %v4441
        %v4530 = vunpack.c.l.b16 %v4442
        %v4531 = vunpack.c.h.b16 %v4442
        %v4532 = vunpack.c.l.b16 %v4443
        %v4533 = vunpack.c.h.b16 %v4443
        %v4534 = vunpack.c.l.b16 %v4444
        %v4535 = vunpack.c.h.b16 %v4444
        %v4536 = vunpack.c.l.b16 %v4445
        %v4537 = vunpack.c.h.b16 %v4445
        %v4538 = vunpack.c.l.b16 %v4446
        %v4539 = vunpack.c.h.b16 %v4446
        %v4540 = vunpack.c.l.b16 %v4447
        %v4541 = vunpack.c.h.b16 %v4447
        %v4542 = vunpack.c.l.b16 %v4448
        %v4543 = vunpack.c.h.b16 %v4448
        %v4544 = vunpack.c.l.b16 %v4449
        %v4545 = vunpack.c.h.b16 %v4449
        %v4546 = vunpack.c.l.b16 %v4450
        %v4547 = vunpack.c.h.b16 %v4450
        %v4548 = vunpack.c.l.b16 %v4451
        %v4549 = vunpack.c.h.b16 %v4451
        %v4550 = vunpack.c.l.b16 %v4452
        %v4551 = vunpack.c.h.b16 %v4452
        %v4552 = vunpack.c.l.b16 %v4453
        %v4553 = vunpack.c.h.b16 %v4453
        %v4554 = vunpack.c.l.b16 %v4454
        %v4555 = vunpack.c.h.b16 %v4454
        %v4556 = vunpack.c.l.b16 %v4455
        %v4557 = vunpack.c.h.b16 %v4455
        %v4558 = vunpack.c.l.b16 %v4456
        %v4559 = vunpack.c.h.b16 %v4456
        %v4560 = vunpack.c.l.b16 %v4457
        %v4561 = vunpack.c.h.b16 %v4457
        %v4562 = vunpack.c.l.b16 %v4458
        %v4563 = vunpack.c.h.b16 %v4458
        %v4564 = vunpack.c.l.b16 %v4459
        %v4565 = vunpack.c.h.b16 %v4459
        %v4566 = vunpack.c.l.b16 %v4460
        %v4567 = vunpack.c.h.b16 %v4460
        %v4568 = vunpack.c.l.b16 %v4461
        %v4569 = vunpack.c.h.b16 %v4461
        %v4570 = vpack.c.b16 %v4508, %v4506
        %v4571 = vpack.c.b16 %v4509, %v4507
        %v4572 = vpack.c.b16 %v4512, %v4510
        %v4573 = vpack.c.b16 %v4513, %v4511
        %v4574 = vpack.c.b16 %v4516, %v4514
        %v4575 = vpack.c.b16 %v4517, %v4515
        %v4576 = vpack.c.b16 %v4520, %v4518
        %v4577 = vpack.c.b16 %v4521, %v4519
        %v4578 = vpack.c.b16 %v4524, %v4522
        %v4579 = vpack.c.b16 %v4525, %v4523
        %v4580 = vpack.c.b16 %v4528, %v4526
        %v4581 = vpack.c.b16 %v4529, %v4527
        %v4582 = vpack.c.b16 %v4532, %v4530
        %v4583 = vpack.c.b16 %v4533, %v4531
        %v4584 = vpack.c.b16 %v4536, %v4534
        %v4585 = vpack.c.b16 %v4537, %v4535
        %v4586 = vpack.c.b16 %v4540, %v4538
        %v4587 = vpack.c.b16 %v4541, %v4539
        %v4588 = vpack.c.b16 %v4544, %v4542
        %v4589 = vpack.c.b16 %v4545, %v4543
        %v4590 = vpack.c.b16 %v4548, %v4546
        %v4591 = vpack.c.b16 %v4549, %v4547
        %v4592 = vpack.c.b16 %v4552, %v4550
        %v4593 = vpack.c.b16 %v4553, %v4551
        %v4594 = vpack.c.b16 %v4556, %v4554
        %v4595 = vpack.c.b16 %v4557, %v4555
        %v4596 = vpack.c.b16 %v4560, %v4558
        %v4597 = vpack.c.b16 %v4561, %v4559
        %v4598 = vpack.c.b16 %v4564, %v4562
        %v4599 = vpack.c.b16 %v4565, %v4563
        %v4600 = vpack.c.b16 %v4568, %v4566
        %v4601 = vpack.c.b16 %v4569, %v4567
        %4634 = vmatprep.subr.bf16.mxu0 %v4571
        %4635 = vmatpush1.bf16.msra.mxu0 %v4570
        %4636 = vmatprep.subr.bf16.mxu0 %v4573
        %4637 = vmatpush1.bf16.msra.mxu0 %v4572
        %4638 = vmatprep.subr.bf16.mxu0 %v4575
        %4639 = vmatpush1.bf16.msra.mxu0 %v4574
        %4640 = vmatprep.subr.bf16.mxu0 %v4577
        %4641 = vmatpush1.bf16.msra.mxu0 %v4576
        %4642 = vmatprep.subr.bf16.mxu0 %v4579
        %4643 = vmatpush1.bf16.msra.mxu0 %v4578
        %4644 = vmatprep.subr.bf16.mxu0 %v4581
        %4645 = vmatpush1.bf16.msra.mxu0 %v4580
        %4646 = vmatprep.subr.bf16.mxu0 %v4583
        %4647 = vmatpush1.bf16.msra.mxu0 %v4582
        %4648 = vmatprep.subr.bf16.mxu0 %v4585
        %4649 = vmatpush1.bf16.msra.mxu0 %v4584
        %4650 = vmatprep.subr.bf16.mxu0 %v4587
        %4651 = vmatpush1.bf16.msra.mxu0 %v4586
        %4652 = vmatprep.subr.bf16.mxu0 %v4589
        %4653 = vmatpush1.bf16.msra.mxu0 %v4588
        %4654 = vmatprep.subr.bf16.mxu0 %v4591
        %4655 = vmatpush1.bf16.msra.mxu0 %v4590
        %4656 = vmatprep.subr.bf16.mxu0 %v4593
        %4657 = vmatpush1.bf16.msra.mxu0 %v4592
        %4658 = vmatprep.subr.bf16.mxu0 %v4595
        %4659 = vmatpush1.bf16.msra.mxu0 %v4594
        %4660 = vmatprep.subr.bf16.mxu0 %v4597
        %4661 = vmatpush1.bf16.msra.mxu0 %v4596
        %4662 = vmatprep.subr.bf16.mxu0 %v4599
        %4663 = vmatpush1.bf16.msra.mxu0 %v4598
        %4664 = vmatprep.subr.bf16.mxu0 %v4601
        %4665 = vmatpush1.bf16.msra.mxu0 %v4600
        %4666 = vmatprep.mubr.bf16.mxu0 %v3896
        %4667 = vmatmul.mubr.bf16.gmra.mrb[0].mxu0 %v3895
        %v4668 = vpop.f32.mrb[0].mxu0
        %v4669 = vadd.f32 %v4467, %v4668
        %v4670 = vpop.f32.mrb[0].mxu0
        %v4671 = vadd.f32 %v4471, %v4670
        %v4672 = vpop.f32.mrb[0].mxu0
        %v4673 = vpop.f32.mrb[0].mxu0
        %4674 = vdwg.mxu0
        %v4675 = vmax.f32 %v4669, 0.0
        %v4676 = vmax.f32 %v4671, 0.0
        %v4677 = vpack.c.bf16 %v4675, %v4675
        %v4678 = vpack.c.bf16 %v4676, %v4676
        %v4679 = vld [vmem:[%s5 + $0x100] sm:$0xf]
        %v4680 = vld [vmem:[%s5 + $0x108] sm:$0xf]
        %v4681 = vld [vmem:[%s5 + $0x110] sm:$0xf]
        %v4682 = vld [vmem:[%s5 + $0x118] sm:$0xf]
        %v4683 = vld [vmem:[%s5 + $0x120] sm:$0xf]
        %v4684 = vld [vmem:[%s5 + $0x128] sm:$0xf]
        %v4685 = vld [vmem:[%s5 + $0x130] sm:$0xf]
        %v4686 = vld [vmem:[%s5 + $0x138] sm:$0xf]
        %v4687 = vld [vmem:[%s5 + $0x140] sm:$0xf]
        %v4688 = vld [vmem:[%s5 + $0x148] sm:$0xf]
        %v4689 = vld [vmem:[%s5 + $0x150] sm:$0xf]
        %v4690 = vld [vmem:[%s5 + $0x158] sm:$0xf]
        %v4691 = vld [vmem:[%s5 + $0x160] sm:$0xf]
        %v4692 = vld [vmem:[%s5 + $0x168] sm:$0xf]
        %v4693 = vld [vmem:[%s5 + $0x170] sm:$0xf]
        %v4694 = vld [vmem:[%s5 + $0x178] sm:$0xf]
        %v4695 = vld [vmem:[%s5 + $0x180] sm:$0xf]
        %v4696 = vld [vmem:[%s5 + $0x188] sm:$0xf]
        %v4697 = vld [vmem:[%s5 + $0x190] sm:$0xf]
        %v4698 = vld [vmem:[%s5 + $0x198] sm:$0xf]
        %v4699 = vld [vmem:[%s5 + $0x1a0] sm:$0xf]
        %v4700 = vld [vmem:[%s5 + $0x1a8] sm:$0xf]
        %v4701 = vld [vmem:[%s5 + $0x1b0] sm:$0xf]
        %v4702 = vld [vmem:[%s5 + $0x1b8] sm:$0xf]
        %v4703 = vld [vmem:[%s5 + $0x1c0] sm:$0xf]
        %v4704 = vld [vmem:[%s5 + $0x1c8] sm:$0xf]
        %v4705 = vld [vmem:[%s5 + $0x1d0] sm:$0xf]
        %v4706 = vld [vmem:[%s5 + $0x1d8] sm:$0xf]
        %v4707 = vld [vmem:[%s5 + $0x1e0] sm:$0xf]
        %v4708 = vld [vmem:[%s5 + $0x1e8] sm:$0xf]
        %v4709 = vld [vmem:[%s5 + $0x1f0] sm:$0xf]
        %v4710 = vld [vmem:[%s5 + $0x1f8] sm:$0xf]
        %v4711 = vld [vmem:[%s6 + $0x1] sm:$0x1]
        %v4712 = vlaneseq
        %v4713 = vshrl.u32 %v4712, 7
        %v4714 = vsub.s32 0, %v4713
        %v4715 = vrot.slane %v4711, %v4714
        %v4748 = vunpack.c.l.b16 %v4679
        %v4749 = vunpack.c.l.b16 %v4680
        %v4750 = vunpack.c.l.b16 %v4681
        %v4751 = vunpack.c.l.b16 %v4682
        %v4752 = vunpack.c.l.b16 %v4683
        %v4753 = vunpack.c.l.b16 %v4684
        %v4754 = vunpack.c.l.b16 %v4685
        %v4755 = vunpack.c.l.b16 %v4686
        %v4756 = vunpack.c.l.b16 %v4687
        %v4757 = vunpack.c.l.b16 %v4688
        %v4758 = vunpack.c.l.b16 %v4689
        %v4759 = vunpack.c.l.b16 %v4690
        %v4760 = vunpack.c.l.b16 %v4691
        %v4761 = vunpack.c.l.b16 %v4692
        %v4762 = vunpack.c.l.b16 %v4693
        %v4763 = vunpack.c.l.b16 %v4694
        %v4764 = vunpack.c.l.b16 %v4695
        %v4765 = vunpack.c.l.b16 %v4696
        %v4766 = vunpack.c.l.b16 %v4697
        %v4767 = vunpack.c.l.b16 %v4698
        %v4768 = vunpack.c.l.b16 %v4699
        %v4769 = vunpack.c.l.b16 %v4700
        %v4770 = vunpack.c.l.b16 %v4701
        %v4771 = vunpack.c.l.b16 %v4702
        %v4772 = vunpack.c.l.b16 %v4703
        %v4773 = vunpack.c.l.b16 %v4704
        %v4774 = vunpack.c.l.b16 %v4705
        %v4775 = vunpack.c.l.b16 %v4706
        %v4776 = vunpack.c.l.b16 %v4707
        %v4777 = vunpack.c.l.b16 %v4708
        %v4778 = vunpack.c.l.b16 %v4709
        %v4779 = vunpack.c.l.b16 %v4710
        %v4780 = vpack.c.b16 %v4749, %v4748
        %v4781 = vpack.c.b16 %v4751, %v4750
        %v4782 = vpack.c.b16 %v4753, %v4752
        %v4783 = vpack.c.b16 %v4755, %v4754
        %v4784 = vpack.c.b16 %v4757, %v4756
        %v4785 = vpack.c.b16 %v4759, %v4758
        %v4786 = vpack.c.b16 %v4761, %v4760
        %v4787 = vpack.c.b16 %v4763, %v4762
        %v4788 = vpack.c.b16 %v4765, %v4764
        %v4789 = vpack.c.b16 %v4767, %v4766
        %v4790 = vpack.c.b16 %v4769, %v4768
        %v4791 = vpack.c.b16 %v4771, %v4770
        %v4792 = vpack.c.b16 %v4773, %v4772
        %v4793 = vpack.c.b16 %v4775, %v4774
        %v4794 = vpack.c.b16 %v4777, %v4776
        %v4795 = vpack.c.b16 %v4779, %v4778
        %4812 = vmatprep.subr.bf16.mxu0 0
        %4813 = vmatpush1.bf16.msra.mxu0 %v4780
        %4814 = vmatprep.subr.bf16.mxu0 0
        %4815 = vmatpush1.bf16.msra.mxu0 %v4781
        %4816 = vmatprep.subr.bf16.mxu0 0
        %4817 = vmatpush1.bf16.msra.mxu0 %v4782
        %4818 = vmatprep.subr.bf16.mxu0 0
        %4819 = vmatpush1.bf16.msra.mxu0 %v4783
        %4820 = vmatprep.subr.bf16.mxu0 0
        %4821 = vmatpush1.bf16.msra.mxu0 %v4784
        %4822 = vmatprep.subr.bf16.mxu0 0
        %4823 = vmatpush1.bf16.msra.mxu0 %v4785
        %4824 = vmatprep.subr.bf16.mxu0 0
        %4825 = vmatpush1.bf16.msra.mxu0 %v4786
        %4826 = vmatprep.subr.bf16.mxu0 0
        %4827 = vmatpush1.bf16.msra.mxu0 %v4787
        %4828 = vmatprep.subr.bf16.mxu0 0
        %4829 = vmatpush1.bf16.msra.mxu0 %v4788
        %4830 = vmatprep.subr.bf16.mxu0 0
        %4831 = vmatpush1.bf16.msra.mxu0 %v4789
        %4832 = vmatprep.subr.bf16.mxu0 0
        %4833 = vmatpush1.bf16.msra.mxu0 %v4790
        %4834 = vmatprep.subr.bf16.mxu0 0
        %4835 = vmatpush1.bf16.msra.mxu0 %v4791
        %4836 = vmatprep.subr.bf16.mxu0 0
        %4837 = vmatpush1.bf16.msra.mxu0 %v4792
        %4838 = vmatprep.subr.bf16.mxu0 0
        %4839 = vmatpush1.bf16.msra.mxu0 %v4793
        %4840 = vmatprep.subr.bf16.mxu0 0
        %4841 = vmatpush1.bf16.msra.mxu0 %v4794
        %4842 = vmatprep.subr.bf16.mxu0 0
        %4843 = vmatpush1.bf16.msra.mxu0 %v4795
        %4844 = vmatprep.mubr.bf16.mxu0 %v4678
        %4845 = vmatmul.mubr.bf16.gmra.mrb[0].mxu0 %v4677
        %v4846 = vpop.f32.mrb[0].mxu0
        %v4847 = vadd.f32 %v4715, %v4846
        %v4848 = vpop.f32.mrb[0].mxu0
        %v4849 = vpop.f32.mrb[0].mxu0
        %v4850 = vpop.f32.mrb[0].mxu0
        %4851 = vdwg.mxu0
        %v4852 = vmax.f32 %v4847, 0.0
        %v4853 = vpack.c.bf16 %v4852, %v4852
        %v4854 = vld [vmem:[%s5 + $0x200] sm:$0xf]
        %v4855 = vld [vmem:[%s5 + $0x208] sm:$0xf]
        %v4856 = vld [vmem:[%s5 + $0x210] sm:$0xf]
        %v4857 = vld [vmem:[%s5 + $0x218] sm:$0xf]
        %v4858 = vld [vmem:[%s5 + $0x220] sm:$0xf]
        %v4859 = vld [vmem:[%s5 + $0x228] sm:$0xf]
        %v4860 = vld [vmem:[%s5 + $0x230] sm:$0xf]
        %v4861 = vld [vmem:[%s5 + $0x238] sm:$0xf]
        %v4862 = vld [vmem:[%s5 + $0x240] sm:$0xf]
        %v4863 = vld [vmem:[%s5 + $0x248] sm:$0xf]
        %v4864 = vld [vmem:[%s5 + $0x250] sm:$0xf]
        %v4865 = vld [vmem:[%s5 + $0x258] sm:$0xf]
        %v4866 = vld [vmem:[%s5 + $0x260] sm:$0xf]
        %v4867 = vld [vmem:[%s5 + $0x268] sm:$0xf]
        %v4868 = vld [vmem:[%s5 + $0x270] sm:$0xf]
        %v4869 = vld [vmem:[%s5 + $0x278] sm:$0xf]
        %v4870 = vld [vmem:[%s6 + $0x2] sm:$0x1]
        %v4871 = vlaneseq
        %v4872 = vshrl.u32 %v4871, 7
        %v4873 = vsub.s32 0, %v4872
        %v4874 = vrot.slane %v4870, %v4873
        %v4891 = vunpack.c.l.b16 %v4854
        %v4892 = vunpack.c.l.b16 %v4855
        %v4893 = vunpack.c.l.b16 %v4856
        %v4894 = vunpack.c.l.b16 %v4857
        %v4895 = vunpack.c.l.b16 %v4858
        %v4896 = vunpack.c.l.b16 %v4859
        %v4897 = vunpack.c.l.b16 %v4860
        %v4898 = vunpack.c.l.b16 %v4861
        %v4899 = vunpack.c.l.b16 %v4862
        %v4900 = vunpack.c.l.b16 %v4863
        %v4901 = vunpack.c.l.b16 %v4864
        %v4902 = vunpack.c.l.b16 %v4865
        %v4903 = vunpack.c.l.b16 %v4866
        %v4904 = vunpack.c.l.b16 %v4867
        %v4905 = vunpack.c.l.b16 %v4868
        %v4906 = vunpack.c.l.b16 %v4869
        %v4907 = vpack.c.b16 %v4892, %v4891
        %v4908 = vpack.c.b16 %v4894, %v4893
        %v4909 = vpack.c.b16 %v4896, %v4895
        %v4910 = vpack.c.b16 %v4898, %v4897
        %v4911 = vpack.c.b16 %v4900, %v4899
        %v4912 = vpack.c.b16 %v4902, %v4901
        %v4913 = vpack.c.b16 %v4904, %v4903
        %v4914 = vpack.c.b16 %v4906, %v4905
        %4923 = vmatprep.subr.bf16.mxu0 0
        %4924 = vmatpush1.bf16.msra.mxu0 %v4907
        %4925 = vmatprep.subr.bf16.mxu0 0
        %4926 = vmatpush1.bf16.msra.mxu0 %v4908
        %4927 = vmatprep.subr.bf16.mxu0 0
        %4928 = vmatpush1.bf16.msra.mxu0 %v4909
        %4929 = vmatprep.subr.bf16.mxu0 0
        %4930 = vmatpush1.bf16.msra.mxu0 %v4910
        %4931 = vmatprep.subr.bf16.mxu0 0
        %4932 = vmatpush1.bf16.msra.mxu0 %v4911
        %4933 = vmatprep.subr.bf16.mxu0 0
        %4934 = vmatpush1.bf16.msra.mxu0 %v4912
        %4935 = vmatprep.subr.bf16.mxu0 0
        %4936 = vmatpush1.bf16.msra.mxu0 %v4913
        %4937 = vmatprep.subr.bf16.mxu0 0
        %4938 = vmatpush1.bf16.msra.mxu0 %v4914
        %4939 = vmatprep.subr.bf16.mxu0 0
        %4940 = vmatpush1.bf16.msra.mxu0 0
        %4941 = vmatprep.subr.bf16.mxu0 0
        %4942 = vmatpush1.bf16.msra.mxu0 0
        %4943 = vmatprep.subr.bf16.mxu0 0
        %4944 = vmatpush1.bf16.msra.mxu0 0
        %4945 = vmatprep.subr.bf16.mxu0 0
        %4946 = vmatpush1.bf16.msra.mxu0 0
        %4947 = vmatprep.subr.bf16.mxu0 0
        %4948 = vmatpush1.bf16.msra.mxu0 0
        %4949 = vmatprep.subr.bf16.mxu0 0
        %4950 = vmatpush1.bf16.msra.mxu0 0
        %4951 = vmatprep.subr.bf16.mxu0 0
        %4952 = vmatpush1.bf16.msra.mxu0 0
        %4953 = vmatprep.subr.bf16.mxu0 0
        %4954 = vmatpush1.bf16.msra.mxu0 0
        %4955 = vmatprep.mubr.bf16.mxu0 0
        %4956 = vmatmul.mubr.bf16.gmra.mrb[0].mxu0 %v4853
        %v4957 = vpop.f32.mrb[0].mxu0
        %v4958 = vadd.f32 %v4874, %v4957
        %v4959 = vpop.f32.mrb[0].mxu0
        %v4960 = vpop.f32.mrb[0].mxu0
        %v4961 = vpop.f32.mrb[0].mxu0
        %4962 = vdwg.mxu0
        %v4963 = vld [vmem:[%s9] sm:$0xf]
        %v4964 = vld [vmem:[%s9 + $0x4] sm:$0xf]
        %v4965 = vld [vmem:[%s9 + $0x8] sm:$0xf]
        %v4966 = vld [vmem:[%s9 + $0xc] sm:$0xf]
        %v4967 = vld [vmem:[%s9 + $0x10] sm:$0xf]
        %v4968 = vld [vmem:[%s9 + $0x14] sm:$0xf]
        %v4969 = vld [vmem:[%s9 + $0x18] sm:$0xf]
        %v4970 = vld [vmem:[%s9 + $0x1c] sm:$0xf]
        %v4971 = vld [vmem:[%s9 + $0x20] sm:$0xf]
        %v4972 = vld [vmem:[%s9 + $0x24] sm:$0xf]
        %v4973 = vld [vmem:[%s9 + $0x28] sm:$0xf]
        %v4974 = vld [vmem:[%s9 + $0x2c] sm:$0xf]
        %v4975 = vld [vmem:[%s9 + $0x30] sm:$0xf]
        %v4976 = vld [vmem:[%s9 + $0x34] sm:$0xf]
        %v4977 = vld [vmem:[%s9 + $0x38] sm:$0xf]
        %v4978 = vld [vmem:[%s9 + $0x3c] sm:$0xf]
        %v4979 = vld [vmem:[%s9 + $0x40] sm:$0xf]
        %v4980 = vld [vmem:[%s9 + $0x44] sm:$0xf]
        %v4981 = vld [vmem:[%s9 + $0x48] sm:$0xf]
        %v4982 = vld [vmem:[%s9 + $0x4c] sm:$0xf]
        %v4983 = vld [vmem:[%s9 + $0x50] sm:$0xf]
        %v4984 = vld [vmem:[%s9 + $0x54] sm:$0xf]
        %v4985 = vld [vmem:[%s9 + $0x58] sm:$0xf]
        %v4986 = vld [vmem:[%s9 + $0x5c] sm:$0xf]
        %v4987 = vld [vmem:[%s9 + $0x60] sm:$0xf]
        %v4988 = vld [vmem:[%s9 + $0x64] sm:$0xf]
        %v4989 = vld [vmem:[%s9 + $0x68] sm:$0xf]
        %v4990 = vld [vmem:[%s9 + $0x6c] sm:$0xf]
        %v4991 = vld [vmem:[%s9 + $0x70] sm:$0xf]
        %v4992 = vld [vmem:[%s9 + $0x74] sm:$0xf]
        %v4993 = vld [vmem:[%s9 + $0x78] sm:$0xf]
        %v4994 = vld [vmem:[%s9 + $0x7c] sm:$0xf]
        %v4995 = vpack.c.bf16 %v4958, %v4958
        %v4996 = vld [vmem:[%s10] sm:$0x1]
        %v4997 = vlaneseq
        %v4998 = vshrl.u32 %v4997, 7
        %v4999 = vsub.s32 0, %v4998
        %v5000 = vrot.slane %v4996, %v4999
        %v5017 = vunpack.c.l.b16 %v4963
        %v5018 = vunpack.c.l.b16 %v4964
        %v5019 = vunpack.c.l.b16 %v4965
        %v5020 = vunpack.c.l.b16 %v4966
        %v5021 = vunpack.c.l.b16 %v4967
        %v5022 = vunpack.c.l.b16 %v4968
        %v5023 = vunpack.c.l.b16 %v4969
        %v5024 = vunpack.c.l.b16 %v4970
        %v5025 = vunpack.c.l.b16 %v4971
        %v5026 = vunpack.c.l.b16 %v4972
        %v5027 = vunpack.c.l.b16 %v4973
        %v5028 = vunpack.c.l.b16 %v4974
        %v5029 = vunpack.c.l.b16 %v4975
        %v5030 = vunpack.c.l.b16 %v4976
        %v5031 = vunpack.c.l.b16 %v4977
        %v5032 = vunpack.c.l.b16 %v4978
        %v5033 = vpack.c.b16 %v5018, %v5017
        %v5034 = vpack.c.b16 %v5020, %v5019
        %v5035 = vpack.c.b16 %v5022, %v5021
        %v5036 = vpack.c.b16 %v5024, %v5023
        %v5037 = vpack.c.b16 %v5026, %v5025
        %v5038 = vpack.c.b16 %v5028, %v5027
        %v5039 = vpack.c.b16 %v5030, %v5029
        %v5040 = vpack.c.b16 %v5032, %v5031
        %5049 = vmatprep.subr.bf16.mxu0 0
        %5050 = vmatpush1.bf16.msra.mxu0 %v5033
        %5051 = vmatprep.subr.bf16.mxu0 0
        %5052 = vmatpush1.bf16.msra.mxu0 %v5034
        %5053 = vmatprep.subr.bf16.mxu0 0
        %5054 = vmatpush1.bf16.msra.mxu0 %v5035
        %5055 = vmatprep.subr.bf16.mxu0 0
        %5056 = vmatpush1.bf16.msra.mxu0 %v5036
        %5057 = vmatprep.subr.bf16.mxu0 0
        %5058 = vmatpush1.bf16.msra.mxu0 %v5037
        %5059 = vmatprep.subr.bf16.mxu0 0
        %5060 = vmatpush1.bf16.msra.mxu0 %v5038
        %5061 = vmatprep.subr.bf16.mxu0 0
        %5062 = vmatpush1.bf16.msra.mxu0 %v5039
        %5063 = vmatprep.subr.bf16.mxu0 0
        %5064 = vmatpush1.bf16.msra.mxu0 %v5040
        %5065 = vmatprep.subr.bf16.mxu0 0
        %5066 = vmatpush1.bf16.msra.mxu0 0
        %5067 = vmatprep.subr.bf16.mxu0 0
        %5068 = vmatpush1.bf16.msra.mxu0 0
        %5069 = vmatprep.subr.bf16.mxu0 0
        %5070 = vmatpush1.bf16.msra.mxu0 0
        %5071 = vmatprep.subr.bf16.mxu0 0
        %5072 = vmatpush1.bf16.msra.mxu0 0
        %5073 = vmatprep.subr.bf16.mxu0 0
        %5074 = vmatpush1.bf16.msra.mxu0 0
        %5075 = vmatprep.subr.bf16.mxu0 0
        %5076 = vmatpush1.bf16.msra.mxu0 0
        %5077 = vmatprep.subr.bf16.mxu0 0
        %5078 = vmatpush1.bf16.msra.mxu0 0
        %5079 = vmatprep.subr.bf16.mxu0 0
        %5080 = vmatpush1.bf16.msra.mxu0 0
        %5081 = vmatprep.mubr.bf16.mxu0 0
        %5082 = vmatmul.mubr.bf16.gmra.mrb[0].mxu0 %v4995
        %v5083 = vpop.f32.mrb[0].mxu0
        %v5084 = vadd.f32 %v5000, %v5083
        %v5085 = vpop.f32.mrb[0].mxu0
        %v5086 = vpop.f32.mrb[0].mxu0
        %v5087 = vpop.f32.mrb[0].mxu0
        %5088 = vdwg.mxu0
        %v5089 = vpack.c.bf16 %v4425, %v4425
        %v5090 = vld [vmem:[%s10 + $0x1] sm:$0x1]
        %v5091 = vlaneseq
        %v5092 = vshrl.u32 %v5091, 7
        %v5093 = vsub.s32 0, %v5092
        %v5094 = vrot.slane %v5090, %v5093
        %v5111 = vunpack.c.l.b16 %v4979
        %v5112 = vunpack.c.l.b16 %v4980
        %v5113 = vunpack.c.l.b16 %v4981
        %v5114 = vunpack.c.l.b16 %v4982
        %v5115 = vunpack.c.l.b16 %v4983
        %v5116 = vunpack.c.l.b16 %v4984
        %v5117 = vunpack.c.l.b16 %v4985
        %v5118 = vunpack.c.l.b16 %v4986
        %v5119 = vunpack.c.l.b16 %v4987
        %v5120 = vunpack.c.l.b16 %v4988
        %v5121 = vunpack.c.l.b16 %v4989
        %v5122 = vunpack.c.l.b16 %v4990
        %v5123 = vunpack.c.l.b16 %v4991
        %v5124 = vunpack.c.l.b16 %v4992
        %v5125 = vunpack.c.l.b16 %v4993
        %v5126 = vunpack.c.l.b16 %v4994
        %v5127 = vpack.c.b16 %v5112, %v5111
        %v5128 = vpack.c.b16 %v5114, %v5113
        %v5129 = vpack.c.b16 %v5116, %v5115
        %v5130 = vpack.c.b16 %v5118, %v5117
        %v5131 = vpack.c.b16 %v5120, %v5119
        %v5132 = vpack.c.b16 %v5122, %v5121
        %v5133 = vpack.c.b16 %v5124, %v5123
        %v5134 = vpack.c.b16 %v5126, %v5125
        %5143 = vmatprep.subr.bf16.mxu0 0
        %5144 = vmatpush1.bf16.msra.mxu0 %v5127
        %5145 = vmatprep.subr.bf16.mxu0 0
        %5146 = vmatpush1.bf16.msra.mxu0 %v5128
        %5147 = vmatprep.subr.bf16.mxu0 0
        %5148 = vmatpush1.bf16.msra.mxu0 %v5129
        %5149 = vmatprep.subr.bf16.mxu0 0
        %5150 = vmatpush1.bf16.msra.mxu0 %v5130
        %5151 = vmatprep.subr.bf16.mxu0 0
        %5152 = vmatpush1.bf16.msra.mxu0 %v5131
        %5153 = vmatprep.subr.bf16.mxu0 0
        %5154 = vmatpush1.bf16.msra.mxu0 %v5132
        %5155 = vmatprep.subr.bf16.mxu0 0
        %5156 = vmatpush1.bf16.msra.mxu0 %v5133
        %5157 = vmatprep.subr.bf16.mxu0 0
        %5158 = vmatpush1.bf16.msra.mxu0 %v5134
        %5159 = vmatprep.subr.bf16.mxu0 0
        %5160 = vmatpush1.bf16.msra.mxu0 0
        %5161 = vmatprep.subr.bf16.mxu0 0
        %5162 = vmatpush1.bf16.msra.mxu0 0
        %5163 = vmatprep.subr.bf16.mxu0 0
        %5164 = vmatpush1.bf16.msra.mxu0 0
        %5165 = vmatprep.subr.bf16.mxu0 0
        %5166 = vmatpush1.bf16.msra.mxu0 0
        %5167 = vmatprep.subr.bf16.mxu0 0
        %5168 = vmatpush1.bf16.msra.mxu0 0
        %5169 = vmatprep.subr.bf16.mxu0 0
        %5170 = vmatpush1.bf16.msra.mxu0 0
        %5171 = vmatprep.subr.bf16.mxu0 0
        %5172 = vmatpush1.bf16.msra.mxu0 0
        %5173 = vmatprep.subr.bf16.mxu0 0
        %5174 = vmatpush1.bf16.msra.mxu0 0
        %5175 = vmatprep.mubr.bf16.mxu0 0
        %5176 = vmatmul.mubr.bf16.gmra.mrb[0].mxu0 %v5089
        %v5177 = vpop.f32.mrb[0].mxu0
        %v5178 = vadd.f32 %v5094, %v5177
        %v5179 = vpop.f32.mrb[0].mxu0
        %v5180 = vpop.f32.mrb[0].mxu0
        %v5181 = vpop.f32.mrb[0].mxu0
        %5182 = vdwg.mxu0
        %v5184 = vrot.slane %v5178, 6
        %v5186 = vrot.slane %v5178, 4
        %v5188 = vrot.slane %v5178, 2
        %v5190 = vsel %vm3886, %v5178, %v5184
        %v5191 = vsel %vm3889, %v5190, %v5186
        %v5192 = vsel %vm3892, %v5191, %v5188
        %v5193 = vadd.f32 %v5084, %v5192
        %v5194 = vld [vmem:[%s10 + $0x2] sm:$0x1]
        %v5195 = vlaneseq
        %v5196 = vshrl.u32 %v5195, 7
        %v5197 = vsub.s32 0, %v5196
        %v5198 = vrot.slane %v5194, %v5197
        %v5199 = vmul.f32 %v5193, %v5198
        %5200 = vadd.xlane.f32.xlu0 %v5199
        %v5201 = vpop.xlane.xlu0 %5200
        %v5202 = vld [vmem:[%s10 + $0x3] sm:$0x1]
        %v5203 = vlaneseq
        %v5204 = vshrl.u32 %v5203, 7
        %v5205 = vsub.s32 0, %v5204
        %v5206 = vrot.slane %v5202, %v5205
        %v5207 = vadd.f32 %v5201, %v5206
        %v5209 = vrot.slane %v5207, 2
        %v5211 = vmax.f32 %v5207, %v5209
        %v5212 = vrot.slane %v5207, 4
        %v5214 = vmax.f32 %v5211, %v5212
        %v5215 = vrot.slane %v5207, 6
        %v5217 = vmax.f32 %v5214, %v5215
        %v5218 = vsub.f32 %v5207, %v5217
        %v5219 = vmul.f32 %v5218, 1.442695
        %v5220 = vpow.pop %v5219
        %v5222 = vrot.slane %v5217, 6
        %v5224 = vsub.f32 %v5207, %v5222
        %v5225 = vmul.f32 %v5224, 1.442695
        %v5226 = vpow.pop %v5225
        %v5227 = vrot.slane %v5217, 4
        %v5229 = vsub.f32 %v5207, %v5227
        %v5230 = vmul.f32 %v5229, 1.442695
        %v5231 = vpow.pop %v5230
        %v5232 = vrot.slane %v5217, 2
        %v5234 = vsub.f32 %v5207, %v5232
        %v5235 = vmul.f32 %v5234, 1.442695
        %v5236 = vpow.pop %v5235
        %v5238 = vrot.slane %v5226, 2
        %v5240 = vadd.f32 %v5220, %v5238
        %v5242 = vrot.slane %v5231, 4
        %v5244 = vadd.f32 %v5240, %v5242
        %v5246 = vrot.slane %v5236, 6
        %v5248 = vadd.f32 %v5244, %v5246
        %v5249 = vrcp.pop %v5248
        %v5250 = vmul.f32 %v5220, %v5249
        %v5252 = vrot.slane %v5248, 6
        %v5254 = vrcp.pop %v5252
        %v5255 = vmul.f32 %v5226, %v5254
        %v5256 = vrot.slane %v5248, 4
        %v5258 = vrcp.pop %v5256
        %v5259 = vmul.f32 %v5231, %v5258
        %v5260 = vrot.slane %v5248, 2
        %v5262 = vrcp.pop %v5260
        %v5263 = vmul.f32 %v5236, %v5262
        %v5265 = vrot.slane %v5255, 2
        %5266 = vrot.lane.b32.xlu0 %v5265, 1
        %v5267 = vpop.permute.xlu0 %5266
        %v5270 = vrot.slane %v5259, 4
        %5271 = vrot.lane.b32.xlu0 %v5270, 2
        %v5272 = vpop.permute.xlu0 %5271
        %v5275 = vrot.slane %v5263, 6
        %5276 = vrot.lane.b32.xlu0 %v5275, 3
        %v5277 = vpop.permute.xlu0 %5276
        %vm5279 = vcmask 7168
        %v5280 = vsel %vm5279, %v5250, %v5267
        %vm5281 = vcmask 15360
        %v5282 = vsel %vm5281, %v5280, %v5272
        %vm5283 = vcmask 23552
        %v5284 = vsel %vm5283, %v5282, %v5277
        %vm5285 = vcmask 25600
        %5286 = vst.msk [vmem:[%s14] sm:$0x3] %vm5285, %v5284
        %v5289 = vunpack.c.l.s4 1966171168
        %v5290 = vunpack.c.0.s8 %v5289
        %v5291 = vlaneseq
        %v5292 = vshrl.u32 %v5291, 7
        %v5293 = vsub.s32 %v5290, %v5292
        %v5294 = vrot.slane %v5250, %v5293
        %v5295 = vcombine.high %v5294, %v5294
        %v5297 = vunpack.c.l.s4 1966171168
        %v5298 = vunpack.c.0.s8 %v5297
        %v5299 = vlaneseq
        %v5300 = vshrl.u32 %v5299, 7
        %v5301 = vsub.s32 %v5298, %v5300
        %v5302 = vrot.slane %v5294, %v5301
        %v5304 = vunpack.c.l.s4 1966171168
        %v5305 = vunpack.c.0.s8 %v5304
        %v5306 = vlaneseq
        %v5307 = vshrl.u32 %v5306, 7
        %v5308 = vsub.s32 %v5305, %v5307
        %v5309 = vrot.slane %v5295, %v5308
        %s5310 = scalar_lea.vmem [#allocation2], 256
        %v5311 = vld [vmem:[%s5310] sm:$0xff]
        %v5312 = vld [vmem:[%s5310 + $0x8] sm:$0xff]
        %v5313 = vld [vmem:[%s5310 + $0x10] sm:$0xff]
        %v5314 = vld [vmem:[%s5310 + $0x18] sm:$0xff]
        %v5315 = vld [vmem:[%s5310 + $0x20] sm:$0xff]
        %v5316 = vld [vmem:[%s5310 + $0x28] sm:$0xff]
        %v5317 = vld [vmem:[%s5310 + $0x30] sm:$0xff]
        %v5318 = vld [vmem:[%s5310 + $0x38] sm:$0xff]
        %v5319 = vld [vmem:[%s5310 + $0x40] sm:$0xff]
        %v5320 = vld [vmem:[%s5310 + $0x48] sm:$0xff]
        %v5321 = vld [vmem:[%s5310 + $0x50] sm:$0xff]
        %v5322 = vld [vmem:[%s5310 + $0x58] sm:$0xff]
        %v5323 = vld [vmem:[%s5310 + $0x60] sm:$0xff]
        %v5324 = vld [vmem:[%s5310 + $0x68] sm:$0xff]
        %v5325 = vld [vmem:[%s5310 + $0x70] sm:$0xff]
        %v5326 = vld [vmem:[%s5310 + $0x78] sm:$0xff]
        %v5327 = vld [vmem:[%s5310 + $0x80] sm:$0xff]
        %v5328 = vld [vmem:[%s5310 + $0x88] sm:$0xff]
        %v5329 = vld [vmem:[%s5310 + $0x90] sm:$0xff]
        %v5330 = vld [vmem:[%s5310 + $0x98] sm:$0xff]
        %v5331 = vld [vmem:[%s5310 + $0xa0] sm:$0xff]
        %v5332 = vld [vmem:[%s5310 + $0xa8] sm:$0xff]
        %v5333 = vld [vmem:[%s5310 + $0xb0] sm:$0xff]
        %v5334 = vld [vmem:[%s5310 + $0xb8] sm:$0xff]
        %v5335 = vld [vmem:[%s5310 + $0xc0] sm:$0xff]
        %v5336 = vld [vmem:[%s5310 + $0xc8] sm:$0xff]
        %v5337 = vld [vmem:[%s5310 + $0xd0] sm:$0xff]
        %v5338 = vld [vmem:[%s5310 + $0xd8] sm:$0xff]
        %v5339 = vld [vmem:[%s5310 + $0xe0] sm:$0xff]
        %v5340 = vld [vmem:[%s5310 + $0xe8] sm:$0xff]
        %v5341 = vld [vmem:[%s5310 + $0xf0] sm:$0xff]
        %v5342 = vld [vmem:[%s5310 + $0xf8] sm:$0xff]
        %v5343 = vunpack.c.l.bf16 %v5311
        %v5344 = vunpack.c.l.bf16 %v5312
        %v5345 = vunpack.c.l.bf16 %v5313
        %v5346 = vunpack.c.l.bf16 %v5314
        %v5347 = vunpack.c.h.bf16 %v5311
        %v5348 = vunpack.c.h.bf16 %v5312
        %v5349 = vunpack.c.h.bf16 %v5313
        %v5350 = vunpack.c.h.bf16 %v5314
        %v5351 = vunpack.c.l.bf16 %v5315
        %v5352 = vunpack.c.l.bf16 %v5316
        %v5353 = vunpack.c.l.bf16 %v5317
        %v5354 = vunpack.c.l.bf16 %v5318
        %v5355 = vunpack.c.h.bf16 %v5315
        %v5356 = vunpack.c.h.bf16 %v5316
        %v5357 = vunpack.c.h.bf16 %v5317
        %v5358 = vunpack.c.h.bf16 %v5318
        %v5359 = vunpack.c.l.bf16 %v5319
        %v5360 = vunpack.c.l.bf16 %v5320
        %v5361 = vunpack.c.l.bf16 %v5321
        %v5362 = vunpack.c.l.bf16 %v5322
        %v5363 = vunpack.c.h.bf16 %v5319
        %v5364 = vunpack.c.h.bf16 %v5320
        %v5365 = vunpack.c.h.bf16 %v5321
        %v5366 = vunpack.c.h.bf16 %v5322
        %v5367 = vunpack.c.l.bf16 %v5323
        %v5368 = vunpack.c.l.bf16 %v5324
        %v5369 = vunpack.c.l.bf16 %v5325
        %v5370 = vunpack.c.l.bf16 %v5326
        %v5371 = vunpack.c.h.bf16 %v5323
        %v5372 = vunpack.c.h.bf16 %v5324
        %v5373 = vunpack.c.h.bf16 %v5325
        %v5374 = vunpack.c.h.bf16 %v5326
        %v5375 = vunpack.c.l.bf16 %v5327
        %v5376 = vunpack.c.l.bf16 %v5328
        %v5377 = vunpack.c.l.bf16 %v5329
        %v5378 = vunpack.c.l.bf16 %v5330
        %v5379 = vunpack.c.h.bf16 %v5327
        %v5380 = vunpack.c.h.bf16 %v5328
        %v5381 = vunpack.c.h.bf16 %v5329
        %v5382 = vunpack.c.h.bf16 %v5330
        %v5383 = vunpack.c.l.bf16 %v5331
        %v5384 = vunpack.c.l.bf16 %v5332
        %v5385 = vunpack.c.l.bf16 %v5333
        %v5386 = vunpack.c.l.bf16 %v5334
        %v5387 = vunpack.c.h.bf16 %v5331
        %v5388 = vunpack.c.h.bf16 %v5332
        %v5389 = vunpack.c.h.bf16 %v5333
        %v5390 = vunpack.c.h.bf16 %v5334
        %v5391 = vunpack.c.l.bf16 %v5335
        %v5392 = vunpack.c.l.bf16 %v5336
        %v5393 = vunpack.c.l.bf16 %v5337
        %v5394 = vunpack.c.l.bf16 %v5338
        %v5395 = vunpack.c.h.bf16 %v5335
        %v5396 = vunpack.c.h.bf16 %v5336
        %v5397 = vunpack.c.h.bf16 %v5337
        %v5398 = vunpack.c.h.bf16 %v5338
        %v5399 = vunpack.c.l.bf16 %v5339
        %v5400 = vunpack.c.l.bf16 %v5340
        %v5401 = vunpack.c.l.bf16 %v5341
        %v5402 = vunpack.c.l.bf16 %v5342
        %v5403 = vunpack.c.h.bf16 %v5339
        %v5404 = vunpack.c.h.bf16 %v5340
        %v5405 = vunpack.c.h.bf16 %v5341
        %v5406 = vunpack.c.h.bf16 %v5342
        %v5407 = vlaneseq
        %v5408 = vshrl.u32 %v5407, 7
        %v5409 = vsub.s32 0, %v5408
        %v5410 = vrot.slane %v5302, %v5409
        %v5411 = vlaneseq
        %v5412 = vshrl.u32 %v5411, 7
        %v5413 = vsub.s32 0, %v5412
        %v5414 = vrot.slane %v5309, %v5413
        %5415 = vset.pattern.permute.xlu0 0
        %5416 = vperm.xlu0 %5415, %v5410
        %v5417 = vpop.permute.xlu0 %5416
        %5419 = vset.pattern.permute.xlu0 0
        %5420 = vperm.xlu0 %5419, %v5414
        %v5421 = vpop.permute.xlu0 %5420
        %v5423 = vmul.f32 %v5417, %v5343
        %v5424 = vmul.f32 %v5417, %v5344
        %v5425 = vmul.f32 %v5417, %v5345
        %v5426 = vmul.f32 %v5417, %v5346
        %v5427 = vmul.f32 %v5417, %v5347
        %v5428 = vmul.f32 %v5417, %v5348
        %v5429 = vmul.f32 %v5417, %v5349
        %v5430 = vmul.f32 %v5417, %v5350
        %v5431 = vmul.f32 %v5417, %v5351
        %v5432 = vmul.f32 %v5417, %v5352
        %v5433 = vmul.f32 %v5417, %v5353
        %v5434 = vmul.f32 %v5417, %v5354
        %v5435 = vmul.f32 %v5417, %v5355
        %v5436 = vmul.f32 %v5417, %v5356
        %v5437 = vmul.f32 %v5417, %v5357
        %v5438 = vmul.f32 %v5417, %v5358
        %v5439 = vmul.f32 %v5417, %v5359
        %v5440 = vmul.f32 %v5417, %v5360
        %v5441 = vmul.f32 %v5417, %v5361
        %v5442 = vmul.f32 %v5417, %v5362
        %v5443 = vmul.f32 %v5417, %v5363
        %v5444 = vmul.f32 %v5417, %v5364
        %v5445 = vmul.f32 %v5417, %v5365
        %v5446 = vmul.f32 %v5417, %v5366
        %v5447 = vmul.f32 %v5417, %v5367
        %v5448 = vmul.f32 %v5417, %v5368
        %v5449 = vmul.f32 %v5417, %v5369
        %v5450 = vmul.f32 %v5417, %v5370
        %v5451 = vmul.f32 %v5417, %v5371
        %v5452 = vmul.f32 %v5417, %v5372
        %v5453 = vmul.f32 %v5417, %v5373
        %v5454 = vmul.f32 %v5417, %v5374
        %v5455 = vmul.f32 %v5421, %v5375
        %v5456 = vmul.f32 %v5421, %v5376
        %v5457 = vmul.f32 %v5421, %v5377
        %v5458 = vmul.f32 %v5421, %v5378
        %v5459 = vmul.f32 %v5421, %v5379
        %v5460 = vmul.f32 %v5421, %v5380
        %v5461 = vmul.f32 %v5421, %v5381
        %v5462 = vmul.f32 %v5421, %v5382
        %v5463 = vmul.f32 %v5421, %v5383
        %v5464 = vmul.f32 %v5421, %v5384
        %v5465 = vmul.f32 %v5421, %v5385
        %v5466 = vmul.f32 %v5421, %v5386
        %v5467 = vmul.f32 %v5421, %v5387
        %v5468 = vmul.f32 %v5421, %v5388
        %v5469 = vmul.f32 %v5421, %v5389
        %v5470 = vmul.f32 %v5421, %v5390
        %v5471 = vmul.f32 %v5421, %v5391
        %v5472 = vmul.f32 %v5421, %v5392
        %v5473 = vmul.f32 %v5421, %v5393
        %v5474 = vmul.f32 %v5421, %v5394
        %v5475 = vmul.f32 %v5421, %v5395
        %v5476 = vmul.f32 %v5421, %v5396
        %v5477 = vmul.f32 %v5421, %v5397
        %v5478 = vmul.f32 %v5421, %v5398
        %v5479 = vmul.f32 %v5421, %v5399
        %v5480 = vmul.f32 %v5421, %v5400
        %v5481 = vmul.f32 %v5421, %v5401
        %v5482 = vmul.f32 %v5421, %v5402
        %v5483 = vmul.f32 %v5421, %v5403
        %v5484 = vmul.f32 %v5421, %v5404
        %v5485 = vmul.f32 %v5421, %v5405
        %v5486 = vmul.f32 %v5421, %v5406
        %v5488 = vunpack.c.l.s4 1966171168
        %v5489 = vunpack.c.0.s8 %v5488
        %v5490 = vlaneseq
        %v5491 = vshrl.u32 %v5490, 7
        %v5492 = vsub.s32 %v5489, %v5491
        %v5493 = vrot.slane %v5255, %v5492
        %v5494 = vcombine.high %v5493, %v5493
        %v5496 = vunpack.c.l.s4 1966171168
        %v5497 = vunpack.c.0.s8 %v5496
        %v5498 = vlaneseq
        %v5499 = vshrl.u32 %v5498, 7
        %v5500 = vsub.s32 %v5497, %v5499
        %v5501 = vrot.slane %v5493, %v5500
        %v5503 = vunpack.c.l.s4 1966171168
        %v5504 = vunpack.c.0.s8 %v5503
        %v5505 = vlaneseq
        %v5506 = vshrl.u32 %v5505, 7
        %v5507 = vsub.s32 %v5504, %v5506
        %v5508 = vrot.slane %v5494, %v5507
        %v5509 = vcombine.high %v5501, %v5501
        %v5510 = vcombine.high %v5508, %v5508
        %s5511 = scalar_lea.vmem [#allocation2], 512
        %v5512 = vld [vmem:[%s5511] sm:$0xff]
        %v5513 = vld [vmem:[%s5511 + $0x8] sm:$0xff]
        %v5514 = vld [vmem:[%s5511 + $0x10] sm:$0xff]
        %v5515 = vld [vmem:[%s5511 + $0x18] sm:$0xff]
        %v5516 = vld [vmem:[%s5511 + $0x20] sm:$0xff]
        %v5517 = vld [vmem:[%s5511 + $0x28] sm:$0xff]
        %v5518 = vld [vmem:[%s5511 + $0x30] sm:$0xff]
        %v5519 = vld [vmem:[%s5511 + $0x38] sm:$0xff]
        %v5520 = vld [vmem:[%s5511 + $0x40] sm:$0xff]
        %v5521 = vld [vmem:[%s5511 + $0x48] sm:$0xff]
        %v5522 = vld [vmem:[%s5511 + $0x50] sm:$0xff]
        %v5523 = vld [vmem:[%s5511 + $0x58] sm:$0xff]
        %v5524 = vld [vmem:[%s5511 + $0x60] sm:$0xff]
        %v5525 = vld [vmem:[%s5511 + $0x68] sm:$0xff]
        %v5526 = vld [vmem:[%s5511 + $0x70] sm:$0xff]
        %v5527 = vld [vmem:[%s5511 + $0x78] sm:$0xff]
        %v5528 = vld [vmem:[%s5511 + $0x80] sm:$0xff]
        %v5529 = vld [vmem:[%s5511 + $0x88] sm:$0xff]
        %v5530 = vld [vmem:[%s5511 + $0x90] sm:$0xff]
        %v5531 = vld [vmem:[%s5511 + $0x98] sm:$0xff]
        %v5532 = vld [vmem:[%s5511 + $0xa0] sm:$0xff]
        %v5533 = vld [vmem:[%s5511 + $0xa8] sm:$0xff]
        %v5534 = vld [vmem:[%s5511 + $0xb0] sm:$0xff]
        %v5535 = vld [vmem:[%s5511 + $0xb8] sm:$0xff]
        %v5536 = vld [vmem:[%s5511 + $0xc0] sm:$0xff]
        %v5537 = vld [vmem:[%s5511 + $0xc8] sm:$0xff]
        %v5538 = vld [vmem:[%s5511 + $0xd0] sm:$0xff]
        %v5539 = vld [vmem:[%s5511 + $0xd8] sm:$0xff]
        %v5540 = vld [vmem:[%s5511 + $0xe0] sm:$0xff]
        %v5541 = vld [vmem:[%s5511 + $0xe8] sm:$0xff]
        %v5542 = vld [vmem:[%s5511 + $0xf0] sm:$0xff]
        %v5543 = vld [vmem:[%s5511 + $0xf8] sm:$0xff]
        %v5544 = vunpack.c.l.bf16 %v5512
        %v5545 = vunpack.c.l.bf16 %v5513
        %v5546 = vunpack.c.l.bf16 %v5514
        %v5547 = vunpack.c.l.bf16 %v5515
        %v5548 = vunpack.c.h.bf16 %v5512
        %v5549 = vunpack.c.h.bf16 %v5513
        %v5550 = vunpack.c.h.bf16 %v5514
        %v5551 = vunpack.c.h.bf16 %v5515
        %v5552 = vunpack.c.l.bf16 %v5516
        %v5553 = vunpack.c.l.bf16 %v5517
        %v5554 = vunpack.c.l.bf16 %v5518
        %v5555 = vunpack.c.l.bf16 %v5519
        %v5556 = vunpack.c.h.bf16 %v5516
        %v5557 = vunpack.c.h.bf16 %v5517
        %v5558 = vunpack.c.h.bf16 %v5518
        %v5559 = vunpack.c.h.bf16 %v5519
        %v5560 = vunpack.c.l.bf16 %v5520
        %v5561 = vunpack.c.l.bf16 %v5521
        %v5562 = vunpack.c.l.bf16 %v5522
        %v5563 = vunpack.c.l.bf16 %v5523
        %v5564 = vunpack.c.h.bf16 %v5520
        %v5565 = vunpack.c.h.bf16 %v5521
        %v5566 = vunpack.c.h.bf16 %v5522
        %v5567 = vunpack.c.h.bf16 %v5523
        %v5568 = vunpack.c.l.bf16 %v5524
        %v5569 = vunpack.c.l.bf16 %v5525
        %v5570 = vunpack.c.l.bf16 %v5526
        %v5571 = vunpack.c.l.bf16 %v5527
        %v5572 = vunpack.c.h.bf16 %v5524
        %v5573 = vunpack.c.h.bf16 %v5525
        %v5574 = vunpack.c.h.bf16 %v5526
        %v5575 = vunpack.c.h.bf16 %v5527
        %v5576 = vunpack.c.l.bf16 %v5528
        %v5577 = vunpack.c.l.bf16 %v5529
        %v5578 = vunpack.c.l.bf16 %v5530
        %v5579 = vunpack.c.l.bf16 %v5531
        %v5580 = vunpack.c.h.bf16 %v5528
        %v5581 = vunpack.c.h.bf16 %v5529
        %v5582 = vunpack.c.h.bf16 %v5530
        %v5583 = vunpack.c.h.bf16 %v5531
        %v5584 = vunpack.c.l.bf16 %v5532
        %v5585 = vunpack.c.l.bf16 %v5533
        %v5586 = vunpack.c.l.bf16 %v5534
        %v5587 = vunpack.c.l.bf16 %v5535
        %v5588 = vunpack.c.h.bf16 %v5532
        %v5589 = vunpack.c.h.bf16 %v5533
        %v5590 = vunpack.c.h.bf16 %v5534
        %v5591 = vunpack.c.h.bf16 %v5535
        %v5592 = vunpack.c.l.bf16 %v5536
        %v5593 = vunpack.c.l.bf16 %v5537
        %v5594 = vunpack.c.l.bf16 %v5538
        %v5595 = vunpack.c.l.bf16 %v5539
        %v5596 = vunpack.c.h.bf16 %v5536
        %v5597 = vunpack.c.h.bf16 %v5537
        %v5598 = vunpack.c.h.bf16 %v5538
        %v5599 = vunpack.c.h.bf16 %v5539
        %v5600 = vunpack.c.l.bf16 %v5540
        %v5601 = vunpack.c.l.bf16 %v5541
        %v5602 = vunpack.c.l.bf16 %v5542
        %v5603 = vunpack.c.l.bf16 %v5543
        %v5604 = vunpack.c.h.bf16 %v5540
        %v5605 = vunpack.c.h.bf16 %v5541
        %v5606 = vunpack.c.h.bf16 %v5542
        %v5607 = vunpack.c.h.bf16 %v5543
        %v5608 = vlaneseq
        %v5609 = vshrl.u32 %v5608, 7
        %v5610 = vsub.s32 0, %v5609
        %v5611 = vrot.slane %v5509, %v5610
        %v5612 = vlaneseq
        %v5613 = vshrl.u32 %v5612, 7
        %v5614 = vsub.s32 0, %v5613
        %v5615 = vrot.slane %v5510, %v5614
        %5616 = vset.pattern.permute.xlu0 0
        %5617 = vperm.xlu0 %5616, %v5611
        %v5618 = vpop.permute.xlu0 %5617
        %5620 = vset.pattern.permute.xlu0 0
        %5621 = vperm.xlu0 %5620, %v5615
        %v5622 = vpop.permute.xlu0 %5621
        %v5624 = vmul.f32 %v5618, %v5544
        %v5625 = vmul.f32 %v5618, %v5545
        %v5626 = vmul.f32 %v5618, %v5546
        %v5627 = vmul.f32 %v5618, %v5547
        %v5628 = vmul.f32 %v5618, %v5548
        %v5629 = vmul.f32 %v5618, %v5549
        %v5630 = vmul.f32 %v5618, %v5550
        %v5631 = vmul.f32 %v5618, %v5551
        %v5632 = vmul.f32 %v5618, %v5552
        %v5633 = vmul.f32 %v5618, %v5553
        %v5634 = vmul.f32 %v5618, %v5554
        %v5635 = vmul.f32 %v5618, %v5555
        %v5636 = vmul.f32 %v5618, %v5556
        %v5637 = vmul.f32 %v5618, %v5557
        %v5638 = vmul.f32 %v5618, %v5558
        %v5639 = vmul.f32 %v5618, %v5559
        %v5640 = vmul.f32 %v5618, %v5560
        %v5641 = vmul.f32 %v5618, %v5561
        %v5642 = vmul.f32 %v5618, %v5562
        %v5643 = vmul.f32 %v5618, %v5563
        %v5644 = vmul.f32 %v5618, %v5564
        %v5645 = vmul.f32 %v5618, %v5565
        %v5646 = vmul.f32 %v5618, %v5566
        %v5647 = vmul.f32 %v5618, %v5567
        %v5648 = vmul.f32 %v5618, %v5568
        %v5649 = vmul.f32 %v5618, %v5569
        %v5650 = vmul.f32 %v5618, %v5570
        %v5651 = vmul.f32 %v5618, %v5571
        %v5652 = vmul.f32 %v5618, %v5572
        %v5653 = vmul.f32 %v5618, %v5573
        %v5654 = vmul.f32 %v5618, %v5574
        %v5655 = vmul.f32 %v5618, %v5575
        %v5656 = vmul.f32 %v5622, %v5576
        %v5657 = vmul.f32 %v5622, %v5577
        %v5658 = vmul.f32 %v5622, %v5578
        %v5659 = vmul.f32 %v5622, %v5579
        %v5660 = vmul.f32 %v5622, %v5580
        %v5661 = vmul.f32 %v5622, %v5581
        %v5662 = vmul.f32 %v5622, %v5582
        %v5663 = vmul.f32 %v5622, %v5583
        %v5664 = vmul.f32 %v5622, %v5584
        %v5665 = vmul.f32 %v5622, %v5585
        %v5666 = vmul.f32 %v5622, %v5586
        %v5667 = vmul.f32 %v5622, %v5587
        %v5668 = vmul.f32 %v5622, %v5588
        %v5669 = vmul.f32 %v5622, %v5589
        %v5670 = vmul.f32 %v5622, %v5590
        %v5671 = vmul.f32 %v5622, %v5591
        %v5672 = vmul.f32 %v5622, %v5592
        %v5673 = vmul.f32 %v5622, %v5593
        %v5674 = vmul.f32 %v5622, %v5594
        %v5675 = vmul.f32 %v5622, %v5595
        %v5676 = vmul.f32 %v5622, %v5596
        %v5677 = vmul.f32 %v5622, %v5597
        %v5678 = vmul.f32 %v5622, %v5598
        %v5679 = vmul.f32 %v5622, %v5599
        %v5680 = vmul.f32 %v5622, %v5600
        %v5681 = vmul.f32 %v5622, %v5601
        %v5682 = vmul.f32 %v5622, %v5602
        %v5683 = vmul.f32 %v5622, %v5603
        %v5684 = vmul.f32 %v5622, %v5604
        %v5685 = vmul.f32 %v5622, %v5605
        %v5686 = vmul.f32 %v5622, %v5606
        %v5687 = vmul.f32 %v5622, %v5607
        %v5688 = vadd.f32 %v5423, %v5624
        %v5689 = vadd.f32 %v5424, %v5625
        %v5690 = vadd.f32 %v5425, %v5626
        %v5691 = vadd.f32 %v5426, %v5627
        %v5692 = vadd.f32 %v5427, %v5628
        %v5693 = vadd.f32 %v5428, %v5629
        %v5694 = vadd.f32 %v5429, %v5630
        %v5695 = vadd.f32 %v5430, %v5631
        %v5696 = vadd.f32 %v5431, %v5632
        %v5697 = vadd.f32 %v5432, %v5633
        %v5698 = vadd.f32 %v5433, %v5634
        %v5699 = vadd.f32 %v5434, %v5635
        %v5700 = vadd.f32 %v5435, %v5636
        %v5701 = vadd.f32 %v5436, %v5637
        %v5702 = vadd.f32 %v5437, %v5638
        %v5703 = vadd.f32 %v5438, %v5639
        %v5704 = vadd.f32 %v5439, %v5640
        %v5705 = vadd.f32 %v5440, %v5641
        %v5706 = vadd.f32 %v5441, %v5642
        %v5707 = vadd.f32 %v5442, %v5643
        %v5708 = vadd.f32 %v5443, %v5644
        %v5709 = vadd.f32 %v5444, %v5645
        %v5710 = vadd.f32 %v5445, %v5646
        %v5711 = vadd.f32 %v5446, %v5647
        %v5712 = vadd.f32 %v5447, %v5648
        %v5713 = vadd.f32 %v5448, %v5649
        %v5714 = vadd.f32 %v5449, %v5650
        %v5715 = vadd.f32 %v5450, %v5651
        %v5716 = vadd.f32 %v5451, %v5652
        %v5717 = vadd.f32 %v5452, %v5653
        %v5718 = vadd.f32 %v5453, %v5654
        %v5719 = vadd.f32 %v5454, %v5655
        %v5720 = vadd.f32 %v5455, %v5656
        %v5721 = vadd.f32 %v5456, %v5657
        %v5722 = vadd.f32 %v5457, %v5658
        %v5723 = vadd.f32 %v5458, %v5659
        %v5724 = vadd.f32 %v5459, %v5660
        %v5725 = vadd.f32 %v5460, %v5661
        %v5726 = vadd.f32 %v5461, %v5662
        %v5727 = vadd.f32 %v5462, %v5663
        %v5728 = vadd.f32 %v5463, %v5664
        %v5729 = vadd.f32 %v5464, %v5665
        %v5730 = vadd.f32 %v5465, %v5666
        %v5731 = vadd.f32 %v5466, %v5667
        %v5732 = vadd.f32 %v5467, %v5668
        %v5733 = vadd.f32 %v5468, %v5669
        %v5734 = vadd.f32 %v5469, %v5670
        %v5735 = vadd.f32 %v5470, %v5671
        %v5736 = vadd.f32 %v5471, %v5672
        %v5737 = vadd.f32 %v5472, %v5673
        %v5738 = vadd.f32 %v5473, %v5674
        %v5739 = vadd.f32 %v5474, %v5675
        %v5740 = vadd.f32 %v5475, %v5676
        %v5741 = vadd.f32 %v5476, %v5677
        %v5742 = vadd.f32 %v5477, %v5678
        %v5743 = vadd.f32 %v5478, %v5679
        %v5744 = vadd.f32 %v5479, %v5680
        %v5745 = vadd.f32 %v5480, %v5681
        %v5746 = vadd.f32 %v5481, %v5682
        %v5747 = vadd.f32 %v5482, %v5683
        %v5748 = vadd.f32 %v5483, %v5684
        %v5749 = vadd.f32 %v5484, %v5685
        %v5750 = vadd.f32 %v5485, %v5686
        %v5751 = vadd.f32 %v5486, %v5687
        %v5752 = vcombine.high %v5259, %v5259
        %v5754 = vunpack.c.l.s4 1966171168
        %v5755 = vunpack.c.0.s8 %v5754
        %v5756 = vlaneseq
        %v5757 = vshrl.u32 %v5756, 7
        %v5758 = vsub.s32 %v5755, %v5757
        %v5759 = vrot.slane %v5752, %v5758
        %v5760 = vcombine.high %v5759, %v5759
        %v5762 = vunpack.c.l.s4 1966171168
        %v5763 = vunpack.c.0.s8 %v5762
        %v5764 = vlaneseq
        %v5765 = vshrl.u32 %v5764, 7
        %v5766 = vsub.s32 %v5763, %v5765
        %v5767 = vrot.slane %v5759, %v5766
        %v5769 = vunpack.c.l.s4 1966171168
        %v5770 = vunpack.c.0.s8 %v5769
        %v5771 = vlaneseq
        %v5772 = vshrl.u32 %v5771, 7
        %v5773 = vsub.s32 %v5770, %v5772
        %v5774 = vrot.slane %v5760, %v5773
        %s5775 = scalar_lea.vmem [#allocation2], 768
        %v5776 = vld [vmem:[%s5775] sm:$0xff]
        %v5777 = vld [vmem:[%s5775 + $0x8] sm:$0xff]
        %v5778 = vld [vmem:[%s5775 + $0x10] sm:$0xff]
        %v5779 = vld [vmem:[%s5775 + $0x18] sm:$0xff]
        %v5780 = vld [vmem:[%s5775 + $0x20] sm:$0xff]
        %v5781 = vld [vmem:[%s5775 + $0x28] sm:$0xff]
        %v5782 = vld [vmem:[%s5775 + $0x30] sm:$0xff]
        %v5783 = vld [vmem:[%s5775 + $0x38] sm:$0xff]
        %v5784 = vld [vmem:[%s5775 + $0x40] sm:$0xff]
        %v5785 = vld [vmem:[%s5775 + $0x48] sm:$0xff]
        %v5786 = vld [vmem:[%s5775 + $0x50] sm:$0xff]
        %v5787 = vld [vmem:[%s5775 + $0x58] sm:$0xff]
        %v5788 = vld [vmem:[%s5775 + $0x60] sm:$0xff]
        %v5789 = vld [vmem:[%s5775 + $0x68] sm:$0xff]
        %v5790 = vld [vmem:[%s5775 + $0x70] sm:$0xff]
        %v5791 = vld [vmem:[%s5775 + $0x78] sm:$0xff]
        %v5792 = vld [vmem:[%s5775 + $0x80] sm:$0xff]
        %v5793 = vld [vmem:[%s5775 + $0x88] sm:$0xff]
        %v5794 = vld [vmem:[%s5775 + $0x90] sm:$0xff]
        %v5795 = vld [vmem:[%s5775 + $0x98] sm:$0xff]
        %v5796 = vld [vmem:[%s5775 + $0xa0] sm:$0xff]
        %v5797 = vld [vmem:[%s5775 + $0xa8] sm:$0xff]
        %v5798 = vld [vmem:[%s5775 + $0xb0] sm:$0xff]
        %v5799 = vld [vmem:[%s5775 + $0xb8] sm:$0xff]
        %v5800 = vld [vmem:[%s5775 + $0xc0] sm:$0xff]
        %v5801 = vld [vmem:[%s5775 + $0xc8] sm:$0xff]
        %v5802 = vld [vmem:[%s5775 + $0xd0] sm:$0xff]
        %v5803 = vld [vmem:[%s5775 + $0xd8] sm:$0xff]
        %v5804 = vld [vmem:[%s5775 + $0xe0] sm:$0xff]
        %v5805 = vld [vmem:[%s5775 + $0xe8] sm:$0xff]
        %v5806 = vld [vmem:[%s5775 + $0xf0] sm:$0xff]
        %v5807 = vld [vmem:[%s5775 + $0xf8] sm:$0xff]
        %v5808 = vunpack.c.l.bf16 %v5776
        %v5809 = vunpack.c.l.bf16 %v5777
        %v5810 = vunpack.c.l.bf16 %v5778
        %v5811 = vunpack.c.l.bf16 %v5779
        %v5812 = vunpack.c.h.bf16 %v5776
        %v5813 = vunpack.c.h.bf16 %v5777
        %v5814 = vunpack.c.h.bf16 %v5778
        %v5815 = vunpack.c.h.bf16 %v5779
        %v5816 = vunpack.c.l.bf16 %v5780
        %v5817 = vunpack.c.l.bf16 %v5781
        %v5818 = vunpack.c.l.bf16 %v5782
        %v5819 = vunpack.c.l.bf16 %v5783
        %v5820 = vunpack.c.h.bf16 %v5780
        %v5821 = vunpack.c.h.bf16 %v5781
        %v5822 = vunpack.c.h.bf16 %v5782
        %v5823 = vunpack.c.h.bf16 %v5783
        %v5824 = vunpack.c.l.bf16 %v5784
        %v5825 = vunpack.c.l.bf16 %v5785
        %v5826 = vunpack.c.l.bf16 %v5786
        %v5827 = vunpack.c.l.bf16 %v5787
        %v5828 = vunpack.c.h.bf16 %v5784
        %v5829 = vunpack.c.h.bf16 %v5785
        %v5830 = vunpack.c.h.bf16 %v5786
        %v5831 = vunpack.c.h.bf16 %v5787
        %v5832 = vunpack.c.l.bf16 %v5788
        %v5833 = vunpack.c.l.bf16 %v5789
        %v5834 = vunpack.c.l.bf16 %v5790
        %v5835 = vunpack.c.l.bf16 %v5791
        %v5836 = vunpack.c.h.bf16 %v5788
        %v5837 = vunpack.c.h.bf16 %v5789
        %v5838 = vunpack.c.h.bf16 %v5790
        %v5839 = vunpack.c.h.bf16 %v5791
        %v5840 = vunpack.c.l.bf16 %v5792
        %v5841 = vunpack.c.l.bf16 %v5793
        %v5842 = vunpack.c.l.bf16 %v5794
        %v5843 = vunpack.c.l.bf16 %v5795
        %v5844 = vunpack.c.h.bf16 %v5792
        %v5845 = vunpack.c.h.bf16 %v5793
        %v5846 = vunpack.c.h.bf16 %v5794
        %v5847 = vunpack.c.h.bf16 %v5795
        %v5848 = vunpack.c.l.bf16 %v5796
        %v5849 = vunpack.c.l.bf16 %v5797
        %v5850 = vunpack.c.l.bf16 %v5798
        %v5851 = vunpack.c.l.bf16 %v5799
        %v5852 = vunpack.c.h.bf16 %v5796
        %v5853 = vunpack.c.h.bf16 %v5797
        %v5854 = vunpack.c.h.bf16 %v5798
        %v5855 = vunpack.c.h.bf16 %v5799
        %v5856 = vunpack.c.l.bf16 %v5800
        %v5857 = vunpack.c.l.bf16 %v5801
        %v5858 = vunpack.c.l.bf16 %v5802
        %v5859 = vunpack.c.l.bf16 %v5803
        %v5860 = vunpack.c.h.bf16 %v5800
        %v5861 = vunpack.c.h.bf16 %v5801
        %v5862 = vunpack.c.h.bf16 %v5802
        %v5863 = vunpack.c.h.bf16 %v5803
        %v5864 = vunpack.c.l.bf16 %v5804
        %v5865 = vunpack.c.l.bf16 %v5805
        %v5866 = vunpack.c.l.bf16 %v5806
        %v5867 = vunpack.c.l.bf16 %v5807
        %v5868 = vunpack.c.h.bf16 %v5804
        %v5869 = vunpack.c.h.bf16 %v5805
        %v5870 = vunpack.c.h.bf16 %v5806
        %v5871 = vunpack.c.h.bf16 %v5807
        %v5872 = vlaneseq
        %v5873 = vshrl.u32 %v5872, 7
        %v5874 = vsub.s32 0, %v5873
        %v5875 = vrot.slane %v5767, %v5874
        %v5876 = vlaneseq
        %v5877 = vshrl.u32 %v5876, 7
        %v5878 = vsub.s32 0, %v5877
        %v5879 = vrot.slane %v5774, %v5878
        %5880 = vset.pattern.permute.xlu0 0
        %5881 = vperm.xlu0 %5880, %v5875
        %v5882 = vpop.permute.xlu0 %5881
        %5884 = vset.pattern.permute.xlu0 0
        %5885 = vperm.xlu0 %5884, %v5879
        %v5886 = vpop.permute.xlu0 %5885
        %v5888 = vmul.f32 %v5882, %v5808
        %v5889 = vmul.f32 %v5882, %v5809
        %v5890 = vmul.f32 %v5882, %v5810
        %v5891 = vmul.f32 %v5882, %v5811
        %v5892 = vmul.f32 %v5882, %v5812
        %v5893 = vmul.f32 %v5882, %v5813
        %v5894 = vmul.f32 %v5882, %v5814
        %v5895 = vmul.f32 %v5882, %v5815
        %v5896 = vmul.f32 %v5882, %v5816
        %v5897 = vmul.f32 %v5882, %v5817
        %v5898 = vmul.f32 %v5882, %v5818
        %v5899 = vmul.f32 %v5882, %v5819
        %v5900 = vmul.f32 %v5882, %v5820
        %v5901 = vmul.f32 %v5882, %v5821
        %v5902 = vmul.f32 %v5882, %v5822
        %v5903 = vmul.f32 %v5882, %v5823
        %v5904 = vmul.f32 %v5882, %v5824
        %v5905 = vmul.f32 %v5882, %v5825
        %v5906 = vmul.f32 %v5882, %v5826
        %v5907 = vmul.f32 %v5882, %v5827
        %v5908 = vmul.f32 %v5882, %v5828
        %v5909 = vmul.f32 %v5882, %v5829
        %v5910 = vmul.f32 %v5882, %v5830
        %v5911 = vmul.f32 %v5882, %v5831
        %v5912 = vmul.f32 %v5882, %v5832
        %v5913 = vmul.f32 %v5882, %v5833
        %v5914 = vmul.f32 %v5882, %v5834
        %v5915 = vmul.f32 %v5882, %v5835
        %v5916 = vmul.f32 %v5882, %v5836
        %v5917 = vmul.f32 %v5882, %v5837
        %v5918 = vmul.f32 %v5882, %v5838
        %v5919 = vmul.f32 %v5882, %v5839
        %v5920 = vmul.f32 %v5886, %v5840
        %v5921 = vmul.f32 %v5886, %v5841
        %v5922 = vmul.f32 %v5886, %v5842
        %v5923 = vmul.f32 %v5886, %v5843
        %v5924 = vmul.f32 %v5886, %v5844
        %v5925 = vmul.f32 %v5886, %v5845
        %v5926 = vmul.f32 %v5886, %v5846
        %v5927 = vmul.f32 %v5886, %v5847
        %v5928 = vmul.f32 %v5886, %v5848
        %v5929 = vmul.f32 %v5886, %v5849
        %v5930 = vmul.f32 %v5886, %v5850
        %v5931 = vmul.f32 %v5886, %v5851
        %v5932 = vmul.f32 %v5886, %v5852
        %v5933 = vmul.f32 %v5886, %v5853
        %v5934 = vmul.f32 %v5886, %v5854
        %v5935 = vmul.f32 %v5886, %v5855
        %v5936 = vmul.f32 %v5886, %v5856
        %v5937 = vmul.f32 %v5886, %v5857
        %v5938 = vmul.f32 %v5886, %v5858
        %v5939 = vmul.f32 %v5886, %v5859
        %v5940 = vmul.f32 %v5886, %v5860
        %v5941 = vmul.f32 %v5886, %v5861
        %v5942 = vmul.f32 %v5886, %v5862
        %v5943 = vmul.f32 %v5886, %v5863
        %v5944 = vmul.f32 %v5886, %v5864
        %v5945 = vmul.f32 %v5886, %v5865
        %v5946 = vmul.f32 %v5886, %v5866
        %v5947 = vmul.f32 %v5886, %v5867
        %v5948 = vmul.f32 %v5886, %v5868
        %v5949 = vmul.f32 %v5886, %v5869
        %v5950 = vmul.f32 %v5886, %v5870
        %v5951 = vmul.f32 %v5886, %v5871
        %v5952 = vadd.f32 %v5688, %v5888
        %v5953 = vadd.f32 %v5689, %v5889
        %v5954 = vadd.f32 %v5690, %v5890
        %v5955 = vadd.f32 %v5691, %v5891
        %v5956 = vadd.f32 %v5692, %v5892
        %v5957 = vadd.f32 %v5693, %v5893
        %v5958 = vadd.f32 %v5694, %v5894
        %v5959 = vadd.f32 %v5695, %v5895
        %v5960 = vadd.f32 %v5696, %v5896
        %v5961 = vadd.f32 %v5697, %v5897
        %v5962 = vadd.f32 %v5698, %v5898
        %v5963 = vadd.f32 %v5699, %v5899
        %v5964 = vadd.f32 %v5700, %v5900
        %v5965 = vadd.f32 %v5701, %v5901
        %v5966 = vadd.f32 %v5702, %v5902
        %v5967 = vadd.f32 %v5703, %v5903
        %v5968 = vadd.f32 %v5704, %v5904
        %v5969 = vadd.f32 %v5705, %v5905
        %v5970 = vadd.f32 %v5706, %v5906
        %v5971 = vadd.f32 %v5707, %v5907
        %v5972 = vadd.f32 %v5708, %v5908
        %v5973 = vadd.f32 %v5709, %v5909
        %v5974 = vadd.f32 %v5710, %v5910
        %v5975 = vadd.f32 %v5711, %v5911
        %v5976 = vadd.f32 %v5712, %v5912
        %v5977 = vadd.f32 %v5713, %v5913
        %v5978 = vadd.f32 %v5714, %v5914
        %v5979 = vadd.f32 %v5715, %v5915
        %v5980 = vadd.f32 %v5716, %v5916
        %v5981 = vadd.f32 %v5717, %v5917
        %v5982 = vadd.f32 %v5718, %v5918
        %v5983 = vadd.f32 %v5719, %v5919
        %v5984 = vadd.f32 %v5720, %v5920
        %v5985 = vadd.f32 %v5721, %v5921
        %v5986 = vadd.f32 %v5722, %v5922
        %v5987 = vadd.f32 %v5723, %v5923
        %v5988 = vadd.f32 %v5724, %v5924
        %v5989 = vadd.f32 %v5725, %v5925
        %v5990 = vadd.f32 %v5726, %v5926
        %v5991 = vadd.f32 %v5727, %v5927
        %v5992 = vadd.f32 %v5728, %v5928
        %v5993 = vadd.f32 %v5729, %v5929
        %v5994 = vadd.f32 %v5730, %v5930
        %v5995 = vadd.f32 %v5731, %v5931
        %v5996 = vadd.f32 %v5732, %v5932
        %v5997 = vadd.f32 %v5733, %v5933
        %v5998 = vadd.f32 %v5734, %v5934
        %v5999 = vadd.f32 %v5735, %v5935
        %v6000 = vadd.f32 %v5736, %v5936
        %v6001 = vadd.f32 %v5737, %v5937
        %v6002 = vadd.f32 %v5738, %v5938
        %v6003 = vadd.f32 %v5739, %v5939
        %v6004 = vadd.f32 %v5740, %v5940
        %v6005 = vadd.f32 %v5741, %v5941
        %v6006 = vadd.f32 %v5742, %v5942
        %v6007 = vadd.f32 %v5743, %v5943
        %v6008 = vadd.f32 %v5744, %v5944
        %v6009 = vadd.f32 %v5745, %v5945
        %v6010 = vadd.f32 %v5746, %v5946
        %v6011 = vadd.f32 %v5747, %v5947
        %v6012 = vadd.f32 %v5748, %v5948
        %v6013 = vadd.f32 %v5749, %v5949
        %v6014 = vadd.f32 %v5750, %v5950
        %v6015 = vadd.f32 %v5751, %v5951
        %v6016 = vcombine.high %v5263, %v5263
        %v6018 = vunpack.c.l.s4 1966171168
        %v6019 = vunpack.c.0.s8 %v6018
        %v6020 = vlaneseq
        %v6021 = vshrl.u32 %v6020, 7
        %v6022 = vsub.s32 %v6019, %v6021
        %v6023 = vrot.slane %v6016, %v6022
        %v6024 = vcombine.high %v6023, %v6023
        %v6026 = vunpack.c.l.s4 1966171168
        %v6027 = vunpack.c.0.s8 %v6026
        %v6028 = vlaneseq
        %v6029 = vshrl.u32 %v6028, 7
        %v6030 = vsub.s32 %v6027, %v6029
        %v6031 = vrot.slane %v6023, %v6030
        %v6033 = vunpack.c.l.s4 1966171168
        %v6034 = vunpack.c.0.s8 %v6033
        %v6035 = vlaneseq
        %v6036 = vshrl.u32 %v6035, 7
        %v6037 = vsub.s32 %v6034, %v6036
        %v6038 = vrot.slane %v6024, %v6037
        %v6039 = vcombine.high %v6031, %v6031
        %v6040 = vcombine.high %v6038, %v6038
        %s6041 = scalar_lea.vmem [#allocation2], 1024
        %v6042 = vld [vmem:[%s6041] sm:$0xff]
        %v6043 = vld [vmem:[%s6041 + $0x8] sm:$0xff]
        %v6044 = vld [vmem:[%s6041 + $0x10] sm:$0xff]
        %v6045 = vld [vmem:[%s6041 + $0x18] sm:$0xff]
        %v6046 = vld [vmem:[%s6041 + $0x20] sm:$0xff]
        %v6047 = vld [vmem:[%s6041 + $0x28] sm:$0xff]
        %v6048 = vld [vmem:[%s6041 + $0x30] sm:$0xff]
        %v6049 = vld [vmem:[%s6041 + $0x38] sm:$0xff]
        %v6050 = vld [vmem:[%s6041 + $0x40] sm:$0xff]
        %v6051 = vld [vmem:[%s6041 + $0x48] sm:$0xff]
        %v6052 = vld [vmem:[%s6041 + $0x50] sm:$0xff]
        %v6053 = vld [vmem:[%s6041 + $0x58] sm:$0xff]
        %v6054 = vld [vmem:[%s6041 + $0x60] sm:$0xff]
        %v6055 = vld [vmem:[%s6041 + $0x68] sm:$0xff]
        %v6056 = vld [vmem:[%s6041 + $0x70] sm:$0xff]
        %v6057 = vld [vmem:[%s6041 + $0x78] sm:$0xff]
        %v6058 = vld [vmem:[%s6041 + $0x80] sm:$0xff]
        %v6059 = vld [vmem:[%s6041 + $0x88] sm:$0xff]
        %v6060 = vld [vmem:[%s6041 + $0x90] sm:$0xff]
        %v6061 = vld [vmem:[%s6041 + $0x98] sm:$0xff]
        %v6062 = vld [vmem:[%s6041 + $0xa0] sm:$0xff]
        %v6063 = vld [vmem:[%s6041 + $0xa8] sm:$0xff]
        %v6064 = vld [vmem:[%s6041 + $0xb0] sm:$0xff]
        %v6065 = vld [vmem:[%s6041 + $0xb8] sm:$0xff]
        %v6066 = vld [vmem:[%s6041 + $0xc0] sm:$0xff]
        %v6067 = vld [vmem:[%s6041 + $0xc8] sm:$0xff]
        %v6068 = vld [vmem:[%s6041 + $0xd0] sm:$0xff]
        %v6069 = vld [vmem:[%s6041 + $0xd8] sm:$0xff]
        %v6070 = vld [vmem:[%s6041 + $0xe0] sm:$0xff]
        %v6071 = vld [vmem:[%s6041 + $0xe8] sm:$0xff]
        %v6072 = vld [vmem:[%s6041 + $0xf0] sm:$0xff]
        %v6073 = vld [vmem:[%s6041 + $0xf8] sm:$0xff]
        %v6074 = vunpack.c.l.bf16 %v6042
        %v6075 = vunpack.c.l.bf16 %v6043
        %v6076 = vunpack.c.l.bf16 %v6044
        %v6077 = vunpack.c.l.bf16 %v6045
        %v6078 = vunpack.c.h.bf16 %v6042
        %v6079 = vunpack.c.h.bf16 %v6043
        %v6080 = vunpack.c.h.bf16 %v6044
        %v6081 = vunpack.c.h.bf16 %v6045
        %v6082 = vunpack.c.l.bf16 %v6046
        %v6083 = vunpack.c.l.bf16 %v6047
        %v6084 = vunpack.c.l.bf16 %v6048
        %v6085 = vunpack.c.l.bf16 %v6049
        %v6086 = vunpack.c.h.bf16 %v6046
        %v6087 = vunpack.c.h.bf16 %v6047
        %v6088 = vunpack.c.h.bf16 %v6048
        %v6089 = vunpack.c.h.bf16 %v6049
        %v6090 = vunpack.c.l.bf16 %v6050
        %v6091 = vunpack.c.l.bf16 %v6051
        %v6092 = vunpack.c.l.bf16 %v6052
        %v6093 = vunpack.c.l.bf16 %v6053
        %v6094 = vunpack.c.h.bf16 %v6050
        %v6095 = vunpack.c.h.bf16 %v6051
        %v6096 = vunpack.c.h.bf16 %v6052
        %v6097 = vunpack.c.h.bf16 %v6053
        %v6098 = vunpack.c.l.bf16 %v6054
        %v6099 = vunpack.c.l.bf16 %v6055
        %v6100 = vunpack.c.l.bf16 %v6056
        %v6101 = vunpack.c.l.bf16 %v6057
        %v6102 = vunpack.c.h.bf16 %v6054
        %v6103 = vunpack.c.h.bf16 %v6055
        %v6104 = vunpack.c.h.bf16 %v6056
        %v6105 = vunpack.c.h.bf16 %v6057
        %v6106 = vunpack.c.l.bf16 %v6058
        %v6107 = vunpack.c.l.bf16 %v6059
        %v6108 = vunpack.c.l.bf16 %v6060
        %v6109 = vunpack.c.l.bf16 %v6061
        %v6110 = vunpack.c.h.bf16 %v6058
        %v6111 = vunpack.c.h.bf16 %v6059
        %v6112 = vunpack.c.h.bf16 %v6060
        %v6113 = vunpack.c.h.bf16 %v6061
        %v6114 = vunpack.c.l.bf16 %v6062
        %v6115 = vunpack.c.l.bf16 %v6063
        %v6116 = vunpack.c.l.bf16 %v6064
        %v6117 = vunpack.c.l.bf16 %v6065
        %v6118 = vunpack.c.h.bf16 %v6062
        %v6119 = vunpack.c.h.bf16 %v6063
        %v6120 = vunpack.c.h.bf16 %v6064
        %v6121 = vunpack.c.h.bf16 %v6065
        %v6122 = vunpack.c.l.bf16 %v6066
        %v6123 = vunpack.c.l.bf16 %v6067
        %v6124 = vunpack.c.l.bf16 %v6068
        %v6125 = vunpack.c.l.bf16 %v6069
        %v6126 = vunpack.c.h.bf16 %v6066
        %v6127 = vunpack.c.h.bf16 %v6067
        %v6128 = vunpack.c.h.bf16 %v6068
        %v6129 = vunpack.c.h.bf16 %v6069
        %v6130 = vunpack.c.l.bf16 %v6070
        %v6131 = vunpack.c.l.bf16 %v6071
        %v6132 = vunpack.c.l.bf16 %v6072
        %v6133 = vunpack.c.l.bf16 %v6073
        %v6134 = vunpack.c.h.bf16 %v6070
        %v6135 = vunpack.c.h.bf16 %v6071
        %v6136 = vunpack.c.h.bf16 %v6072
        %v6137 = vunpack.c.h.bf16 %v6073
        %v6138 = vlaneseq
        %v6139 = vshrl.u32 %v6138, 7
        %v6140 = vsub.s32 0, %v6139
        %v6141 = vrot.slane %v6039, %v6140
        %v6142 = vlaneseq
        %v6143 = vshrl.u32 %v6142, 7
        %v6144 = vsub.s32 0, %v6143
        %v6145 = vrot.slane %v6040, %v6144
        %6146 = vset.pattern.permute.xlu0 0
        %6147 = vperm.xlu0 %6146, %v6141
        %v6148 = vpop.permute.xlu0 %6147
        %6150 = vset.pattern.permute.xlu0 0
        %6151 = vperm.xlu0 %6150, %v6145
        %v6152 = vpop.permute.xlu0 %6151
        %v6154 = vmul.f32 %v6148, %v6074
        %v6155 = vmul.f32 %v6148, %v6075
        %v6156 = vmul.f32 %v6148, %v6076
        %v6157 = vmul.f32 %v6148, %v6077
        %v6158 = vmul.f32 %v6148, %v6078
        %v6159 = vmul.f32 %v6148, %v6079
        %v6160 = vmul.f32 %v6148, %v6080
        %v6161 = vmul.f32 %v6148, %v6081
        %v6162 = vmul.f32 %v6148, %v6082
        %v6163 = vmul.f32 %v6148, %v6083
        %v6164 = vmul.f32 %v6148, %v6084
        %v6165 = vmul.f32 %v6148, %v6085
        %v6166 = vmul.f32 %v6148, %v6086
        %v6167 = vmul.f32 %v6148, %v6087
        %v6168 = vmul.f32 %v6148, %v6088
        %v6169 = vmul.f32 %v6148, %v6089
        %v6170 = vmul.f32 %v6148, %v6090
        %v6171 = vmul.f32 %v6148, %v6091
        %v6172 = vmul.f32 %v6148, %v6092
        %v6173 = vmul.f32 %v6148, %v6093
        %v6174 = vmul.f32 %v6148, %v6094
        %v6175 = vmul.f32 %v6148, %v6095
        %v6176 = vmul.f32 %v6148, %v6096
        %v6177 = vmul.f32 %v6148, %v6097
        %v6178 = vmul.f32 %v6148, %v6098
        %v6179 = vmul.f32 %v6148, %v6099
        %v6180 = vmul.f32 %v6148, %v6100
        %v6181 = vmul.f32 %v6148, %v6101
        %v6182 = vmul.f32 %v6148, %v6102
        %v6183 = vmul.f32 %v6148, %v6103
        %v6184 = vmul.f32 %v6148, %v6104
        %v6185 = vmul.f32 %v6148, %v6105
        %v6186 = vmul.f32 %v6152, %v6106
        %v6187 = vmul.f32 %v6152, %v6107
        %v6188 = vmul.f32 %v6152, %v6108
        %v6189 = vmul.f32 %v6152, %v6109
        %v6190 = vmul.f32 %v6152, %v6110
        %v6191 = vmul.f32 %v6152, %v6111
        %v6192 = vmul.f32 %v6152, %v6112
        %v6193 = vmul.f32 %v6152, %v6113
        %v6194 = vmul.f32 %v6152, %v6114
        %v6195 = vmul.f32 %v6152, %v6115
        %v6196 = vmul.f32 %v6152, %v6116
        %v6197 = vmul.f32 %v6152, %v6117
        %v6198 = vmul.f32 %v6152, %v6118
        %v6199 = vmul.f32 %v6152, %v6119
        %v6200 = vmul.f32 %v6152, %v6120
        %v6201 = vmul.f32 %v6152, %v6121
        %v6202 = vmul.f32 %v6152, %v6122
        %v6203 = vmul.f32 %v6152, %v6123
        %v6204 = vmul.f32 %v6152, %v6124
        %v6205 = vmul.f32 %v6152, %v6125
        %v6206 = vmul.f32 %v6152, %v6126
        %v6207 = vmul.f32 %v6152, %v6127
        %v6208 = vmul.f32 %v6152, %v6128
        %v6209 = vmul.f32 %v6152, %v6129
        %v6210 = vmul.f32 %v6152, %v6130
        %v6211 = vmul.f32 %v6152, %v6131
        %v6212 = vmul.f32 %v6152, %v6132
        %v6213 = vmul.f32 %v6152, %v6133
        %v6214 = vmul.f32 %v6152, %v6134
        %v6215 = vmul.f32 %v6152, %v6135
        %v6216 = vmul.f32 %v6152, %v6136
        %v6217 = vmul.f32 %v6152, %v6137
        %v6218 = vadd.f32 %v5952, %v6154
        %v6219 = vadd.f32 %v5953, %v6155
        %v6220 = vadd.f32 %v5954, %v6156
        %v6221 = vadd.f32 %v5955, %v6157
        %v6222 = vadd.f32 %v5956, %v6158
        %v6223 = vadd.f32 %v5957, %v6159
        %v6224 = vadd.f32 %v5958, %v6160
        %v6225 = vadd.f32 %v5959, %v6161
        %v6226 = vadd.f32 %v5960, %v6162
        %v6227 = vadd.f32 %v5961, %v6163
        %v6228 = vadd.f32 %v5962, %v6164
        %v6229 = vadd.f32 %v5963, %v6165
        %v6230 = vadd.f32 %v5964, %v6166
        %v6231 = vadd.f32 %v5965, %v6167
        %v6232 = vadd.f32 %v5966, %v6168
        %v6233 = vadd.f32 %v5967, %v6169
        %v6234 = vadd.f32 %v5968, %v6170
        %v6235 = vadd.f32 %v5969, %v6171
        %v6236 = vadd.f32 %v5970, %v6172
        %v6237 = vadd.f32 %v5971, %v6173
        %v6238 = vadd.f32 %v5972, %v6174
        %v6239 = vadd.f32 %v5973, %v6175
        %v6240 = vadd.f32 %v5974, %v6176
        %v6241 = vadd.f32 %v5975, %v6177
        %v6242 = vadd.f32 %v5976, %v6178
        %v6243 = vadd.f32 %v5977, %v6179
        %v6244 = vadd.f32 %v5978, %v6180
        %v6245 = vadd.f32 %v5979, %v6181
        %v6246 = vadd.f32 %v5980, %v6182
        %v6247 = vadd.f32 %v5981, %v6183
        %v6248 = vadd.f32 %v5982, %v6184
        %v6249 = vadd.f32 %v5983, %v6185
        %v6250 = vadd.f32 %v5984, %v6186
        %v6251 = vadd.f32 %v5985, %v6187
        %v6252 = vadd.f32 %v5986, %v6188
        %v6253 = vadd.f32 %v5987, %v6189
        %v6254 = vadd.f32 %v5988, %v6190
        %v6255 = vadd.f32 %v5989, %v6191
        %v6256 = vadd.f32 %v5990, %v6192
        %v6257 = vadd.f32 %v5991, %v6193
        %v6258 = vadd.f32 %v5992, %v6194
        %v6259 = vadd.f32 %v5993, %v6195
        %v6260 = vadd.f32 %v5994, %v6196
        %v6261 = vadd.f32 %v5995, %v6197
        %v6262 = vadd.f32 %v5996, %v6198
        %v6263 = vadd.f32 %v5997, %v6199
        %v6264 = vadd.f32 %v5998, %v6200
        %v6265 = vadd.f32 %v5999, %v6201
        %v6266 = vadd.f32 %v6000, %v6202
        %v6267 = vadd.f32 %v6001, %v6203
        %v6268 = vadd.f32 %v6002, %v6204
        %v6269 = vadd.f32 %v6003, %v6205
        %v6270 = vadd.f32 %v6004, %v6206
        %v6271 = vadd.f32 %v6005, %v6207
        %v6272 = vadd.f32 %v6006, %v6208
        %v6273 = vadd.f32 %v6007, %v6209
        %v6274 = vadd.f32 %v6008, %v6210
        %v6275 = vadd.f32 %v6009, %v6211
        %v6276 = vadd.f32 %v6010, %v6212
        %v6277 = vadd.f32 %v6011, %v6213
        %v6278 = vadd.f32 %v6012, %v6214
        %v6279 = vadd.f32 %v6013, %v6215
        %v6280 = vadd.f32 %v6014, %v6216
        %v6281 = vadd.f32 %v6015, %v6217
        %v6282 = vld [vmem:[#allocation2] sm:$0xff]
        %v6283 = vld [vmem:[#allocation2 + $0x8] sm:$0xff]
        %v6284 = vld [vmem:[#allocation2 + $0x10] sm:$0xff]
        %v6285 = vld [vmem:[#allocation2 + $0x18] sm:$0xff]
        %v6286 = vld [vmem:[#allocation2 + $0x20] sm:$0xff]
        %v6287 = vld [vmem:[#allocation2 + $0x28] sm:$0xff]
        %v6288 = vld [vmem:[#allocation2 + $0x30] sm:$0xff]
        %v6289 = vld [vmem:[#allocation2 + $0x38] sm:$0xff]
        %v6290 = vld [vmem:[#allocation2 + $0x40] sm:$0xff]
        %v6291 = vld [vmem:[#allocation2 + $0x48] sm:$0xff]
        %v6292 = vld [vmem:[#allocation2 + $0x50] sm:$0xff]
        %v6293 = vld [vmem:[#allocation2 + $0x58] sm:$0xff]
        %v6294 = vld [vmem:[#allocation2 + $0x60] sm:$0xff]
        %v6295 = vld [vmem:[#allocation2 + $0x68] sm:$0xff]
        %v6296 = vld [vmem:[#allocation2 + $0x70] sm:$0xff]
        %v6297 = vld [vmem:[#allocation2 + $0x78] sm:$0xff]
        %v6298 = vld [vmem:[#allocation2 + $0x80] sm:$0xff]
        %v6299 = vld [vmem:[#allocation2 + $0x88] sm:$0xff]
        %v6300 = vld [vmem:[#allocation2 + $0x90] sm:$0xff]
        %v6301 = vld [vmem:[#allocation2 + $0x98] sm:$0xff]
        %v6302 = vld [vmem:[#allocation2 + $0xa0] sm:$0xff]
        %v6303 = vld [vmem:[#allocation2 + $0xa8] sm:$0xff]
        %v6304 = vld [vmem:[#allocation2 + $0xb0] sm:$0xff]
        %v6305 = vld [vmem:[#allocation2 + $0xb8] sm:$0xff]
        %v6306 = vld [vmem:[#allocation2 + $0xc0] sm:$0xff]
        %v6307 = vld [vmem:[#allocation2 + $0xc8] sm:$0xff]
        %v6308 = vld [vmem:[#allocation2 + $0xd0] sm:$0xff]
        %v6309 = vld [vmem:[#allocation2 + $0xd8] sm:$0xff]
        %v6310 = vld [vmem:[#allocation2 + $0xe0] sm:$0xff]
        %v6311 = vld [vmem:[#allocation2 + $0xe8] sm:$0xff]
        %v6312 = vld [vmem:[#allocation2 + $0xf0] sm:$0xff]
        %v6313 = vld [vmem:[#allocation2 + $0xf8] sm:$0xff]
        %v6314 = vpack.c.bf16 %v6222, %v6218
        %v6315 = vpack.c.bf16 %v6223, %v6219
        %v6316 = vpack.c.bf16 %v6224, %v6220
        %v6317 = vpack.c.bf16 %v6225, %v6221
        %v6318 = vpack.c.bf16 %v6230, %v6226
        %v6319 = vpack.c.bf16 %v6231, %v6227
        %v6320 = vpack.c.bf16 %v6232, %v6228
        %v6321 = vpack.c.bf16 %v6233, %v6229
        %v6322 = vpack.c.bf16 %v6238, %v6234
        %v6323 = vpack.c.bf16 %v6239, %v6235
        %v6324 = vpack.c.bf16 %v6240, %v6236
        %v6325 = vpack.c.bf16 %v6241, %v6237
        %v6326 = vpack.c.bf16 %v6246, %v6242
        %v6327 = vpack.c.bf16 %v6247, %v6243
        %v6328 = vpack.c.bf16 %v6248, %v6244
        %v6329 = vpack.c.bf16 %v6249, %v6245
        %v6330 = vpack.c.bf16 %v6254, %v6250
        %v6331 = vpack.c.bf16 %v6255, %v6251
        %v6332 = vpack.c.bf16 %v6256, %v6252
        %v6333 = vpack.c.bf16 %v6257, %v6253
        %v6334 = vpack.c.bf16 %v6262, %v6258
        %v6335 = vpack.c.bf16 %v6263, %v6259
        %v6336 = vpack.c.bf16 %v6264, %v6260
        %v6337 = vpack.c.bf16 %v6265, %v6261
        %v6338 = vpack.c.bf16 %v6270, %v6266
        %v6339 = vpack.c.bf16 %v6271, %v6267
        %v6340 = vpack.c.bf16 %v6272, %v6268
        %v6341 = vpack.c.bf16 %v6273, %v6269
        %v6342 = vpack.c.bf16 %v6278, %v6274
        %v6343 = vpack.c.bf16 %v6279, %v6275
        %v6344 = vpack.c.bf16 %v6280, %v6276
        %v6345 = vpack.c.bf16 %v6281, %v6277
        %v6346 = vld [vmem:[%s11] sm:$0xf]
        %v6347 = vld [vmem:[%s11 + $0x4] sm:$0xf]
        %v6348 = vld [vmem:[%s11 + $0x8] sm:$0xf]
        %v6349 = vld [vmem:[%s11 + $0xc] sm:$0xf]
        %v6350 = vld [vmem:[%s11 + $0x10] sm:$0xf]
        %v6351 = vld [vmem:[%s11 + $0x14] sm:$0xf]
        %v6352 = vld [vmem:[%s11 + $0x18] sm:$0xf]
        %v6353 = vld [vmem:[%s11 + $0x1c] sm:$0xf]
        %v6354 = vld [vmem:[%s11 + $0x20] sm:$0xf]
        %v6355 = vld [vmem:[%s11 + $0x24] sm:$0xf]
        %v6356 = vld [vmem:[%s11 + $0x28] sm:$0xf]
        %v6357 = vld [vmem:[%s11 + $0x2c] sm:$0xf]
        %v6358 = vld [vmem:[%s11 + $0x30] sm:$0xf]
        %v6359 = vld [vmem:[%s11 + $0x34] sm:$0xf]
        %v6360 = vld [vmem:[%s11 + $0x38] sm:$0xf]
        %v6361 = vld [vmem:[%s11 + $0x3c] sm:$0xf]
        %v6362 = vld [vmem:[%s11 + $0x40] sm:$0xf]
        %v6363 = vld [vmem:[%s11 + $0x44] sm:$0xf]
        %v6364 = vld [vmem:[%s11 + $0x48] sm:$0xf]
        %v6365 = vld [vmem:[%s11 + $0x4c] sm:$0xf]
        %v6366 = vld [vmem:[%s11 + $0x50] sm:$0xf]
        %v6367 = vld [vmem:[%s11 + $0x54] sm:$0xf]
        %v6368 = vld [vmem:[%s11 + $0x58] sm:$0xf]
        %v6369 = vld [vmem:[%s11 + $0x5c] sm:$0xf]
        %v6370 = vld [vmem:[%s11 + $0x60] sm:$0xf]
        %v6371 = vld [vmem:[%s11 + $0x64] sm:$0xf]
        %v6372 = vld [vmem:[%s11 + $0x68] sm:$0xf]
        %v6373 = vld [vmem:[%s11 + $0x6c] sm:$0xf]
        %v6374 = vld [vmem:[%s11 + $0x70] sm:$0xf]
        %v6375 = vld [vmem:[%s11 + $0x74] sm:$0xf]
        %v6376 = vld [vmem:[%s11 + $0x78] sm:$0xf]
        %v6377 = vld [vmem:[%s11 + $0x7c] sm:$0xf]
        %v6378 = vld [vmem:[%s11 + $0x80] sm:$0xf]
        %v6379 = vld [vmem:[%s11 + $0x84] sm:$0xf]
        %v6380 = vld [vmem:[%s11 + $0x88] sm:$0xf]
        %v6381 = vld [vmem:[%s11 + $0x8c] sm:$0xf]
        %v6382 = vld [vmem:[%s11 + $0x90] sm:$0xf]
        %v6383 = vld [vmem:[%s11 + $0x94] sm:$0xf]
        %v6384 = vld [vmem:[%s11 + $0x98] sm:$0xf]
        %v6385 = vld [vmem:[%s11 + $0x9c] sm:$0xf]
        %v6386 = vld [vmem:[%s11 + $0xa0] sm:$0xf]
        %v6387 = vld [vmem:[%s11 + $0xa4] sm:$0xf]
        %v6388 = vld [vmem:[%s11 + $0xa8] sm:$0xf]
        %v6389 = vld [vmem:[%s11 + $0xac] sm:$0xf]
        %v6390 = vld [vmem:[%s11 + $0xb0] sm:$0xf]
        %v6391 = vld [vmem:[%s11 + $0xb4] sm:$0xf]
        %v6392 = vld [vmem:[%s11 + $0xb8] sm:$0xf]
        %v6393 = vld [vmem:[%s11 + $0xbc] sm:$0xf]
        %v6394 = vld [vmem:[%s11 + $0xc0] sm:$0xf]
        %v6395 = vld [vmem:[%s11 + $0xc4] sm:$0xf]
        %v6396 = vld [vmem:[%s11 + $0xc8] sm:$0xf]
        %v6397 = vld [vmem:[%s11 + $0xcc] sm:$0xf]
        %v6398 = vld [vmem:[%s11 + $0xd0] sm:$0xf]
        %v6399 = vld [vmem:[%s11 + $0xd4] sm:$0xf]
        %v6400 = vld [vmem:[%s11 + $0xd8] sm:$0xf]
        %v6401 = vld [vmem:[%s11 + $0xdc] sm:$0xf]
        %v6402 = vld [vmem:[%s11 + $0xe0] sm:$0xf]
        %v6403 = vld [vmem:[%s11 + $0xe4] sm:$0xf]
        %v6404 = vld [vmem:[%s11 + $0xe8] sm:$0xf]
        %v6405 = vld [vmem:[%s11 + $0xec] sm:$0xf]
        %v6406 = vld [vmem:[%s11 + $0xf0] sm:$0xf]
        %v6407 = vld [vmem:[%s11 + $0xf4] sm:$0xf]
        %v6408 = vld [vmem:[%s11 + $0xf8] sm:$0xf]
        %v6409 = vld [vmem:[%s11 + $0xfc] sm:$0xf]
        %v6410 = vld [vmem:[%s11 + $0x100] sm:$0xf]
        %v6411 = vld [vmem:[%s11 + $0x104] sm:$0xf]
        %v6412 = vld [vmem:[%s11 + $0x108] sm:$0xf]
        %v6413 = vld [vmem:[%s11 + $0x10c] sm:$0xf]
        %v6414 = vld [vmem:[%s11 + $0x110] sm:$0xf]
        %v6415 = vld [vmem:[%s11 + $0x114] sm:$0xf]
        %v6416 = vld [vmem:[%s11 + $0x118] sm:$0xf]
        %v6417 = vld [vmem:[%s11 + $0x11c] sm:$0xf]
        %v6418 = vld [vmem:[%s11 + $0x120] sm:$0xf]
        %v6419 = vld [vmem:[%s11 + $0x124] sm:$0xf]
        %v6420 = vld [vmem:[%s11 + $0x128] sm:$0xf]
        %v6421 = vld [vmem:[%s11 + $0x12c] sm:$0xf]
        %v6422 = vld [vmem:[%s11 + $0x130] sm:$0xf]
        %v6423 = vld [vmem:[%s11 + $0x134] sm:$0xf]
        %v6424 = vld [vmem:[%s11 + $0x138] sm:$0xf]
        %v6425 = vld [vmem:[%s11 + $0x13c] sm:$0xf]
        %v6426 = vld [vmem:[%s11 + $0x140] sm:$0xf]
        %v6427 = vld [vmem:[%s11 + $0x144] sm:$0xf]
        %v6428 = vld [vmem:[%s11 + $0x148] sm:$0xf]
        %v6429 = vld [vmem:[%s11 + $0x14c] sm:$0xf]
        %v6430 = vld [vmem:[%s11 + $0x150] sm:$0xf]
        %v6431 = vld [vmem:[%s11 + $0x154] sm:$0xf]
        %v6432 = vld [vmem:[%s11 + $0x158] sm:$0xf]
        %v6433 = vld [vmem:[%s11 + $0x15c] sm:$0xf]
        %v6434 = vld [vmem:[%s11 + $0x160] sm:$0xf]
        %v6435 = vld [vmem:[%s11 + $0x164] sm:$0xf]
        %v6436 = vld [vmem:[%s11 + $0x168] sm:$0xf]
        %v6437 = vld [vmem:[%s11 + $0x16c] sm:$0xf]
        %v6438 = vld [vmem:[%s11 + $0x170] sm:$0xf]
        %v6439 = vld [vmem:[%s11 + $0x174] sm:$0xf]
        %v6440 = vld [vmem:[%s11 + $0x178] sm:$0xf]
        %v6441 = vld [vmem:[%s11 + $0x17c] sm:$0xf]
        %v6442 = vld [vmem:[%s11 + $0x180] sm:$0xf]
        %v6443 = vld [vmem:[%s11 + $0x184] sm:$0xf]
        %v6444 = vld [vmem:[%s11 + $0x188] sm:$0xf]
        %v6445 = vld [vmem:[%s11 + $0x18c] sm:$0xf]
        %v6446 = vld [vmem:[%s11 + $0x190] sm:$0xf]
        %v6447 = vld [vmem:[%s11 + $0x194] sm:$0xf]
        %v6448 = vld [vmem:[%s11 + $0x198] sm:$0xf]
        %v6449 = vld [vmem:[%s11 + $0x19c] sm:$0xf]
        %v6450 = vld [vmem:[%s11 + $0x1a0] sm:$0xf]
        %v6451 = vld [vmem:[%s11 + $0x1a4] sm:$0xf]
        %v6452 = vld [vmem:[%s11 + $0x1a8] sm:$0xf]
        %v6453 = vld [vmem:[%s11 + $0x1ac] sm:$0xf]
        %v6454 = vld [vmem:[%s11 + $0x1b0] sm:$0xf]
        %v6455 = vld [vmem:[%s11 + $0x1b4] sm:$0xf]
        %v6456 = vld [vmem:[%s11 + $0x1b8] sm:$0xf]
        %v6457 = vld [vmem:[%s11 + $0x1bc] sm:$0xf]
        %v6458 = vld [vmem:[%s11 + $0x1c0] sm:$0xf]
        %v6459 = vld [vmem:[%s11 + $0x1c4] sm:$0xf]
        %v6460 = vld [vmem:[%s11 + $0x1c8] sm:$0xf]
        %v6461 = vld [vmem:[%s11 + $0x1cc] sm:$0xf]
        %v6462 = vld [vmem:[%s11 + $0x1d0] sm:$0xf]
        %v6463 = vld [vmem:[%s11 + $0x1d4] sm:$0xf]
        %v6464 = vld [vmem:[%s11 + $0x1d8] sm:$0xf]
        %v6465 = vld [vmem:[%s11 + $0x1dc] sm:$0xf]
        %v6466 = vld [vmem:[%s11 + $0x1e0] sm:$0xf]
        %v6467 = vld [vmem:[%s11 + $0x1e4] sm:$0xf]
        %v6468 = vld [vmem:[%s11 + $0x1e8] sm:$0xf]
        %v6469 = vld [vmem:[%s11 + $0x1ec] sm:$0xf]
        %v6470 = vld [vmem:[%s11 + $0x1f0] sm:$0xf]
        %v6471 = vld [vmem:[%s11 + $0x1f4] sm:$0xf]
        %v6472 = vld [vmem:[%s11 + $0x1f8] sm:$0xf]
        %v6473 = vld [vmem:[%s11 + $0x1fc] sm:$0xf]
        %v6538 = vunpack.c.l.b16 %v6410
        %v6539 = vunpack.c.l.b16 %v6411
        %v6540 = vunpack.c.l.b16 %v6412
        %v6541 = vunpack.c.l.b16 %v6413
        %v6542 = vunpack.c.l.b16 %v6414
        %v6543 = vunpack.c.l.b16 %v6415
        %v6544 = vunpack.c.l.b16 %v6416
        %v6545 = vunpack.c.l.b16 %v6417
        %v6546 = vunpack.c.l.b16 %v6418
        %v6547 = vunpack.c.l.b16 %v6419
        %v6548 = vunpack.c.l.b16 %v6420
        %v6549 = vunpack.c.l.b16 %v6421
        %v6550 = vunpack.c.l.b16 %v6422
        %v6551 = vunpack.c.l.b16 %v6423
        %v6552 = vunpack.c.l.b16 %v6424
        %v6553 = vunpack.c.l.b16 %v6425
        %v6554 = vunpack.c.l.b16 %v6426
        %v6555 = vunpack.c.l.b16 %v6427
        %v6556 = vunpack.c.l.b16 %v6428
        %v6557 = vunpack.c.l.b16 %v6429
        %v6558 = vunpack.c.l.b16 %v6430
        %v6559 = vunpack.c.l.b16 %v6431
        %v6560 = vunpack.c.l.b16 %v6432
        %v6561 = vunpack.c.l.b16 %v6433
        %v6562 = vunpack.c.l.b16 %v6434
        %v6563 = vunpack.c.l.b16 %v6435
        %v6564 = vunpack.c.l.b16 %v6436
        %v6565 = vunpack.c.l.b16 %v6437
        %v6566 = vunpack.c.l.b16 %v6438
        %v6567 = vunpack.c.l.b16 %v6439
        %v6568 = vunpack.c.l.b16 %v6440
        %v6569 = vunpack.c.l.b16 %v6441
        %v6570 = vunpack.c.l.b16 %v6442
        %v6571 = vunpack.c.l.b16 %v6443
        %v6572 = vunpack.c.l.b16 %v6444
        %v6573 = vunpack.c.l.b16 %v6445
        %v6574 = vunpack.c.l.b16 %v6446
        %v6575 = vunpack.c.l.b16 %v6447
        %v6576 = vunpack.c.l.b16 %v6448
        %v6577 = vunpack.c.l.b16 %v6449
        %v6578 = vunpack.c.l.b16 %v6450
        %v6579 = vunpack.c.l.b16 %v6451
        %v6580 = vunpack.c.l.b16 %v6452
        %v6581 = vunpack.c.l.b16 %v6453
        %v6582 = vunpack.c.l.b16 %v6454
        %v6583 = vunpack.c.l.b16 %v6455
        %v6584 = vunpack.c.l.b16 %v6456
        %v6585 = vunpack.c.l.b16 %v6457
        %v6586 = vunpack.c.l.b16 %v6458
        %v6587 = vunpack.c.l.b16 %v6459
        %v6588 = vunpack.c.l.b16 %v6460
        %v6589 = vunpack.c.l.b16 %v6461
        %v6590 = vunpack.c.l.b16 %v6462
        %v6591 = vunpack.c.l.b16 %v6463
        %v6592 = vunpack.c.l.b16 %v6464
        %v6593 = vunpack.c.l.b16 %v6465
        %v6594 = vunpack.c.l.b16 %v6466
        %v6595 = vunpack.c.l.b16 %v6467
        %v6596 = vunpack.c.l.b16 %v6468
        %v6597 = vunpack.c.l.b16 %v6469
        %v6598 = vunpack.c.l.b16 %v6470
        %v6599 = vunpack.c.l.b16 %v6471
        %v6600 = vunpack.c.l.b16 %v6472
        %v6601 = vunpack.c.l.b16 %v6473
        %v6602 = vpack.c.b16 %v6539, %v6538
        %v6603 = vpack.c.b16 %v6541, %v6540
        %v6604 = vpack.c.b16 %v6543, %v6542
        %v6605 = vpack.c.b16 %v6545, %v6544
        %v6606 = vpack.c.b16 %v6547, %v6546
        %v6607 = vpack.c.b16 %v6549, %v6548
        %v6608 = vpack.c.b16 %v6551, %v6550
        %v6609 = vpack.c.b16 %v6553, %v6552
        %v6610 = vpack.c.b16 %v6555, %v6554
        %v6611 = vpack.c.b16 %v6557, %v6556
        %v6612 = vpack.c.b16 %v6559, %v6558
        %v6613 = vpack.c.b16 %v6561, %v6560
        %v6614 = vpack.c.b16 %v6563, %v6562
        %v6615 = vpack.c.b16 %v6565, %v6564
        %v6616 = vpack.c.b16 %v6567, %v6566
        %v6617 = vpack.c.b16 %v6569, %v6568
        %v6618 = vpack.c.b16 %v6571, %v6570
        %v6619 = vpack.c.b16 %v6573, %v6572
        %v6620 = vpack.c.b16 %v6575, %v6574
        %v6621 = vpack.c.b16 %v6577, %v6576
        %v6622 = vpack.c.b16 %v6579, %v6578
        %v6623 = vpack.c.b16 %v6581, %v6580
        %v6624 = vpack.c.b16 %v6583, %v6582
        %v6625 = vpack.c.b16 %v6585, %v6584
        %v6626 = vpack.c.b16 %v6587, %v6586
        %v6627 = vpack.c.b16 %v6589, %v6588
        %v6628 = vpack.c.b16 %v6591, %v6590
        %v6629 = vpack.c.b16 %v6593, %v6592
        %v6630 = vpack.c.b16 %v6595, %v6594
        %v6631 = vpack.c.b16 %v6597, %v6596
        %v6632 = vpack.c.b16 %v6599, %v6598
        %v6633 = vpack.c.b16 %v6601, %v6600
        %6666 = vmatprep.subr.bf16.mxu0 0
        %6667 = vmatpush1.bf16.msra.mxu0 %v6602
        %6668 = vmatprep.subr.bf16.mxu0 0
        %6669 = vmatpush1.bf16.msra.mxu0 %v6603
        %6670 = vmatprep.subr.bf16.mxu0 0
        %6671 = vmatpush1.bf16.msra.mxu0 %v6604
        %6672 = vmatprep.subr.bf16.mxu0 0
        %6673 = vmatpush1.bf16.msra.mxu0 %v6605
        %6674 = vmatprep.subr.bf16.mxu0 0
        %6675 = vmatpush1.bf16.msra.mxu0 %v6606
        %6676 = vmatprep.subr.bf16.mxu0 0
        %6677 = vmatpush1.bf16.msra.mxu0 %v6607
        %6678 = vmatprep.subr.bf16.mxu0 0
        %6679 = vmatpush1.bf16.msra.mxu0 %v6608
        %6680 = vmatprep.subr.bf16.mxu0 0
        %6681 = vmatpush1.bf16.msra.mxu0 %v6609
        %6682 = vmatprep.subr.bf16.mxu0 0
        %6683 = vmatpush1.bf16.msra.mxu0 %v6610
        %6684 = vmatprep.subr.bf16.mxu0 0
        %6685 = vmatpush1.bf16.msra.mxu0 %v6611
        %6686 = vmatprep.subr.bf16.mxu0 0
        %6687 = vmatpush1.bf16.msra.mxu0 %v6612
        %6688 = vmatprep.subr.bf16.mxu0 0
        %6689 = vmatpush1.bf16.msra.mxu0 %v6613
        %6690 = vmatprep.subr.bf16.mxu0 0
        %6691 = vmatpush1.bf16.msra.mxu0 %v6614
        %6692 = vmatprep.subr.bf16.mxu0 0
        %6693 = vmatpush1.bf16.msra.mxu0 %v6615
        %6694 = vmatprep.subr.bf16.mxu0 0
        %6695 = vmatpush1.bf16.msra.mxu0 %v6616
        %6696 = vmatprep.subr.bf16.mxu0 0
        %6697 = vmatpush1.bf16.msra.mxu0 %v6617
        %6698 = vmatprep.mubr.bf16.mxu0 %v6315
        %6699 = vmatmul.mubr.bf16.gmra.mrb[0].mxu0 %v6314
        %v6700 = vpop.f32.mrb[0].mxu0
        %v6701 = vadd.f32 0.0, %v6700
        %v6702 = vpop.f32.mrb[0].mxu0
        %v6703 = vpop.f32.mrb[0].mxu0
        %v6704 = vadd.f32 0.0, %v6703
        %v6705 = vpop.f32.mrb[0].mxu0
        %6706 = vmatprep.mubr.bf16.mxu0 %v6319
        %6707 = vmatmul.mubr.bf16.gmra.mrb[0].mxu0 %v6318
        %v6708 = vpop.f32.mrb[0].mxu0
        %v6709 = vadd.f32 0.0, %v6708
        %v6710 = vpop.f32.mrb[0].mxu0
        %v6711 = vpop.f32.mrb[0].mxu0
        %v6712 = vadd.f32 0.0, %v6711
        %v6713 = vpop.f32.mrb[0].mxu0
        %6714 = vmatprep.mubr.bf16.mxu0 %v6323
        %6715 = vmatmul.mubr.bf16.gmra.mrb[0].mxu0 %v6322
        %v6716 = vpop.f32.mrb[0].mxu0
        %v6717 = vadd.f32 0.0, %v6716
        %v6718 = vpop.f32.mrb[0].mxu0
        %v6719 = vpop.f32.mrb[0].mxu0
        %v6720 = vadd.f32 0.0, %v6719
        %v6721 = vpop.f32.mrb[0].mxu0
        %6722 = vmatprep.mubr.bf16.mxu0 %v6327
        %6723 = vmatmul.mubr.bf16.gmra.mrb[0].mxu0 %v6326
        %v6724 = vpop.f32.mrb[0].mxu0
        %v6725 = vadd.f32 0.0, %v6724
        %v6726 = vpop.f32.mrb[0].mxu0
        %v6727 = vpop.f32.mrb[0].mxu0
        %v6728 = vadd.f32 0.0, %v6727
        %v6729 = vpop.f32.mrb[0].mxu0
        %6730 = vmatprep.mubr.bf16.mxu0 %v6331
        %6731 = vmatmul.mubr.bf16.gmra.mrb[0].mxu0 %v6330
        %v6732 = vpop.f32.mrb[0].mxu0
        %v6733 = vadd.f32 0.0, %v6732
        %v6734 = vpop.f32.mrb[0].mxu0
        %v6735 = vpop.f32.mrb[0].mxu0
        %v6736 = vadd.f32 0.0, %v6735
        %v6737 = vpop.f32.mrb[0].mxu0
        %6738 = vmatprep.mubr.bf16.mxu0 %v6335
        %6739 = vmatmul.mubr.bf16.gmra.mrb[0].mxu0 %v6334
        %v6740 = vpop.f32.mrb[0].mxu0
        %v6741 = vadd.f32 0.0, %v6740
        %v6742 = vpop.f32.mrb[0].mxu0
        %v6743 = vpop.f32.mrb[0].mxu0
        %v6744 = vadd.f32 0.0, %v6743
        %v6745 = vpop.f32.mrb[0].mxu0
        %6746 = vmatprep.mubr.bf16.mxu0 %v6339
        %6747 = vmatmul.mubr.bf16.gmra.mrb[0].mxu0 %v6338
        %v6748 = vpop.f32.mrb[0].mxu0
        %v6749 = vadd.f32 0.0, %v6748
        %v6750 = vpop.f32.mrb[0].mxu0
        %v6751 = vpop.f32.mrb[0].mxu0
        %v6752 = vadd.f32 0.0, %v6751
        %v6753 = vpop.f32.mrb[0].mxu0
        %6754 = vmatprep.mubr.bf16.mxu0 %v6343
        %6755 = vmatmul.mubr.bf16.gmra.mrb[0].mxu0 %v6342
        %v6756 = vpop.f32.mrb[0].mxu0
        %v6757 = vadd.f32 0.0, %v6756
        %v6758 = vpop.f32.mrb[0].mxu0
        %v6759 = vpop.f32.mrb[0].mxu0
        %v6760 = vadd.f32 0.0, %v6759
        %v6761 = vpop.f32.mrb[0].mxu0
        %6762 = vdwg.mxu0
        %6763 = vmatprep.subr.bf16.mxu0 0
        %6764 = vmatpush1.bf16.msra.mxu0 %v6618
        %6765 = vmatprep.subr.bf16.mxu0 0
        %6766 = vmatpush1.bf16.msra.mxu0 %v6619
        %6767 = vmatprep.subr.bf16.mxu0 0
        %6768 = vmatpush1.bf16.msra.mxu0 %v6620
        %6769 = vmatprep.subr.bf16.mxu0 0
        %6770 = vmatpush1.bf16.msra.mxu0 %v6621
        %6771 = vmatprep.subr.bf16.mxu0 0
        %6772 = vmatpush1.bf16.msra.mxu0 %v6622
        %6773 = vmatprep.subr.bf16.mxu0 0
        %6774 = vmatpush1.bf16.msra.mxu0 %v6623
        %6775 = vmatprep.subr.bf16.mxu0 0
        %6776 = vmatpush1.bf16.msra.mxu0 %v6624
        %6777 = vmatprep.subr.bf16.mxu0 0
        %6778 = vmatpush1.bf16.msra.mxu0 %v6625
        %6779 = vmatprep.subr.bf16.mxu0 0
        %6780 = vmatpush1.bf16.msra.mxu0 %v6626
        %6781 = vmatprep.subr.bf16.mxu0 0
        %6782 = vmatpush1.bf16.msra.mxu0 %v6627
        %6783 = vmatprep.subr.bf16.mxu0 0
        %6784 = vmatpush1.bf16.msra.mxu0 %v6628
        %6785 = vmatprep.subr.bf16.mxu0 0
        %6786 = vmatpush1.bf16.msra.mxu0 %v6629
        %6787 = vmatprep.subr.bf16.mxu0 0
        %6788 = vmatpush1.bf16.msra.mxu0 %v6630
        %6789 = vmatprep.subr.bf16.mxu0 0
        %6790 = vmatpush1.bf16.msra.mxu0 %v6631
        %6791 = vmatprep.subr.bf16.mxu0 0
        %6792 = vmatpush1.bf16.msra.mxu0 %v6632
        %6793 = vmatprep.subr.bf16.mxu0 0
        %6794 = vmatpush1.bf16.msra.mxu0 %v6633
        %6795 = vmatprep.mubr.bf16.mxu0 %v6317
        %6796 = vmatmul.mubr.bf16.gmra.mrb[0].mxu0 %v6316
        %v6797 = vpop.f32.mrb[0].mxu0
        %v6798 = vadd.f32 %v6701, %v6797
        %v6799 = vpop.f32.mrb[0].mxu0
        %v6800 = vpop.f32.mrb[0].mxu0
        %v6801 = vadd.f32 %v6704, %v6800
        %v6802 = vpop.f32.mrb[0].mxu0
        %6803 = vmatprep.mubr.bf16.mxu0 %v6321
        %6804 = vmatmul.mubr.bf16.gmra.mrb[0].mxu0 %v6320
        %v6805 = vpop.f32.mrb[0].mxu0
        %v6806 = vadd.f32 %v6709, %v6805
        %v6807 = vpop.f32.mrb[0].mxu0
        %v6808 = vpop.f32.mrb[0].mxu0
        %v6809 = vadd.f32 %v6712, %v6808
        %v6810 = vpop.f32.mrb[0].mxu0
        %6811 = vmatprep.mubr.bf16.mxu0 %v6325
        %6812 = vmatmul.mubr.bf16.gmra.mrb[0].mxu0 %v6324
        %v6813 = vpop.f32.mrb[0].mxu0
        %v6814 = vadd.f32 %v6717, %v6813
        %v6815 = vpop.f32.mrb[0].mxu0
        %v6816 = vpop.f32.mrb[0].mxu0
        %v6817 = vadd.f32 %v6720, %v6816
        %v6818 = vpop.f32.mrb[0].mxu0
        %6819 = vmatprep.mubr.bf16.mxu0 %v6329
        %6820 = vmatmul.mubr.bf16.gmra.mrb[0].mxu0 %v6328
        %v6821 = vpop.f32.mrb[0].mxu0
        %v6822 = vadd.f32 %v6725, %v6821
        %v6823 = vpop.f32.mrb[0].mxu0
        %v6824 = vpop.f32.mrb[0].mxu0
        %v6825 = vadd.f32 %v6728, %v6824
        %v6826 = vpop.f32.mrb[0].mxu0
        %6827 = vmatprep.mubr.bf16.mxu0 %v6333
        %6828 = vmatmul.mubr.bf16.gmra.mrb[0].mxu0 %v6332
        %v6829 = vpop.f32.mrb[0].mxu0
        %v6830 = vadd.f32 %v6733, %v6829
        %v6831 = vpop.f32.mrb[0].mxu0
        %v6832 = vpop.f32.mrb[0].mxu0
        %v6833 = vadd.f32 %v6736, %v6832
        %v6834 = vpop.f32.mrb[0].mxu0
        %6835 = vmatprep.mubr.bf16.mxu0 %v6337
        %6836 = vmatmul.mubr.bf16.gmra.mrb[0].mxu0 %v6336
        %v6837 = vpop.f32.mrb[0].mxu0
        %v6838 = vadd.f32 %v6741, %v6837
        %v6839 = vpop.f32.mrb[0].mxu0
        %v6840 = vpop.f32.mrb[0].mxu0
        %v6841 = vadd.f32 %v6744, %v6840
        %v6842 = vpop.f32.mrb[0].mxu0
        %6843 = vmatprep.mubr.bf16.mxu0 %v6341
        %6844 = vmatmul.mubr.bf16.gmra.mrb[0].mxu0 %v6340
        %v6845 = vpop.f32.mrb[0].mxu0
        %v6846 = vadd.f32 %v6749, %v6845
        %v6847 = vpop.f32.mrb[0].mxu0
        %v6848 = vpop.f32.mrb[0].mxu0
        %v6849 = vadd.f32 %v6752, %v6848
        %v6850 = vpop.f32.mrb[0].mxu0
        %6851 = vmatprep.mubr.bf16.mxu0 %v6345
        %6852 = vmatmul.mubr.bf16.gmra.mrb[0].mxu0 %v6344
        %v6853 = vpop.f32.mrb[0].mxu0
        %v6854 = vadd.f32 %v6757, %v6853
        %v6855 = vpop.f32.mrb[0].mxu0
        %v6856 = vpop.f32.mrb[0].mxu0
        %v6857 = vadd.f32 %v6760, %v6856
        %v6858 = vpop.f32.mrb[0].mxu0
        %6859 = vdwg.mxu0
        %v6924 = vunpack.c.l.b16 %v6346
        %v6925 = vunpack.c.l.b16 %v6347
        %v6926 = vunpack.c.l.b16 %v6348
        %v6927 = vunpack.c.l.b16 %v6349
        %v6928 = vunpack.c.l.b16 %v6350
        %v6929 = vunpack.c.l.b16 %v6351
        %v6930 = vunpack.c.l.b16 %v6352
        %v6931 = vunpack.c.l.b16 %v6353
        %v6932 = vunpack.c.l.b16 %v6354
        %v6933 = vunpack.c.l.b16 %v6355
        %v6934 = vunpack.c.l.b16 %v6356
        %v6935 = vunpack.c.l.b16 %v6357
        %v6936 = vunpack.c.l.b16 %v6358
        %v6937 = vunpack.c.l.b16 %v6359
        %v6938 = vunpack.c.l.b16 %v6360
        %v6939 = vunpack.c.l.b16 %v6361
        %v6940 = vunpack.c.l.b16 %v6362
        %v6941 = vunpack.c.l.b16 %v6363
        %v6942 = vunpack.c.l.b16 %v6364
        %v6943 = vunpack.c.l.b16 %v6365
        %v6944 = vunpack.c.l.b16 %v6366
        %v6945 = vunpack.c.l.b16 %v6367
        %v6946 = vunpack.c.l.b16 %v6368
        %v6947 = vunpack.c.l.b16 %v6369
        %v6948 = vunpack.c.l.b16 %v6370
        %v6949 = vunpack.c.l.b16 %v6371
        %v6950 = vunpack.c.l.b16 %v6372
        %v6951 = vunpack.c.l.b16 %v6373
        %v6952 = vunpack.c.l.b16 %v6374
        %v6953 = vunpack.c.l.b16 %v6375
        %v6954 = vunpack.c.l.b16 %v6376
        %v6955 = vunpack.c.l.b16 %v6377
        %v6956 = vunpack.c.l.b16 %v6378
        %v6957 = vunpack.c.l.b16 %v6379
        %v6958 = vunpack.c.l.b16 %v6380
        %v6959 = vunpack.c.l.b16 %v6381
        %v6960 = vunpack.c.l.b16 %v6382
        %v6961 = vunpack.c.l.b16 %v6383
        %v6962 = vunpack.c.l.b16 %v6384
        %v6963 = vunpack.c.l.b16 %v6385
        %v6964 = vunpack.c.l.b16 %v6386
        %v6965 = vunpack.c.l.b16 %v6387
        %v6966 = vunpack.c.l.b16 %v6388
        %v6967 = vunpack.c.l.b16 %v6389
        %v6968 = vunpack.c.l.b16 %v6390
        %v6969 = vunpack.c.l.b16 %v6391
        %v6970 = vunpack.c.l.b16 %v6392
        %v6971 = vunpack.c.l.b16 %v6393
        %v6972 = vunpack.c.l.b16 %v6394
        %v6973 = vunpack.c.l.b16 %v6395
        %v6974 = vunpack.c.l.b16 %v6396
        %v6975 = vunpack.c.l.b16 %v6397
        %v6976 = vunpack.c.l.b16 %v6398
        %v6977 = vunpack.c.l.b16 %v6399
        %v6978 = vunpack.c.l.b16 %v6400
        %v6979 = vunpack.c.l.b16 %v6401
        %v6980 = vunpack.c.l.b16 %v6402
        %v6981 = vunpack.c.l.b16 %v6403
        %v6982 = vunpack.c.l.b16 %v6404
        %v6983 = vunpack.c.l.b16 %v6405
        %v6984 = vunpack.c.l.b16 %v6406
        %v6985 = vunpack.c.l.b16 %v6407
        %v6986 = vunpack.c.l.b16 %v6408
        %v6987 = vunpack.c.l.b16 %v6409
        %v6988 = vpack.c.b16 %v6925, %v6924
        %v6989 = vpack.c.b16 %v6927, %v6926
        %v6990 = vpack.c.b16 %v6929, %v6928
        %v6991 = vpack.c.b16 %v6931, %v6930
        %v6992 = vpack.c.b16 %v6933, %v6932
        %v6993 = vpack.c.b16 %v6935, %v6934
        %v6994 = vpack.c.b16 %v6937, %v6936
        %v6995 = vpack.c.b16 %v6939, %v6938
        %v6996 = vpack.c.b16 %v6941, %v6940
        %v6997 = vpack.c.b16 %v6943, %v6942
        %v6998 = vpack.c.b16 %v6945, %v6944
        %v6999 = vpack.c.b16 %v6947, %v6946
        %v7000 = vpack.c.b16 %v6949, %v6948
        %v7001 = vpack.c.b16 %v6951, %v6950
        %v7002 = vpack.c.b16 %v6953, %v6952
        %v7003 = vpack.c.b16 %v6955, %v6954
        %v7004 = vpack.c.b16 %v6957, %v6956
        %v7005 = vpack.c.b16 %v6959, %v6958
        %v7006 = vpack.c.b16 %v6961, %v6960
        %v7007 = vpack.c.b16 %v6963, %v6962
        %v7008 = vpack.c.b16 %v6965, %v6964
        %v7009 = vpack.c.b16 %v6967, %v6966
        %v7010 = vpack.c.b16 %v6969, %v6968
        %v7011 = vpack.c.b16 %v6971, %v6970
        %v7012 = vpack.c.b16 %v6973, %v6972
        %v7013 = vpack.c.b16 %v6975, %v6974
        %v7014 = vpack.c.b16 %v6977, %v6976
        %v7015 = vpack.c.b16 %v6979, %v6978
        %v7016 = vpack.c.b16 %v6981, %v6980
        %v7017 = vpack.c.b16 %v6983, %v6982
        %v7018 = vpack.c.b16 %v6985, %v6984
        %v7019 = vpack.c.b16 %v6987, %v6986
        %7052 = vmatprep.subr.bf16.mxu0 0
        %7053 = vmatpush1.bf16.msra.mxu0 %v6988
        %7054 = vmatprep.subr.bf16.mxu0 0
        %7055 = vmatpush1.bf16.msra.mxu0 %v6989
        %7056 = vmatprep.subr.bf16.mxu0 0
        %7057 = vmatpush1.bf16.msra.mxu0 %v6990
        %7058 = vmatprep.subr.bf16.mxu0 0
        %7059 = vmatpush1.bf16.msra.mxu0 %v6991
        %7060 = vmatprep.subr.bf16.mxu0 0
        %7061 = vmatpush1.bf16.msra.mxu0 %v6992
        %7062 = vmatprep.subr.bf16.mxu0 0
        %7063 = vmatpush1.bf16.msra.mxu0 %v6993
        %7064 = vmatprep.subr.bf16.mxu0 0
        %7065 = vmatpush1.bf16.msra.mxu0 %v6994
        %7066 = vmatprep.subr.bf16.mxu0 0
        %7067 = vmatpush1.bf16.msra.mxu0 %v6995
        %7068 = vmatprep.subr.bf16.mxu0 0
        %7069 = vmatpush1.bf16.msra.mxu0 %v6996
        %7070 = vmatprep.subr.bf16.mxu0 0
        %7071 = vmatpush1.bf16.msra.mxu0 %v6997
        %7072 = vmatprep.subr.bf16.mxu0 0
        %7073 = vmatpush1.bf16.msra.mxu0 %v6998
        %7074 = vmatprep.subr.bf16.mxu0 0
        %7075 = vmatpush1.bf16.msra.mxu0 %v6999
        %7076 = vmatprep.subr.bf16.mxu0 0
        %7077 = vmatpush1.bf16.msra.mxu0 %v7000
        %7078 = vmatprep.subr.bf16.mxu0 0
        %7079 = vmatpush1.bf16.msra.mxu0 %v7001
        %7080 = vmatprep.subr.bf16.mxu0 0
        %7081 = vmatpush1.bf16.msra.mxu0 %v7002
        %7082 = vmatprep.subr.bf16.mxu0 0
        %7083 = vmatpush1.bf16.msra.mxu0 %v7003
        %7084 = vmatprep.mubr.bf16.mxu0 %v6283
        %7085 = vmatmul.mubr.bf16.gmra.mrb[0].mxu0 %v6282
        %v7086 = vpop.f32.mrb[0].mxu0
        %v7087 = vadd.f32 %v6798, %v7086
        %v7088 = vpop.f32.mrb[0].mxu0
        %v7089 = vpop.f32.mrb[0].mxu0
        %v7090 = vadd.f32 %v6801, %v7089
        %v7091 = vpop.f32.mrb[0].mxu0
        %7092 = vmatprep.mubr.bf16.mxu0 %v6287
        %7093 = vmatmul.mubr.bf16.gmra.mrb[0].mxu0 %v6286
        %v7094 = vpop.f32.mrb[0].mxu0
        %v7095 = vadd.f32 %v6806, %v7094
        %v7096 = vpop.f32.mrb[0].mxu0
        %v7097 = vpop.f32.mrb[0].mxu0
        %v7098 = vadd.f32 %v6809, %v7097
        %v7099 = vpop.f32.mrb[0].mxu0
        %7100 = vmatprep.mubr.bf16.mxu0 %v6291
        %7101 = vmatmul.mubr.bf16.gmra.mrb[0].mxu0 %v6290
        %v7102 = vpop.f32.mrb[0].mxu0
        %v7103 = vadd.f32 %v6814, %v7102
        %v7104 = vpop.f32.mrb[0].mxu0
        %v7105 = vpop.f32.mrb[0].mxu0
        %v7106 = vadd.f32 %v6817, %v7105
        %v7107 = vpop.f32.mrb[0].mxu0
        %7108 = vmatprep.mubr.bf16.mxu0 %v6295
        %7109 = vmatmul.mubr.bf16.gmra.mrb[0].mxu0 %v6294
        %v7110 = vpop.f32.mrb[0].mxu0
        %v7111 = vadd.f32 %v6822, %v7110
        %v7112 = vpop.f32.mrb[0].mxu0
        %v7113 = vpop.f32.mrb[0].mxu0
        %v7114 = vadd.f32 %v6825, %v7113
        %v7115 = vpop.f32.mrb[0].mxu0
        %7116 = vmatprep.mubr.bf16.mxu0 %v6299
        %7117 = vmatmul.mubr.bf16.gmra.mrb[0].mxu0 %v6298
        %v7118 = vpop.f32.mrb[0].mxu0
        %v7119 = vadd.f32 %v6830, %v7118
        %v7120 = vpop.f32.mrb[0].mxu0
        %v7121 = vpop.f32.mrb[0].mxu0
        %v7122 = vadd.f32 %v6833, %v7121
        %v7123 = vpop.f32.mrb[0].mxu0
        %7124 = vmatprep.mubr.bf16.mxu0 %v6303
        %7125 = vmatmul.mubr.bf16.gmra.mrb[0].mxu0 %v6302
        %v7126 = vpop.f32.mrb[0].mxu0
        %v7127 = vadd.f32 %v6838, %v7126
        %v7128 = vpop.f32.mrb[0].mxu0
        %v7129 = vpop.f32.mrb[0].mxu0
        %v7130 = vadd.f32 %v6841, %v7129
        %v7131 = vpop.f32.mrb[0].mxu0
        %7132 = vmatprep.mubr.bf16.mxu0 %v6307
        %7133 = vmatmul.mubr.bf16.gmra.mrb[0].mxu0 %v6306
        %v7134 = vpop.f32.mrb[0].mxu0
        %v7135 = vadd.f32 %v6846, %v7134
        %v7136 = vpop.f32.mrb[0].mxu0
        %v7137 = vpop.f32.mrb[0].mxu0
        %v7138 = vadd.f32 %v6849, %v7137
        %v7139 = vpop.f32.mrb[0].mxu0
        %7140 = vmatprep.mubr.bf16.mxu0 %v6311
        %7141 = vmatmul.mubr.bf16.gmra.mrb[0].mxu0 %v6310
        %v7142 = vpop.f32.mrb[0].mxu0
        %v7143 = vadd.f32 %v6854, %v7142
        %v7144 = vpop.f32.mrb[0].mxu0
        %v7145 = vpop.f32.mrb[0].mxu0
        %v7146 = vadd.f32 %v6857, %v7145
        %v7147 = vpop.f32.mrb[0].mxu0
        %7148 = vdwg.mxu0
        %7149 = vmatprep.subr.bf16.mxu0 0
        %7150 = vmatpush1.bf16.msra.mxu0 %v7004
        %7151 = vmatprep.subr.bf16.mxu0 0
        %7152 = vmatpush1.bf16.msra.mxu0 %v7005
        %7153 = vmatprep.subr.bf16.mxu0 0
        %7154 = vmatpush1.bf16.msra.mxu0 %v7006
        %7155 = vmatprep.subr.bf16.mxu0 0
        %7156 = vmatpush1.bf16.msra.mxu0 %v7007
        %7157 = vmatprep.subr.bf16.mxu0 0
        %7158 = vmatpush1.bf16.msra.mxu0 %v7008
        %7159 = vmatprep.subr.bf16.mxu0 0
        %7160 = vmatpush1.bf16.msra.mxu0 %v7009
        %7161 = vmatprep.subr.bf16.mxu0 0
        %7162 = vmatpush1.bf16.msra.mxu0 %v7010
        %7163 = vmatprep.subr.bf16.mxu0 0
        %7164 = vmatpush1.bf16.msra.mxu0 %v7011
        %7165 = vmatprep.subr.bf16.mxu0 0
        %7166 = vmatpush1.bf16.msra.mxu0 %v7012
        %7167 = vmatprep.subr.bf16.mxu0 0
        %7168 = vmatpush1.bf16.msra.mxu0 %v7013
        %7169 = vmatprep.subr.bf16.mxu0 0
        %7170 = vmatpush1.bf16.msra.mxu0 %v7014
        %7171 = vmatprep.subr.bf16.mxu0 0
        %7172 = vmatpush1.bf16.msra.mxu0 %v7015
        %7173 = vmatprep.subr.bf16.mxu0 0
        %7174 = vmatpush1.bf16.msra.mxu0 %v7016
        %7175 = vmatprep.subr.bf16.mxu0 0
        %7176 = vmatpush1.bf16.msra.mxu0 %v7017
        %7177 = vmatprep.subr.bf16.mxu0 0
        %7178 = vmatpush1.bf16.msra.mxu0 %v7018
        %7179 = vmatprep.subr.bf16.mxu0 0
        %7180 = vmatpush1.bf16.msra.mxu0 %v7019
        %7181 = vmatprep.mubr.bf16.mxu0 %v6285
        %7182 = vmatmul.mubr.bf16.gmra.mrb[0].mxu0 %v6284
        %v7183 = vpop.f32.mrb[0].mxu0
        %v7184 = vadd.f32 %v7087, %v7183
        %v7185 = vpop.f32.mrb[0].mxu0
        %v7186 = vpop.f32.mrb[0].mxu0
        %v7187 = vadd.f32 %v7090, %v7186
        %v7188 = vpop.f32.mrb[0].mxu0
        %7189 = vmatprep.mubr.bf16.mxu0 %v6289
        %7190 = vmatmul.mubr.bf16.gmra.mrb[0].mxu0 %v6288
        %v7191 = vpop.f32.mrb[0].mxu0
        %v7192 = vadd.f32 %v7095, %v7191
        %v7193 = vpop.f32.mrb[0].mxu0
        %v7194 = vpop.f32.mrb[0].mxu0
        %v7195 = vadd.f32 %v7098, %v7194
        %v7196 = vpop.f32.mrb[0].mxu0
        %7197 = vmatprep.mubr.bf16.mxu0 %v6293
        %7198 = vmatmul.mubr.bf16.gmra.mrb[0].mxu0 %v6292
        %v7199 = vpop.f32.mrb[0].mxu0
        %v7200 = vadd.f32 %v7103, %v7199
        %v7201 = vpop.f32.mrb[0].mxu0
        %v7202 = vpop.f32.mrb[0].mxu0
        %v7203 = vadd.f32 %v7106, %v7202
        %v7204 = vpop.f32.mrb[0].mxu0
        %7205 = vmatprep.mubr.bf16.mxu0 %v6297
        %7206 = vmatmul.mubr.bf16.gmra.mrb[0].mxu0 %v6296
        %v7207 = vpop.f32.mrb[0].mxu0
        %v7208 = vadd.f32 %v7111, %v7207
        %v7209 = vpop.f32.mrb[0].mxu0
        %v7210 = vpop.f32.mrb[0].mxu0
        %v7211 = vadd.f32 %v7114, %v7210
        %v7212 = vpop.f32.mrb[0].mxu0
        %7213 = vmatprep.mubr.bf16.mxu0 %v6301
        %7214 = vmatmul.mubr.bf16.gmra.mrb[0].mxu0 %v6300
        %v7215 = vpop.f32.mrb[0].mxu0
        %v7216 = vadd.f32 %v7119, %v7215
        %v7217 = vpop.f32.mrb[0].mxu0
        %v7218 = vpop.f32.mrb[0].mxu0
        %v7219 = vadd.f32 %v7122, %v7218
        %v7220 = vpop.f32.mrb[0].mxu0
        %7221 = vmatprep.mubr.bf16.mxu0 %v6305
        %7222 = vmatmul.mubr.bf16.gmra.mrb[0].mxu0 %v6304
        %v7223 = vpop.f32.mrb[0].mxu0
        %v7224 = vadd.f32 %v7127, %v7223
        %v7225 = vpop.f32.mrb[0].mxu0
        %v7226 = vpop.f32.mrb[0].mxu0
        %v7227 = vadd.f32 %v7130, %v7226
        %v7228 = vpop.f32.mrb[0].mxu0
        %7229 = vmatprep.mubr.bf16.mxu0 %v6309
        %7230 = vmatmul.mubr.bf16.gmra.mrb[0].mxu0 %v6308
        %v7231 = vpop.f32.mrb[0].mxu0
        %v7232 = vadd.f32 %v7135, %v7231
        %v7233 = vpop.f32.mrb[0].mxu0
        %v7234 = vpop.f32.mrb[0].mxu0
        %v7235 = vadd.f32 %v7138, %v7234
        %v7236 = vpop.f32.mrb[0].mxu0
        %7237 = vmatprep.mubr.bf16.mxu0 %v6313
        %7238 = vmatmul.mubr.bf16.gmra.mrb[0].mxu0 %v6312
        %v7239 = vpop.f32.mrb[0].mxu0
        %v7240 = vadd.f32 %v7143, %v7239
        %v7241 = vpop.f32.mrb[0].mxu0
        %v7242 = vpop.f32.mrb[0].mxu0
        %v7243 = vadd.f32 %v7146, %v7242
        %v7244 = vpop.f32.mrb[0].mxu0
        %7245 = vdwg.mxu0
        %v7246 = vld [vmem:[%s12] sm:$0x1]
        %v7248 = vlaneseq
        %v7249 = vshrl.u32 %v7248, 7
        %v7250 = vsub.s32 0, %v7249
        %v7251 = vrot.slane %v7246, %v7250
        %v7253 = vadd.f32 %v7184, %v7251
        %v7254 = vadd.f32 %v7187, %v7251
        %v7255 = vadd.f32 %v7192, %v7251
        %v7256 = vadd.f32 %v7195, %v7251
        %v7257 = vadd.f32 %v7200, %v7251
        %v7258 = vadd.f32 %v7203, %v7251
        %v7259 = vadd.f32 %v7208, %v7251
        %v7260 = vadd.f32 %v7211, %v7251
        %v7261 = vadd.f32 %v7216, %v7251
        %v7262 = vadd.f32 %v7219, %v7251
        %v7263 = vadd.f32 %v7224, %v7251
        %v7264 = vadd.f32 %v7227, %v7251
        %v7265 = vadd.f32 %v7232, %v7251
        %v7266 = vadd.f32 %v7235, %v7251
        %v7267 = vadd.f32 %v7240, %v7251
        %v7268 = vadd.f32 %v7243, %v7251
        %7269 = vst [vmem:[%s13] sm:$0xff] %v7253
        %7270 = vst [vmem:[%s13 + $0x8] sm:$0xff] %v7254
        %7271 = vst [vmem:[%s13 + $0x10] sm:$0xff] %v7255
        %7272 = vst [vmem:[%s13 + $0x18] sm:$0xff] %v7256
        %7273 = vst [vmem:[%s13 + $0x20] sm:$0xff] %v7257
        %7274 = vst [vmem:[%s13 + $0x28] sm:$0xff] %v7258
        %7275 = vst [vmem:[%s13 + $0x30] sm:$0xff] %v7259
        %7276 = vst [vmem:[%s13 + $0x38] sm:$0xff] %v7260
        %7277 = vst [vmem:[%s13 + $0x40] sm:$0xff] %v7261
        %7278 = vst [vmem:[%s13 + $0x48] sm:$0xff] %v7262
        %7279 = vst [vmem:[%s13 + $0x50] sm:$0xff] %v7263
        %7280 = vst [vmem:[%s13 + $0x58] sm:$0xff] %v7264
        %7281 = vst [vmem:[%s13 + $0x60] sm:$0xff] %v7265
        %7282 = vst [vmem:[%s13 + $0x68] sm:$0xff] %v7266
        %7283 = vst [vmem:[%s13 + $0x70] sm:$0xff] %v7267
        %7284 = vst [vmem:[%s13 + $0x78] sm:$0xff] %v7268
      $region76: #{learn_who2com_forward.1} parent=71 // pred_fallthru
        _
      // Predicated region
      $region77: #{learn_who2com_forward.1} parent=71 // pred_check
        %p7285 = pneg %p327
      $region78: #{learn_who2com_forward.1} parent=71 // pred_check_branch
        %7287 = sbr.rel (%p7285) target = $region80
      $region79: #{learn_who2com_forward.1} parent=71 // pred_region
        _
      $region80: #{learn_who2com_forward.1} parent=71 // pred_fallthru
        _
      // Predicated region
      $region81: #{learn_who2com_forward.1} parent=71 // pred_check
        %p7288 = pneg %p348
      $region82: #{learn_who2com_forward.1} parent=71 // pred_check_branch
        %7290 = sbr.rel (%p7288) target = $region84
      $region83: #{learn_who2com_forward.1} parent=71 // pred_region
        _
      $region84: #{learn_who2com_forward.1} parent=71 // pred_fallthru
        _
      // Predicated region
      $region85: #{learn_who2com_forward.1} parent=71 // pred_check
        %p7291 = pneg %p327
      $region86: #{learn_who2com_forward.1} parent=71 // pred_check_branch
        %7293 = sbr.rel (%p7291) target = $region88
      $region87: #{learn_who2com_forward.1} parent=71 // pred_region
        _
      $region88: #{learn_who2com_forward.1} parent=71 // pred_fallthru
        _
      // Predicated region
      $region89: #{learn_who2com_forward.1} parent=71 // pred_check
        %p7294 = pneg %p348
      $region90: #{learn_who2com_forward.1} parent=71 // pred_check_branch
        %7296 = sbr.rel (%p7294) target = $region92
      $region91: #{learn_who2com_forward.1} parent=71 // pred_region
        _
      $region92: #{learn_who2com_forward.1} parent=71 // pred_fallthru
        _
    $region72: #{learn_who2com_forward.1} parent=5 // pred_fallthru
      _
    %p7297 = scmp.le.s32.totalorder 2, %s21
    // Predicated region
    $region93: #{learn_who2com_forward.1} parent=5 // pred_check
      %p7298 = pneg %p7297
    $region94: #{learn_who2com_forward.1} parent=5 // pred_check_branch
      %7300 = sbr.rel (%p7298) target = $region96
    $region95: #{learn_who2com_forward.1} parent=5 // pred_region
      %s7301 = ssub.s32 %s21, 2
    $region96: #{learn_who2com_forward.1} parent=5 // pred_fallthru
      _
  $region6: #{learn_who2com_forward.1} parent=0 // loop_footer
    %s25 = sadd.s32 1, %s21
  $region7: #{learn_who2com_forward.1} parent=0 // loop_footer_branch
    %20 = sbr.rel target = $region3
  $region8: #{learn_who2com_forward.1} parent=0 // loop_exit
    _

</llo_original>
